<compile_context>
chip_gen: v7x
topology: tpu7x:2x2x1
jax: 0.10.0
libtpu: 0.0.40
codegen_flags: <defaults>
</compile_context>

<pallas_src>
import functools

import jax
import jax.numpy as jnp
from jax import lax
from jax.experimental import pallas as pl
from jax.experimental.pallas import tpu as pltpu

EPS = 1e-5
_DEFAULT_TILE = 8192
_VMEM_LIMIT_BYTES = 40 * 1024 * 1024  # room for 8K-row tiles on every gen


def _round_up(x, m):
    return ((x + m - 1) // m) * m


# --------------------------------------------------------------------------
# in-kernel helpers
# --------------------------------------------------------------------------
def _tile_mask_rows(i, tile_n, n_rows, num_tiles):
    """Row-validity mask + valid-row count for tile `i` (remainder is static)."""
    rem = n_rows % tile_n
    if rem == 0:
        return None, jnp.float32(tile_n)
    row = lax.broadcasted_iota(jnp.int32, (tile_n, 1), 0)
    mask = (i * tile_n + row) < n_rows
    cnt = jnp.where(i == num_tiles - 1, jnp.float32(rem), jnp.float32(tile_n))
    return mask, cnt


def _masked_col_stats(y, mask, cnt):
    """Per-column mean and M2 (sum of squared deviations) over valid rows."""
    ys = y if mask is None else jnp.where(mask, y, 0.0)
    m = jnp.sum(ys, axis=0, keepdims=True) / cnt          # [1, C]
    d = y - m
    if mask is not None:
        d = jnp.where(mask, d, 0.0)
    m2 = jnp.sum(d * d, axis=0, keepdims=True)            # [1, C]
    return m, m2


def _psi_pre(gate_ref, skip_ref, wg_ref, wx_ref, pk_ref):
    """Shared pass-2 / pass-3 math: relu(gate@Wg' + skip@Wx' + shift) @ wpsi."""
    yg = jnp.dot(gate_ref[...], wg_ref[...], preferred_element_type=jnp.float32)
    yx = jnp.dot(skip_ref[...], wx_ref[...], preferred_element_type=jnp.float32)
    a = jnp.maximum(yg + yx + pk_ref[0:1, :], 0.0)        # [tile, nc]
    # nc -> 1 "conv": VPU multiply + lane reduction (no width-1 MXU call).
    return jnp.sum(a * pk_ref[1:2, :], axis=1, keepdims=True)  # [tile, 1]


# --------------------------------------------------------------------------
# pass 1: per-tile per-channel mean / M2 of both branch pre-activations
# --------------------------------------------------------------------------
def _bn_stats_kernel(gate_ref, skip_ref, wg_ref, wx_ref, stats_ref, *,
                     tile_n, n_rows, num_tiles):
    i = pl.program_id(0)
    yg = jnp.dot(gate_ref[...], wg_ref[...], preferred_element_type=jnp.float32)
    yx = jnp.dot(skip_ref[...], wx_ref[...], preferred_element_type=jnp.float32)
    mask, cnt = _tile_mask_rows(i, tile_n, n_rows, num_tiles)
    mg, m2g = _masked_col_stats(yg, mask, cnt)
    mx, m2x = _masked_col_stats(yx, mask, cnt)
    # row 0 = means, row 1 = M2; columns = [gate-branch ch, skip-branch ch]
    stats_ref[...] = jnp.concatenate(
        [jnp.concatenate([mg, mx], axis=1),
         jnp.concatenate([m2g, m2x], axis=1)], axis=0)    # [2, 2nc]


# --------------------------------------------------------------------------
# pass 2: folded BN1+BN2 + relu, psi pre-activation, per-tile BN3 stats
# --------------------------------------------------------------------------
def _psi_stats_kernel(gate_ref, skip_ref, wg_ref, wx_ref, pk_ref, stats_ref, *,
                      tile_n, n_rows, num_tiles):
    i = pl.program_id(0)
    p = _psi_pre(gate_ref, skip_ref, wg_ref, wx_ref, pk_ref)   # [tile, 1]
    mask, cnt = _tile_mask_rows(i, tile_n, n_rows, num_tiles)
    m, m2 = _masked_col_stats(p, mask, cnt)
    stats_ref[...] = jnp.concatenate([m, m2], axis=1)           # [1, 2]


# --------------------------------------------------------------------------
# pass 3: fold BN3 + sigmoid, gate the skip connection (native [N, F_l] store)
# --------------------------------------------------------------------------
def _gate_kernel(gate_ref, skip_ref, wg_ref, wx_ref, pk_ref, s3t3_ref, out_ref):
    p = _psi_pre(gate_ref, skip_ref, wg_ref, wx_ref, pk_ref)    # [tile, 1]
    g = jax.nn.sigmoid(p * s3t3_ref[0:1, 0:1] + s3t3_ref[0:1, 1:2])
    out_ref[...] = (skip_ref[...] * g).astype(out_ref.dtype)


# --------------------------------------------------------------------------
# wrapper
# --------------------------------------------------------------------------
def attention_block(gate, skip, params, *, tile_n=_DEFAULT_TILE):
    N, F_g = gate.shape
    N2, F_l = skip.shape
    assert N2 == N
    nc = params["wg"].shape[1]
    f32 = jnp.float32

    # NOTE: below ~16K points a plain-XLA implementation (attention_block_ref)
    # beats the 3-pass Pallas path; callers can dispatch on N if that matters.

    tile_n = max(128, min(_round_up(int(tile_n), 128), _round_up(N, 128)))
    num_tiles = -(-N // tile_n)
    rem = N % tile_n

    wg = params["wg"].astype(f32)                          # [F_g, nc]
    wx = params["wx"].astype(f32)                          # [F_l, nc]

    cparams = pltpu.CompilerParams(dimension_semantics=("parallel",),
                                   vmem_limit_bytes=_VMEM_LIMIT_BYTES)

    # ---- pass 1: per-tile partial BN1/BN2 statistics ----
    stats1 = pl.pallas_call(
        functools.partial(_bn_stats_kernel, tile_n=tile_n, n_rows=N,
                          num_tiles=num_tiles),
        out_shape=jax.ShapeDtypeStruct((num_tiles, 2, 2 * nc), f32),
        grid=(num_tiles,),
        in_specs=[pl.BlockSpec((tile_n, F_g), lambda i: (i, 0)),
                  pl.BlockSpec((tile_n, F_l), lambda i: (i, 0)),
                  pl.BlockSpec((F_g, nc), lambda i: (0, 0)),
                  pl.BlockSpec((F_l, nc), lambda i: (0, 0))],
        out_specs=pl.BlockSpec((None, 2, 2 * nc), lambda i: (i, 0, 0)),
        compiler_params=cparams,
    )(gate, skip, wg, wx)

    # Combine per-tile partials (tiny XLA work; robust grouped-variance merge).
    counts = [float(tile_n)] * num_tiles
    if rem:
        counts[-1] = float(rem)
    counts = jnp.asarray(counts, f32)                      # [T]
    n_f = jnp.float32(N)

    means_t = stats1[:, 0, :]                              # [T, 2nc]
    m2_t = stats1[:, 1, :]
    mean12 = jnp.sum(counts[:, None] * means_t, axis=0) / n_f
    m2_12 = (jnp.sum(m2_t, axis=0)
             + jnp.sum(counts[:, None] * (means_t - mean12) ** 2, axis=0))
    var12 = m2_12 / n_f

    gamma12 = jnp.concatenate([params["g1_gamma"].reshape(-1),
                               params["g2_gamma"].reshape(-1)]).astype(f32)
    beta12 = jnp.concatenate([params["g1_beta"].reshape(-1),
                              params["g2_beta"].reshape(-1)]).astype(f32)
    s12 = gamma12 * lax.rsqrt(var12 + EPS)
    shift12 = beta12 - mean12 * s12
    tsum = shift12[:nc] + shift12[nc:]                     # [nc]

    # Fold the BN scales into the conv weights; pack shift + psi weights.
    wg_s = wg * s12[:nc][None, :]
    wx_s = wx * s12[nc:][None, :]
    pk = jnp.stack([tsum, params["wpsi"].reshape(-1).astype(f32)], axis=0)  # [2, nc]

    # ---- pass 2: psi pre-activation statistics (per-tile partials) ----
    stats3 = pl.pallas_call(
        functools.partial(_psi_stats_kernel, tile_n=tile_n, n_rows=N,
                          num_tiles=num_tiles),
        out_shape=jax.ShapeDtypeStruct((num_tiles, 1, 2), f32),
        grid=(num_tiles,),
        in_specs=[pl.BlockSpec((tile_n, F_g), lambda i: (i, 0)),
                  pl.BlockSpec((tile_n, F_l), lambda i: (i, 0)),
                  pl.BlockSpec((F_g, nc), lambda i: (0, 0)),
                  pl.BlockSpec((F_l, nc), lambda i: (0, 0)),
                  pl.BlockSpec((2, nc), lambda i: (0, 0))],
        out_specs=pl.BlockSpec((None, 1, 2), lambda i: (i, 0, 0)),
        compiler_params=cparams,
    )(gate, skip, wg_s, wx_s, pk)

    pmean_t = stats3[:, 0, 0]
    pm2_t = stats3[:, 0, 1]
    pmean = jnp.sum(counts * pmean_t) / n_f
    pm2 = jnp.sum(pm2_t) + jnp.sum(counts * (pmean_t - pmean) ** 2)
    var3 = pm2 / n_f
    s3 = params["g3_gamma"].reshape(()).astype(f32) * lax.rsqrt(var3 + EPS)
    t3 = params["g3_beta"].reshape(()).astype(f32) - pmean * s3
    s3t3 = jnp.stack([s3, t3]).reshape(1, 2)

    # ---- pass 3: sigmoid gate applied to the skip connection ----
    out = pl.pallas_call(
        _gate_kernel,
        out_shape=jax.ShapeDtypeStruct((N, F_l), skip.dtype),
        grid=(num_tiles,),
        in_specs=[pl.BlockSpec((tile_n, F_g), lambda i: (i, 0)),
                  pl.BlockSpec((tile_n, F_l), lambda i: (i, 0)),
                  pl.BlockSpec((F_g, nc), lambda i: (0, 0)),
                  pl.BlockSpec((F_l, nc), lambda i: (0, 0)),
                  pl.BlockSpec((2, nc), lambda i: (0, 0)),
                  pl.BlockSpec((1, 2), lambda i: (0, 0))],
        out_specs=pl.BlockSpec((tile_n, F_l), lambda i: (i, 0)),
        compiler_params=cparams,
    )(gate, skip, wg_s, wx_s, pk, s3t3)
    return out


# --------------------------------------------------------------------------
# parameters / pure-JAX reference
# --------------------------------------------------------------------------
def init_params(key, F_g, F_l, n_coefficients):
    k = jax.random.split(key, 6)
    scale_g = 1.0 / jnp.sqrt(F_g)
    scale_x = 1.0 / jnp.sqrt(F_l)
    scale_p = 1.0 / jnp.sqrt(n_coefficients)
    return {
        # W_gate conv (kernel_size=1): weight [F_g, nc], bias [1, nc]
        "wg": jax.random.uniform(k[0], (F_g, n_coefficients), jnp.float32,
                                 -scale_g, scale_g),
        "bg": jax.random.uniform(k[1], (1, n_coefficients), jnp.float32,
                                 -scale_g, scale_g),
        "g1_gamma": jnp.ones((1, n_coefficients), jnp.float32),
        "g1_beta": jnp.zeros((1, n_coefficients), jnp.float32),
        # W_x conv
        "wx": jax.random.uniform(k[2], (F_l, n_coefficients), jnp.float32,
                                 -scale_x, scale_x),
        "bx": jax.random.uniform(k[3], (1, n_coefficients), jnp.float32,
                                 -scale_x, scale_x),
        "g2_gamma": jnp.ones((1, n_coefficients), jnp.float32),
        "g2_beta": jnp.zeros((1, n_coefficients), jnp.float32),
        # psi conv (nc -> 1)
        "wpsi": jax.random.uniform(k[4], (n_coefficients, 1), jnp.float32,
                                   -scale_p, scale_p),
        "bpsi": jax.random.uniform(k[5], (1, 1), jnp.float32,
                                   -scale_p, scale_p),
        "g3_gamma": jnp.ones((1, 1), jnp.float32),
        "g3_beta": jnp.zeros((1, 1), jnp.float32),
    }


def _batchnorm_ref(x, gamma, beta):
    mean = jnp.mean(x, axis=0, keepdims=True)
    var = jnp.mean((x - mean) ** 2, axis=0, keepdims=True)
    return (x - mean) * lax.rsqrt(var + EPS) * gamma + beta


def attention_block_ref(gate, skip, p):
    g1 = _batchnorm_ref(gate @ p["wg"] + p["bg"], p["g1_gamma"], p["g1_beta"])
    x1 = _batchnorm_ref(skip @ p["wx"] + p["bx"], p["g2_gamma"], p["g2_beta"])
    a = jnp.maximum(g1 + x1, 0.0)
    psi = jax.nn.sigmoid(
        _batchnorm_ref(a @ p["wpsi"] + p["bpsi"], p["g3_gamma"], p["g3_beta"]))
    return skip * psi


if __name__ == "__main__":
    F_g = 8            # gating-signal channels
    F_l = 8            # skip-connection channels
    n_coefficients = 16

    key = jax.random.PRNGKey(0)
    kg, ks, kp, kg2, ks2 = jax.random.split(key, 5)
    params = init_params(kp, F_g, F_l, n_coefficients)

    # Case 1: multiple full tiles (tile divides N).
    N1 = 6144
    gate1 = jax.random.normal(kg, (N1, F_g), jnp.float32)
    skip1 = jax.random.normal(ks, (N1, F_l), jnp.float32)
    out1 = jax.block_until_ready(attention_block(gate1, skip1, params,
                                                 tile_n=2048))
    ref1 = attention_block_ref(gate1, skip1, params)
    assert out1.shape == (N1, F_l)
    assert jnp.allclose(out1, ref1, atol=1e-4, rtol=1e-4), "mismatch (even N)"

    # Case 2: ragged point count (exercises partial blocks + masked BN stats).
    N2 = 5000
    gate2 = jax.random.normal(kg2, (N2, F_g), jnp.float32)
    skip2 = jax.random.normal(ks2, (N2, F_l), jnp.float32)
    out2 = jax.block_until_ready(attention_block(gate2, skip2, params,
                                                 tile_n=2048))
    ref2 = attention_block_ref(gate2, skip2, params)
    assert out2.shape == (N2, F_l)
    assert jnp.allclose(out2, ref2, atol=1e-4, rtol=1e-4), "mismatch (ragged N)"

    print("KERNEL_OK")
</pallas_src>

<mosaic_0001>
module attributes {stable_mosaic.version = 11 : i64} {
  func.func @_bn_stats_kernel(%arg0: i32, %arg1: memref<2048x8xf32, #tpu.memory_space<vmem>>, %arg2: memref<2048x8xf32, #tpu.memory_space<vmem>>, %arg3: memref<8x16xf32, #tpu.memory_space<vmem>>, %arg4: memref<8x16xf32, #tpu.memory_space<vmem>>, %arg5: memref<1x2x32xf32, #tpu.memory_space<vmem>>) attributes {dimension_semantics = [#tpu.dimension_semantics<parallel>], iteration_bounds = array<i64: 3>, scalar_prefetch = 0 : i64, scratch_operands = 0 : i64, tpu.core_type = #tpu.core_type<tc>, window_params = [{transform_indices = @transform_0, window_bounds = array<i64: 2048, 8>}, {transform_indices = @transform_1, window_bounds = array<i64: 2048, 8>}, {pipeline_mode = #tpu.pipeline_mode<synchronous>, transform_indices = @transform_2, window_bounds = array<i64: 8, 16>}, {pipeline_mode = #tpu.pipeline_mode<synchronous>, transform_indices = @transform_3, window_bounds = array<i64: 8, 16>}, {transform_indices = @transform_4, window_bounds = array<i64: 1, 2, 32>}]} {
    %c0 = arith.constant 0 : index
    %c0_0 = arith.constant 0 : index
    %0 = vector.load %arg1[%c0, %c0_0] : memref<2048x8xf32, #tpu.memory_space<vmem>>, vector<2048x8xf32>
    %c0_1 = arith.constant 0 : index
    %c0_2 = arith.constant 0 : index
    %1 = vector.load %arg3[%c0_1, %c0_2] : memref<8x16xf32, #tpu.memory_space<vmem>>, vector<8x16xf32>
    %cst = arith.constant dense<0.000000e+00> : vector<2048x16xf32>
    %2 = tpu.matmul %0, %1, %cst {dimension_numbers = #tpu.dot_dimension_numbers<[1], [0], [0], [1], [0, 0, 1, 1], [], []>} : vector<2048x8xf32>, vector<8x16xf32>, vector<2048x16xf32> -> vector<2048x16xf32>
    %c0_3 = arith.constant 0 : index
    %c0_4 = arith.constant 0 : index
    %3 = vector.load %arg2[%c0_3, %c0_4] : memref<2048x8xf32, #tpu.memory_space<vmem>>, vector<2048x8xf32>
    %c0_5 = arith.constant 0 : index
    %c0_6 = arith.constant 0 : index
    %4 = vector.load %arg4[%c0_5, %c0_6] : memref<8x16xf32, #tpu.memory_space<vmem>>, vector<8x16xf32>
    %cst_7 = arith.constant dense<0.000000e+00> : vector<2048x16xf32>
    %5 = tpu.matmul %3, %4, %cst_7 {dimension_numbers = #tpu.dot_dimension_numbers<[1], [0], [0], [1], [0, 0, 1, 1], [], []>} : vector<2048x8xf32>, vector<8x16xf32>, vector<2048x16xf32> -> vector<2048x16xf32>
    %cst_8 = arith.constant dense<0.000000e+00> : vector<16xf32>
    %6 = vector.multi_reduction <add>, %2, %cst_8 [0] : vector<2048x16xf32> to vector<16xf32>
    %7 = vector.shape_cast %6 : vector<16xf32> to vector<1x16xf32>
    %cst_9 = arith.constant 2.048000e+03 : f32
    %8 = vector.broadcast %cst_9 : f32 to vector<1x16xf32>
    %9 = arith.divf %7, %8 : vector<1x16xf32>
    %10 = vector.broadcast %9 : vector<1x16xf32> to vector<2048x16xf32>
    %11 = arith.subf %2, %10 : vector<2048x16xf32>
    %12 = arith.mulf %11, %11 : vector<2048x16xf32>
    %cst_10 = arith.constant dense<0.000000e+00> : vector<16xf32>
    %13 = vector.multi_reduction <add>, %12, %cst_10 [0] : vector<2048x16xf32> to vector<16xf32>
    %14 = vector.shape_cast %13 : vector<16xf32> to vector<1x16xf32>
    %cst_11 = arith.constant dense<0.000000e+00> : vector<16xf32>
    %15 = vector.multi_reduction <add>, %5, %cst_11 [0] : vector<2048x16xf32> to vector<16xf32>
    %16 = vector.shape_cast %15 : vector<16xf32> to vector<1x16xf32>
    %cst_12 = arith.constant 2.048000e+03 : f32
    %17 = vector.broadcast %cst_12 : f32 to vector<1x16xf32>
    %18 = arith.divf %16, %17 : vector<1x16xf32>
    %19 = vector.broadcast %18 : vector<1x16xf32> to vector<2048x16xf32>
    %20 = arith.subf %5, %19 : vector<2048x16xf32>
    %21 = arith.mulf %20, %20 : vector<2048x16xf32>
    %cst_13 = arith.constant dense<0.000000e+00> : vector<16xf32>
    %22 = vector.multi_reduction <add>, %21, %cst_13 [0] : vector<2048x16xf32> to vector<16xf32>
    %23 = vector.shape_cast %22 : vector<16xf32> to vector<1x16xf32>
    %24 = tpu.concatenate %9, %18 in 1 : vector<1x16xf32>, vector<1x16xf32> -> vector<1x32xf32>
    %25 = tpu.concatenate %14, %23 in 1 : vector<1x16xf32>, vector<1x16xf32> -> vector<1x32xf32>
    %26 = tpu.concatenate %24, %25 in 0 : vector<1x32xf32>, vector<1x32xf32> -> vector<2x32xf32>
    %c0_14 = arith.constant 0 : index
    %c0_15 = arith.constant 0 : index
    %c0_16 = arith.constant 0 : index
    %27 = vector.load %arg5[%c0_14, %c0_15, %c0_16] : memref<1x2x32xf32, #tpu.memory_space<vmem>>, vector<1x2x32xf32>
    %28 = vector.shape_cast %27 : vector<1x2x32xf32> to vector<2x32xf32>
    %29 = vector.shape_cast %26 : vector<2x32xf32> to vector<1x2x32xf32>
    tpu.vector_store %arg5[%c0_14, %c0_15, %c0_16], %29 {strides = array<i32>} : memref<1x2x32xf32, #tpu.memory_space<vmem>>, vector<1x2x32xf32>,
    return
  }
  func.func @transform_0(%arg0: i32) -> (i32, i32) {
    %c0_i32 = arith.constant 0 : i32
    %c0_i32_0 = arith.constant 0 : i32
    return %arg0, %c0_i32 : i32, i32
  }
  func.func @transform_1(%arg0: i32) -> (i32, i32) {
    %c0_i32 = arith.constant 0 : i32
    %c0_i32_0 = arith.constant 0 : i32
    return %arg0, %c0_i32 : i32, i32
  }
  func.func @transform_2(%arg0: i32) -> (i32, i32) {
    %c0_i32 = arith.constant 0 : i32
    %c0_i32_0 = arith.constant 0 : i32
    %c0_i32_1 = arith.constant 0 : i32
    return %c0_i32, %c0_i32_0 : i32, i32
  }
  func.func @transform_3(%arg0: i32) -> (i32, i32) {
    %c0_i32 = arith.constant 0 : i32
    %c0_i32_0 = arith.constant 0 : i32
    %c0_i32_1 = arith.constant 0 : i32
    return %c0_i32, %c0_i32_0 : i32, i32
  }
  func.func @transform_4(%arg0: i32) -> (i32, i32, i32) {
    %c0_i32 = arith.constant 0 : i32
    %c0_i32_0 = arith.constant 0 : i32
    %c0_i32_1 = arith.constant 0 : i32
    return %arg0, %c0_i32, %c0_i32_0 : i32, i32, i32
  }
}

</mosaic_0001>

<llo_original>
// kernel: tpu_custom_call.1
$region0: #{tpu_custom_call.1}
  #allocation0 [shape = 'u32[]', space=smem, size = 0x4, offset = 0x4, fixed_abs, tag = 'smem constant byte address 0x4 - core index']
  #allocation1 [shape = 'u32[144,128]{1,0:T(1,128)}', space=vmem, size = 0x12000, scoped, tag = 'internal scratch']
  %s0 = inlined_call_operand.vmem [shape: f32[6144,8], index: 0, kind: input, shape index: {}]
  %s1 = inlined_call_operand.vmem [shape: f32[6144,8], index: 1, kind: input, shape index: {}]
  %s2 = inlined_call_operand.vmem [shape: f32[8,16], index: 2, kind: input, shape index: {}]
  %s3 = inlined_call_operand.vmem [shape: f32[8,16], index: 3, kind: input, shape index: {}]
  %s4 = inlined_call_operand.hbm [shape: f32[3,2,32], index: 4, kind: output, shape index: {}]
  %s5 = sld [smem:[#allocation0]]
  $region49: #{tpu_custom_call.1} parent=0
    _
  %s7 = ssub.s32 1, %s5
  %s8 = scalar_select 0, %s7, %s5
  $region1: #{tpu_custom_call.1} parent=0
    #allocation2 [shape = 'u8[2048]{0}', space=vmem, size = 0x800, scoped, tag = 'output window, operand 0']
    #allocation3 [shape = 's32[2]{0}', space=sflag, size = 0x8, scoped, tag = 'scoped memory for tpu_custom_call.1']
    %9 = vsyncpa [#allocation3], 0
    %s10 = scalar_lea.sflag [#allocation3], 1
    %11 = vsyncpa %s10, 0
    loop: start=0, step=1, limit=5
    $region2: #{tpu_custom_call.1} parent=1 // loop_pre_header
      _
    $region3: #{tpu_custom_call.1} parent=1 // loop_header
      %s13 = sphi 0, %s17
      %p14 = scmp.ge.s32.totalorder %s13, 5
      %s23 = sphi 0, %s25
      %s26 = sphi 0, %s23
      %s27 = sphi 0, %s26
      %s43 = sphi 0, %s27
      %s49 = sphi 0, %s51
      %s52 = sphi 0, %s49
      %s53 = sphi 0, %s52
      %s69 = sphi 0, %s53
      %s73 = sphi 0, %s73
      %s75 = sphi 0, %s73
      %s76 = sphi 0, %s75
      %s90 = sphi 0, %s76
      %s94 = sphi 0, %s94
      %s96 = sphi 0, %s94
      %s97 = sphi 0, %s96
      %s111 = sphi 0, %s97
      %s117 = sphi 0, %s119
      %s120 = sphi 0, %s117
      %s121 = sphi 0, %s120
      %s137 = sphi 0, %s121
    $region4: #{tpu_custom_call.1} parent=1 // loop_header_branch
      %16 = sbr.rel (%p14) target = $region8
    $region5: #{tpu_custom_call.1} parent=1 // loop_body
      %s18 = ssub.s32 %s13, 1
      %s19 = ssub.s32 %s13, 2
      %s20 = sadd.s32 %s13, 1
      %s21 = ssub.s32 %s13, %s20
      %p22 = scmp.eq.s32.totalorder %s21, 0
      %s24 = sadd.s32 %s23, 1
      %s25 = scalar_select %p22, %s23, %s24
      %p28 = pneg %p22
      %p29 = scmp.eq.s32.totalorder %s13, 2
      %p30 = por %p28, %p29
      %p31 = scmp.ne.s32.totalorder %s23, %s26
      %p32 = scmp.eq.s32.totalorder %s13, 0
      %p33 = por %p31, %p32
      %p34 = scmp.ne.s32.totalorder %s23, %s26
      %p35 = scmp.eq.s32.totalorder %s18, 2
      %p36 = por %p34, %p35
      %p37 = scmp.ne.s32.totalorder %s26, %s27
      %p38 = scmp.eq.s32.totalorder %s18, 0
      %p39 = por %p37, %p38
      %p40 = scmp.ne.s32.totalorder %s26, %s27
      %p41 = scmp.eq.s32.totalorder %s19, 2
      %p42 = por %p40, %p41
      %p44 = scmp.ne.s32.totalorder %s27, %s43
      %p45 = scmp.eq.s32.totalorder %s19, 0
      %p46 = por %p44, %p45
      %s47 = ssub.s32 %s13, %s20
      %p48 = scmp.eq.s32.totalorder %s47, 0
      %s50 = sadd.s32 %s49, 1
      %s51 = scalar_select %p48, %s49, %s50
      %p54 = pneg %p48
      %p55 = scmp.eq.s32.totalorder %s13, 2
      %p56 = por %p54, %p55
      %p57 = scmp.ne.s32.totalorder %s49, %s52
      %p58 = scmp.eq.s32.totalorder %s13, 0
      %p59 = por %p57, %p58
      %p60 = scmp.ne.s32.totalorder %s49, %s52
      %p61 = scmp.eq.s32.totalorder %s18, 2
      %p62 = por %p60, %p61
      %p63 = scmp.ne.s32.totalorder %s52, %s53
      %p64 = scmp.eq.s32.totalorder %s18, 0
      %p65 = por %p63, %p64
      %p66 = scmp.ne.s32.totalorder %s52, %s53
      %p67 = scmp.eq.s32.totalorder %s19, 2
      %p68 = por %p66, %p67
      %p70 = scmp.ne.s32.totalorder %s53, %s69
      %p71 = scmp.eq.s32.totalorder %s19, 0
      %p72 = por %p70, %p71
      %s74 = sadd.s32 %s73, 1
      %p77 = scmp.eq.s32.totalorder %s13, 2
      %p78 = scmp.ne.s32.totalorder %s73, %s75
      %p79 = scmp.eq.s32.totalorder %s13, 0
      %p80 = por %p78, %p79
      %p81 = scmp.ne.s32.totalorder %s73, %s75
      %p82 = scmp.eq.s32.totalorder %s18, 2
      %p83 = por %p81, %p82
      %p84 = scmp.ne.s32.totalorder %s75, %s76
      %p85 = scmp.eq.s32.totalorder %s18, 0
      %p86 = por %p84, %p85
      %p87 = scmp.ne.s32.totalorder %s75, %s76
      %p88 = scmp.eq.s32.totalorder %s19, 2
      %p89 = por %p87, %p88
      %p91 = scmp.ne.s32.totalorder %s76, %s90
      %p92 = scmp.eq.s32.totalorder %s19, 0
      %p93 = por %p91, %p92
      %s95 = sadd.s32 %s94, 1
      %p98 = scmp.eq.s32.totalorder %s13, 2
      %p99 = scmp.ne.s32.totalorder %s94, %s96
      %p100 = scmp.eq.s32.totalorder %s13, 0
      %p101 = por %p99, %p100
      %p102 = scmp.ne.s32.totalorder %s94, %s96
      %p103 = scmp.eq.s32.totalorder %s18, 2
      %p104 = por %p102, %p103
      %p105 = scmp.ne.s32.totalorder %s96, %s97
      %p106 = scmp.eq.s32.totalorder %s18, 0
      %p107 = por %p105, %p106
      %p108 = scmp.ne.s32.totalorder %s96, %s97
      %p109 = scmp.eq.s32.totalorder %s19, 2
      %p110 = por %p108, %p109
      %p112 = scmp.ne.s32.totalorder %s97, %s111
      %p113 = scmp.eq.s32.totalorder %s19, 0
      %p114 = por %p112, %p113
      %s115 = ssub.s32 %s13, %s20
      %p116 = scmp.eq.s32.totalorder %s115, 0
      %s118 = sadd.s32 %s117, 1
      %s119 = scalar_select %p116, %s117, %s118
      %p122 = pneg %p116
      %p123 = scmp.eq.s32.totalorder %s13, 2
      %p124 = por %p122, %p123
      %p125 = scmp.ne.s32.totalorder %s117, %s120
      %p126 = scmp.eq.s32.totalorder %s13, 0
      %p127 = por %p125, %p126
      %p128 = scmp.ne.s32.totalorder %s117, %s120
      %p129 = scmp.eq.s32.totalorder %s18, 2
      %p130 = por %p128, %p129
      %p131 = scmp.ne.s32.totalorder %s120, %s121
      %p132 = scmp.eq.s32.totalorder %s18, 0
      %p133 = por %p131, %p132
      %p134 = scmp.ne.s32.totalorder %s120, %s121
      %p135 = scmp.eq.s32.totalorder %s19, 2
      %p136 = por %p134, %p135
      %p138 = scmp.ne.s32.totalorder %s121, %s137
      %p139 = scmp.eq.s32.totalorder %s19, 0
      %p140 = por %p138, %p139
      %p141 = scmp.le.s32.totalorder 1, %s13
      %p142 = scmp.lt.s32.totalorder %s13, 4
      %p143 = pnand %p141, %p142
      %p144 = pneg %p143
      // Predicated region
      $region9: #{tpu_custom_call.1} parent=5 // pred_check
        _
      $region10: #{tpu_custom_call.1} parent=5 // pred_check_branch
        %146 = sbr.rel (%p143) target = $region12
      $region11: #{tpu_custom_call.1} parent=5 // pred_region
        %s147 = ssub.s32 %s13, 1
        // Predicated region
        $region13: #{tpu_custom_call.1} parent=11 // pred_check
          %p148 = pneg %p86
        $region14: #{tpu_custom_call.1} parent=11 // pred_check_branch
          %150 = sbr.rel (%p148) target = $region16
        $region15: #{tpu_custom_call.1} parent=11 // pred_region
          _
        $region16: #{tpu_custom_call.1} parent=11 // pred_fallthru
          _
        // Predicated region
        $region17: #{tpu_custom_call.1} parent=11 // pred_check
          %p151 = pneg %p107
        $region18: #{tpu_custom_call.1} parent=11 // pred_check_branch
          %153 = sbr.rel (%p151) target = $region20
        $region19: #{tpu_custom_call.1} parent=11 // pred_region
          _
        $region20: #{tpu_custom_call.1} parent=11 // pred_fallthru
          _
      $region12: #{tpu_custom_call.1} parent=5 // pred_fallthru
        _
      %p154 = scmp.lt.s32.totalorder %s13, 3
      // Predicated region
      $region21: #{tpu_custom_call.1} parent=5 // pred_check
        %p155 = pneg %p154
      $region22: #{tpu_custom_call.1} parent=5 // pred_check_branch
        %157 = sbr.rel (%p155) target = $region24
      $region23: #{tpu_custom_call.1} parent=5 // pred_region
        // Predicated region
        $region25: #{tpu_custom_call.1} parent=23 // pred_check
          %p158 = pneg %p33
        $region26: #{tpu_custom_call.1} parent=23 // pred_check_branch
          %160 = sbr.rel (%p158) target = $region28
        $region27: #{tpu_custom_call.1} parent=23 // pred_region
          %s161 = smul.u32 256, %s13
          %p162 = scmp.lt.s32.totalorder %s161, 767
          %s163 = scalar_select %p162, %s161, 767
          %s164 = smul.addr %s163, 8
          %s165 = scalar_lea.vmem %s0, %s164
          %s166 = smul.u32 256, %s13
        $region28: #{tpu_custom_call.1} parent=23 // pred_fallthru
          _
        // Predicated region
        $region29: #{tpu_custom_call.1} parent=23 // pred_check
          %p167 = pneg %p59
        $region30: #{tpu_custom_call.1} parent=23 // pred_check_branch
          %169 = sbr.rel (%p167) target = $region32
        $region31: #{tpu_custom_call.1} parent=23 // pred_region
          %s170 = smul.u32 256, %s13
          %p171 = scmp.lt.s32.totalorder %s170, 767
          %s172 = scalar_select %p171, %s170, 767
          %s173 = smul.addr %s172, 8
          %s174 = scalar_lea.vmem %s1, %s173
          %s175 = smul.u32 256, %s13
        $region32: #{tpu_custom_call.1} parent=23 // pred_fallthru
          _
      $region24: #{tpu_custom_call.1} parent=5 // pred_fallthru
        _
      %p176 = scmp.le.s32.totalorder 1, %s13
      %p177 = scmp.lt.s32.totalorder %s13, 4
      %p178 = pnand %p176, %p177
      %p179 = pneg %p178
      // Predicated region
      $region33: #{tpu_custom_call.1} parent=5 // pred_check
        _
      $region34: #{tpu_custom_call.1} parent=5 // pred_check_branch
        %181 = sbr.rel (%p178) target = $region36
      $region35: #{tpu_custom_call.1} parent=5 // pred_region
        %s182 = ssub.s32 %s13, 1
        %s183 = smul.u32 256, %s18
        %p184 = scmp.lt.s32.totalorder %s183, 767
        %s185 = scalar_select %p184, %s183, 767
        %s186 = smul.addr %s185, 8
        %s187 = scalar_lea.vmem %s0, %s186
        %p188 = pneg %p39
        %p189 = pneg %p36
        %s190 = smul.u32 256, %s18
        %p191 = scmp.lt.s32.totalorder %s190, 767
        %s192 = scalar_select %p191, %s190, 767
        %s193 = smul.addr %s192, 8
        %s194 = scalar_lea.vmem %s1, %s193
        %p195 = pneg %p65
        %p196 = pneg %p62
        %p197 = pneg %p86
        %p198 = pneg %p83
        %p199 = pneg %p107
        %p200 = pneg %p104
        %p201 = pneg %p133
        %p202 = pneg %p130
        %s203 = sand.u32 %s120, 1
        %s204 = scalar_lea.sflag [#allocation3], %s203
        %s205 = sand.u32 %s120, 1
        %s206 = smul.addr %s205, 2
        %s207 = scalar_lea.vmem [#allocation2], %s206
        %s208 = smul.u32 256, %s18
        %p209 = scmp.lt.s32.totalorder %s208, 767
        %s210 = scalar_select %p209, %s208, 767
        %s211 = smul.addr %s210, 8
        %s212 = scalar_lea.vmem %s0, %s211
        %s213 = smul.u32 256, %s18
        %s214 = smul.u32 256, %s18
        %p215 = scmp.lt.s32.totalorder %s214, 767
        %s216 = scalar_select %p215, %s214, 767
        %s217 = smul.addr %s216, 8
        %s218 = scalar_lea.vmem %s1, %s217
        %s219 = smul.u32 256, %s18
        %v220 = vld [vmem:[%s212] sm:$0xff]
        %v221 = vld [vmem:[%s212 + $0x8] sm:$0xff]
        %v222 = vld [vmem:[%s212 + $0x10] sm:$0xff]
        %v223 = vld [vmem:[%s212 + $0x18] sm:$0xff]
        %v224 = vld [vmem:[%s212 + $0x20] sm:$0xff]
        %v225 = vld [vmem:[%s212 + $0x28] sm:$0xff]
        %v226 = vld [vmem:[%s212 + $0x30] sm:$0xff]
        %v227 = vld [vmem:[%s212 + $0x38] sm:$0xff]
        %v228 = vld [vmem:[%s212 + $0x40] sm:$0xff]
        %v229 = vld [vmem:[%s212 + $0x48] sm:$0xff]
        %v230 = vld [vmem:[%s212 + $0x50] sm:$0xff]
        %v231 = vld [vmem:[%s212 + $0x58] sm:$0xff]
        %v232 = vld [vmem:[%s212 + $0x60] sm:$0xff]
        %v233 = vld [vmem:[%s212 + $0x68] sm:$0xff]
        %v234 = vld [vmem:[%s212 + $0x70] sm:$0xff]
        %v235 = vld [vmem:[%s212 + $0x78] sm:$0xff]
        %v236 = vld [vmem:[%s212 + $0x80] sm:$0xff]
        %v237 = vld [vmem:[%s212 + $0x88] sm:$0xff]
        %v238 = vld [vmem:[%s212 + $0x90] sm:$0xff]
        %v239 = vld [vmem:[%s212 + $0x98] sm:$0xff]
        %v240 = vld [vmem:[%s212 + $0xa0] sm:$0xff]
        %v241 = vld [vmem:[%s212 + $0xa8] sm:$0xff]
        %v242 = vld [vmem:[%s212 + $0xb0] sm:$0xff]
        %v243 = vld [vmem:[%s212 + $0xb8] sm:$0xff]
        %v244 = vld [vmem:[%s212 + $0xc0] sm:$0xff]
        %v245 = vld [vmem:[%s212 + $0xc8] sm:$0xff]
        %v246 = vld [vmem:[%s212 + $0xd0] sm:$0xff]
        %v247 = vld [vmem:[%s212 + $0xd8] sm:$0xff]
        %v248 = vld [vmem:[%s212 + $0xe0] sm:$0xff]
        %v249 = vld [vmem:[%s212 + $0xe8] sm:$0xff]
        %v250 = vld [vmem:[%s212 + $0xf0] sm:$0xff]
        %v251 = vld [vmem:[%s212 + $0xf8] sm:$0xff]
        %v252 = vld [vmem:[%s212 + $0x100] sm:$0xff]
        %v253 = vld [vmem:[%s212 + $0x108] sm:$0xff]
        %v254 = vld [vmem:[%s212 + $0x110] sm:$0xff]
        %v255 = vld [vmem:[%s212 + $0x118] sm:$0xff]
        %v256 = vld [vmem:[%s212 + $0x120] sm:$0xff]
        %v257 = vld [vmem:[%s212 + $0x128] sm:$0xff]
        %v258 = vld [vmem:[%s212 + $0x130] sm:$0xff]
        %v259 = vld [vmem:[%s212 + $0x138] sm:$0xff]
        %v260 = vld [vmem:[%s212 + $0x140] sm:$0xff]
        %v261 = vld [vmem:[%s212 + $0x148] sm:$0xff]
        %v262 = vld [vmem:[%s212 + $0x150] sm:$0xff]
        %v263 = vld [vmem:[%s212 + $0x158] sm:$0xff]
        %v264 = vld [vmem:[%s212 + $0x160] sm:$0xff]
        %v265 = vld [vmem:[%s212 + $0x168] sm:$0xff]
        %v266 = vld [vmem:[%s212 + $0x170] sm:$0xff]
        %v267 = vld [vmem:[%s212 + $0x178] sm:$0xff]
        %v268 = vld [vmem:[%s212 + $0x180] sm:$0xff]
        %v269 = vld [vmem:[%s212 + $0x188] sm:$0xff]
        %v270 = vld [vmem:[%s212 + $0x190] sm:$0xff]
        %v271 = vld [vmem:[%s212 + $0x198] sm:$0xff]
        %v272 = vld [vmem:[%s212 + $0x1a0] sm:$0xff]
        %v273 = vld [vmem:[%s212 + $0x1a8] sm:$0xff]
        %v274 = vld [vmem:[%s212 + $0x1b0] sm:$0xff]
        %v275 = vld [vmem:[%s212 + $0x1b8] sm:$0xff]
        %v276 = vld [vmem:[%s212 + $0x1c0] sm:$0xff]
        %v277 = vld [vmem:[%s212 + $0x1c8] sm:$0xff]
        %v278 = vld [vmem:[%s212 + $0x1d0] sm:$0xff]
        %v279 = vld [vmem:[%s212 + $0x1d8] sm:$0xff]
        %v280 = vld [vmem:[%s212 + $0x1e0] sm:$0xff]
        %v281 = vld [vmem:[%s212 + $0x1e8] sm:$0xff]
        %v282 = vld [vmem:[%s212 + $0x1f0] sm:$0xff]
        %v283 = vld [vmem:[%s212 + $0x1f8] sm:$0xff]
        %v284 = vld [vmem:[%s212 + $0x200] sm:$0xff]
        %v285 = vld [vmem:[%s212 + $0x208] sm:$0xff]
        %v286 = vld [vmem:[%s212 + $0x210] sm:$0xff]
        %v287 = vld [vmem:[%s212 + $0x218] sm:$0xff]
        %v288 = vld [vmem:[%s212 + $0x220] sm:$0xff]
        %v289 = vld [vmem:[%s212 + $0x228] sm:$0xff]
        %v290 = vld [vmem:[%s212 + $0x230] sm:$0xff]
        %v291 = vld [vmem:[%s212 + $0x238] sm:$0xff]
        %v292 = vld [vmem:[%s212 + $0x240] sm:$0xff]
        %v293 = vld [vmem:[%s212 + $0x248] sm:$0xff]
        %v294 = vld [vmem:[%s212 + $0x250] sm:$0xff]
        %v295 = vld [vmem:[%s212 + $0x258] sm:$0xff]
        %v296 = vld [vmem:[%s212 + $0x260] sm:$0xff]
        %v297 = vld [vmem:[%s212 + $0x268] sm:$0xff]
        %v298 = vld [vmem:[%s212 + $0x270] sm:$0xff]
        %v299 = vld [vmem:[%s212 + $0x278] sm:$0xff]
        %v300 = vld [vmem:[%s212 + $0x280] sm:$0xff]
        %v301 = vld [vmem:[%s212 + $0x288] sm:$0xff]
        %v302 = vld [vmem:[%s212 + $0x290] sm:$0xff]
        %v303 = vld [vmem:[%s212 + $0x298] sm:$0xff]
        %v304 = vld [vmem:[%s212 + $0x2a0] sm:$0xff]
        %v305 = vld [vmem:[%s212 + $0x2a8] sm:$0xff]
        %v306 = vld [vmem:[%s212 + $0x2b0] sm:$0xff]
        %v307 = vld [vmem:[%s212 + $0x2b8] sm:$0xff]
        %v308 = vld [vmem:[%s212 + $0x2c0] sm:$0xff]
        %v309 = vld [vmem:[%s212 + $0x2c8] sm:$0xff]
        %v310 = vld [vmem:[%s212 + $0x2d0] sm:$0xff]
        %v311 = vld [vmem:[%s212 + $0x2d8] sm:$0xff]
        %v312 = vld [vmem:[%s212 + $0x2e0] sm:$0xff]
        %v313 = vld [vmem:[%s212 + $0x2e8] sm:$0xff]
        %v314 = vld [vmem:[%s212 + $0x2f0] sm:$0xff]
        %v315 = vld [vmem:[%s212 + $0x2f8] sm:$0xff]
        %v316 = vld [vmem:[%s212 + $0x300] sm:$0xff]
        %v317 = vld [vmem:[%s212 + $0x308] sm:$0xff]
        %v318 = vld [vmem:[%s212 + $0x310] sm:$0xff]
        %v319 = vld [vmem:[%s212 + $0x318] sm:$0xff]
        %v320 = vld [vmem:[%s212 + $0x320] sm:$0xff]
        %v321 = vld [vmem:[%s212 + $0x328] sm:$0xff]
        %v322 = vld [vmem:[%s212 + $0x330] sm:$0xff]
        %v323 = vld [vmem:[%s212 + $0x338] sm:$0xff]
        %v324 = vld [vmem:[%s212 + $0x340] sm:$0xff]
        %v325 = vld [vmem:[%s212 + $0x348] sm:$0xff]
        %v326 = vld [vmem:[%s212 + $0x350] sm:$0xff]
        %v327 = vld [vmem:[%s212 + $0x358] sm:$0xff]
        %v328 = vld [vmem:[%s212 + $0x360] sm:$0xff]
        %v329 = vld [vmem:[%s212 + $0x368] sm:$0xff]
        %v330 = vld [vmem:[%s212 + $0x370] sm:$0xff]
        %v331 = vld [vmem:[%s212 + $0x378] sm:$0xff]
        %v332 = vld [vmem:[%s212 + $0x380] sm:$0xff]
        %v333 = vld [vmem:[%s212 + $0x388] sm:$0xff]
        %v334 = vld [vmem:[%s212 + $0x390] sm:$0xff]
        %v335 = vld [vmem:[%s212 + $0x398] sm:$0xff]
        %v336 = vld [vmem:[%s212 + $0x3a0] sm:$0xff]
        %v337 = vld [vmem:[%s212 + $0x3a8] sm:$0xff]
        %v338 = vld [vmem:[%s212 + $0x3b0] sm:$0xff]
        %v339 = vld [vmem:[%s212 + $0x3b8] sm:$0xff]
        %v340 = vld [vmem:[%s212 + $0x3c0] sm:$0xff]
        %v341 = vld [vmem:[%s212 + $0x3c8] sm:$0xff]
        %v342 = vld [vmem:[%s212 + $0x3d0] sm:$0xff]
        %v343 = vld [vmem:[%s212 + $0x3d8] sm:$0xff]
        %v344 = vld [vmem:[%s212 + $0x3e0] sm:$0xff]
        %v345 = vld [vmem:[%s212 + $0x3e8] sm:$0xff]
        %v346 = vld [vmem:[%s212 + $0x3f0] sm:$0xff]
        %v347 = vld [vmem:[%s212 + $0x3f8] sm:$0xff]
        %v348 = vld [vmem:[%s212 + $0x400] sm:$0xff]
        %v349 = vld [vmem:[%s212 + $0x408] sm:$0xff]
        %v350 = vld [vmem:[%s212 + $0x410] sm:$0xff]
        %v351 = vld [vmem:[%s212 + $0x418] sm:$0xff]
        %v352 = vld [vmem:[%s212 + $0x420] sm:$0xff]
        %v353 = vld [vmem:[%s212 + $0x428] sm:$0xff]
        %v354 = vld [vmem:[%s212 + $0x430] sm:$0xff]
        %v355 = vld [vmem:[%s212 + $0x438] sm:$0xff]
        %v356 = vld [vmem:[%s212 + $0x440] sm:$0xff]
        %v357 = vld [vmem:[%s212 + $0x448] sm:$0xff]
        %v358 = vld [vmem:[%s212 + $0x450] sm:$0xff]
        %v359 = vld [vmem:[%s212 + $0x458] sm:$0xff]
        %v360 = vld [vmem:[%s212 + $0x460] sm:$0xff]
        %v361 = vld [vmem:[%s212 + $0x468] sm:$0xff]
        %v362 = vld [vmem:[%s212 + $0x470] sm:$0xff]
        %v363 = vld [vmem:[%s212 + $0x478] sm:$0xff]
        %v364 = vld [vmem:[%s212 + $0x480] sm:$0xff]
        %v365 = vld [vmem:[%s212 + $0x488] sm:$0xff]
        %v366 = vld [vmem:[%s212 + $0x490] sm:$0xff]
        %v367 = vld [vmem:[%s212 + $0x498] sm:$0xff]
        %v368 = vld [vmem:[%s212 + $0x4a0] sm:$0xff]
        %v369 = vld [vmem:[%s212 + $0x4a8] sm:$0xff]
        %v370 = vld [vmem:[%s212 + $0x4b0] sm:$0xff]
        %v371 = vld [vmem:[%s212 + $0x4b8] sm:$0xff]
        %v372 = vld [vmem:[%s212 + $0x4c0] sm:$0xff]
        %v373 = vld [vmem:[%s212 + $0x4c8] sm:$0xff]
        %v374 = vld [vmem:[%s212 + $0x4d0] sm:$0xff]
        %v375 = vld [vmem:[%s212 + $0x4d8] sm:$0xff]
        %v376 = vld [vmem:[%s212 + $0x4e0] sm:$0xff]
        %v377 = vld [vmem:[%s212 + $0x4e8] sm:$0xff]
        %v378 = vld [vmem:[%s212 + $0x4f0] sm:$0xff]
        %v379 = vld [vmem:[%s212 + $0x4f8] sm:$0xff]
        %v380 = vld [vmem:[%s212 + $0x500] sm:$0xff]
        %v381 = vld [vmem:[%s212 + $0x508] sm:$0xff]
        %v382 = vld [vmem:[%s212 + $0x510] sm:$0xff]
        %v383 = vld [vmem:[%s212 + $0x518] sm:$0xff]
        %v384 = vld [vmem:[%s212 + $0x520] sm:$0xff]
        %v385 = vld [vmem:[%s212 + $0x528] sm:$0xff]
        %v386 = vld [vmem:[%s212 + $0x530] sm:$0xff]
        %v387 = vld [vmem:[%s212 + $0x538] sm:$0xff]
        %v388 = vld [vmem:[%s212 + $0x540] sm:$0xff]
        %v389 = vld [vmem:[%s212 + $0x548] sm:$0xff]
        %v390 = vld [vmem:[%s212 + $0x550] sm:$0xff]
        %v391 = vld [vmem:[%s212 + $0x558] sm:$0xff]
        %v392 = vld [vmem:[%s212 + $0x560] sm:$0xff]
        %v393 = vld [vmem:[%s212 + $0x568] sm:$0xff]
        %v394 = vld [vmem:[%s212 + $0x570] sm:$0xff]
        %v395 = vld [vmem:[%s212 + $0x578] sm:$0xff]
        %v396 = vld [vmem:[%s212 + $0x580] sm:$0xff]
        %v397 = vld [vmem:[%s212 + $0x588] sm:$0xff]
        %v398 = vld [vmem:[%s212 + $0x590] sm:$0xff]
        %v399 = vld [vmem:[%s212 + $0x598] sm:$0xff]
        %v400 = vld [vmem:[%s212 + $0x5a0] sm:$0xff]
        %v401 = vld [vmem:[%s212 + $0x5a8] sm:$0xff]
        %v402 = vld [vmem:[%s212 + $0x5b0] sm:$0xff]
        %v403 = vld [vmem:[%s212 + $0x5b8] sm:$0xff]
        %v404 = vld [vmem:[%s212 + $0x5c0] sm:$0xff]
        %v405 = vld [vmem:[%s212 + $0x5c8] sm:$0xff]
        %v406 = vld [vmem:[%s212 + $0x5d0] sm:$0xff]
        %v407 = vld [vmem:[%s212 + $0x5d8] sm:$0xff]
        %v408 = vld [vmem:[%s212 + $0x5e0] sm:$0xff]
        %v409 = vld [vmem:[%s212 + $0x5e8] sm:$0xff]
        %v410 = vld [vmem:[%s212 + $0x5f0] sm:$0xff]
        %v411 = vld [vmem:[%s212 + $0x5f8] sm:$0xff]
        %v412 = vld [vmem:[%s212 + $0x600] sm:$0xff]
        %v413 = vld [vmem:[%s212 + $0x608] sm:$0xff]
        %v414 = vld [vmem:[%s212 + $0x610] sm:$0xff]
        %v415 = vld [vmem:[%s212 + $0x618] sm:$0xff]
        %v416 = vld [vmem:[%s212 + $0x620] sm:$0xff]
        %v417 = vld [vmem:[%s212 + $0x628] sm:$0xff]
        %v418 = vld [vmem:[%s212 + $0x630] sm:$0xff]
        %v419 = vld [vmem:[%s212 + $0x638] sm:$0xff]
        %v420 = vld [vmem:[%s212 + $0x640] sm:$0xff]
        %v421 = vld [vmem:[%s212 + $0x648] sm:$0xff]
        %v422 = vld [vmem:[%s212 + $0x650] sm:$0xff]
        %v423 = vld [vmem:[%s212 + $0x658] sm:$0xff]
        %v424 = vld [vmem:[%s212 + $0x660] sm:$0xff]
        %v425 = vld [vmem:[%s212 + $0x668] sm:$0xff]
        %v426 = vld [vmem:[%s212 + $0x670] sm:$0xff]
        %v427 = vld [vmem:[%s212 + $0x678] sm:$0xff]
        %v428 = vld [vmem:[%s212 + $0x680] sm:$0xff]
        %v429 = vld [vmem:[%s212 + $0x688] sm:$0xff]
        %v430 = vld [vmem:[%s212 + $0x690] sm:$0xff]
        %v431 = vld [vmem:[%s212 + $0x698] sm:$0xff]
        %v432 = vld [vmem:[%s212 + $0x6a0] sm:$0xff]
        %v433 = vld [vmem:[%s212 + $0x6a8] sm:$0xff]
        %v434 = vld [vmem:[%s212 + $0x6b0] sm:$0xff]
        %v435 = vld [vmem:[%s212 + $0x6b8] sm:$0xff]
        %v436 = vld [vmem:[%s212 + $0x6c0] sm:$0xff]
        %v437 = vld [vmem:[%s212 + $0x6c8] sm:$0xff]
        %v438 = vld [vmem:[%s212 + $0x6d0] sm:$0xff]
        %v439 = vld [vmem:[%s212 + $0x6d8] sm:$0xff]
        %v440 = vld [vmem:[%s212 + $0x6e0] sm:$0xff]
        %v441 = vld [vmem:[%s212 + $0x6e8] sm:$0xff]
        %v442 = vld [vmem:[%s212 + $0x6f0] sm:$0xff]
        %v443 = vld [vmem:[%s212 + $0x6f8] sm:$0xff]
        %v444 = vld [vmem:[%s212 + $0x700] sm:$0xff]
        %v445 = vld [vmem:[%s212 + $0x708] sm:$0xff]
        %v446 = vld [vmem:[%s212 + $0x710] sm:$0xff]
        %v447 = vld [vmem:[%s212 + $0x718] sm:$0xff]
        %v448 = vld [vmem:[%s212 + $0x720] sm:$0xff]
        %v449 = vld [vmem:[%s212 + $0x728] sm:$0xff]
        %v450 = vld [vmem:[%s212 + $0x730] sm:$0xff]
        %v451 = vld [vmem:[%s212 + $0x738] sm:$0xff]
        %v452 = vld [vmem:[%s212 + $0x740] sm:$0xff]
        %v453 = vld [vmem:[%s212 + $0x748] sm:$0xff]
        %v454 = vld [vmem:[%s212 + $0x750] sm:$0xff]
        %v455 = vld [vmem:[%s212 + $0x758] sm:$0xff]
        %v456 = vld [vmem:[%s212 + $0x760] sm:$0xff]
        %v457 = vld [vmem:[%s212 + $0x768] sm:$0xff]
        %v458 = vld [vmem:[%s212 + $0x770] sm:$0xff]
        %v459 = vld [vmem:[%s212 + $0x778] sm:$0xff]
        %v460 = vld [vmem:[%s212 + $0x780] sm:$0xff]
        %v461 = vld [vmem:[%s212 + $0x788] sm:$0xff]
        %v462 = vld [vmem:[%s212 + $0x790] sm:$0xff]
        %v463 = vld [vmem:[%s212 + $0x798] sm:$0xff]
        %v464 = vld [vmem:[%s212 + $0x7a0] sm:$0xff]
        %v465 = vld [vmem:[%s212 + $0x7a8] sm:$0xff]
        %v466 = vld [vmem:[%s212 + $0x7b0] sm:$0xff]
        %v467 = vld [vmem:[%s212 + $0x7b8] sm:$0xff]
        %v468 = vld [vmem:[%s212 + $0x7c0] sm:$0xff]
        %v469 = vld [vmem:[%s212 + $0x7c8] sm:$0xff]
        %v470 = vld [vmem:[%s212 + $0x7d0] sm:$0xff]
        %v471 = vld [vmem:[%s212 + $0x7d8] sm:$0xff]
        %v472 = vld [vmem:[%s212 + $0x7e0] sm:$0xff]
        %v473 = vld [vmem:[%s212 + $0x7e8] sm:$0xff]
        %v474 = vld [vmem:[%s212 + $0x7f0] sm:$0xff]
        %v475 = vld [vmem:[%s212 + $0x7f8] sm:$0xff]
        %v476 = vld [vmem:[%s2] sm:$0xff]
        %vm477 = vcmask 64512
        %v479 = vsel %vm477, %v220, 0
        %v482 = vsel %vm477, %v221, 0
        %v485 = vsel %vm477, %v222, 0
        %v488 = vsel %vm477, %v223, 0
        %v491 = vsel %vm477, %v224, 0
        %v494 = vsel %vm477, %v225, 0
        %v497 = vsel %vm477, %v226, 0
        %v500 = vsel %vm477, %v227, 0
        %v503 = vsel %vm477, %v228, 0
        %v506 = vsel %vm477, %v229, 0
        %v509 = vsel %vm477, %v230, 0
        %v512 = vsel %vm477, %v231, 0
        %v515 = vsel %vm477, %v232, 0
        %v518 = vsel %vm477, %v233, 0
        %v521 = vsel %vm477, %v234, 0
        %v524 = vsel %vm477, %v235, 0
        %v527 = vsel %vm477, %v236, 0
        %v530 = vsel %vm477, %v237, 0
        %v533 = vsel %vm477, %v238, 0
        %v536 = vsel %vm477, %v239, 0
        %v539 = vsel %vm477, %v240, 0
        %v542 = vsel %vm477, %v241, 0
        %v545 = vsel %vm477, %v242, 0
        %v548 = vsel %vm477, %v243, 0
        %v551 = vsel %vm477, %v244, 0
        %v554 = vsel %vm477, %v245, 0
        %v557 = vsel %vm477, %v246, 0
        %v560 = vsel %vm477, %v247, 0
        %v563 = vsel %vm477, %v248, 0
        %v566 = vsel %vm477, %v249, 0
        %v569 = vsel %vm477, %v250, 0
        %v572 = vsel %vm477, %v251, 0
        %v575 = vsel %vm477, %v252, 0
        %v578 = vsel %vm477, %v253, 0
        %v581 = vsel %vm477, %v254, 0
        %v584 = vsel %vm477, %v255, 0
        %v587 = vsel %vm477, %v256, 0
        %v590 = vsel %vm477, %v257, 0
        %v593 = vsel %vm477, %v258, 0
        %v596 = vsel %vm477, %v259, 0
        %v599 = vsel %vm477, %v260, 0
        %v602 = vsel %vm477, %v261, 0
        %v605 = vsel %vm477, %v262, 0
        %v608 = vsel %vm477, %v263, 0
        %v611 = vsel %vm477, %v264, 0
        %v614 = vsel %vm477, %v265, 0
        %v617 = vsel %vm477, %v266, 0
        %v620 = vsel %vm477, %v267, 0
        %v623 = vsel %vm477, %v268, 0
        %v626 = vsel %vm477, %v269, 0
        %v629 = vsel %vm477, %v270, 0
        %v632 = vsel %vm477, %v271, 0
        %v635 = vsel %vm477, %v272, 0
        %v638 = vsel %vm477, %v273, 0
        %v641 = vsel %vm477, %v274, 0
        %v644 = vsel %vm477, %v275, 0
        %v647 = vsel %vm477, %v276, 0
        %v650 = vsel %vm477, %v277, 0
        %v653 = vsel %vm477, %v278, 0
        %v656 = vsel %vm477, %v279, 0
        %v659 = vsel %vm477, %v280, 0
        %v662 = vsel %vm477, %v281, 0
        %v665 = vsel %vm477, %v282, 0
        %v668 = vsel %vm477, %v283, 0
        %v671 = vsel %vm477, %v284, 0
        %v674 = vsel %vm477, %v285, 0
        %v677 = vsel %vm477, %v286, 0
        %v680 = vsel %vm477, %v287, 0
        %v683 = vsel %vm477, %v288, 0
        %v686 = vsel %vm477, %v289, 0
        %v689 = vsel %vm477, %v290, 0
        %v692 = vsel %vm477, %v291, 0
        %v695 = vsel %vm477, %v292, 0
        %v698 = vsel %vm477, %v293, 0
        %v701 = vsel %vm477, %v294, 0
        %v704 = vsel %vm477, %v295, 0
        %v707 = vsel %vm477, %v296, 0
        %v710 = vsel %vm477, %v297, 0
        %v713 = vsel %vm477, %v298, 0
        %v716 = vsel %vm477, %v299, 0
        %v719 = vsel %vm477, %v300, 0
        %v722 = vsel %vm477, %v301, 0
        %v725 = vsel %vm477, %v302, 0
        %v728 = vsel %vm477, %v303, 0
        %v731 = vsel %vm477, %v304, 0
        %v734 = vsel %vm477, %v305, 0
        %v737 = vsel %vm477, %v306, 0
        %v740 = vsel %vm477, %v307, 0
        %v743 = vsel %vm477, %v308, 0
        %v746 = vsel %vm477, %v309, 0
        %v749 = vsel %vm477, %v310, 0
        %v752 = vsel %vm477, %v311, 0
        %v755 = vsel %vm477, %v312, 0
        %v758 = vsel %vm477, %v313, 0
        %v761 = vsel %vm477, %v314, 0
        %v764 = vsel %vm477, %v315, 0
        %v767 = vsel %vm477, %v316, 0
        %v770 = vsel %vm477, %v317, 0
        %v773 = vsel %vm477, %v318, 0
        %v776 = vsel %vm477, %v319, 0
        %v779 = vsel %vm477, %v320, 0
        %v782 = vsel %vm477, %v321, 0
        %v785 = vsel %vm477, %v322, 0
        %v788 = vsel %vm477, %v323, 0
        %v791 = vsel %vm477, %v324, 0
        %v794 = vsel %vm477, %v325, 0
        %v797 = vsel %vm477, %v326, 0
        %v800 = vsel %vm477, %v327, 0
        %v803 = vsel %vm477, %v328, 0
        %v806 = vsel %vm477, %v329, 0
        %v809 = vsel %vm477, %v330, 0
        %v812 = vsel %vm477, %v331, 0
        %v815 = vsel %vm477, %v332, 0
        %v818 = vsel %vm477, %v333, 0
        %v821 = vsel %vm477, %v334, 0
        %v824 = vsel %vm477, %v335, 0
        %v827 = vsel %vm477, %v336, 0
        %v830 = vsel %vm477, %v337, 0
        %v833 = vsel %vm477, %v338, 0
        %v836 = vsel %vm477, %v339, 0
        %v839 = vsel %vm477, %v340, 0
        %v842 = vsel %vm477, %v341, 0
        %v845 = vsel %vm477, %v342, 0
        %v848 = vsel %vm477, %v343, 0
        %v851 = vsel %vm477, %v344, 0
        %v854 = vsel %vm477, %v345, 0
        %v857 = vsel %vm477, %v346, 0
        %v860 = vsel %vm477, %v347, 0
        %v863 = vsel %vm477, %v348, 0
        %v866 = vsel %vm477, %v349, 0
        %v869 = vsel %vm477, %v350, 0
        %v872 = vsel %vm477, %v351, 0
        %v875 = vsel %vm477, %v352, 0
        %v878 = vsel %vm477, %v353, 0
        %v881 = vsel %vm477, %v354, 0
        %v884 = vsel %vm477, %v355, 0
        %v887 = vsel %vm477, %v356, 0
        %v890 = vsel %vm477, %v357, 0
        %v893 = vsel %vm477, %v358, 0
        %v896 = vsel %vm477, %v359, 0
        %v899 = vsel %vm477, %v360, 0
        %v902 = vsel %vm477, %v361, 0
        %v905 = vsel %vm477, %v362, 0
        %v908 = vsel %vm477, %v363, 0
        %v911 = vsel %vm477, %v364, 0
        %v914 = vsel %vm477, %v365, 0
        %v917 = vsel %vm477, %v366, 0
        %v920 = vsel %vm477, %v367, 0
        %v923 = vsel %vm477, %v368, 0
        %v926 = vsel %vm477, %v369, 0
        %v929 = vsel %vm477, %v370, 0
        %v932 = vsel %vm477, %v371, 0
        %v935 = vsel %vm477, %v372, 0
        %v938 = vsel %vm477, %v373, 0
        %v941 = vsel %vm477, %v374, 0
        %v944 = vsel %vm477, %v375, 0
        %v947 = vsel %vm477, %v376, 0
        %v950 = vsel %vm477, %v377, 0
        %v953 = vsel %vm477, %v378, 0
        %v956 = vsel %vm477, %v379, 0
        %v959 = vsel %vm477, %v380, 0
        %v962 = vsel %vm477, %v381, 0
        %v965 = vsel %vm477, %v382, 0
        %v968 = vsel %vm477, %v383, 0
        %v971 = vsel %vm477, %v384, 0
        %v974 = vsel %vm477, %v385, 0
        %v977 = vsel %vm477, %v386, 0
        %v980 = vsel %vm477, %v387, 0
        %v983 = vsel %vm477, %v388, 0
        %v986 = vsel %vm477, %v389, 0
        %v989 = vsel %vm477, %v390, 0
        %v992 = vsel %vm477, %v391, 0
        %v995 = vsel %vm477, %v392, 0
        %v998 = vsel %vm477, %v393, 0
        %v1001 = vsel %vm477, %v394, 0
        %v1004 = vsel %vm477, %v395, 0
        %v1007 = vsel %vm477, %v396, 0
        %v1010 = vsel %vm477, %v397, 0
        %v1013 = vsel %vm477, %v398, 0
        %v1016 = vsel %vm477, %v399, 0
        %v1019 = vsel %vm477, %v400, 0
        %v1022 = vsel %vm477, %v401, 0
        %v1025 = vsel %vm477, %v402, 0
        %v1028 = vsel %vm477, %v403, 0
        %v1031 = vsel %vm477, %v404, 0
        %v1034 = vsel %vm477, %v405, 0
        %v1037 = vsel %vm477, %v406, 0
        %v1040 = vsel %vm477, %v407, 0
        %v1043 = vsel %vm477, %v408, 0
        %v1046 = vsel %vm477, %v409, 0
        %v1049 = vsel %vm477, %v410, 0
        %v1052 = vsel %vm477, %v411, 0
        %v1055 = vsel %vm477, %v412, 0
        %v1058 = vsel %vm477, %v413, 0
        %v1061 = vsel %vm477, %v414, 0
        %v1064 = vsel %vm477, %v415, 0
        %v1067 = vsel %vm477, %v416, 0
        %v1070 = vsel %vm477, %v417, 0
        %v1073 = vsel %vm477, %v418, 0
        %v1076 = vsel %vm477, %v419, 0
        %v1079 = vsel %vm477, %v420, 0
        %v1082 = vsel %vm477, %v421, 0
        %v1085 = vsel %vm477, %v422, 0
        %v1088 = vsel %vm477, %v423, 0
        %v1091 = vsel %vm477, %v424, 0
        %v1094 = vsel %vm477, %v425, 0
        %v1097 = vsel %vm477, %v426, 0
        %v1100 = vsel %vm477, %v427, 0
        %v1103 = vsel %vm477, %v428, 0
        %v1106 = vsel %vm477, %v429, 0
        %v1109 = vsel %vm477, %v430, 0
        %v1112 = vsel %vm477, %v431, 0
        %v1115 = vsel %vm477, %v432, 0
        %v1118 = vsel %vm477, %v433, 0
        %v1121 = vsel %vm477, %v434, 0
        %v1124 = vsel %vm477, %v435, 0
        %v1127 = vsel %vm477, %v436, 0
        %v1130 = vsel %vm477, %v437, 0
        %v1133 = vsel %vm477, %v438, 0
        %v1136 = vsel %vm477, %v439, 0
        %v1139 = vsel %vm477, %v440, 0
        %v1142 = vsel %vm477, %v441, 0
        %v1145 = vsel %vm477, %v442, 0
        %v1148 = vsel %vm477, %v443, 0
        %v1151 = vsel %vm477, %v444, 0
        %v1154 = vsel %vm477, %v445, 0
        %v1157 = vsel %vm477, %v446, 0
        %v1160 = vsel %vm477, %v447, 0
        %v1163 = vsel %vm477, %v448, 0
        %v1166 = vsel %vm477, %v449, 0
        %v1169 = vsel %vm477, %v450, 0
        %v1172 = vsel %vm477, %v451, 0
        %v1175 = vsel %vm477, %v452, 0
        %v1178 = vsel %vm477, %v453, 0
        %v1181 = vsel %vm477, %v454, 0
        %v1184 = vsel %vm477, %v455, 0
        %v1187 = vsel %vm477, %v456, 0
        %v1190 = vsel %vm477, %v457, 0
        %v1193 = vsel %vm477, %v458, 0
        %v1196 = vsel %vm477, %v459, 0
        %v1199 = vsel %vm477, %v460, 0
        %v1202 = vsel %vm477, %v461, 0
        %v1205 = vsel %vm477, %v462, 0
        %v1208 = vsel %vm477, %v463, 0
        %v1211 = vsel %vm477, %v464, 0
        %v1214 = vsel %vm477, %v465, 0
        %v1217 = vsel %vm477, %v466, 0
        %v1220 = vsel %vm477, %v467, 0
        %v1223 = vsel %vm477, %v468, 0
        %v1226 = vsel %vm477, %v469, 0
        %v1229 = vsel %vm477, %v470, 0
        %v1232 = vsel %vm477, %v471, 0
        %v1235 = vsel %vm477, %v472, 0
        %v1238 = vsel %vm477, %v473, 0
        %v1241 = vsel %vm477, %v474, 0
        %v1244 = vsel %vm477, %v475, 0
        %1246 = vmatprep.subr.mxu0 0.0
        %1247 = vmatpush1.msra.mxu0 %v476
        %1248 = vmatprep.subr.mxu0 0.0
        %1249 = vmatpush1.msra.mxu0 0.0
        %1250 = vmatprep.subr.mxu0 0.0
        %1251 = vmatpush1.msra.mxu0 0.0
        %1252 = vmatprep.subr.mxu0 0.0
        %1253 = vmatpush1.msra.mxu0 0.0
        %1254 = vmatprep.subr.mxu0 0.0
        %1255 = vmatpush1.msra.mxu0 0.0
        %1256 = vmatprep.subr.mxu0 0.0
        %1257 = vmatpush1.msra.mxu0 0.0
        %1258 = vmatprep.subr.mxu0 0.0
        %1259 = vmatpush1.msra.mxu0 0.0
        %1260 = vmatprep.subr.mxu0 0.0
        %1261 = vmatpush1.msra.mxu0 0.0
        %1262 = vmatprep.subr.mxu0 0.0
        %1263 = vmatpush1.msra.mxu0 0.0
        %1264 = vmatprep.subr.mxu0 0.0
        %1265 = vmatpush1.msra.mxu0 0.0
        %1266 = vmatprep.subr.mxu0 0.0
        %1267 = vmatpush1.msra.mxu0 0.0
        %1268 = vmatprep.subr.mxu0 0.0
        %1269 = vmatpush1.msra.mxu0 0.0
        %1270 = vmatprep.subr.mxu0 0.0
        %1271 = vmatpush1.msra.mxu0 0.0
        %1272 = vmatprep.subr.mxu0 0.0
        %1273 = vmatpush1.msra.mxu0 0.0
        %1274 = vmatprep.subr.mxu0 0.0
        %1275 = vmatpush1.msra.mxu0 0.0
        %1276 = vmatprep.subr.mxu0 0.0
        %1277 = vmatpush1.msra.mxu0 0.0
        %1278 = vmatprep.subr.mxu0 0.0
        %1279 = vmatpush1.msra.mxu0 0.0
        %1280 = vmatprep.subr.mxu0 0.0
        %1281 = vmatpush1.msra.mxu0 0.0
        %1282 = vmatprep.subr.mxu0 0.0
        %1283 = vmatpush1.msra.mxu0 0.0
        %1284 = vmatprep.subr.mxu0 0.0
        %1285 = vmatpush1.msra.mxu0 0.0
        %1286 = vmatprep.subr.mxu0 0.0
        %1287 = vmatpush1.msra.mxu0 0.0
        %1288 = vmatprep.subr.mxu0 0.0
        %1289 = vmatpush1.msra.mxu0 0.0
        %1290 = vmatprep.subr.mxu0 0.0
        %1291 = vmatpush1.msra.mxu0 0.0
        %1292 = vmatprep.subr.mxu0 0.0
        %1293 = vmatpush1.msra.mxu0 0.0
        %1294 = vmatprep.subr.mxu0 0.0
        %1295 = vmatpush1.msra.mxu0 0.0
        %1296 = vmatprep.subr.mxu0 0.0
        %1297 = vmatpush1.msra.mxu0 0.0
        %1298 = vmatprep.subr.mxu0 0.0
        %1299 = vmatpush1.msra.mxu0 0.0
        %1300 = vmatprep.subr.mxu0 0.0
        %1301 = vmatpush1.msra.mxu0 0.0
        %1302 = vmatprep.subr.mxu0 0.0
        %1303 = vmatpush1.msra.mxu0 0.0
        %1304 = vmatprep.subr.mxu0 0.0
        %1305 = vmatpush1.msra.mxu0 0.0
        %1306 = vmatprep.subr.mxu0 0.0
        %1307 = vmatpush1.msra.mxu0 0.0
        %1308 = vmatprep.subr.mxu0 0.0
        %1309 = vmatpush1.msra.mxu0 0.0
        %1310 = vmatprep.mubr.f32.mxu0 0.0
        %1311 = vmatmul.mubr.f32.gmra.mrb[0].mxu0 %v479
        %v1312 = vpop.f32.mrb[0].mxu0
        %v1313 = vadd.f32 0.0, %v1312
        %v1314 = vpop.f32.mrb[0].mxu0
        %1315 = vmatprep.mubr.f32.mxu0 0.0
        %1316 = vmatmul.mubr.f32.gmra.mrb[0].mxu0 %v482
        %v1317 = vpop.f32.mrb[0].mxu0
        %v1318 = vadd.f32 0.0, %v1317
        %v1319 = vpop.f32.mrb[0].mxu0
        %1320 = vmatprep.mubr.f32.mxu0 0.0
        %1321 = vmatmul.mubr.f32.gmra.mrb[0].mxu0 %v485
        %v1322 = vpop.f32.mrb[0].mxu0
        %v1323 = vadd.f32 0.0, %v1322
        %v1324 = vpop.f32.mrb[0].mxu0
        %1325 = vmatprep.mubr.f32.mxu0 0.0
        %1326 = vmatmul.mubr.f32.gmra.mrb[0].mxu0 %v488
        %v1327 = vpop.f32.mrb[0].mxu0
        %v1328 = vadd.f32 0.0, %v1327
        %v1329 = vpop.f32.mrb[0].mxu0
        %1330 = vmatprep.mubr.f32.mxu0 0.0
        %1331 = vmatmul.mubr.f32.gmra.mrb[0].mxu0 %v491
        %v1332 = vpop.f32.mrb[0].mxu0
        %v1333 = vadd.f32 0.0, %v1332
        %v1334 = vpop.f32.mrb[0].mxu0
        %1335 = vmatprep.mubr.f32.mxu0 0.0
        %1336 = vmatmul.mubr.f32.gmra.mrb[0].mxu0 %v494
        %v1337 = vpop.f32.mrb[0].mxu0
        %v1338 = vadd.f32 0.0, %v1337
        %v1339 = vpop.f32.mrb[0].mxu0
        %1340 = vmatprep.mubr.f32.mxu0 0.0
        %1341 = vmatmul.mubr.f32.gmra.mrb[0].mxu0 %v497
        %v1342 = vpop.f32.mrb[0].mxu0
        %v1343 = vadd.f32 0.0, %v1342
        %v1344 = vpop.f32.mrb[0].mxu0
        %1345 = vmatprep.mubr.f32.mxu0 0.0
        %1346 = vmatmul.mubr.f32.gmra.mrb[0].mxu0 %v500
        %v1347 = vpop.f32.mrb[0].mxu0
        %v1348 = vadd.f32 0.0, %v1347
        %v1349 = vpop.f32.mrb[0].mxu0
        %1350 = vmatprep.mubr.f32.mxu0 0.0
        %1351 = vmatmul.mubr.f32.gmra.mrb[0].mxu0 %v503
        %v1352 = vpop.f32.mrb[0].mxu0
        %v1353 = vadd.f32 0.0, %v1352
        %v1354 = vpop.f32.mrb[0].mxu0
        %1355 = vmatprep.mubr.f32.mxu0 0.0
        %1356 = vmatmul.mubr.f32.gmra.mrb[0].mxu0 %v506
        %v1357 = vpop.f32.mrb[0].mxu0
        %v1358 = vadd.f32 0.0, %v1357
        %v1359 = vpop.f32.mrb[0].mxu0
        %1360 = vmatprep.mubr.f32.mxu0 0.0
        %1361 = vmatmul.mubr.f32.gmra.mrb[0].mxu0 %v509
        %v1362 = vpop.f32.mrb[0].mxu0
        %v1363 = vadd.f32 0.0, %v1362
        %v1364 = vpop.f32.mrb[0].mxu0
        %1365 = vmatprep.mubr.f32.mxu0 0.0
        %1366 = vmatmul.mubr.f32.gmra.mrb[0].mxu0 %v512
        %v1367 = vpop.f32.mrb[0].mxu0
        %v1368 = vadd.f32 0.0, %v1367
        %v1369 = vpop.f32.mrb[0].mxu0
        %1370 = vmatprep.mubr.f32.mxu0 0.0
        %1371 = vmatmul.mubr.f32.gmra.mrb[0].mxu0 %v515
        %v1372 = vpop.f32.mrb[0].mxu0
        %v1373 = vadd.f32 0.0, %v1372
        %v1374 = vpop.f32.mrb[0].mxu0
        %1375 = vmatprep.mubr.f32.mxu0 0.0
        %1376 = vmatmul.mubr.f32.gmra.mrb[0].mxu0 %v518
        %v1377 = vpop.f32.mrb[0].mxu0
        %v1378 = vadd.f32 0.0, %v1377
        %v1379 = vpop.f32.mrb[0].mxu0
        %1380 = vmatprep.mubr.f32.mxu0 0.0
        %1381 = vmatmul.mubr.f32.gmra.mrb[0].mxu0 %v521
        %v1382 = vpop.f32.mrb[0].mxu0
        %v1383 = vadd.f32 0.0, %v1382
        %v1384 = vpop.f32.mrb[0].mxu0
        %1385 = vmatprep.mubr.f32.mxu0 0.0
        %1386 = vmatmul.mubr.f32.gmra.mrb[0].mxu0 %v524
        %v1387 = vpop.f32.mrb[0].mxu0
        %v1388 = vadd.f32 0.0, %v1387
        %v1389 = vpop.f32.mrb[0].mxu0
        %1390 = vmatprep.mubr.f32.mxu0 0.0
        %1391 = vmatmul.mubr.f32.gmra.mrb[0].mxu0 %v527
        %v1392 = vpop.f32.mrb[0].mxu0
        %v1393 = vadd.f32 0.0, %v1392
        %v1394 = vpop.f32.mrb[0].mxu0
        %1395 = vmatprep.mubr.f32.mxu0 0.0
        %1396 = vmatmul.mubr.f32.gmra.mrb[0].mxu0 %v530
        %v1397 = vpop.f32.mrb[0].mxu0
        %v1398 = vadd.f32 0.0, %v1397
        %v1399 = vpop.f32.mrb[0].mxu0
        %1400 = vmatprep.mubr.f32.mxu0 0.0
        %1401 = vmatmul.mubr.f32.gmra.mrb[0].mxu0 %v533
        %v1402 = vpop.f32.mrb[0].mxu0
        %v1403 = vadd.f32 0.0, %v1402
        %v1404 = vpop.f32.mrb[0].mxu0
        %1405 = vmatprep.mubr.f32.mxu0 0.0
        %1406 = vmatmul.mubr.f32.gmra.mrb[0].mxu0 %v536
        %v1407 = vpop.f32.mrb[0].mxu0
        %v1408 = vadd.f32 0.0, %v1407
        %v1409 = vpop.f32.mrb[0].mxu0
        %1410 = vmatprep.mubr.f32.mxu0 0.0
        %1411 = vmatmul.mubr.f32.gmra.mrb[0].mxu0 %v539
        %v1412 = vpop.f32.mrb[0].mxu0
        %v1413 = vadd.f32 0.0, %v1412
        %v1414 = vpop.f32.mrb[0].mxu0
        %1415 = vmatprep.mubr.f32.mxu0 0.0
        %1416 = vmatmul.mubr.f32.gmra.mrb[0].mxu0 %v542
        %v1417 = vpop.f32.mrb[0].mxu0
        %v1418 = vadd.f32 0.0, %v1417
        %v1419 = vpop.f32.mrb[0].mxu0
        %1420 = vmatprep.mubr.f32.mxu0 0.0
        %1421 = vmatmul.mubr.f32.gmra.mrb[0].mxu0 %v545
        %v1422 = vpop.f32.mrb[0].mxu0
        %v1423 = vadd.f32 0.0, %v1422
        %v1424 = vpop.f32.mrb[0].mxu0
        %1425 = vmatprep.mubr.f32.mxu0 0.0
        %1426 = vmatmul.mubr.f32.gmra.mrb[0].mxu0 %v548
        %v1427 = vpop.f32.mrb[0].mxu0
        %v1428 = vadd.f32 0.0, %v1427
        %v1429 = vpop.f32.mrb[0].mxu0
        %1430 = vmatprep.mubr.f32.mxu0 0.0
        %1431 = vmatmul.mubr.f32.gmra.mrb[0].mxu0 %v551
        %v1432 = vpop.f32.mrb[0].mxu0
        %v1433 = vadd.f32 0.0, %v1432
        %v1434 = vpop.f32.mrb[0].mxu0
        %1435 = vmatprep.mubr.f32.mxu0 0.0
        %1436 = vmatmul.mubr.f32.gmra.mrb[0].mxu0 %v554
        %v1437 = vpop.f32.mrb[0].mxu0
        %v1438 = vadd.f32 0.0, %v1437
        %v1439 = vpop.f32.mrb[0].mxu0
        %1440 = vmatprep.mubr.f32.mxu0 0.0
        %1441 = vmatmul.mubr.f32.gmra.mrb[0].mxu0 %v557
        %v1442 = vpop.f32.mrb[0].mxu0
        %v1443 = vadd.f32 0.0, %v1442
        %v1444 = vpop.f32.mrb[0].mxu0
        %1445 = vmatprep.mubr.f32.mxu0 0.0
        %1446 = vmatmul.mubr.f32.gmra.mrb[0].mxu0 %v560
        %v1447 = vpop.f32.mrb[0].mxu0
        %v1448 = vadd.f32 0.0, %v1447
        %v1449 = vpop.f32.mrb[0].mxu0
        %1450 = vmatprep.mubr.f32.mxu0 0.0
        %1451 = vmatmul.mubr.f32.gmra.mrb[0].mxu0 %v563
        %v1452 = vpop.f32.mrb[0].mxu0
        %v1453 = vadd.f32 0.0, %v1452
        %v1454 = vpop.f32.mrb[0].mxu0
        %1455 = vmatprep.mubr.f32.mxu0 0.0
        %1456 = vmatmul.mubr.f32.gmra.mrb[0].mxu0 %v566
        %v1457 = vpop.f32.mrb[0].mxu0
        %v1458 = vadd.f32 0.0, %v1457
        %v1459 = vpop.f32.mrb[0].mxu0
        %1460 = vmatprep.mubr.f32.mxu0 0.0
        %1461 = vmatmul.mubr.f32.gmra.mrb[0].mxu0 %v569
        %v1462 = vpop.f32.mrb[0].mxu0
        %v1463 = vadd.f32 0.0, %v1462
        %v1464 = vpop.f32.mrb[0].mxu0
        %1465 = vmatprep.mubr.f32.mxu0 0.0
        %1466 = vmatmul.mubr.f32.gmra.mrb[0].mxu0 %v572
        %v1467 = vpop.f32.mrb[0].mxu0
        %v1468 = vadd.f32 0.0, %v1467
        %v1469 = vpop.f32.mrb[0].mxu0
        %1470 = vmatprep.mubr.f32.mxu0 0.0
        %1471 = vmatmul.mubr.f32.gmra.mrb[0].mxu0 %v575
        %v1472 = vpop.f32.mrb[0].mxu0
        %v1473 = vadd.f32 0.0, %v1472
        %v1474 = vpop.f32.mrb[0].mxu0
        %1475 = vmatprep.mubr.f32.mxu0 0.0
        %1476 = vmatmul.mubr.f32.gmra.mrb[0].mxu0 %v578
        %v1477 = vpop.f32.mrb[0].mxu0
        %v1478 = vadd.f32 0.0, %v1477
        %v1479 = vpop.f32.mrb[0].mxu0
        %1480 = vmatprep.mubr.f32.mxu0 0.0
        %1481 = vmatmul.mubr.f32.gmra.mrb[0].mxu0 %v581
        %v1482 = vpop.f32.mrb[0].mxu0
        %v1483 = vadd.f32 0.0, %v1482
        %v1484 = vpop.f32.mrb[0].mxu0
        %1485 = vmatprep.mubr.f32.mxu0 0.0
        %1486 = vmatmul.mubr.f32.gmra.mrb[0].mxu0 %v584
        %v1487 = vpop.f32.mrb[0].mxu0
        %v1488 = vadd.f32 0.0, %v1487
        %v1489 = vpop.f32.mrb[0].mxu0
        %1490 = vmatprep.mubr.f32.mxu0 0.0
        %1491 = vmatmul.mubr.f32.gmra.mrb[0].mxu0 %v587
        %v1492 = vpop.f32.mrb[0].mxu0
        %v1493 = vadd.f32 0.0, %v1492
        %v1494 = vpop.f32.mrb[0].mxu0
        %1495 = vmatprep.mubr.f32.mxu0 0.0
        %1496 = vmatmul.mubr.f32.gmra.mrb[0].mxu0 %v590
        %v1497 = vpop.f32.mrb[0].mxu0
        %v1498 = vadd.f32 0.0, %v1497
        %v1499 = vpop.f32.mrb[0].mxu0
        %1500 = vmatprep.mubr.f32.mxu0 0.0
        %1501 = vmatmul.mubr.f32.gmra.mrb[0].mxu0 %v593
        %v1502 = vpop.f32.mrb[0].mxu0
        %v1503 = vadd.f32 0.0, %v1502
        %v1504 = vpop.f32.mrb[0].mxu0
        %1505 = vmatprep.mubr.f32.mxu0 0.0
        %1506 = vmatmul.mubr.f32.gmra.mrb[0].mxu0 %v596
        %v1507 = vpop.f32.mrb[0].mxu0
        %v1508 = vadd.f32 0.0, %v1507
        %v1509 = vpop.f32.mrb[0].mxu0
        %1510 = vmatprep.mubr.f32.mxu0 0.0
        %1511 = vmatmul.mubr.f32.gmra.mrb[0].mxu0 %v599
        %v1512 = vpop.f32.mrb[0].mxu0
        %v1513 = vadd.f32 0.0, %v1512
        %v1514 = vpop.f32.mrb[0].mxu0
        %1515 = vmatprep.mubr.f32.mxu0 0.0
        %1516 = vmatmul.mubr.f32.gmra.mrb[0].mxu0 %v602
        %v1517 = vpop.f32.mrb[0].mxu0
        %v1518 = vadd.f32 0.0, %v1517
        %v1519 = vpop.f32.mrb[0].mxu0
        %1520 = vmatprep.mubr.f32.mxu0 0.0
        %1521 = vmatmul.mubr.f32.gmra.mrb[0].mxu0 %v605
        %v1522 = vpop.f32.mrb[0].mxu0
        %v1523 = vadd.f32 0.0, %v1522
        %v1524 = vpop.f32.mrb[0].mxu0
        %1525 = vmatprep.mubr.f32.mxu0 0.0
        %1526 = vmatmul.mubr.f32.gmra.mrb[0].mxu0 %v608
        %v1527 = vpop.f32.mrb[0].mxu0
        %v1528 = vadd.f32 0.0, %v1527
        %v1529 = vpop.f32.mrb[0].mxu0
        %1530 = vmatprep.mubr.f32.mxu0 0.0
        %1531 = vmatmul.mubr.f32.gmra.mrb[0].mxu0 %v611
        %v1532 = vpop.f32.mrb[0].mxu0
        %v1533 = vadd.f32 0.0, %v1532
        %v1534 = vpop.f32.mrb[0].mxu0
        %1535 = vmatprep.mubr.f32.mxu0 0.0
        %1536 = vmatmul.mubr.f32.gmra.mrb[0].mxu0 %v614
        %v1537 = vpop.f32.mrb[0].mxu0
        %v1538 = vadd.f32 0.0, %v1537
        %v1539 = vpop.f32.mrb[0].mxu0
        %1540 = vmatprep.mubr.f32.mxu0 0.0
        %1541 = vmatmul.mubr.f32.gmra.mrb[0].mxu0 %v617
        %v1542 = vpop.f32.mrb[0].mxu0
        %v1543 = vadd.f32 0.0, %v1542
        %v1544 = vpop.f32.mrb[0].mxu0
        %1545 = vmatprep.mubr.f32.mxu0 0.0
        %1546 = vmatmul.mubr.f32.gmra.mrb[0].mxu0 %v620
        %v1547 = vpop.f32.mrb[0].mxu0
        %v1548 = vadd.f32 0.0, %v1547
        %v1549 = vpop.f32.mrb[0].mxu0
        %1550 = vmatprep.mubr.f32.mxu0 0.0
        %1551 = vmatmul.mubr.f32.gmra.mrb[0].mxu0 %v623
        %v1552 = vpop.f32.mrb[0].mxu0
        %v1553 = vadd.f32 0.0, %v1552
        %v1554 = vpop.f32.mrb[0].mxu0
        %1555 = vmatprep.mubr.f32.mxu0 0.0
        %1556 = vmatmul.mubr.f32.gmra.mrb[0].mxu0 %v626
        %v1557 = vpop.f32.mrb[0].mxu0
        %v1558 = vadd.f32 0.0, %v1557
        %v1559 = vpop.f32.mrb[0].mxu0
        %1560 = vmatprep.mubr.f32.mxu0 0.0
        %1561 = vmatmul.mubr.f32.gmra.mrb[0].mxu0 %v629
        %v1562 = vpop.f32.mrb[0].mxu0
        %v1563 = vadd.f32 0.0, %v1562
        %v1564 = vpop.f32.mrb[0].mxu0
        %1565 = vmatprep.mubr.f32.mxu0 0.0
        %1566 = vmatmul.mubr.f32.gmra.mrb[0].mxu0 %v632
        %v1567 = vpop.f32.mrb[0].mxu0
        %v1568 = vadd.f32 0.0, %v1567
        %v1569 = vpop.f32.mrb[0].mxu0
        %1570 = vmatprep.mubr.f32.mxu0 0.0
        %1571 = vmatmul.mubr.f32.gmra.mrb[0].mxu0 %v635
        %v1572 = vpop.f32.mrb[0].mxu0
        %v1573 = vadd.f32 0.0, %v1572
        %v1574 = vpop.f32.mrb[0].mxu0
        %1575 = vmatprep.mubr.f32.mxu0 0.0
        %1576 = vmatmul.mubr.f32.gmra.mrb[0].mxu0 %v638
        %v1577 = vpop.f32.mrb[0].mxu0
        %v1578 = vadd.f32 0.0, %v1577
        %v1579 = vpop.f32.mrb[0].mxu0
        %1580 = vmatprep.mubr.f32.mxu0 0.0
        %1581 = vmatmul.mubr.f32.gmra.mrb[0].mxu0 %v641
        %v1582 = vpop.f32.mrb[0].mxu0
        %v1583 = vadd.f32 0.0, %v1582
        %v1584 = vpop.f32.mrb[0].mxu0
        %1585 = vmatprep.mubr.f32.mxu0 0.0
        %1586 = vmatmul.mubr.f32.gmra.mrb[0].mxu0 %v644
        %v1587 = vpop.f32.mrb[0].mxu0
        %v1588 = vadd.f32 0.0, %v1587
        %v1589 = vpop.f32.mrb[0].mxu0
        %1590 = vmatprep.mubr.f32.mxu0 0.0
        %1591 = vmatmul.mubr.f32.gmra.mrb[0].mxu0 %v647
        %v1592 = vpop.f32.mrb[0].mxu0
        %v1593 = vadd.f32 0.0, %v1592
        %v1594 = vpop.f32.mrb[0].mxu0
        %1595 = vmatprep.mubr.f32.mxu0 0.0
        %1596 = vmatmul.mubr.f32.gmra.mrb[0].mxu0 %v650
        %v1597 = vpop.f32.mrb[0].mxu0
        %v1598 = vadd.f32 0.0, %v1597
        %v1599 = vpop.f32.mrb[0].mxu0
        %1600 = vmatprep.mubr.f32.mxu0 0.0
        %1601 = vmatmul.mubr.f32.gmra.mrb[0].mxu0 %v653
        %v1602 = vpop.f32.mrb[0].mxu0
        %v1603 = vadd.f32 0.0, %v1602
        %v1604 = vpop.f32.mrb[0].mxu0
        %1605 = vmatprep.mubr.f32.mxu0 0.0
        %1606 = vmatmul.mubr.f32.gmra.mrb[0].mxu0 %v656
        %v1607 = vpop.f32.mrb[0].mxu0
        %v1608 = vadd.f32 0.0, %v1607
        %v1609 = vpop.f32.mrb[0].mxu0
        %1610 = vmatprep.mubr.f32.mxu0 0.0
        %1611 = vmatmul.mubr.f32.gmra.mrb[0].mxu0 %v659
        %v1612 = vpop.f32.mrb[0].mxu0
        %v1613 = vadd.f32 0.0, %v1612
        %v1614 = vpop.f32.mrb[0].mxu0
        %1615 = vmatprep.mubr.f32.mxu0 0.0
        %1616 = vmatmul.mubr.f32.gmra.mrb[0].mxu0 %v662
        %v1617 = vpop.f32.mrb[0].mxu0
        %v1618 = vadd.f32 0.0, %v1617
        %v1619 = vpop.f32.mrb[0].mxu0
        %1620 = vmatprep.mubr.f32.mxu0 0.0
        %1621 = vmatmul.mubr.f32.gmra.mrb[0].mxu0 %v665
        %v1622 = vpop.f32.mrb[0].mxu0
        %v1623 = vadd.f32 0.0, %v1622
        %v1624 = vpop.f32.mrb[0].mxu0
        %1625 = vmatprep.mubr.f32.mxu0 0.0
        %1626 = vmatmul.mubr.f32.gmra.mrb[0].mxu0 %v668
        %v1627 = vpop.f32.mrb[0].mxu0
        %v1628 = vadd.f32 0.0, %v1627
        %v1629 = vpop.f32.mrb[0].mxu0
        %1630 = vmatprep.mubr.f32.mxu0 0.0
        %1631 = vmatmul.mubr.f32.gmra.mrb[0].mxu0 %v671
        %v1632 = vpop.f32.mrb[0].mxu0
        %v1633 = vadd.f32 0.0, %v1632
        %v1634 = vpop.f32.mrb[0].mxu0
        %1635 = vmatprep.mubr.f32.mxu0 0.0
        %1636 = vmatmul.mubr.f32.gmra.mrb[0].mxu0 %v674
        %v1637 = vpop.f32.mrb[0].mxu0
        %v1638 = vadd.f32 0.0, %v1637
        %v1639 = vpop.f32.mrb[0].mxu0
        %1640 = vmatprep.mubr.f32.mxu0 0.0
        %1641 = vmatmul.mubr.f32.gmra.mrb[0].mxu0 %v677
        %v1642 = vpop.f32.mrb[0].mxu0
        %v1643 = vadd.f32 0.0, %v1642
        %v1644 = vpop.f32.mrb[0].mxu0
        %1645 = vmatprep.mubr.f32.mxu0 0.0
        %1646 = vmatmul.mubr.f32.gmra.mrb[0].mxu0 %v680
        %v1647 = vpop.f32.mrb[0].mxu0
        %v1648 = vadd.f32 0.0, %v1647
        %v1649 = vpop.f32.mrb[0].mxu0
        %1650 = vmatprep.mubr.f32.mxu0 0.0
        %1651 = vmatmul.mubr.f32.gmra.mrb[0].mxu0 %v683
        %v1652 = vpop.f32.mrb[0].mxu0
        %v1653 = vadd.f32 0.0, %v1652
        %v1654 = vpop.f32.mrb[0].mxu0
        %1655 = vmatprep.mubr.f32.mxu0 0.0
        %1656 = vmatmul.mubr.f32.gmra.mrb[0].mxu0 %v686
        %v1657 = vpop.f32.mrb[0].mxu0
        %v1658 = vadd.f32 0.0, %v1657
        %v1659 = vpop.f32.mrb[0].mxu0
        %1660 = vmatprep.mubr.f32.mxu0 0.0
        %1661 = vmatmul.mubr.f32.gmra.mrb[0].mxu0 %v689
        %v1662 = vpop.f32.mrb[0].mxu0
        %v1663 = vadd.f32 0.0, %v1662
        %v1664 = vpop.f32.mrb[0].mxu0
        %1665 = vmatprep.mubr.f32.mxu0 0.0
        %1666 = vmatmul.mubr.f32.gmra.mrb[0].mxu0 %v692
        %v1667 = vpop.f32.mrb[0].mxu0
        %v1668 = vadd.f32 0.0, %v1667
        %v1669 = vpop.f32.mrb[0].mxu0
        %1670 = vmatprep.mubr.f32.mxu0 0.0
        %1671 = vmatmul.mubr.f32.gmra.mrb[0].mxu0 %v695
        %v1672 = vpop.f32.mrb[0].mxu0
        %v1673 = vadd.f32 0.0, %v1672
        %v1674 = vpop.f32.mrb[0].mxu0
        %1675 = vmatprep.mubr.f32.mxu0 0.0
        %1676 = vmatmul.mubr.f32.gmra.mrb[0].mxu0 %v698
        %v1677 = vpop.f32.mrb[0].mxu0
        %v1678 = vadd.f32 0.0, %v1677
        %v1679 = vpop.f32.mrb[0].mxu0
        %1680 = vmatprep.mubr.f32.mxu0 0.0
        %1681 = vmatmul.mubr.f32.gmra.mrb[0].mxu0 %v701
        %v1682 = vpop.f32.mrb[0].mxu0
        %v1683 = vadd.f32 0.0, %v1682
        %v1684 = vpop.f32.mrb[0].mxu0
        %1685 = vmatprep.mubr.f32.mxu0 0.0
        %1686 = vmatmul.mubr.f32.gmra.mrb[0].mxu0 %v704
        %v1687 = vpop.f32.mrb[0].mxu0
        %v1688 = vadd.f32 0.0, %v1687
        %v1689 = vpop.f32.mrb[0].mxu0
        %1690 = vmatprep.mubr.f32.mxu0 0.0
        %1691 = vmatmul.mubr.f32.gmra.mrb[0].mxu0 %v707
        %v1692 = vpop.f32.mrb[0].mxu0
        %v1693 = vadd.f32 0.0, %v1692
        %v1694 = vpop.f32.mrb[0].mxu0
        %1695 = vmatprep.mubr.f32.mxu0 0.0
        %1696 = vmatmul.mubr.f32.gmra.mrb[0].mxu0 %v710
        %v1697 = vpop.f32.mrb[0].mxu0
        %v1698 = vadd.f32 0.0, %v1697
        %v1699 = vpop.f32.mrb[0].mxu0
        %1700 = vmatprep.mubr.f32.mxu0 0.0
        %1701 = vmatmul.mubr.f32.gmra.mrb[0].mxu0 %v713
        %v1702 = vpop.f32.mrb[0].mxu0
        %v1703 = vadd.f32 0.0, %v1702
        %v1704 = vpop.f32.mrb[0].mxu0
        %1705 = vmatprep.mubr.f32.mxu0 0.0
        %1706 = vmatmul.mubr.f32.gmra.mrb[0].mxu0 %v716
        %v1707 = vpop.f32.mrb[0].mxu0
        %v1708 = vadd.f32 0.0, %v1707
        %v1709 = vpop.f32.mrb[0].mxu0
        %1710 = vmatprep.mubr.f32.mxu0 0.0
        %1711 = vmatmul.mubr.f32.gmra.mrb[0].mxu0 %v719
        %v1712 = vpop.f32.mrb[0].mxu0
        %v1713 = vadd.f32 0.0, %v1712
        %v1714 = vpop.f32.mrb[0].mxu0
        %1715 = vmatprep.mubr.f32.mxu0 0.0
        %1716 = vmatmul.mubr.f32.gmra.mrb[0].mxu0 %v722
        %v1717 = vpop.f32.mrb[0].mxu0
        %v1718 = vadd.f32 0.0, %v1717
        %v1719 = vpop.f32.mrb[0].mxu0
        %1720 = vmatprep.mubr.f32.mxu0 0.0
        %1721 = vmatmul.mubr.f32.gmra.mrb[0].mxu0 %v725
        %v1722 = vpop.f32.mrb[0].mxu0
        %v1723 = vadd.f32 0.0, %v1722
        %v1724 = vpop.f32.mrb[0].mxu0
        %1725 = vmatprep.mubr.f32.mxu0 0.0
        %1726 = vmatmul.mubr.f32.gmra.mrb[0].mxu0 %v728
        %v1727 = vpop.f32.mrb[0].mxu0
        %v1728 = vadd.f32 0.0, %v1727
        %v1729 = vpop.f32.mrb[0].mxu0
        %1730 = vmatprep.mubr.f32.mxu0 0.0
        %1731 = vmatmul.mubr.f32.gmra.mrb[0].mxu0 %v731
        %v1732 = vpop.f32.mrb[0].mxu0
        %v1733 = vadd.f32 0.0, %v1732
        %v1734 = vpop.f32.mrb[0].mxu0
        %1735 = vmatprep.mubr.f32.mxu0 0.0
        %1736 = vmatmul.mubr.f32.gmra.mrb[0].mxu0 %v734
        %v1737 = vpop.f32.mrb[0].mxu0
        %v1738 = vadd.f32 0.0, %v1737
        %v1739 = vpop.f32.mrb[0].mxu0
        %1740 = vmatprep.mubr.f32.mxu0 0.0
        %1741 = vmatmul.mubr.f32.gmra.mrb[0].mxu0 %v737
        %v1742 = vpop.f32.mrb[0].mxu0
        %v1743 = vadd.f32 0.0, %v1742
        %v1744 = vpop.f32.mrb[0].mxu0
        %1745 = vmatprep.mubr.f32.mxu0 0.0
        %1746 = vmatmul.mubr.f32.gmra.mrb[0].mxu0 %v740
        %v1747 = vpop.f32.mrb[0].mxu0
        %v1748 = vadd.f32 0.0, %v1747
        %v1749 = vpop.f32.mrb[0].mxu0
        %1750 = vmatprep.mubr.f32.mxu0 0.0
        %1751 = vmatmul.mubr.f32.gmra.mrb[0].mxu0 %v743
        %v1752 = vpop.f32.mrb[0].mxu0
        %v1753 = vadd.f32 0.0, %v1752
        %v1754 = vpop.f32.mrb[0].mxu0
        %1755 = vmatprep.mubr.f32.mxu0 0.0
        %1756 = vmatmul.mubr.f32.gmra.mrb[0].mxu0 %v746
        %v1757 = vpop.f32.mrb[0].mxu0
        %v1758 = vadd.f32 0.0, %v1757
        %v1759 = vpop.f32.mrb[0].mxu0
        %1760 = vmatprep.mubr.f32.mxu0 0.0
        %1761 = vmatmul.mubr.f32.gmra.mrb[0].mxu0 %v749
        %v1762 = vpop.f32.mrb[0].mxu0
        %v1763 = vadd.f32 0.0, %v1762
        %v1764 = vpop.f32.mrb[0].mxu0
        %1765 = vmatprep.mubr.f32.mxu0 0.0
        %1766 = vmatmul.mubr.f32.gmra.mrb[0].mxu0 %v752
        %v1767 = vpop.f32.mrb[0].mxu0
        %v1768 = vadd.f32 0.0, %v1767
        %v1769 = vpop.f32.mrb[0].mxu0
        %1770 = vmatprep.mubr.f32.mxu0 0.0
        %1771 = vmatmul.mubr.f32.gmra.mrb[0].mxu0 %v755
        %v1772 = vpop.f32.mrb[0].mxu0
        %v1773 = vadd.f32 0.0, %v1772
        %v1774 = vpop.f32.mrb[0].mxu0
        %1775 = vmatprep.mubr.f32.mxu0 0.0
        %1776 = vmatmul.mubr.f32.gmra.mrb[0].mxu0 %v758
        %v1777 = vpop.f32.mrb[0].mxu0
        %v1778 = vadd.f32 0.0, %v1777
        %v1779 = vpop.f32.mrb[0].mxu0
        %1780 = vmatprep.mubr.f32.mxu0 0.0
        %1781 = vmatmul.mubr.f32.gmra.mrb[0].mxu0 %v761
        %v1782 = vpop.f32.mrb[0].mxu0
        %v1783 = vadd.f32 0.0, %v1782
        %v1784 = vpop.f32.mrb[0].mxu0
        %1785 = vmatprep.mubr.f32.mxu0 0.0
        %1786 = vmatmul.mubr.f32.gmra.mrb[0].mxu0 %v764
        %v1787 = vpop.f32.mrb[0].mxu0
        %v1788 = vadd.f32 0.0, %v1787
        %v1789 = vpop.f32.mrb[0].mxu0
        %1790 = vmatprep.mubr.f32.mxu0 0.0
        %1791 = vmatmul.mubr.f32.gmra.mrb[0].mxu0 %v767
        %v1792 = vpop.f32.mrb[0].mxu0
        %v1793 = vadd.f32 0.0, %v1792
        %v1794 = vpop.f32.mrb[0].mxu0
        %1795 = vmatprep.mubr.f32.mxu0 0.0
        %1796 = vmatmul.mubr.f32.gmra.mrb[0].mxu0 %v770
        %v1797 = vpop.f32.mrb[0].mxu0
        %v1798 = vadd.f32 0.0, %v1797
        %v1799 = vpop.f32.mrb[0].mxu0
        %1800 = vmatprep.mubr.f32.mxu0 0.0
        %1801 = vmatmul.mubr.f32.gmra.mrb[0].mxu0 %v773
        %v1802 = vpop.f32.mrb[0].mxu0
        %v1803 = vadd.f32 0.0, %v1802
        %v1804 = vpop.f32.mrb[0].mxu0
        %1805 = vmatprep.mubr.f32.mxu0 0.0
        %1806 = vmatmul.mubr.f32.gmra.mrb[0].mxu0 %v776
        %v1807 = vpop.f32.mrb[0].mxu0
        %v1808 = vadd.f32 0.0, %v1807
        %v1809 = vpop.f32.mrb[0].mxu0
        %1810 = vmatprep.mubr.f32.mxu0 0.0
        %1811 = vmatmul.mubr.f32.gmra.mrb[0].mxu0 %v779
        %v1812 = vpop.f32.mrb[0].mxu0
        %v1813 = vadd.f32 0.0, %v1812
        %v1814 = vpop.f32.mrb[0].mxu0
        %1815 = vmatprep.mubr.f32.mxu0 0.0
        %1816 = vmatmul.mubr.f32.gmra.mrb[0].mxu0 %v782
        %v1817 = vpop.f32.mrb[0].mxu0
        %v1818 = vadd.f32 0.0, %v1817
        %v1819 = vpop.f32.mrb[0].mxu0
        %1820 = vmatprep.mubr.f32.mxu0 0.0
        %1821 = vmatmul.mubr.f32.gmra.mrb[0].mxu0 %v785
        %v1822 = vpop.f32.mrb[0].mxu0
        %v1823 = vadd.f32 0.0, %v1822
        %v1824 = vpop.f32.mrb[0].mxu0
        %1825 = vmatprep.mubr.f32.mxu0 0.0
        %1826 = vmatmul.mubr.f32.gmra.mrb[0].mxu0 %v788
        %v1827 = vpop.f32.mrb[0].mxu0
        %v1828 = vadd.f32 0.0, %v1827
        %v1829 = vpop.f32.mrb[0].mxu0
        %1830 = vmatprep.mubr.f32.mxu0 0.0
        %1831 = vmatmul.mubr.f32.gmra.mrb[0].mxu0 %v791
        %v1832 = vpop.f32.mrb[0].mxu0
        %v1833 = vadd.f32 0.0, %v1832
        %v1834 = vpop.f32.mrb[0].mxu0
        %1835 = vmatprep.mubr.f32.mxu0 0.0
        %1836 = vmatmul.mubr.f32.gmra.mrb[0].mxu0 %v794
        %v1837 = vpop.f32.mrb[0].mxu0
        %v1838 = vadd.f32 0.0, %v1837
        %v1839 = vpop.f32.mrb[0].mxu0
        %1840 = vmatprep.mubr.f32.mxu0 0.0
        %1841 = vmatmul.mubr.f32.gmra.mrb[0].mxu0 %v797
        %v1842 = vpop.f32.mrb[0].mxu0
        %v1843 = vadd.f32 0.0, %v1842
        %v1844 = vpop.f32.mrb[0].mxu0
        %1845 = vmatprep.mubr.f32.mxu0 0.0
        %1846 = vmatmul.mubr.f32.gmra.mrb[0].mxu0 %v800
        %v1847 = vpop.f32.mrb[0].mxu0
        %v1848 = vadd.f32 0.0, %v1847
        %v1849 = vpop.f32.mrb[0].mxu0
        %1850 = vmatprep.mubr.f32.mxu0 0.0
        %1851 = vmatmul.mubr.f32.gmra.mrb[0].mxu0 %v803
        %v1852 = vpop.f32.mrb[0].mxu0
        %v1853 = vadd.f32 0.0, %v1852
        %v1854 = vpop.f32.mrb[0].mxu0
        %1855 = vmatprep.mubr.f32.mxu0 0.0
        %1856 = vmatmul.mubr.f32.gmra.mrb[0].mxu0 %v806
        %v1857 = vpop.f32.mrb[0].mxu0
        %v1858 = vadd.f32 0.0, %v1857
        %v1859 = vpop.f32.mrb[0].mxu0
        %1860 = vmatprep.mubr.f32.mxu0 0.0
        %1861 = vmatmul.mubr.f32.gmra.mrb[0].mxu0 %v809
        %v1862 = vpop.f32.mrb[0].mxu0
        %v1863 = vadd.f32 0.0, %v1862
        %v1864 = vpop.f32.mrb[0].mxu0
        %1865 = vmatprep.mubr.f32.mxu0 0.0
        %1866 = vmatmul.mubr.f32.gmra.mrb[0].mxu0 %v812
        %v1867 = vpop.f32.mrb[0].mxu0
        %v1868 = vadd.f32 0.0, %v1867
        %v1869 = vpop.f32.mrb[0].mxu0
        %1870 = vmatprep.mubr.f32.mxu0 0.0
        %1871 = vmatmul.mubr.f32.gmra.mrb[0].mxu0 %v815
        %v1872 = vpop.f32.mrb[0].mxu0
        %v1873 = vadd.f32 0.0, %v1872
        %v1874 = vpop.f32.mrb[0].mxu0
        %1875 = vmatprep.mubr.f32.mxu0 0.0
        %1876 = vmatmul.mubr.f32.gmra.mrb[0].mxu0 %v818
        %v1877 = vpop.f32.mrb[0].mxu0
        %v1878 = vadd.f32 0.0, %v1877
        %v1879 = vpop.f32.mrb[0].mxu0
        %1880 = vmatprep.mubr.f32.mxu0 0.0
        %1881 = vmatmul.mubr.f32.gmra.mrb[0].mxu0 %v821
        %v1882 = vpop.f32.mrb[0].mxu0
        %v1883 = vadd.f32 0.0, %v1882
        %v1884 = vpop.f32.mrb[0].mxu0
        %1885 = vmatprep.mubr.f32.mxu0 0.0
        %1886 = vmatmul.mubr.f32.gmra.mrb[0].mxu0 %v824
        %v1887 = vpop.f32.mrb[0].mxu0
        %v1888 = vadd.f32 0.0, %v1887
        %v1889 = vpop.f32.mrb[0].mxu0
        %1890 = vmatprep.mubr.f32.mxu0 0.0
        %1891 = vmatmul.mubr.f32.gmra.mrb[0].mxu0 %v827
        %v1892 = vpop.f32.mrb[0].mxu0
        %v1893 = vadd.f32 0.0, %v1892
        %v1894 = vpop.f32.mrb[0].mxu0
        %1895 = vmatprep.mubr.f32.mxu0 0.0
        %1896 = vmatmul.mubr.f32.gmra.mrb[0].mxu0 %v830
        %v1897 = vpop.f32.mrb[0].mxu0
        %v1898 = vadd.f32 0.0, %v1897
        %v1899 = vpop.f32.mrb[0].mxu0
        %1900 = vmatprep.mubr.f32.mxu0 0.0
        %1901 = vmatmul.mubr.f32.gmra.mrb[0].mxu0 %v833
        %v1902 = vpop.f32.mrb[0].mxu0
        %v1903 = vadd.f32 0.0, %v1902
        %v1904 = vpop.f32.mrb[0].mxu0
        %1905 = vmatprep.mubr.f32.mxu0 0.0
        %1906 = vmatmul.mubr.f32.gmra.mrb[0].mxu0 %v836
        %v1907 = vpop.f32.mrb[0].mxu0
        %v1908 = vadd.f32 0.0, %v1907
        %v1909 = vpop.f32.mrb[0].mxu0
        %1910 = vmatprep.mubr.f32.mxu0 0.0
        %1911 = vmatmul.mubr.f32.gmra.mrb[0].mxu0 %v839
        %v1912 = vpop.f32.mrb[0].mxu0
        %v1913 = vadd.f32 0.0, %v1912
        %v1914 = vpop.f32.mrb[0].mxu0
        %1915 = vmatprep.mubr.f32.mxu0 0.0
        %1916 = vmatmul.mubr.f32.gmra.mrb[0].mxu0 %v842
        %v1917 = vpop.f32.mrb[0].mxu0
        %v1918 = vadd.f32 0.0, %v1917
        %v1919 = vpop.f32.mrb[0].mxu0
        %1920 = vmatprep.mubr.f32.mxu0 0.0
        %1921 = vmatmul.mubr.f32.gmra.mrb[0].mxu0 %v845
        %v1922 = vpop.f32.mrb[0].mxu0
        %v1923 = vadd.f32 0.0, %v1922
        %v1924 = vpop.f32.mrb[0].mxu0
        %1925 = vmatprep.mubr.f32.mxu0 0.0
        %1926 = vmatmul.mubr.f32.gmra.mrb[0].mxu0 %v848
        %v1927 = vpop.f32.mrb[0].mxu0
        %v1928 = vadd.f32 0.0, %v1927
        %v1929 = vpop.f32.mrb[0].mxu0
        %1930 = vmatprep.mubr.f32.mxu0 0.0
        %1931 = vmatmul.mubr.f32.gmra.mrb[0].mxu0 %v851
        %v1932 = vpop.f32.mrb[0].mxu0
        %v1933 = vadd.f32 0.0, %v1932
        %v1934 = vpop.f32.mrb[0].mxu0
        %1935 = vmatprep.mubr.f32.mxu0 0.0
        %1936 = vmatmul.mubr.f32.gmra.mrb[0].mxu0 %v854
        %v1937 = vpop.f32.mrb[0].mxu0
        %v1938 = vadd.f32 0.0, %v1937
        %v1939 = vpop.f32.mrb[0].mxu0
        %1940 = vmatprep.mubr.f32.mxu0 0.0
        %1941 = vmatmul.mubr.f32.gmra.mrb[0].mxu0 %v857
        %v1942 = vpop.f32.mrb[0].mxu0
        %v1943 = vadd.f32 0.0, %v1942
        %v1944 = vpop.f32.mrb[0].mxu0
        %1945 = vmatprep.mubr.f32.mxu0 0.0
        %1946 = vmatmul.mubr.f32.gmra.mrb[0].mxu0 %v860
        %v1947 = vpop.f32.mrb[0].mxu0
        %v1948 = vadd.f32 0.0, %v1947
        %v1949 = vpop.f32.mrb[0].mxu0
        %1950 = vmatprep.mubr.f32.mxu0 0.0
        %1951 = vmatmul.mubr.f32.gmra.mrb[0].mxu0 %v863
        %v1952 = vpop.f32.mrb[0].mxu0
        %v1953 = vadd.f32 0.0, %v1952
        %v1954 = vpop.f32.mrb[0].mxu0
        %1955 = vmatprep.mubr.f32.mxu0 0.0
        %1956 = vmatmul.mubr.f32.gmra.mrb[0].mxu0 %v866
        %v1957 = vpop.f32.mrb[0].mxu0
        %v1958 = vadd.f32 0.0, %v1957
        %v1959 = vpop.f32.mrb[0].mxu0
        %1960 = vmatprep.mubr.f32.mxu0 0.0
        %1961 = vmatmul.mubr.f32.gmra.mrb[0].mxu0 %v869
        %v1962 = vpop.f32.mrb[0].mxu0
        %v1963 = vadd.f32 0.0, %v1962
        %v1964 = vpop.f32.mrb[0].mxu0
        %1965 = vmatprep.mubr.f32.mxu0 0.0
        %1966 = vmatmul.mubr.f32.gmra.mrb[0].mxu0 %v872
        %v1967 = vpop.f32.mrb[0].mxu0
        %v1968 = vadd.f32 0.0, %v1967
        %v1969 = vpop.f32.mrb[0].mxu0
        %1970 = vmatprep.mubr.f32.mxu0 0.0
        %1971 = vmatmul.mubr.f32.gmra.mrb[0].mxu0 %v875
        %v1972 = vpop.f32.mrb[0].mxu0
        %v1973 = vadd.f32 0.0, %v1972
        %v1974 = vpop.f32.mrb[0].mxu0
        %1975 = vmatprep.mubr.f32.mxu0 0.0
        %1976 = vmatmul.mubr.f32.gmra.mrb[0].mxu0 %v878
        %v1977 = vpop.f32.mrb[0].mxu0
        %v1978 = vadd.f32 0.0, %v1977
        %v1979 = vpop.f32.mrb[0].mxu0
        %1980 = vmatprep.mubr.f32.mxu0 0.0
        %1981 = vmatmul.mubr.f32.gmra.mrb[0].mxu0 %v881
        %v1982 = vpop.f32.mrb[0].mxu0
        %v1983 = vadd.f32 0.0, %v1982
        %v1984 = vpop.f32.mrb[0].mxu0
        %1985 = vmatprep.mubr.f32.mxu0 0.0
        %1986 = vmatmul.mubr.f32.gmra.mrb[0].mxu0 %v884
        %v1987 = vpop.f32.mrb[0].mxu0
        %v1988 = vadd.f32 0.0, %v1987
        %v1989 = vpop.f32.mrb[0].mxu0
        %1990 = vmatprep.mubr.f32.mxu0 0.0
        %1991 = vmatmul.mubr.f32.gmra.mrb[0].mxu0 %v887
        %v1992 = vpop.f32.mrb[0].mxu0
        %v1993 = vadd.f32 0.0, %v1992
        %v1994 = vpop.f32.mrb[0].mxu0
        %1995 = vmatprep.mubr.f32.mxu0 0.0
        %1996 = vmatmul.mubr.f32.gmra.mrb[0].mxu0 %v890
        %v1997 = vpop.f32.mrb[0].mxu0
        %v1998 = vadd.f32 0.0, %v1997
        %v1999 = vpop.f32.mrb[0].mxu0
        %2000 = vmatprep.mubr.f32.mxu0 0.0
        %2001 = vmatmul.mubr.f32.gmra.mrb[0].mxu0 %v893
        %v2002 = vpop.f32.mrb[0].mxu0
        %v2003 = vadd.f32 0.0, %v2002
        %v2004 = vpop.f32.mrb[0].mxu0
        %2005 = vmatprep.mubr.f32.mxu0 0.0
        %2006 = vmatmul.mubr.f32.gmra.mrb[0].mxu0 %v896
        %v2007 = vpop.f32.mrb[0].mxu0
        %v2008 = vadd.f32 0.0, %v2007
        %v2009 = vpop.f32.mrb[0].mxu0
        %2010 = vmatprep.mubr.f32.mxu0 0.0
        %2011 = vmatmul.mubr.f32.gmra.mrb[0].mxu0 %v899
        %v2012 = vpop.f32.mrb[0].mxu0
        %v2013 = vadd.f32 0.0, %v2012
        %v2014 = vpop.f32.mrb[0].mxu0
        %2015 = vmatprep.mubr.f32.mxu0 0.0
        %2016 = vmatmul.mubr.f32.gmra.mrb[0].mxu0 %v902
        %v2017 = vpop.f32.mrb[0].mxu0
        %v2018 = vadd.f32 0.0, %v2017
        %v2019 = vpop.f32.mrb[0].mxu0
        %2020 = vmatprep.mubr.f32.mxu0 0.0
        %2021 = vmatmul.mubr.f32.gmra.mrb[0].mxu0 %v905
        %v2022 = vpop.f32.mrb[0].mxu0
        %v2023 = vadd.f32 0.0, %v2022
        %v2024 = vpop.f32.mrb[0].mxu0
        %2025 = vmatprep.mubr.f32.mxu0 0.0
        %2026 = vmatmul.mubr.f32.gmra.mrb[0].mxu0 %v908
        %v2027 = vpop.f32.mrb[0].mxu0
        %v2028 = vadd.f32 0.0, %v2027
        %v2029 = vpop.f32.mrb[0].mxu0
        %2030 = vmatprep.mubr.f32.mxu0 0.0
        %2031 = vmatmul.mubr.f32.gmra.mrb[0].mxu0 %v911
        %v2032 = vpop.f32.mrb[0].mxu0
        %v2033 = vadd.f32 0.0, %v2032
        %v2034 = vpop.f32.mrb[0].mxu0
        %2035 = vmatprep.mubr.f32.mxu0 0.0
        %2036 = vmatmul.mubr.f32.gmra.mrb[0].mxu0 %v914
        %v2037 = vpop.f32.mrb[0].mxu0
        %v2038 = vadd.f32 0.0, %v2037
        %v2039 = vpop.f32.mrb[0].mxu0
        %2040 = vmatprep.mubr.f32.mxu0 0.0
        %2041 = vmatmul.mubr.f32.gmra.mrb[0].mxu0 %v917
        %v2042 = vpop.f32.mrb[0].mxu0
        %v2043 = vadd.f32 0.0, %v2042
        %v2044 = vpop.f32.mrb[0].mxu0
        %2045 = vmatprep.mubr.f32.mxu0 0.0
        %2046 = vmatmul.mubr.f32.gmra.mrb[0].mxu0 %v920
        %v2047 = vpop.f32.mrb[0].mxu0
        %v2048 = vadd.f32 0.0, %v2047
        %v2049 = vpop.f32.mrb[0].mxu0
        %2050 = vmatprep.mubr.f32.mxu0 0.0
        %2051 = vmatmul.mubr.f32.gmra.mrb[0].mxu0 %v923
        %v2052 = vpop.f32.mrb[0].mxu0
        %v2053 = vadd.f32 0.0, %v2052
        %v2054 = vpop.f32.mrb[0].mxu0
        %2055 = vmatprep.mubr.f32.mxu0 0.0
        %2056 = vmatmul.mubr.f32.gmra.mrb[0].mxu0 %v926
        %v2057 = vpop.f32.mrb[0].mxu0
        %v2058 = vadd.f32 0.0, %v2057
        %v2059 = vpop.f32.mrb[0].mxu0
        %2060 = vmatprep.mubr.f32.mxu0 0.0
        %2061 = vmatmul.mubr.f32.gmra.mrb[0].mxu0 %v929
        %v2062 = vpop.f32.mrb[0].mxu0
        %v2063 = vadd.f32 0.0, %v2062
        %v2064 = vpop.f32.mrb[0].mxu0
        %2065 = vmatprep.mubr.f32.mxu0 0.0
        %2066 = vmatmul.mubr.f32.gmra.mrb[0].mxu0 %v932
        %v2067 = vpop.f32.mrb[0].mxu0
        %v2068 = vadd.f32 0.0, %v2067
        %v2069 = vpop.f32.mrb[0].mxu0
        %2070 = vmatprep.mubr.f32.mxu0 0.0
        %2071 = vmatmul.mubr.f32.gmra.mrb[0].mxu0 %v935
        %v2072 = vpop.f32.mrb[0].mxu0
        %v2073 = vadd.f32 0.0, %v2072
        %v2074 = vpop.f32.mrb[0].mxu0
        %2075 = vmatprep.mubr.f32.mxu0 0.0
        %2076 = vmatmul.mubr.f32.gmra.mrb[0].mxu0 %v938
        %v2077 = vpop.f32.mrb[0].mxu0
        %v2078 = vadd.f32 0.0, %v2077
        %v2079 = vpop.f32.mrb[0].mxu0
        %2080 = vmatprep.mubr.f32.mxu0 0.0
        %2081 = vmatmul.mubr.f32.gmra.mrb[0].mxu0 %v941
        %v2082 = vpop.f32.mrb[0].mxu0
        %v2083 = vadd.f32 0.0, %v2082
        %v2084 = vpop.f32.mrb[0].mxu0
        %2085 = vmatprep.mubr.f32.mxu0 0.0
        %2086 = vmatmul.mubr.f32.gmra.mrb[0].mxu0 %v944
        %v2087 = vpop.f32.mrb[0].mxu0
        %v2088 = vadd.f32 0.0, %v2087
        %v2089 = vpop.f32.mrb[0].mxu0
        %2090 = vmatprep.mubr.f32.mxu0 0.0
        %2091 = vmatmul.mubr.f32.gmra.mrb[0].mxu0 %v947
        %v2092 = vpop.f32.mrb[0].mxu0
        %v2093 = vadd.f32 0.0, %v2092
        %v2094 = vpop.f32.mrb[0].mxu0
        %2095 = vmatprep.mubr.f32.mxu0 0.0
        %2096 = vmatmul.mubr.f32.gmra.mrb[0].mxu0 %v950
        %v2097 = vpop.f32.mrb[0].mxu0
        %v2098 = vadd.f32 0.0, %v2097
        %v2099 = vpop.f32.mrb[0].mxu0
        %2100 = vmatprep.mubr.f32.mxu0 0.0
        %2101 = vmatmul.mubr.f32.gmra.mrb[0].mxu0 %v953
        %v2102 = vpop.f32.mrb[0].mxu0
        %v2103 = vadd.f32 0.0, %v2102
        %v2104 = vpop.f32.mrb[0].mxu0
        %2105 = vmatprep.mubr.f32.mxu0 0.0
        %2106 = vmatmul.mubr.f32.gmra.mrb[0].mxu0 %v956
        %v2107 = vpop.f32.mrb[0].mxu0
        %v2108 = vadd.f32 0.0, %v2107
        %v2109 = vpop.f32.mrb[0].mxu0
        %2110 = vmatprep.mubr.f32.mxu0 0.0
        %2111 = vmatmul.mubr.f32.gmra.mrb[0].mxu0 %v959
        %v2112 = vpop.f32.mrb[0].mxu0
        %v2113 = vadd.f32 0.0, %v2112
        %v2114 = vpop.f32.mrb[0].mxu0
        %2115 = vmatprep.mubr.f32.mxu0 0.0
        %2116 = vmatmul.mubr.f32.gmra.mrb[0].mxu0 %v962
        %v2117 = vpop.f32.mrb[0].mxu0
        %v2118 = vadd.f32 0.0, %v2117
        %v2119 = vpop.f32.mrb[0].mxu0
        %2120 = vmatprep.mubr.f32.mxu0 0.0
        %2121 = vmatmul.mubr.f32.gmra.mrb[0].mxu0 %v965
        %v2122 = vpop.f32.mrb[0].mxu0
        %v2123 = vadd.f32 0.0, %v2122
        %v2124 = vpop.f32.mrb[0].mxu0
        %2125 = vmatprep.mubr.f32.mxu0 0.0
        %2126 = vmatmul.mubr.f32.gmra.mrb[0].mxu0 %v968
        %v2127 = vpop.f32.mrb[0].mxu0
        %v2128 = vadd.f32 0.0, %v2127
        %v2129 = vpop.f32.mrb[0].mxu0
        %2130 = vmatprep.mubr.f32.mxu0 0.0
        %2131 = vmatmul.mubr.f32.gmra.mrb[0].mxu0 %v971
        %v2132 = vpop.f32.mrb[0].mxu0
        %v2133 = vadd.f32 0.0, %v2132
        %v2134 = vpop.f32.mrb[0].mxu0
        %2135 = vmatprep.mubr.f32.mxu0 0.0
        %2136 = vmatmul.mubr.f32.gmra.mrb[0].mxu0 %v974
        %v2137 = vpop.f32.mrb[0].mxu0
        %v2138 = vadd.f32 0.0, %v2137
        %v2139 = vpop.f32.mrb[0].mxu0
        %2140 = vmatprep.mubr.f32.mxu0 0.0
        %2141 = vmatmul.mubr.f32.gmra.mrb[0].mxu0 %v977
        %v2142 = vpop.f32.mrb[0].mxu0
        %v2143 = vadd.f32 0.0, %v2142
        %v2144 = vpop.f32.mrb[0].mxu0
        %2145 = vmatprep.mubr.f32.mxu0 0.0
        %2146 = vmatmul.mubr.f32.gmra.mrb[0].mxu0 %v980
        %v2147 = vpop.f32.mrb[0].mxu0
        %v2148 = vadd.f32 0.0, %v2147
        %v2149 = vpop.f32.mrb[0].mxu0
        %2150 = vmatprep.mubr.f32.mxu0 0.0
        %2151 = vmatmul.mubr.f32.gmra.mrb[0].mxu0 %v983
        %v2152 = vpop.f32.mrb[0].mxu0
        %v2153 = vadd.f32 0.0, %v2152
        %v2154 = vpop.f32.mrb[0].mxu0
        %2155 = vmatprep.mubr.f32.mxu0 0.0
        %2156 = vmatmul.mubr.f32.gmra.mrb[0].mxu0 %v986
        %v2157 = vpop.f32.mrb[0].mxu0
        %v2158 = vadd.f32 0.0, %v2157
        %v2159 = vpop.f32.mrb[0].mxu0
        %2160 = vmatprep.mubr.f32.mxu0 0.0
        %2161 = vmatmul.mubr.f32.gmra.mrb[0].mxu0 %v989
        %v2162 = vpop.f32.mrb[0].mxu0
        %v2163 = vadd.f32 0.0, %v2162
        %v2164 = vpop.f32.mrb[0].mxu0
        %2165 = vmatprep.mubr.f32.mxu0 0.0
        %2166 = vmatmul.mubr.f32.gmra.mrb[0].mxu0 %v992
        %v2167 = vpop.f32.mrb[0].mxu0
        %v2168 = vadd.f32 0.0, %v2167
        %v2169 = vpop.f32.mrb[0].mxu0
        %2170 = vmatprep.mubr.f32.mxu0 0.0
        %2171 = vmatmul.mubr.f32.gmra.mrb[0].mxu0 %v995
        %v2172 = vpop.f32.mrb[0].mxu0
        %v2173 = vadd.f32 0.0, %v2172
        %v2174 = vpop.f32.mrb[0].mxu0
        %2175 = vmatprep.mubr.f32.mxu0 0.0
        %2176 = vmatmul.mubr.f32.gmra.mrb[0].mxu0 %v998
        %v2177 = vpop.f32.mrb[0].mxu0
        %v2178 = vadd.f32 0.0, %v2177
        %v2179 = vpop.f32.mrb[0].mxu0
        %2180 = vmatprep.mubr.f32.mxu0 0.0
        %2181 = vmatmul.mubr.f32.gmra.mrb[0].mxu0 %v1001
        %v2182 = vpop.f32.mrb[0].mxu0
        %v2183 = vadd.f32 0.0, %v2182
        %v2184 = vpop.f32.mrb[0].mxu0
        %2185 = vmatprep.mubr.f32.mxu0 0.0
        %2186 = vmatmul.mubr.f32.gmra.mrb[0].mxu0 %v1004
        %v2187 = vpop.f32.mrb[0].mxu0
        %v2188 = vadd.f32 0.0, %v2187
        %v2189 = vpop.f32.mrb[0].mxu0
        %2190 = vmatprep.mubr.f32.mxu0 0.0
        %2191 = vmatmul.mubr.f32.gmra.mrb[0].mxu0 %v1007
        %v2192 = vpop.f32.mrb[0].mxu0
        %v2193 = vadd.f32 0.0, %v2192
        %v2194 = vpop.f32.mrb[0].mxu0
        %2195 = vmatprep.mubr.f32.mxu0 0.0
        %2196 = vmatmul.mubr.f32.gmra.mrb[0].mxu0 %v1010
        %v2197 = vpop.f32.mrb[0].mxu0
        %v2198 = vadd.f32 0.0, %v2197
        %v2199 = vpop.f32.mrb[0].mxu0
        %2200 = vmatprep.mubr.f32.mxu0 0.0
        %2201 = vmatmul.mubr.f32.gmra.mrb[0].mxu0 %v1013
        %v2202 = vpop.f32.mrb[0].mxu0
        %v2203 = vadd.f32 0.0, %v2202
        %v2204 = vpop.f32.mrb[0].mxu0
        %2205 = vmatprep.mubr.f32.mxu0 0.0
        %2206 = vmatmul.mubr.f32.gmra.mrb[0].mxu0 %v1016
        %v2207 = vpop.f32.mrb[0].mxu0
        %v2208 = vadd.f32 0.0, %v2207
        %v2209 = vpop.f32.mrb[0].mxu0
        %2210 = vmatprep.mubr.f32.mxu0 0.0
        %2211 = vmatmul.mubr.f32.gmra.mrb[0].mxu0 %v1019
        %v2212 = vpop.f32.mrb[0].mxu0
        %v2213 = vadd.f32 0.0, %v2212
        %v2214 = vpop.f32.mrb[0].mxu0
        %2215 = vmatprep.mubr.f32.mxu0 0.0
        %2216 = vmatmul.mubr.f32.gmra.mrb[0].mxu0 %v1022
        %v2217 = vpop.f32.mrb[0].mxu0
        %v2218 = vadd.f32 0.0, %v2217
        %v2219 = vpop.f32.mrb[0].mxu0
        %2220 = vmatprep.mubr.f32.mxu0 0.0
        %2221 = vmatmul.mubr.f32.gmra.mrb[0].mxu0 %v1025
        %v2222 = vpop.f32.mrb[0].mxu0
        %v2223 = vadd.f32 0.0, %v2222
        %v2224 = vpop.f32.mrb[0].mxu0
        %2225 = vmatprep.mubr.f32.mxu0 0.0
        %2226 = vmatmul.mubr.f32.gmra.mrb[0].mxu0 %v1028
        %v2227 = vpop.f32.mrb[0].mxu0
        %v2228 = vadd.f32 0.0, %v2227
        %v2229 = vpop.f32.mrb[0].mxu0
        %2230 = vmatprep.mubr.f32.mxu0 0.0
        %2231 = vmatmul.mubr.f32.gmra.mrb[0].mxu0 %v1031
        %v2232 = vpop.f32.mrb[0].mxu0
        %v2233 = vadd.f32 0.0, %v2232
        %v2234 = vpop.f32.mrb[0].mxu0
        %2235 = vmatprep.mubr.f32.mxu0 0.0
        %2236 = vmatmul.mubr.f32.gmra.mrb[0].mxu0 %v1034
        %v2237 = vpop.f32.mrb[0].mxu0
        %v2238 = vadd.f32 0.0, %v2237
        %v2239 = vpop.f32.mrb[0].mxu0
        %2240 = vmatprep.mubr.f32.mxu0 0.0
        %2241 = vmatmul.mubr.f32.gmra.mrb[0].mxu0 %v1037
        %v2242 = vpop.f32.mrb[0].mxu0
        %v2243 = vadd.f32 0.0, %v2242
        %v2244 = vpop.f32.mrb[0].mxu0
        %2245 = vmatprep.mubr.f32.mxu0 0.0
        %2246 = vmatmul.mubr.f32.gmra.mrb[0].mxu0 %v1040
        %v2247 = vpop.f32.mrb[0].mxu0
        %v2248 = vadd.f32 0.0, %v2247
        %v2249 = vpop.f32.mrb[0].mxu0
        %2250 = vmatprep.mubr.f32.mxu0 0.0
        %2251 = vmatmul.mubr.f32.gmra.mrb[0].mxu0 %v1043
        %v2252 = vpop.f32.mrb[0].mxu0
        %v2253 = vadd.f32 0.0, %v2252
        %v2254 = vpop.f32.mrb[0].mxu0
        %2255 = vmatprep.mubr.f32.mxu0 0.0
        %2256 = vmatmul.mubr.f32.gmra.mrb[0].mxu0 %v1046
        %v2257 = vpop.f32.mrb[0].mxu0
        %v2258 = vadd.f32 0.0, %v2257
        %v2259 = vpop.f32.mrb[0].mxu0
        %2260 = vmatprep.mubr.f32.mxu0 0.0
        %2261 = vmatmul.mubr.f32.gmra.mrb[0].mxu0 %v1049
        %v2262 = vpop.f32.mrb[0].mxu0
        %v2263 = vadd.f32 0.0, %v2262
        %v2264 = vpop.f32.mrb[0].mxu0
        %2265 = vmatprep.mubr.f32.mxu0 0.0
        %2266 = vmatmul.mubr.f32.gmra.mrb[0].mxu0 %v1052
        %v2267 = vpop.f32.mrb[0].mxu0
        %v2268 = vadd.f32 0.0, %v2267
        %v2269 = vpop.f32.mrb[0].mxu0
        %2270 = vmatprep.mubr.f32.mxu0 0.0
        %2271 = vmatmul.mubr.f32.gmra.mrb[0].mxu0 %v1055
        %v2272 = vpop.f32.mrb[0].mxu0
        %v2273 = vadd.f32 0.0, %v2272
        %v2274 = vpop.f32.mrb[0].mxu0
        %2275 = vmatprep.mubr.f32.mxu0 0.0
        %2276 = vmatmul.mubr.f32.gmra.mrb[0].mxu0 %v1058
        %v2277 = vpop.f32.mrb[0].mxu0
        %v2278 = vadd.f32 0.0, %v2277
        %v2279 = vpop.f32.mrb[0].mxu0
        %2280 = vmatprep.mubr.f32.mxu0 0.0
        %2281 = vmatmul.mubr.f32.gmra.mrb[0].mxu0 %v1061
        %v2282 = vpop.f32.mrb[0].mxu0
        %v2283 = vadd.f32 0.0, %v2282
        %v2284 = vpop.f32.mrb[0].mxu0
        %2285 = vmatprep.mubr.f32.mxu0 0.0
        %2286 = vmatmul.mubr.f32.gmra.mrb[0].mxu0 %v1064
        %v2287 = vpop.f32.mrb[0].mxu0
        %v2288 = vadd.f32 0.0, %v2287
        %v2289 = vpop.f32.mrb[0].mxu0
        %2290 = vmatprep.mubr.f32.mxu0 0.0
        %2291 = vmatmul.mubr.f32.gmra.mrb[0].mxu0 %v1067
        %v2292 = vpop.f32.mrb[0].mxu0
        %v2293 = vadd.f32 0.0, %v2292
        %v2294 = vpop.f32.mrb[0].mxu0
        %2295 = vmatprep.mubr.f32.mxu0 0.0
        %2296 = vmatmul.mubr.f32.gmra.mrb[0].mxu0 %v1070
        %v2297 = vpop.f32.mrb[0].mxu0
        %v2298 = vadd.f32 0.0, %v2297
        %v2299 = vpop.f32.mrb[0].mxu0
        %2300 = vmatprep.mubr.f32.mxu0 0.0
        %2301 = vmatmul.mubr.f32.gmra.mrb[0].mxu0 %v1073
        %v2302 = vpop.f32.mrb[0].mxu0
        %v2303 = vadd.f32 0.0, %v2302
        %v2304 = vpop.f32.mrb[0].mxu0
        %2305 = vmatprep.mubr.f32.mxu0 0.0
        %2306 = vmatmul.mubr.f32.gmra.mrb[0].mxu0 %v1076
        %v2307 = vpop.f32.mrb[0].mxu0
        %v2308 = vadd.f32 0.0, %v2307
        %v2309 = vpop.f32.mrb[0].mxu0
        %2310 = vmatprep.mubr.f32.mxu0 0.0
        %2311 = vmatmul.mubr.f32.gmra.mrb[0].mxu0 %v1079
        %v2312 = vpop.f32.mrb[0].mxu0
        %v2313 = vadd.f32 0.0, %v2312
        %v2314 = vpop.f32.mrb[0].mxu0
        %2315 = vmatprep.mubr.f32.mxu0 0.0
        %2316 = vmatmul.mubr.f32.gmra.mrb[0].mxu0 %v1082
        %v2317 = vpop.f32.mrb[0].mxu0
        %v2318 = vadd.f32 0.0, %v2317
        %v2319 = vpop.f32.mrb[0].mxu0
        %2320 = vmatprep.mubr.f32.mxu0 0.0
        %2321 = vmatmul.mubr.f32.gmra.mrb[0].mxu0 %v1085
        %v2322 = vpop.f32.mrb[0].mxu0
        %v2323 = vadd.f32 0.0, %v2322
        %v2324 = vpop.f32.mrb[0].mxu0
        %2325 = vmatprep.mubr.f32.mxu0 0.0
        %2326 = vmatmul.mubr.f32.gmra.mrb[0].mxu0 %v1088
        %v2327 = vpop.f32.mrb[0].mxu0
        %v2328 = vadd.f32 0.0, %v2327
        %v2329 = vpop.f32.mrb[0].mxu0
        %2330 = vmatprep.mubr.f32.mxu0 0.0
        %2331 = vmatmul.mubr.f32.gmra.mrb[0].mxu0 %v1091
        %v2332 = vpop.f32.mrb[0].mxu0
        %v2333 = vadd.f32 0.0, %v2332
        %v2334 = vpop.f32.mrb[0].mxu0
        %2335 = vmatprep.mubr.f32.mxu0 0.0
        %2336 = vmatmul.mubr.f32.gmra.mrb[0].mxu0 %v1094
        %v2337 = vpop.f32.mrb[0].mxu0
        %v2338 = vadd.f32 0.0, %v2337
        %v2339 = vpop.f32.mrb[0].mxu0
        %2340 = vmatprep.mubr.f32.mxu0 0.0
        %2341 = vmatmul.mubr.f32.gmra.mrb[0].mxu0 %v1097
        %v2342 = vpop.f32.mrb[0].mxu0
        %v2343 = vadd.f32 0.0, %v2342
        %v2344 = vpop.f32.mrb[0].mxu0
        %2345 = vmatprep.mubr.f32.mxu0 0.0
        %2346 = vmatmul.mubr.f32.gmra.mrb[0].mxu0 %v1100
        %v2347 = vpop.f32.mrb[0].mxu0
        %v2348 = vadd.f32 0.0, %v2347
        %v2349 = vpop.f32.mrb[0].mxu0
        %2350 = vmatprep.mubr.f32.mxu0 0.0
        %2351 = vmatmul.mubr.f32.gmra.mrb[0].mxu0 %v1103
        %v2352 = vpop.f32.mrb[0].mxu0
        %v2353 = vadd.f32 0.0, %v2352
        %v2354 = vpop.f32.mrb[0].mxu0
        %2355 = vmatprep.mubr.f32.mxu0 0.0
        %2356 = vmatmul.mubr.f32.gmra.mrb[0].mxu0 %v1106
        %v2357 = vpop.f32.mrb[0].mxu0
        %v2358 = vadd.f32 0.0, %v2357
        %v2359 = vpop.f32.mrb[0].mxu0
        %2360 = vmatprep.mubr.f32.mxu0 0.0
        %2361 = vmatmul.mubr.f32.gmra.mrb[0].mxu0 %v1109
        %v2362 = vpop.f32.mrb[0].mxu0
        %v2363 = vadd.f32 0.0, %v2362
        %v2364 = vpop.f32.mrb[0].mxu0
        %2365 = vmatprep.mubr.f32.mxu0 0.0
        %2366 = vmatmul.mubr.f32.gmra.mrb[0].mxu0 %v1112
        %v2367 = vpop.f32.mrb[0].mxu0
        %v2368 = vadd.f32 0.0, %v2367
        %v2369 = vpop.f32.mrb[0].mxu0
        %2370 = vmatprep.mubr.f32.mxu0 0.0
        %2371 = vmatmul.mubr.f32.gmra.mrb[0].mxu0 %v1115
        %v2372 = vpop.f32.mrb[0].mxu0
        %v2373 = vadd.f32 0.0, %v2372
        %v2374 = vpop.f32.mrb[0].mxu0
        %2375 = vmatprep.mubr.f32.mxu0 0.0
        %2376 = vmatmul.mubr.f32.gmra.mrb[0].mxu0 %v1118
        %v2377 = vpop.f32.mrb[0].mxu0
        %v2378 = vadd.f32 0.0, %v2377
        %v2379 = vpop.f32.mrb[0].mxu0
        %2380 = vmatprep.mubr.f32.mxu0 0.0
        %2381 = vmatmul.mubr.f32.gmra.mrb[0].mxu0 %v1121
        %v2382 = vpop.f32.mrb[0].mxu0
        %v2383 = vadd.f32 0.0, %v2382
        %v2384 = vpop.f32.mrb[0].mxu0
        %2385 = vmatprep.mubr.f32.mxu0 0.0
        %2386 = vmatmul.mubr.f32.gmra.mrb[0].mxu0 %v1124
        %v2387 = vpop.f32.mrb[0].mxu0
        %v2388 = vadd.f32 0.0, %v2387
        %v2389 = vpop.f32.mrb[0].mxu0
        %2390 = vmatprep.mubr.f32.mxu0 0.0
        %2391 = vmatmul.mubr.f32.gmra.mrb[0].mxu0 %v1127
        %v2392 = vpop.f32.mrb[0].mxu0
        %v2393 = vadd.f32 0.0, %v2392
        %v2394 = vpop.f32.mrb[0].mxu0
        %2395 = vmatprep.mubr.f32.mxu0 0.0
        %2396 = vmatmul.mubr.f32.gmra.mrb[0].mxu0 %v1130
        %v2397 = vpop.f32.mrb[0].mxu0
        %v2398 = vadd.f32 0.0, %v2397
        %v2399 = vpop.f32.mrb[0].mxu0
        %2400 = vmatprep.mubr.f32.mxu0 0.0
        %2401 = vmatmul.mubr.f32.gmra.mrb[0].mxu0 %v1133
        %v2402 = vpop.f32.mrb[0].mxu0
        %v2403 = vadd.f32 0.0, %v2402
        %v2404 = vpop.f32.mrb[0].mxu0
        %2405 = vmatprep.mubr.f32.mxu0 0.0
        %2406 = vmatmul.mubr.f32.gmra.mrb[0].mxu0 %v1136
        %v2407 = vpop.f32.mrb[0].mxu0
        %v2408 = vadd.f32 0.0, %v2407
        %v2409 = vpop.f32.mrb[0].mxu0
        %2410 = vmatprep.mubr.f32.mxu0 0.0
        %2411 = vmatmul.mubr.f32.gmra.mrb[0].mxu0 %v1139
        %v2412 = vpop.f32.mrb[0].mxu0
        %v2413 = vadd.f32 0.0, %v2412
        %v2414 = vpop.f32.mrb[0].mxu0
        %2415 = vmatprep.mubr.f32.mxu0 0.0
        %2416 = vmatmul.mubr.f32.gmra.mrb[0].mxu0 %v1142
        %v2417 = vpop.f32.mrb[0].mxu0
        %v2418 = vadd.f32 0.0, %v2417
        %v2419 = vpop.f32.mrb[0].mxu0
        %2420 = vmatprep.mubr.f32.mxu0 0.0
        %2421 = vmatmul.mubr.f32.gmra.mrb[0].mxu0 %v1145
        %v2422 = vpop.f32.mrb[0].mxu0
        %v2423 = vadd.f32 0.0, %v2422
        %v2424 = vpop.f32.mrb[0].mxu0
        %2425 = vmatprep.mubr.f32.mxu0 0.0
        %2426 = vmatmul.mubr.f32.gmra.mrb[0].mxu0 %v1148
        %v2427 = vpop.f32.mrb[0].mxu0
        %v2428 = vadd.f32 0.0, %v2427
        %v2429 = vpop.f32.mrb[0].mxu0
        %2430 = vmatprep.mubr.f32.mxu0 0.0
        %2431 = vmatmul.mubr.f32.gmra.mrb[0].mxu0 %v1151
        %v2432 = vpop.f32.mrb[0].mxu0
        %v2433 = vadd.f32 0.0, %v2432
        %v2434 = vpop.f32.mrb[0].mxu0
        %2435 = vmatprep.mubr.f32.mxu0 0.0
        %2436 = vmatmul.mubr.f32.gmra.mrb[0].mxu0 %v1154
        %v2437 = vpop.f32.mrb[0].mxu0
        %v2438 = vadd.f32 0.0, %v2437
        %v2439 = vpop.f32.mrb[0].mxu0
        %2440 = vmatprep.mubr.f32.mxu0 0.0
        %2441 = vmatmul.mubr.f32.gmra.mrb[0].mxu0 %v1157
        %v2442 = vpop.f32.mrb[0].mxu0
        %v2443 = vadd.f32 0.0, %v2442
        %v2444 = vpop.f32.mrb[0].mxu0
        %2445 = vmatprep.mubr.f32.mxu0 0.0
        %2446 = vmatmul.mubr.f32.gmra.mrb[0].mxu0 %v1160
        %v2447 = vpop.f32.mrb[0].mxu0
        %v2448 = vadd.f32 0.0, %v2447
        %v2449 = vpop.f32.mrb[0].mxu0
        %2450 = vmatprep.mubr.f32.mxu0 0.0
        %2451 = vmatmul.mubr.f32.gmra.mrb[0].mxu0 %v1163
        %v2452 = vpop.f32.mrb[0].mxu0
        %v2453 = vadd.f32 0.0, %v2452
        %v2454 = vpop.f32.mrb[0].mxu0
        %2455 = vmatprep.mubr.f32.mxu0 0.0
        %2456 = vmatmul.mubr.f32.gmra.mrb[0].mxu0 %v1166
        %v2457 = vpop.f32.mrb[0].mxu0
        %v2458 = vadd.f32 0.0, %v2457
        %v2459 = vpop.f32.mrb[0].mxu0
        %2460 = vmatprep.mubr.f32.mxu0 0.0
        %2461 = vmatmul.mubr.f32.gmra.mrb[0].mxu0 %v1169
        %v2462 = vpop.f32.mrb[0].mxu0
        %v2463 = vadd.f32 0.0, %v2462
        %v2464 = vpop.f32.mrb[0].mxu0
        %2465 = vmatprep.mubr.f32.mxu0 0.0
        %2466 = vmatmul.mubr.f32.gmra.mrb[0].mxu0 %v1172
        %v2467 = vpop.f32.mrb[0].mxu0
        %v2468 = vadd.f32 0.0, %v2467
        %v2469 = vpop.f32.mrb[0].mxu0
        %2470 = vmatprep.mubr.f32.mxu0 0.0
        %2471 = vmatmul.mubr.f32.gmra.mrb[0].mxu0 %v1175
        %v2472 = vpop.f32.mrb[0].mxu0
        %v2473 = vadd.f32 0.0, %v2472
        %v2474 = vpop.f32.mrb[0].mxu0
        %2475 = vmatprep.mubr.f32.mxu0 0.0
        %2476 = vmatmul.mubr.f32.gmra.mrb[0].mxu0 %v1178
        %v2477 = vpop.f32.mrb[0].mxu0
        %v2478 = vadd.f32 0.0, %v2477
        %v2479 = vpop.f32.mrb[0].mxu0
        %2480 = vmatprep.mubr.f32.mxu0 0.0
        %2481 = vmatmul.mubr.f32.gmra.mrb[0].mxu0 %v1181
        %v2482 = vpop.f32.mrb[0].mxu0
        %v2483 = vadd.f32 0.0, %v2482
        %v2484 = vpop.f32.mrb[0].mxu0
        %2485 = vmatprep.mubr.f32.mxu0 0.0
        %2486 = vmatmul.mubr.f32.gmra.mrb[0].mxu0 %v1184
        %v2487 = vpop.f32.mrb[0].mxu0
        %v2488 = vadd.f32 0.0, %v2487
        %v2489 = vpop.f32.mrb[0].mxu0
        %2490 = vmatprep.mubr.f32.mxu0 0.0
        %2491 = vmatmul.mubr.f32.gmra.mrb[0].mxu0 %v1187
        %v2492 = vpop.f32.mrb[0].mxu0
        %v2493 = vadd.f32 0.0, %v2492
        %v2494 = vpop.f32.mrb[0].mxu0
        %2495 = vmatprep.mubr.f32.mxu0 0.0
        %2496 = vmatmul.mubr.f32.gmra.mrb[0].mxu0 %v1190
        %v2497 = vpop.f32.mrb[0].mxu0
        %v2498 = vadd.f32 0.0, %v2497
        %v2499 = vpop.f32.mrb[0].mxu0
        %2500 = vmatprep.mubr.f32.mxu0 0.0
        %2501 = vmatmul.mubr.f32.gmra.mrb[0].mxu0 %v1193
        %v2502 = vpop.f32.mrb[0].mxu0
        %v2503 = vadd.f32 0.0, %v2502
        %v2504 = vpop.f32.mrb[0].mxu0
        %2505 = vmatprep.mubr.f32.mxu0 0.0
        %2506 = vmatmul.mubr.f32.gmra.mrb[0].mxu0 %v1196
        %v2507 = vpop.f32.mrb[0].mxu0
        %v2508 = vadd.f32 0.0, %v2507
        %v2509 = vpop.f32.mrb[0].mxu0
        %2510 = vmatprep.mubr.f32.mxu0 0.0
        %2511 = vmatmul.mubr.f32.gmra.mrb[0].mxu0 %v1199
        %v2512 = vpop.f32.mrb[0].mxu0
        %v2513 = vadd.f32 0.0, %v2512
        %v2514 = vpop.f32.mrb[0].mxu0
        %2515 = vmatprep.mubr.f32.mxu0 0.0
        %2516 = vmatmul.mubr.f32.gmra.mrb[0].mxu0 %v1202
        %v2517 = vpop.f32.mrb[0].mxu0
        %v2518 = vadd.f32 0.0, %v2517
        %v2519 = vpop.f32.mrb[0].mxu0
        %2520 = vmatprep.mubr.f32.mxu0 0.0
        %2521 = vmatmul.mubr.f32.gmra.mrb[0].mxu0 %v1205
        %v2522 = vpop.f32.mrb[0].mxu0
        %v2523 = vadd.f32 0.0, %v2522
        %v2524 = vpop.f32.mrb[0].mxu0
        %2525 = vmatprep.mubr.f32.mxu0 0.0
        %2526 = vmatmul.mubr.f32.gmra.mrb[0].mxu0 %v1208
        %v2527 = vpop.f32.mrb[0].mxu0
        %v2528 = vadd.f32 0.0, %v2527
        %v2529 = vpop.f32.mrb[0].mxu0
        %2530 = vmatprep.mubr.f32.mxu0 0.0
        %2531 = vmatmul.mubr.f32.gmra.mrb[0].mxu0 %v1211
        %v2532 = vpop.f32.mrb[0].mxu0
        %v2533 = vadd.f32 0.0, %v2532
        %v2534 = vpop.f32.mrb[0].mxu0
        %2535 = vmatprep.mubr.f32.mxu0 0.0
        %2536 = vmatmul.mubr.f32.gmra.mrb[0].mxu0 %v1214
        %v2537 = vpop.f32.mrb[0].mxu0
        %v2538 = vadd.f32 0.0, %v2537
        %v2539 = vpop.f32.mrb[0].mxu0
        %2540 = vmatprep.mubr.f32.mxu0 0.0
        %2541 = vmatmul.mubr.f32.gmra.mrb[0].mxu0 %v1217
        %v2542 = vpop.f32.mrb[0].mxu0
        %v2543 = vadd.f32 0.0, %v2542
        %v2544 = vpop.f32.mrb[0].mxu0
        %2545 = vmatprep.mubr.f32.mxu0 0.0
        %2546 = vmatmul.mubr.f32.gmra.mrb[0].mxu0 %v1220
        %v2547 = vpop.f32.mrb[0].mxu0
        %v2548 = vadd.f32 0.0, %v2547
        %v2549 = vpop.f32.mrb[0].mxu0
        %2550 = vmatprep.mubr.f32.mxu0 0.0
        %2551 = vmatmul.mubr.f32.gmra.mrb[0].mxu0 %v1223
        %v2552 = vpop.f32.mrb[0].mxu0
        %v2553 = vadd.f32 0.0, %v2552
        %v2554 = vpop.f32.mrb[0].mxu0
        %2555 = vmatprep.mubr.f32.mxu0 0.0
        %2556 = vmatmul.mubr.f32.gmra.mrb[0].mxu0 %v1226
        %v2557 = vpop.f32.mrb[0].mxu0
        %v2558 = vadd.f32 0.0, %v2557
        %v2559 = vpop.f32.mrb[0].mxu0
        %2560 = vmatprep.mubr.f32.mxu0 0.0
        %2561 = vmatmul.mubr.f32.gmra.mrb[0].mxu0 %v1229
        %v2562 = vpop.f32.mrb[0].mxu0
        %v2563 = vadd.f32 0.0, %v2562
        %v2564 = vpop.f32.mrb[0].mxu0
        %2565 = vmatprep.mubr.f32.mxu0 0.0
        %2566 = vmatmul.mubr.f32.gmra.mrb[0].mxu0 %v1232
        %v2567 = vpop.f32.mrb[0].mxu0
        %v2568 = vadd.f32 0.0, %v2567
        %v2569 = vpop.f32.mrb[0].mxu0
        %2570 = vmatprep.mubr.f32.mxu0 0.0
        %2571 = vmatmul.mubr.f32.gmra.mrb[0].mxu0 %v1235
        %v2572 = vpop.f32.mrb[0].mxu0
        %v2573 = vadd.f32 0.0, %v2572
        %v2574 = vpop.f32.mrb[0].mxu0
        %2575 = vmatprep.mubr.f32.mxu0 0.0
        %2576 = vmatmul.mubr.f32.gmra.mrb[0].mxu0 %v1238
        %v2577 = vpop.f32.mrb[0].mxu0
        %v2578 = vadd.f32 0.0, %v2577
        %v2579 = vpop.f32.mrb[0].mxu0
        %2580 = vmatprep.mubr.f32.mxu0 0.0
        %2581 = vmatmul.mubr.f32.gmra.mrb[0].mxu0 %v1241
        %v2582 = vpop.f32.mrb[0].mxu0
        %v2583 = vadd.f32 0.0, %v2582
        %v2584 = vpop.f32.mrb[0].mxu0
        %2585 = vmatprep.mubr.f32.mxu0 0.0
        %2586 = vmatmul.mubr.f32.gmra.mrb[0].mxu0 %v1244
        %v2587 = vpop.f32.mrb[0].mxu0
        %v2588 = vadd.f32 0.0, %v2587
        %v2589 = vpop.f32.mrb[0].mxu0
        %2590 = vdwg.mxu0
        %v2591 = vld [vmem:[%s218] sm:$0xff]
        %v2592 = vld [vmem:[%s218 + $0x8] sm:$0xff]
        %v2593 = vld [vmem:[%s218 + $0x10] sm:$0xff]
        %v2594 = vld [vmem:[%s218 + $0x18] sm:$0xff]
        %v2595 = vld [vmem:[%s218 + $0x20] sm:$0xff]
        %v2596 = vld [vmem:[%s218 + $0x28] sm:$0xff]
        %v2597 = vld [vmem:[%s218 + $0x30] sm:$0xff]
        %v2598 = vld [vmem:[%s218 + $0x38] sm:$0xff]
        %v2599 = vld [vmem:[%s218 + $0x40] sm:$0xff]
        %v2600 = vld [vmem:[%s218 + $0x48] sm:$0xff]
        %v2601 = vld [vmem:[%s218 + $0x50] sm:$0xff]
        %v2602 = vld [vmem:[%s218 + $0x58] sm:$0xff]
        %v2603 = vld [vmem:[%s218 + $0x60] sm:$0xff]
        %v2604 = vld [vmem:[%s218 + $0x68] sm:$0xff]
        %v2605 = vld [vmem:[%s218 + $0x70] sm:$0xff]
        %v2606 = vld [vmem:[%s218 + $0x78] sm:$0xff]
        %v2607 = vld [vmem:[%s218 + $0x80] sm:$0xff]
        %v2608 = vld [vmem:[%s218 + $0x88] sm:$0xff]
        %v2609 = vld [vmem:[%s218 + $0x90] sm:$0xff]
        %v2610 = vld [vmem:[%s218 + $0x98] sm:$0xff]
        %v2611 = vld [vmem:[%s218 + $0xa0] sm:$0xff]
        %v2612 = vld [vmem:[%s218 + $0xa8] sm:$0xff]
        %v2613 = vld [vmem:[%s218 + $0xb0] sm:$0xff]
        %v2614 = vld [vmem:[%s218 + $0xb8] sm:$0xff]
        %v2615 = vld [vmem:[%s218 + $0xc0] sm:$0xff]
        %v2616 = vld [vmem:[%s218 + $0xc8] sm:$0xff]
        %v2617 = vld [vmem:[%s218 + $0xd0] sm:$0xff]
        %v2618 = vld [vmem:[%s218 + $0xd8] sm:$0xff]
        %v2619 = vld [vmem:[%s218 + $0xe0] sm:$0xff]
        %v2620 = vld [vmem:[%s218 + $0xe8] sm:$0xff]
        %v2621 = vld [vmem:[%s218 + $0xf0] sm:$0xff]
        %v2622 = vld [vmem:[%s218 + $0xf8] sm:$0xff]
        %v2623 = vld [vmem:[%s218 + $0x100] sm:$0xff]
        %v2624 = vld [vmem:[%s218 + $0x108] sm:$0xff]
        %v2625 = vld [vmem:[%s218 + $0x110] sm:$0xff]
        %v2626 = vld [vmem:[%s218 + $0x118] sm:$0xff]
        %v2627 = vld [vmem:[%s218 + $0x120] sm:$0xff]
        %v2628 = vld [vmem:[%s218 + $0x128] sm:$0xff]
        %v2629 = vld [vmem:[%s218 + $0x130] sm:$0xff]
        %v2630 = vld [vmem:[%s218 + $0x138] sm:$0xff]
        %v2631 = vld [vmem:[%s218 + $0x140] sm:$0xff]
        %v2632 = vld [vmem:[%s218 + $0x148] sm:$0xff]
        %v2633 = vld [vmem:[%s218 + $0x150] sm:$0xff]
        %v2634 = vld [vmem:[%s218 + $0x158] sm:$0xff]
        %v2635 = vld [vmem:[%s218 + $0x160] sm:$0xff]
        %v2636 = vld [vmem:[%s218 + $0x168] sm:$0xff]
        %v2637 = vld [vmem:[%s218 + $0x170] sm:$0xff]
        %v2638 = vld [vmem:[%s218 + $0x178] sm:$0xff]
        %v2639 = vld [vmem:[%s218 + $0x180] sm:$0xff]
        %v2640 = vld [vmem:[%s218 + $0x188] sm:$0xff]
        %v2641 = vld [vmem:[%s218 + $0x190] sm:$0xff]
        %v2642 = vld [vmem:[%s218 + $0x198] sm:$0xff]
        %v2643 = vld [vmem:[%s218 + $0x1a0] sm:$0xff]
        %v2644 = vld [vmem:[%s218 + $0x1a8] sm:$0xff]
        %v2645 = vld [vmem:[%s218 + $0x1b0] sm:$0xff]
        %v2646 = vld [vmem:[%s218 + $0x1b8] sm:$0xff]
        %v2647 = vld [vmem:[%s218 + $0x1c0] sm:$0xff]
        %v2648 = vld [vmem:[%s218 + $0x1c8] sm:$0xff]
        %v2649 = vld [vmem:[%s218 + $0x1d0] sm:$0xff]
        %v2650 = vld [vmem:[%s218 + $0x1d8] sm:$0xff]
        %v2651 = vld [vmem:[%s218 + $0x1e0] sm:$0xff]
        %v2652 = vld [vmem:[%s218 + $0x1e8] sm:$0xff]
        %v2653 = vld [vmem:[%s218 + $0x1f0] sm:$0xff]
        %v2654 = vld [vmem:[%s218 + $0x1f8] sm:$0xff]
        %v2655 = vld [vmem:[%s218 + $0x200] sm:$0xff]
        %v2656 = vld [vmem:[%s218 + $0x208] sm:$0xff]
        %v2657 = vld [vmem:[%s218 + $0x210] sm:$0xff]
        %v2658 = vld [vmem:[%s218 + $0x218] sm:$0xff]
        %v2659 = vld [vmem:[%s218 + $0x220] sm:$0xff]
        %v2660 = vld [vmem:[%s218 + $0x228] sm:$0xff]
        %v2661 = vld [vmem:[%s218 + $0x230] sm:$0xff]
        %v2662 = vld [vmem:[%s218 + $0x238] sm:$0xff]
        %v2663 = vld [vmem:[%s218 + $0x240] sm:$0xff]
        %v2664 = vld [vmem:[%s218 + $0x248] sm:$0xff]
        %v2665 = vld [vmem:[%s218 + $0x250] sm:$0xff]
        %v2666 = vld [vmem:[%s218 + $0x258] sm:$0xff]
        %v2667 = vld [vmem:[%s218 + $0x260] sm:$0xff]
        %v2668 = vld [vmem:[%s218 + $0x268] sm:$0xff]
        %v2669 = vld [vmem:[%s218 + $0x270] sm:$0xff]
        %v2670 = vld [vmem:[%s218 + $0x278] sm:$0xff]
        %v2671 = vld [vmem:[%s218 + $0x280] sm:$0xff]
        %v2672 = vld [vmem:[%s218 + $0x288] sm:$0xff]
        %v2673 = vld [vmem:[%s218 + $0x290] sm:$0xff]
        %v2674 = vld [vmem:[%s218 + $0x298] sm:$0xff]
        %v2675 = vld [vmem:[%s218 + $0x2a0] sm:$0xff]
        %v2676 = vld [vmem:[%s218 + $0x2a8] sm:$0xff]
        %v2677 = vld [vmem:[%s218 + $0x2b0] sm:$0xff]
        %v2678 = vld [vmem:[%s218 + $0x2b8] sm:$0xff]
        %v2679 = vld [vmem:[%s218 + $0x2c0] sm:$0xff]
        %v2680 = vld [vmem:[%s218 + $0x2c8] sm:$0xff]
        %v2681 = vld [vmem:[%s218 + $0x2d0] sm:$0xff]
        %v2682 = vld [vmem:[%s218 + $0x2d8] sm:$0xff]
        %v2683 = vld [vmem:[%s218 + $0x2e0] sm:$0xff]
        %v2684 = vld [vmem:[%s218 + $0x2e8] sm:$0xff]
        %v2685 = vld [vmem:[%s218 + $0x2f0] sm:$0xff]
        %v2686 = vld [vmem:[%s218 + $0x2f8] sm:$0xff]
        %v2687 = vld [vmem:[%s218 + $0x300] sm:$0xff]
        %v2688 = vld [vmem:[%s218 + $0x308] sm:$0xff]
        %v2689 = vld [vmem:[%s218 + $0x310] sm:$0xff]
        %v2690 = vld [vmem:[%s218 + $0x318] sm:$0xff]
        %v2691 = vld [vmem:[%s218 + $0x320] sm:$0xff]
        %v2692 = vld [vmem:[%s218 + $0x328] sm:$0xff]
        %v2693 = vld [vmem:[%s218 + $0x330] sm:$0xff]
        %v2694 = vld [vmem:[%s218 + $0x338] sm:$0xff]
        %v2695 = vld [vmem:[%s218 + $0x340] sm:$0xff]
        %v2696 = vld [vmem:[%s218 + $0x348] sm:$0xff]
        %v2697 = vld [vmem:[%s218 + $0x350] sm:$0xff]
        %v2698 = vld [vmem:[%s218 + $0x358] sm:$0xff]
        %v2699 = vld [vmem:[%s218 + $0x360] sm:$0xff]
        %v2700 = vld [vmem:[%s218 + $0x368] sm:$0xff]
        %v2701 = vld [vmem:[%s218 + $0x370] sm:$0xff]
        %v2702 = vld [vmem:[%s218 + $0x378] sm:$0xff]
        %v2703 = vld [vmem:[%s218 + $0x380] sm:$0xff]
        %v2704 = vld [vmem:[%s218 + $0x388] sm:$0xff]
        %v2705 = vld [vmem:[%s218 + $0x390] sm:$0xff]
        %v2706 = vld [vmem:[%s218 + $0x398] sm:$0xff]
        %v2707 = vld [vmem:[%s218 + $0x3a0] sm:$0xff]
        %v2708 = vld [vmem:[%s218 + $0x3a8] sm:$0xff]
        %v2709 = vld [vmem:[%s218 + $0x3b0] sm:$0xff]
        %v2710 = vld [vmem:[%s218 + $0x3b8] sm:$0xff]
        %v2711 = vld [vmem:[%s218 + $0x3c0] sm:$0xff]
        %v2712 = vld [vmem:[%s218 + $0x3c8] sm:$0xff]
        %v2713 = vld [vmem:[%s218 + $0x3d0] sm:$0xff]
        %v2714 = vld [vmem:[%s218 + $0x3d8] sm:$0xff]
        %v2715 = vld [vmem:[%s218 + $0x3e0] sm:$0xff]
        %v2716 = vld [vmem:[%s218 + $0x3e8] sm:$0xff]
        %v2717 = vld [vmem:[%s218 + $0x3f0] sm:$0xff]
        %v2718 = vld [vmem:[%s218 + $0x3f8] sm:$0xff]
        %v2719 = vld [vmem:[%s218 + $0x400] sm:$0xff]
        %v2720 = vld [vmem:[%s218 + $0x408] sm:$0xff]
        %v2721 = vld [vmem:[%s218 + $0x410] sm:$0xff]
        %v2722 = vld [vmem:[%s218 + $0x418] sm:$0xff]
        %v2723 = vld [vmem:[%s218 + $0x420] sm:$0xff]
        %v2724 = vld [vmem:[%s218 + $0x428] sm:$0xff]
        %v2725 = vld [vmem:[%s218 + $0x430] sm:$0xff]
        %v2726 = vld [vmem:[%s218 + $0x438] sm:$0xff]
        %v2727 = vld [vmem:[%s218 + $0x440] sm:$0xff]
        %v2728 = vld [vmem:[%s218 + $0x448] sm:$0xff]
        %v2729 = vld [vmem:[%s218 + $0x450] sm:$0xff]
        %v2730 = vld [vmem:[%s218 + $0x458] sm:$0xff]
        %v2731 = vld [vmem:[%s218 + $0x460] sm:$0xff]
        %v2732 = vld [vmem:[%s218 + $0x468] sm:$0xff]
        %v2733 = vld [vmem:[%s218 + $0x470] sm:$0xff]
        %v2734 = vld [vmem:[%s218 + $0x478] sm:$0xff]
        %v2735 = vld [vmem:[%s218 + $0x480] sm:$0xff]
        %v2736 = vld [vmem:[%s218 + $0x488] sm:$0xff]
        %v2737 = vld [vmem:[%s218 + $0x490] sm:$0xff]
        %v2738 = vld [vmem:[%s218 + $0x498] sm:$0xff]
        %v2739 = vld [vmem:[%s218 + $0x4a0] sm:$0xff]
        %v2740 = vld [vmem:[%s218 + $0x4a8] sm:$0xff]
        %v2741 = vld [vmem:[%s218 + $0x4b0] sm:$0xff]
        %v2742 = vld [vmem:[%s218 + $0x4b8] sm:$0xff]
        %v2743 = vld [vmem:[%s218 + $0x4c0] sm:$0xff]
        %v2744 = vld [vmem:[%s218 + $0x4c8] sm:$0xff]
        %v2745 = vld [vmem:[%s218 + $0x4d0] sm:$0xff]
        %v2746 = vld [vmem:[%s218 + $0x4d8] sm:$0xff]
        %v2747 = vld [vmem:[%s218 + $0x4e0] sm:$0xff]
        %v2748 = vld [vmem:[%s218 + $0x4e8] sm:$0xff]
        %v2749 = vld [vmem:[%s218 + $0x4f0] sm:$0xff]
        %v2750 = vld [vmem:[%s218 + $0x4f8] sm:$0xff]
        %v2751 = vld [vmem:[%s218 + $0x500] sm:$0xff]
        %v2752 = vld [vmem:[%s218 + $0x508] sm:$0xff]
        %v2753 = vld [vmem:[%s218 + $0x510] sm:$0xff]
        %v2754 = vld [vmem:[%s218 + $0x518] sm:$0xff]
        %v2755 = vld [vmem:[%s218 + $0x520] sm:$0xff]
        %v2756 = vld [vmem:[%s218 + $0x528] sm:$0xff]
        %v2757 = vld [vmem:[%s218 + $0x530] sm:$0xff]
        %v2758 = vld [vmem:[%s218 + $0x538] sm:$0xff]
        %v2759 = vld [vmem:[%s218 + $0x540] sm:$0xff]
        %v2760 = vld [vmem:[%s218 + $0x548] sm:$0xff]
        %v2761 = vld [vmem:[%s218 + $0x550] sm:$0xff]
        %v2762 = vld [vmem:[%s218 + $0x558] sm:$0xff]
        %v2763 = vld [vmem:[%s218 + $0x560] sm:$0xff]
        %v2764 = vld [vmem:[%s218 + $0x568] sm:$0xff]
        %v2765 = vld [vmem:[%s218 + $0x570] sm:$0xff]
        %v2766 = vld [vmem:[%s218 + $0x578] sm:$0xff]
        %v2767 = vld [vmem:[%s218 + $0x580] sm:$0xff]
        %v2768 = vld [vmem:[%s218 + $0x588] sm:$0xff]
        %v2769 = vld [vmem:[%s218 + $0x590] sm:$0xff]
        %v2770 = vld [vmem:[%s218 + $0x598] sm:$0xff]
        %v2771 = vld [vmem:[%s218 + $0x5a0] sm:$0xff]
        %v2772 = vld [vmem:[%s218 + $0x5a8] sm:$0xff]
        %v2773 = vld [vmem:[%s218 + $0x5b0] sm:$0xff]
        %v2774 = vld [vmem:[%s218 + $0x5b8] sm:$0xff]
        %v2775 = vld [vmem:[%s218 + $0x5c0] sm:$0xff]
        %v2776 = vld [vmem:[%s218 + $0x5c8] sm:$0xff]
        %v2777 = vld [vmem:[%s218 + $0x5d0] sm:$0xff]
        %v2778 = vld [vmem:[%s218 + $0x5d8] sm:$0xff]
        %v2779 = vld [vmem:[%s218 + $0x5e0] sm:$0xff]
        %v2780 = vld [vmem:[%s218 + $0x5e8] sm:$0xff]
        %v2781 = vld [vmem:[%s218 + $0x5f0] sm:$0xff]
        %v2782 = vld [vmem:[%s218 + $0x5f8] sm:$0xff]
        %v2783 = vld [vmem:[%s218 + $0x600] sm:$0xff]
        %v2784 = vld [vmem:[%s218 + $0x608] sm:$0xff]
        %v2785 = vld [vmem:[%s218 + $0x610] sm:$0xff]
        %v2786 = vld [vmem:[%s218 + $0x618] sm:$0xff]
        %v2787 = vld [vmem:[%s218 + $0x620] sm:$0xff]
        %v2788 = vld [vmem:[%s218 + $0x628] sm:$0xff]
        %v2789 = vld [vmem:[%s218 + $0x630] sm:$0xff]
        %v2790 = vld [vmem:[%s218 + $0x638] sm:$0xff]
        %v2791 = vld [vmem:[%s218 + $0x640] sm:$0xff]
        %v2792 = vld [vmem:[%s218 + $0x648] sm:$0xff]
        %v2793 = vld [vmem:[%s218 + $0x650] sm:$0xff]
        %v2794 = vld [vmem:[%s218 + $0x658] sm:$0xff]
        %v2795 = vld [vmem:[%s218 + $0x660] sm:$0xff]
        %v2796 = vld [vmem:[%s218 + $0x668] sm:$0xff]
        %v2797 = vld [vmem:[%s218 + $0x670] sm:$0xff]
        %v2798 = vld [vmem:[%s218 + $0x678] sm:$0xff]
        %v2799 = vld [vmem:[%s218 + $0x680] sm:$0xff]
        %v2800 = vld [vmem:[%s218 + $0x688] sm:$0xff]
        %v2801 = vld [vmem:[%s218 + $0x690] sm:$0xff]
        %v2802 = vld [vmem:[%s218 + $0x698] sm:$0xff]
        %v2803 = vld [vmem:[%s218 + $0x6a0] sm:$0xff]
        %v2804 = vld [vmem:[%s218 + $0x6a8] sm:$0xff]
        %v2805 = vld [vmem:[%s218 + $0x6b0] sm:$0xff]
        %v2806 = vld [vmem:[%s218 + $0x6b8] sm:$0xff]
        %v2807 = vld [vmem:[%s218 + $0x6c0] sm:$0xff]
        %v2808 = vld [vmem:[%s218 + $0x6c8] sm:$0xff]
        %v2809 = vld [vmem:[%s218 + $0x6d0] sm:$0xff]
        %v2810 = vld [vmem:[%s218 + $0x6d8] sm:$0xff]
        %v2811 = vld [vmem:[%s218 + $0x6e0] sm:$0xff]
        %v2812 = vld [vmem:[%s218 + $0x6e8] sm:$0xff]
        %v2813 = vld [vmem:[%s218 + $0x6f0] sm:$0xff]
        %v2814 = vld [vmem:[%s218 + $0x6f8] sm:$0xff]
        %v2815 = vld [vmem:[%s218 + $0x700] sm:$0xff]
        %v2816 = vld [vmem:[%s218 + $0x708] sm:$0xff]
        %v2817 = vld [vmem:[%s218 + $0x710] sm:$0xff]
        %v2818 = vld [vmem:[%s218 + $0x718] sm:$0xff]
        %v2819 = vld [vmem:[%s218 + $0x720] sm:$0xff]
        %v2820 = vld [vmem:[%s218 + $0x728] sm:$0xff]
        %v2821 = vld [vmem:[%s218 + $0x730] sm:$0xff]
        %v2822 = vld [vmem:[%s218 + $0x738] sm:$0xff]
        %v2823 = vld [vmem:[%s218 + $0x740] sm:$0xff]
        %v2824 = vld [vmem:[%s218 + $0x748] sm:$0xff]
        %v2825 = vld [vmem:[%s218 + $0x750] sm:$0xff]
        %v2826 = vld [vmem:[%s218 + $0x758] sm:$0xff]
        %v2827 = vld [vmem:[%s218 + $0x760] sm:$0xff]
        %v2828 = vld [vmem:[%s218 + $0x768] sm:$0xff]
        %v2829 = vld [vmem:[%s218 + $0x770] sm:$0xff]
        %v2830 = vld [vmem:[%s218 + $0x778] sm:$0xff]
        %v2831 = vld [vmem:[%s218 + $0x780] sm:$0xff]
        %v2832 = vld [vmem:[%s218 + $0x788] sm:$0xff]
        %v2833 = vld [vmem:[%s218 + $0x790] sm:$0xff]
        %v2834 = vld [vmem:[%s218 + $0x798] sm:$0xff]
        %v2835 = vld [vmem:[%s218 + $0x7a0] sm:$0xff]
        %v2836 = vld [vmem:[%s218 + $0x7a8] sm:$0xff]
        %v2837 = vld [vmem:[%s218 + $0x7b0] sm:$0xff]
        %v2838 = vld [vmem:[%s218 + $0x7b8] sm:$0xff]
        %v2839 = vld [vmem:[%s218 + $0x7c0] sm:$0xff]
        %v2840 = vld [vmem:[%s218 + $0x7c8] sm:$0xff]
        %v2841 = vld [vmem:[%s218 + $0x7d0] sm:$0xff]
        %v2842 = vld [vmem:[%s218 + $0x7d8] sm:$0xff]
        %v2843 = vld [vmem:[%s218 + $0x7e0] sm:$0xff]
        %v2844 = vld [vmem:[%s218 + $0x7e8] sm:$0xff]
        %v2845 = vld [vmem:[%s218 + $0x7f0] sm:$0xff]
        %v2846 = vld [vmem:[%s218 + $0x7f8] sm:$0xff]
        %v2847 = vld [vmem:[%s3] sm:$0xff]
        %v2849 = vsel %vm477, %v2591, 0
        %v2852 = vsel %vm477, %v2592, 0
        %v2855 = vsel %vm477, %v2593, 0
        %v2858 = vsel %vm477, %v2594, 0
        %v2861 = vsel %vm477, %v2595, 0
        %v2864 = vsel %vm477, %v2596, 0
        %v2867 = vsel %vm477, %v2597, 0
        %v2870 = vsel %vm477, %v2598, 0
        %v2873 = vsel %vm477, %v2599, 0
        %v2876 = vsel %vm477, %v2600, 0
        %v2879 = vsel %vm477, %v2601, 0
        %v2882 = vsel %vm477, %v2602, 0
        %v2885 = vsel %vm477, %v2603, 0
        %v2888 = vsel %vm477, %v2604, 0
        %v2891 = vsel %vm477, %v2605, 0
        %v2894 = vsel %vm477, %v2606, 0
        %v2897 = vsel %vm477, %v2607, 0
        %v2900 = vsel %vm477, %v2608, 0
        %v2903 = vsel %vm477, %v2609, 0
        %v2906 = vsel %vm477, %v2610, 0
        %v2909 = vsel %vm477, %v2611, 0
        %v2912 = vsel %vm477, %v2612, 0
        %v2915 = vsel %vm477, %v2613, 0
        %v2918 = vsel %vm477, %v2614, 0
        %v2921 = vsel %vm477, %v2615, 0
        %v2924 = vsel %vm477, %v2616, 0
        %v2927 = vsel %vm477, %v2617, 0
        %v2930 = vsel %vm477, %v2618, 0
        %v2933 = vsel %vm477, %v2619, 0
        %v2936 = vsel %vm477, %v2620, 0
        %v2939 = vsel %vm477, %v2621, 0
        %v2942 = vsel %vm477, %v2622, 0
        %v2945 = vsel %vm477, %v2623, 0
        %v2948 = vsel %vm477, %v2624, 0
        %v2951 = vsel %vm477, %v2625, 0
        %v2954 = vsel %vm477, %v2626, 0
        %v2957 = vsel %vm477, %v2627, 0
        %v2960 = vsel %vm477, %v2628, 0
        %v2963 = vsel %vm477, %v2629, 0
        %v2966 = vsel %vm477, %v2630, 0
        %v2969 = vsel %vm477, %v2631, 0
        %v2972 = vsel %vm477, %v2632, 0
        %v2975 = vsel %vm477, %v2633, 0
        %v2978 = vsel %vm477, %v2634, 0
        %v2981 = vsel %vm477, %v2635, 0
        %v2984 = vsel %vm477, %v2636, 0
        %v2987 = vsel %vm477, %v2637, 0
        %v2990 = vsel %vm477, %v2638, 0
        %v2993 = vsel %vm477, %v2639, 0
        %v2996 = vsel %vm477, %v2640, 0
        %v2999 = vsel %vm477, %v2641, 0
        %v3002 = vsel %vm477, %v2642, 0
        %v3005 = vsel %vm477, %v2643, 0
        %v3008 = vsel %vm477, %v2644, 0
        %v3011 = vsel %vm477, %v2645, 0
        %v3014 = vsel %vm477, %v2646, 0
        %v3017 = vsel %vm477, %v2647, 0
        %v3020 = vsel %vm477, %v2648, 0
        %v3023 = vsel %vm477, %v2649, 0
        %v3026 = vsel %vm477, %v2650, 0
        %v3029 = vsel %vm477, %v2651, 0
        %v3032 = vsel %vm477, %v2652, 0
        %v3035 = vsel %vm477, %v2653, 0
        %v3038 = vsel %vm477, %v2654, 0
        %v3041 = vsel %vm477, %v2655, 0
        %v3044 = vsel %vm477, %v2656, 0
        %v3047 = vsel %vm477, %v2657, 0
        %v3050 = vsel %vm477, %v2658, 0
        %v3053 = vsel %vm477, %v2659, 0
        %v3056 = vsel %vm477, %v2660, 0
        %v3059 = vsel %vm477, %v2661, 0
        %v3062 = vsel %vm477, %v2662, 0
        %v3065 = vsel %vm477, %v2663, 0
        %v3068 = vsel %vm477, %v2664, 0
        %v3071 = vsel %vm477, %v2665, 0
        %v3074 = vsel %vm477, %v2666, 0
        %v3077 = vsel %vm477, %v2667, 0
        %v3080 = vsel %vm477, %v2668, 0
        %v3083 = vsel %vm477, %v2669, 0
        %v3086 = vsel %vm477, %v2670, 0
        %v3089 = vsel %vm477, %v2671, 0
        %v3092 = vsel %vm477, %v2672, 0
        %v3095 = vsel %vm477, %v2673, 0
        %v3098 = vsel %vm477, %v2674, 0
        %v3101 = vsel %vm477, %v2675, 0
        %v3104 = vsel %vm477, %v2676, 0
        %v3107 = vsel %vm477, %v2677, 0
        %v3110 = vsel %vm477, %v2678, 0
        %v3113 = vsel %vm477, %v2679, 0
        %v3116 = vsel %vm477, %v2680, 0
        %v3119 = vsel %vm477, %v2681, 0
        %v3122 = vsel %vm477, %v2682, 0
        %v3125 = vsel %vm477, %v2683, 0
        %v3128 = vsel %vm477, %v2684, 0
        %v3131 = vsel %vm477, %v2685, 0
        %v3134 = vsel %vm477, %v2686, 0
        %v3137 = vsel %vm477, %v2687, 0
        %v3140 = vsel %vm477, %v2688, 0
        %v3143 = vsel %vm477, %v2689, 0
        %v3146 = vsel %vm477, %v2690, 0
        %v3149 = vsel %vm477, %v2691, 0
        %v3152 = vsel %vm477, %v2692, 0
        %v3155 = vsel %vm477, %v2693, 0
        %v3158 = vsel %vm477, %v2694, 0
        %v3161 = vsel %vm477, %v2695, 0
        %v3164 = vsel %vm477, %v2696, 0
        %v3167 = vsel %vm477, %v2697, 0
        %v3170 = vsel %vm477, %v2698, 0
        %v3173 = vsel %vm477, %v2699, 0
        %v3176 = vsel %vm477, %v2700, 0
        %v3179 = vsel %vm477, %v2701, 0
        %v3182 = vsel %vm477, %v2702, 0
        %v3185 = vsel %vm477, %v2703, 0
        %v3188 = vsel %vm477, %v2704, 0
        %v3191 = vsel %vm477, %v2705, 0
        %v3194 = vsel %vm477, %v2706, 0
        %v3197 = vsel %vm477, %v2707, 0
        %v3200 = vsel %vm477, %v2708, 0
        %v3203 = vsel %vm477, %v2709, 0
        %v3206 = vsel %vm477, %v2710, 0
        %v3209 = vsel %vm477, %v2711, 0
        %v3212 = vsel %vm477, %v2712, 0
        %v3215 = vsel %vm477, %v2713, 0
        %v3218 = vsel %vm477, %v2714, 0
        %v3221 = vsel %vm477, %v2715, 0
        %v3224 = vsel %vm477, %v2716, 0
        %v3227 = vsel %vm477, %v2717, 0
        %v3230 = vsel %vm477, %v2718, 0
        %v3233 = vsel %vm477, %v2719, 0
        %v3236 = vsel %vm477, %v2720, 0
        %v3239 = vsel %vm477, %v2721, 0
        %v3242 = vsel %vm477, %v2722, 0
        %v3245 = vsel %vm477, %v2723, 0
        %v3248 = vsel %vm477, %v2724, 0
        %v3251 = vsel %vm477, %v2725, 0
        %v3254 = vsel %vm477, %v2726, 0
        %v3257 = vsel %vm477, %v2727, 0
        %v3260 = vsel %vm477, %v2728, 0
        %v3263 = vsel %vm477, %v2729, 0
        %v3266 = vsel %vm477, %v2730, 0
        %v3269 = vsel %vm477, %v2731, 0
        %v3272 = vsel %vm477, %v2732, 0
        %v3275 = vsel %vm477, %v2733, 0
        %v3278 = vsel %vm477, %v2734, 0
        %v3281 = vsel %vm477, %v2735, 0
        %v3284 = vsel %vm477, %v2736, 0
        %v3287 = vsel %vm477, %v2737, 0
        %v3290 = vsel %vm477, %v2738, 0
        %v3293 = vsel %vm477, %v2739, 0
        %v3296 = vsel %vm477, %v2740, 0
        %v3299 = vsel %vm477, %v2741, 0
        %v3302 = vsel %vm477, %v2742, 0
        %v3305 = vsel %vm477, %v2743, 0
        %v3308 = vsel %vm477, %v2744, 0
        %v3311 = vsel %vm477, %v2745, 0
        %v3314 = vsel %vm477, %v2746, 0
        %v3317 = vsel %vm477, %v2747, 0
        %v3320 = vsel %vm477, %v2748, 0
        %v3323 = vsel %vm477, %v2749, 0
        %v3326 = vsel %vm477, %v2750, 0
        %v3329 = vsel %vm477, %v2751, 0
        %v3332 = vsel %vm477, %v2752, 0
        %v3335 = vsel %vm477, %v2753, 0
        %v3338 = vsel %vm477, %v2754, 0
        %v3341 = vsel %vm477, %v2755, 0
        %v3344 = vsel %vm477, %v2756, 0
        %v3347 = vsel %vm477, %v2757, 0
        %v3350 = vsel %vm477, %v2758, 0
        %v3353 = vsel %vm477, %v2759, 0
        %v3356 = vsel %vm477, %v2760, 0
        %v3359 = vsel %vm477, %v2761, 0
        %v3362 = vsel %vm477, %v2762, 0
        %v3365 = vsel %vm477, %v2763, 0
        %v3368 = vsel %vm477, %v2764, 0
        %v3371 = vsel %vm477, %v2765, 0
        %v3374 = vsel %vm477, %v2766, 0
        %v3377 = vsel %vm477, %v2767, 0
        %v3380 = vsel %vm477, %v2768, 0
        %v3383 = vsel %vm477, %v2769, 0
        %v3386 = vsel %vm477, %v2770, 0
        %v3389 = vsel %vm477, %v2771, 0
        %v3392 = vsel %vm477, %v2772, 0
        %v3395 = vsel %vm477, %v2773, 0
        %v3398 = vsel %vm477, %v2774, 0
        %v3401 = vsel %vm477, %v2775, 0
        %v3404 = vsel %vm477, %v2776, 0
        %v3407 = vsel %vm477, %v2777, 0
        %v3410 = vsel %vm477, %v2778, 0
        %v3413 = vsel %vm477, %v2779, 0
        %v3416 = vsel %vm477, %v2780, 0
        %v3419 = vsel %vm477, %v2781, 0
        %v3422 = vsel %vm477, %v2782, 0
        %v3425 = vsel %vm477, %v2783, 0
        %v3428 = vsel %vm477, %v2784, 0
        %v3431 = vsel %vm477, %v2785, 0
        %v3434 = vsel %vm477, %v2786, 0
        %v3437 = vsel %vm477, %v2787, 0
        %v3440 = vsel %vm477, %v2788, 0
        %v3443 = vsel %vm477, %v2789, 0
        %v3446 = vsel %vm477, %v2790, 0
        %v3449 = vsel %vm477, %v2791, 0
        %v3452 = vsel %vm477, %v2792, 0
        %v3455 = vsel %vm477, %v2793, 0
        %v3458 = vsel %vm477, %v2794, 0
        %v3461 = vsel %vm477, %v2795, 0
        %v3464 = vsel %vm477, %v2796, 0
        %v3467 = vsel %vm477, %v2797, 0
        %v3470 = vsel %vm477, %v2798, 0
        %v3473 = vsel %vm477, %v2799, 0
        %v3476 = vsel %vm477, %v2800, 0
        %v3479 = vsel %vm477, %v2801, 0
        %v3482 = vsel %vm477, %v2802, 0
        %v3485 = vsel %vm477, %v2803, 0
        %v3488 = vsel %vm477, %v2804, 0
        %v3491 = vsel %vm477, %v2805, 0
        %v3494 = vsel %vm477, %v2806, 0
        %v3497 = vsel %vm477, %v2807, 0
        %v3500 = vsel %vm477, %v2808, 0
        %v3503 = vsel %vm477, %v2809, 0
        %v3506 = vsel %vm477, %v2810, 0
        %v3509 = vsel %vm477, %v2811, 0
        %v3512 = vsel %vm477, %v2812, 0
        %v3515 = vsel %vm477, %v2813, 0
        %v3518 = vsel %vm477, %v2814, 0
        %v3521 = vsel %vm477, %v2815, 0
        %v3524 = vsel %vm477, %v2816, 0
        %v3527 = vsel %vm477, %v2817, 0
        %v3530 = vsel %vm477, %v2818, 0
        %v3533 = vsel %vm477, %v2819, 0
        %v3536 = vsel %vm477, %v2820, 0
        %v3539 = vsel %vm477, %v2821, 0
        %v3542 = vsel %vm477, %v2822, 0
        %v3545 = vsel %vm477, %v2823, 0
        %v3548 = vsel %vm477, %v2824, 0
        %v3551 = vsel %vm477, %v2825, 0
        %v3554 = vsel %vm477, %v2826, 0
        %v3557 = vsel %vm477, %v2827, 0
        %v3560 = vsel %vm477, %v2828, 0
        %v3563 = vsel %vm477, %v2829, 0
        %v3566 = vsel %vm477, %v2830, 0
        %v3569 = vsel %vm477, %v2831, 0
        %v3572 = vsel %vm477, %v2832, 0
        %v3575 = vsel %vm477, %v2833, 0
        %v3578 = vsel %vm477, %v2834, 0
        %v3581 = vsel %vm477, %v2835, 0
        %v3584 = vsel %vm477, %v2836, 0
        %v3587 = vsel %vm477, %v2837, 0
        %v3590 = vsel %vm477, %v2838, 0
        %v3593 = vsel %vm477, %v2839, 0
        %v3596 = vsel %vm477, %v2840, 0
        %v3599 = vsel %vm477, %v2841, 0
        %v3602 = vsel %vm477, %v2842, 0
        %v3605 = vsel %vm477, %v2843, 0
        %v3608 = vsel %vm477, %v2844, 0
        %v3611 = vsel %vm477, %v2845, 0
        %v3614 = vsel %vm477, %v2846, 0
        %3616 = vmatprep.subr.mxu0 0.0
        %3617 = vmatpush1.msra.mxu0 %v2847
        %3618 = vmatprep.subr.mxu0 0.0
        %3619 = vmatpush1.msra.mxu0 0.0
        %3620 = vmatprep.subr.mxu0 0.0
        %3621 = vmatpush1.msra.mxu0 0.0
        %3622 = vmatprep.subr.mxu0 0.0
        %3623 = vmatpush1.msra.mxu0 0.0
        %3624 = vmatprep.subr.mxu0 0.0
        %3625 = vmatpush1.msra.mxu0 0.0
        %3626 = vmatprep.subr.mxu0 0.0
        %3627 = vmatpush1.msra.mxu0 0.0
        %3628 = vmatprep.subr.mxu0 0.0
        %3629 = vmatpush1.msra.mxu0 0.0
        %3630 = vmatprep.subr.mxu0 0.0
        %3631 = vmatpush1.msra.mxu0 0.0
        %3632 = vmatprep.subr.mxu0 0.0
        %3633 = vmatpush1.msra.mxu0 0.0
        %3634 = vmatprep.subr.mxu0 0.0
        %3635 = vmatpush1.msra.mxu0 0.0
        %3636 = vmatprep.subr.mxu0 0.0
        %3637 = vmatpush1.msra.mxu0 0.0
        %3638 = vmatprep.subr.mxu0 0.0
        %3639 = vmatpush1.msra.mxu0 0.0
        %3640 = vmatprep.subr.mxu0 0.0
        %3641 = vmatpush1.msra.mxu0 0.0
        %3642 = vmatprep.subr.mxu0 0.0
        %3643 = vmatpush1.msra.mxu0 0.0
        %3644 = vmatprep.subr.mxu0 0.0
        %3645 = vmatpush1.msra.mxu0 0.0
        %3646 = vmatprep.subr.mxu0 0.0
        %3647 = vmatpush1.msra.mxu0 0.0
        %3648 = vmatprep.subr.mxu0 0.0
        %3649 = vmatpush1.msra.mxu0 0.0
        %3650 = vmatprep.subr.mxu0 0.0
        %3651 = vmatpush1.msra.mxu0 0.0
        %3652 = vmatprep.subr.mxu0 0.0
        %3653 = vmatpush1.msra.mxu0 0.0
        %3654 = vmatprep.subr.mxu0 0.0
        %3655 = vmatpush1.msra.mxu0 0.0
        %3656 = vmatprep.subr.mxu0 0.0
        %3657 = vmatpush1.msra.mxu0 0.0
        %3658 = vmatprep.subr.mxu0 0.0
        %3659 = vmatpush1.msra.mxu0 0.0
        %3660 = vmatprep.subr.mxu0 0.0
        %3661 = vmatpush1.msra.mxu0 0.0
        %3662 = vmatprep.subr.mxu0 0.0
        %3663 = vmatpush1.msra.mxu0 0.0
        %3664 = vmatprep.subr.mxu0 0.0
        %3665 = vmatpush1.msra.mxu0 0.0
        %3666 = vmatprep.subr.mxu0 0.0
        %3667 = vmatpush1.msra.mxu0 0.0
        %3668 = vmatprep.subr.mxu0 0.0
        %3669 = vmatpush1.msra.mxu0 0.0
        %3670 = vmatprep.subr.mxu0 0.0
        %3671 = vmatpush1.msra.mxu0 0.0
        %3672 = vmatprep.subr.mxu0 0.0
        %3673 = vmatpush1.msra.mxu0 0.0
        %3674 = vmatprep.subr.mxu0 0.0
        %3675 = vmatpush1.msra.mxu0 0.0
        %3676 = vmatprep.subr.mxu0 0.0
        %3677 = vmatpush1.msra.mxu0 0.0
        %3678 = vmatprep.subr.mxu0 0.0
        %3679 = vmatpush1.msra.mxu0 0.0
        %3680 = vmatprep.mubr.f32.mxu0 0.0
        %3681 = vmatmul.mubr.f32.gmra.mrb[0].mxu0 %v2849
        %v3682 = vpop.f32.mrb[0].mxu0
        %v3683 = vadd.f32 0.0, %v3682
        %v3684 = vpop.f32.mrb[0].mxu0
        %3685 = vmatprep.mubr.f32.mxu0 0.0
        %3686 = vmatmul.mubr.f32.gmra.mrb[0].mxu0 %v2852
        %v3687 = vpop.f32.mrb[0].mxu0
        %v3688 = vadd.f32 0.0, %v3687
        %v3689 = vpop.f32.mrb[0].mxu0
        %3690 = vmatprep.mubr.f32.mxu0 0.0
        %3691 = vmatmul.mubr.f32.gmra.mrb[0].mxu0 %v2855
        %v3692 = vpop.f32.mrb[0].mxu0
        %v3693 = vadd.f32 0.0, %v3692
        %v3694 = vpop.f32.mrb[0].mxu0
        %3695 = vmatprep.mubr.f32.mxu0 0.0
        %3696 = vmatmul.mubr.f32.gmra.mrb[0].mxu0 %v2858
        %v3697 = vpop.f32.mrb[0].mxu0
        %v3698 = vadd.f32 0.0, %v3697
        %v3699 = vpop.f32.mrb[0].mxu0
        %3700 = vmatprep.mubr.f32.mxu0 0.0
        %3701 = vmatmul.mubr.f32.gmra.mrb[0].mxu0 %v2861
        %v3702 = vpop.f32.mrb[0].mxu0
        %v3703 = vadd.f32 0.0, %v3702
        %v3704 = vpop.f32.mrb[0].mxu0
        %3705 = vmatprep.mubr.f32.mxu0 0.0
        %3706 = vmatmul.mubr.f32.gmra.mrb[0].mxu0 %v2864
        %v3707 = vpop.f32.mrb[0].mxu0
        %v3708 = vadd.f32 0.0, %v3707
        %v3709 = vpop.f32.mrb[0].mxu0
        %3710 = vmatprep.mubr.f32.mxu0 0.0
        %3711 = vmatmul.mubr.f32.gmra.mrb[0].mxu0 %v2867
        %v3712 = vpop.f32.mrb[0].mxu0
        %v3713 = vadd.f32 0.0, %v3712
        %v3714 = vpop.f32.mrb[0].mxu0
        %3715 = vmatprep.mubr.f32.mxu0 0.0
        %3716 = vmatmul.mubr.f32.gmra.mrb[0].mxu0 %v2870
        %v3717 = vpop.f32.mrb[0].mxu0
        %v3718 = vadd.f32 0.0, %v3717
        %v3719 = vpop.f32.mrb[0].mxu0
        %3720 = vmatprep.mubr.f32.mxu0 0.0
        %3721 = vmatmul.mubr.f32.gmra.mrb[0].mxu0 %v2873
        %v3722 = vpop.f32.mrb[0].mxu0
        %v3723 = vadd.f32 0.0, %v3722
        %v3724 = vpop.f32.mrb[0].mxu0
        %3725 = vmatprep.mubr.f32.mxu0 0.0
        %3726 = vmatmul.mubr.f32.gmra.mrb[0].mxu0 %v2876
        %v3727 = vpop.f32.mrb[0].mxu0
        %v3728 = vadd.f32 0.0, %v3727
        %v3729 = vpop.f32.mrb[0].mxu0
        %3730 = vmatprep.mubr.f32.mxu0 0.0
        %3731 = vmatmul.mubr.f32.gmra.mrb[0].mxu0 %v2879
        %v3732 = vpop.f32.mrb[0].mxu0
        %v3733 = vadd.f32 0.0, %v3732
        %v3734 = vpop.f32.mrb[0].mxu0
        %3735 = vmatprep.mubr.f32.mxu0 0.0
        %3736 = vmatmul.mubr.f32.gmra.mrb[0].mxu0 %v2882
        %v3737 = vpop.f32.mrb[0].mxu0
        %v3738 = vadd.f32 0.0, %v3737
        %v3739 = vpop.f32.mrb[0].mxu0
        %3740 = vmatprep.mubr.f32.mxu0 0.0
        %3741 = vmatmul.mubr.f32.gmra.mrb[0].mxu0 %v2885
        %v3742 = vpop.f32.mrb[0].mxu0
        %v3743 = vadd.f32 0.0, %v3742
        %v3744 = vpop.f32.mrb[0].mxu0
        %3745 = vmatprep.mubr.f32.mxu0 0.0
        %3746 = vmatmul.mubr.f32.gmra.mrb[0].mxu0 %v2888
        %v3747 = vpop.f32.mrb[0].mxu0
        %v3748 = vadd.f32 0.0, %v3747
        %v3749 = vpop.f32.mrb[0].mxu0
        %3750 = vmatprep.mubr.f32.mxu0 0.0
        %3751 = vmatmul.mubr.f32.gmra.mrb[0].mxu0 %v2891
        %v3752 = vpop.f32.mrb[0].mxu0
        %v3753 = vadd.f32 0.0, %v3752
        %v3754 = vpop.f32.mrb[0].mxu0
        %3755 = vmatprep.mubr.f32.mxu0 0.0
        %3756 = vmatmul.mubr.f32.gmra.mrb[0].mxu0 %v2894
        %v3757 = vpop.f32.mrb[0].mxu0
        %v3758 = vadd.f32 0.0, %v3757
        %v3759 = vpop.f32.mrb[0].mxu0
        %3760 = vmatprep.mubr.f32.mxu0 0.0
        %3761 = vmatmul.mubr.f32.gmra.mrb[0].mxu0 %v2897
        %v3762 = vpop.f32.mrb[0].mxu0
        %v3763 = vadd.f32 0.0, %v3762
        %v3764 = vpop.f32.mrb[0].mxu0
        %3765 = vmatprep.mubr.f32.mxu0 0.0
        %3766 = vmatmul.mubr.f32.gmra.mrb[0].mxu0 %v2900
        %v3767 = vpop.f32.mrb[0].mxu0
        %v3768 = vadd.f32 0.0, %v3767
        %v3769 = vpop.f32.mrb[0].mxu0
        %3770 = vmatprep.mubr.f32.mxu0 0.0
        %3771 = vmatmul.mubr.f32.gmra.mrb[0].mxu0 %v2903
        %v3772 = vpop.f32.mrb[0].mxu0
        %v3773 = vadd.f32 0.0, %v3772
        %v3774 = vpop.f32.mrb[0].mxu0
        %3775 = vmatprep.mubr.f32.mxu0 0.0
        %3776 = vmatmul.mubr.f32.gmra.mrb[0].mxu0 %v2906
        %v3777 = vpop.f32.mrb[0].mxu0
        %v3778 = vadd.f32 0.0, %v3777
        %v3779 = vpop.f32.mrb[0].mxu0
        %3780 = vmatprep.mubr.f32.mxu0 0.0
        %3781 = vmatmul.mubr.f32.gmra.mrb[0].mxu0 %v2909
        %v3782 = vpop.f32.mrb[0].mxu0
        %v3783 = vadd.f32 0.0, %v3782
        %v3784 = vpop.f32.mrb[0].mxu0
        %3785 = vmatprep.mubr.f32.mxu0 0.0
        %3786 = vmatmul.mubr.f32.gmra.mrb[0].mxu0 %v2912
        %v3787 = vpop.f32.mrb[0].mxu0
        %v3788 = vadd.f32 0.0, %v3787
        %v3789 = vpop.f32.mrb[0].mxu0
        %3790 = vmatprep.mubr.f32.mxu0 0.0
        %3791 = vmatmul.mubr.f32.gmra.mrb[0].mxu0 %v2915
        %v3792 = vpop.f32.mrb[0].mxu0
        %v3793 = vadd.f32 0.0, %v3792
        %v3794 = vpop.f32.mrb[0].mxu0
        %3795 = vmatprep.mubr.f32.mxu0 0.0
        %3796 = vmatmul.mubr.f32.gmra.mrb[0].mxu0 %v2918
        %v3797 = vpop.f32.mrb[0].mxu0
        %v3798 = vadd.f32 0.0, %v3797
        %v3799 = vpop.f32.mrb[0].mxu0
        %3800 = vmatprep.mubr.f32.mxu0 0.0
        %3801 = vmatmul.mubr.f32.gmra.mrb[0].mxu0 %v2921
        %v3802 = vpop.f32.mrb[0].mxu0
        %v3803 = vadd.f32 0.0, %v3802
        %v3804 = vpop.f32.mrb[0].mxu0
        %3805 = vmatprep.mubr.f32.mxu0 0.0
        %3806 = vmatmul.mubr.f32.gmra.mrb[0].mxu0 %v2924
        %v3807 = vpop.f32.mrb[0].mxu0
        %v3808 = vadd.f32 0.0, %v3807
        %v3809 = vpop.f32.mrb[0].mxu0
        %3810 = vmatprep.mubr.f32.mxu0 0.0
        %3811 = vmatmul.mubr.f32.gmra.mrb[0].mxu0 %v2927
        %v3812 = vpop.f32.mrb[0].mxu0
        %v3813 = vadd.f32 0.0, %v3812
        %v3814 = vpop.f32.mrb[0].mxu0
        %3815 = vmatprep.mubr.f32.mxu0 0.0
        %3816 = vmatmul.mubr.f32.gmra.mrb[0].mxu0 %v2930
        %v3817 = vpop.f32.mrb[0].mxu0
        %v3818 = vadd.f32 0.0, %v3817
        %v3819 = vpop.f32.mrb[0].mxu0
        %3820 = vmatprep.mubr.f32.mxu0 0.0
        %3821 = vmatmul.mubr.f32.gmra.mrb[0].mxu0 %v2933
        %v3822 = vpop.f32.mrb[0].mxu0
        %v3823 = vadd.f32 0.0, %v3822
        %v3824 = vpop.f32.mrb[0].mxu0
        %3825 = vmatprep.mubr.f32.mxu0 0.0
        %3826 = vmatmul.mubr.f32.gmra.mrb[0].mxu0 %v2936
        %v3827 = vpop.f32.mrb[0].mxu0
        %v3828 = vadd.f32 0.0, %v3827
        %v3829 = vpop.f32.mrb[0].mxu0
        %3830 = vmatprep.mubr.f32.mxu0 0.0
        %3831 = vmatmul.mubr.f32.gmra.mrb[0].mxu0 %v2939
        %v3832 = vpop.f32.mrb[0].mxu0
        %v3833 = vadd.f32 0.0, %v3832
        %v3834 = vpop.f32.mrb[0].mxu0
        %3835 = vmatprep.mubr.f32.mxu0 0.0
        %3836 = vmatmul.mubr.f32.gmra.mrb[0].mxu0 %v2942
        %v3837 = vpop.f32.mrb[0].mxu0
        %v3838 = vadd.f32 0.0, %v3837
        %v3839 = vpop.f32.mrb[0].mxu0
        %3840 = vmatprep.mubr.f32.mxu0 0.0
        %3841 = vmatmul.mubr.f32.gmra.mrb[0].mxu0 %v2945
        %v3842 = vpop.f32.mrb[0].mxu0
        %v3843 = vadd.f32 0.0, %v3842
        %v3844 = vpop.f32.mrb[0].mxu0
        %3845 = vmatprep.mubr.f32.mxu0 0.0
        %3846 = vmatmul.mubr.f32.gmra.mrb[0].mxu0 %v2948
        %v3847 = vpop.f32.mrb[0].mxu0
        %v3848 = vadd.f32 0.0, %v3847
        %v3849 = vpop.f32.mrb[0].mxu0
        %3850 = vmatprep.mubr.f32.mxu0 0.0
        %3851 = vmatmul.mubr.f32.gmra.mrb[0].mxu0 %v2951
        %v3852 = vpop.f32.mrb[0].mxu0
        %v3853 = vadd.f32 0.0, %v3852
        %v3854 = vpop.f32.mrb[0].mxu0
        %3855 = vmatprep.mubr.f32.mxu0 0.0
        %3856 = vmatmul.mubr.f32.gmra.mrb[0].mxu0 %v2954
        %v3857 = vpop.f32.mrb[0].mxu0
        %v3858 = vadd.f32 0.0, %v3857
        %v3859 = vpop.f32.mrb[0].mxu0
        %3860 = vmatprep.mubr.f32.mxu0 0.0
        %3861 = vmatmul.mubr.f32.gmra.mrb[0].mxu0 %v2957
        %v3862 = vpop.f32.mrb[0].mxu0
        %v3863 = vadd.f32 0.0, %v3862
        %v3864 = vpop.f32.mrb[0].mxu0
        %3865 = vmatprep.mubr.f32.mxu0 0.0
        %3866 = vmatmul.mubr.f32.gmra.mrb[0].mxu0 %v2960
        %v3867 = vpop.f32.mrb[0].mxu0
        %v3868 = vadd.f32 0.0, %v3867
        %v3869 = vpop.f32.mrb[0].mxu0
        %3870 = vmatprep.mubr.f32.mxu0 0.0
        %3871 = vmatmul.mubr.f32.gmra.mrb[0].mxu0 %v2963
        %v3872 = vpop.f32.mrb[0].mxu0
        %v3873 = vadd.f32 0.0, %v3872
        %v3874 = vpop.f32.mrb[0].mxu0
        %3875 = vmatprep.mubr.f32.mxu0 0.0
        %3876 = vmatmul.mubr.f32.gmra.mrb[0].mxu0 %v2966
        %v3877 = vpop.f32.mrb[0].mxu0
        %v3878 = vadd.f32 0.0, %v3877
        %v3879 = vpop.f32.mrb[0].mxu0
        %3880 = vmatprep.mubr.f32.mxu0 0.0
        %3881 = vmatmul.mubr.f32.gmra.mrb[0].mxu0 %v2969
        %v3882 = vpop.f32.mrb[0].mxu0
        %v3883 = vadd.f32 0.0, %v3882
        %v3884 = vpop.f32.mrb[0].mxu0
        %3885 = vmatprep.mubr.f32.mxu0 0.0
        %3886 = vmatmul.mubr.f32.gmra.mrb[0].mxu0 %v2972
        %v3887 = vpop.f32.mrb[0].mxu0
        %v3888 = vadd.f32 0.0, %v3887
        %v3889 = vpop.f32.mrb[0].mxu0
        %3890 = vmatprep.mubr.f32.mxu0 0.0
        %3891 = vmatmul.mubr.f32.gmra.mrb[0].mxu0 %v2975
        %v3892 = vpop.f32.mrb[0].mxu0
        %v3893 = vadd.f32 0.0, %v3892
        %v3894 = vpop.f32.mrb[0].mxu0
        %3895 = vmatprep.mubr.f32.mxu0 0.0
        %3896 = vmatmul.mubr.f32.gmra.mrb[0].mxu0 %v2978
        %v3897 = vpop.f32.mrb[0].mxu0
        %v3898 = vadd.f32 0.0, %v3897
        %v3899 = vpop.f32.mrb[0].mxu0
        %3900 = vmatprep.mubr.f32.mxu0 0.0
        %3901 = vmatmul.mubr.f32.gmra.mrb[0].mxu0 %v2981
        %v3902 = vpop.f32.mrb[0].mxu0
        %v3903 = vadd.f32 0.0, %v3902
        %v3904 = vpop.f32.mrb[0].mxu0
        %3905 = vmatprep.mubr.f32.mxu0 0.0
        %3906 = vmatmul.mubr.f32.gmra.mrb[0].mxu0 %v2984
        %v3907 = vpop.f32.mrb[0].mxu0
        %v3908 = vadd.f32 0.0, %v3907
        %v3909 = vpop.f32.mrb[0].mxu0
        %3910 = vmatprep.mubr.f32.mxu0 0.0
        %3911 = vmatmul.mubr.f32.gmra.mrb[0].mxu0 %v2987
        %v3912 = vpop.f32.mrb[0].mxu0
        %v3913 = vadd.f32 0.0, %v3912
        %v3914 = vpop.f32.mrb[0].mxu0
        %3915 = vmatprep.mubr.f32.mxu0 0.0
        %3916 = vmatmul.mubr.f32.gmra.mrb[0].mxu0 %v2990
        %v3917 = vpop.f32.mrb[0].mxu0
        %v3918 = vadd.f32 0.0, %v3917
        %v3919 = vpop.f32.mrb[0].mxu0
        %3920 = vmatprep.mubr.f32.mxu0 0.0
        %3921 = vmatmul.mubr.f32.gmra.mrb[0].mxu0 %v2993
        %v3922 = vpop.f32.mrb[0].mxu0
        %v3923 = vadd.f32 0.0, %v3922
        %v3924 = vpop.f32.mrb[0].mxu0
        %3925 = vmatprep.mubr.f32.mxu0 0.0
        %3926 = vmatmul.mubr.f32.gmra.mrb[0].mxu0 %v2996
        %v3927 = vpop.f32.mrb[0].mxu0
        %v3928 = vadd.f32 0.0, %v3927
        %v3929 = vpop.f32.mrb[0].mxu0
        %3930 = vmatprep.mubr.f32.mxu0 0.0
        %3931 = vmatmul.mubr.f32.gmra.mrb[0].mxu0 %v2999
        %v3932 = vpop.f32.mrb[0].mxu0
        %v3933 = vadd.f32 0.0, %v3932
        %v3934 = vpop.f32.mrb[0].mxu0
        %3935 = vmatprep.mubr.f32.mxu0 0.0
        %3936 = vmatmul.mubr.f32.gmra.mrb[0].mxu0 %v3002
        %v3937 = vpop.f32.mrb[0].mxu0
        %v3938 = vadd.f32 0.0, %v3937
        %v3939 = vpop.f32.mrb[0].mxu0
        %3940 = vmatprep.mubr.f32.mxu0 0.0
        %3941 = vmatmul.mubr.f32.gmra.mrb[0].mxu0 %v3005
        %v3942 = vpop.f32.mrb[0].mxu0
        %v3943 = vadd.f32 0.0, %v3942
        %v3944 = vpop.f32.mrb[0].mxu0
        %3945 = vmatprep.mubr.f32.mxu0 0.0
        %3946 = vmatmul.mubr.f32.gmra.mrb[0].mxu0 %v3008
        %v3947 = vpop.f32.mrb[0].mxu0
        %v3948 = vadd.f32 0.0, %v3947
        %v3949 = vpop.f32.mrb[0].mxu0
        %3950 = vmatprep.mubr.f32.mxu0 0.0
        %3951 = vmatmul.mubr.f32.gmra.mrb[0].mxu0 %v3011
        %v3952 = vpop.f32.mrb[0].mxu0
        %v3953 = vadd.f32 0.0, %v3952
        %v3954 = vpop.f32.mrb[0].mxu0
        %3955 = vmatprep.mubr.f32.mxu0 0.0
        %3956 = vmatmul.mubr.f32.gmra.mrb[0].mxu0 %v3014
        %v3957 = vpop.f32.mrb[0].mxu0
        %v3958 = vadd.f32 0.0, %v3957
        %v3959 = vpop.f32.mrb[0].mxu0
        %3960 = vmatprep.mubr.f32.mxu0 0.0
        %3961 = vmatmul.mubr.f32.gmra.mrb[0].mxu0 %v3017
        %v3962 = vpop.f32.mrb[0].mxu0
        %v3963 = vadd.f32 0.0, %v3962
        %v3964 = vpop.f32.mrb[0].mxu0
        %3965 = vmatprep.mubr.f32.mxu0 0.0
        %3966 = vmatmul.mubr.f32.gmra.mrb[0].mxu0 %v3020
        %v3967 = vpop.f32.mrb[0].mxu0
        %v3968 = vadd.f32 0.0, %v3967
        %v3969 = vpop.f32.mrb[0].mxu0
        %3970 = vmatprep.mubr.f32.mxu0 0.0
        %3971 = vmatmul.mubr.f32.gmra.mrb[0].mxu0 %v3023
        %v3972 = vpop.f32.mrb[0].mxu0
        %v3973 = vadd.f32 0.0, %v3972
        %v3974 = vpop.f32.mrb[0].mxu0
        %3975 = vmatprep.mubr.f32.mxu0 0.0
        %3976 = vmatmul.mubr.f32.gmra.mrb[0].mxu0 %v3026
        %v3977 = vpop.f32.mrb[0].mxu0
        %v3978 = vadd.f32 0.0, %v3977
        %v3979 = vpop.f32.mrb[0].mxu0
        %3980 = vmatprep.mubr.f32.mxu0 0.0
        %3981 = vmatmul.mubr.f32.gmra.mrb[0].mxu0 %v3029
        %v3982 = vpop.f32.mrb[0].mxu0
        %v3983 = vadd.f32 0.0, %v3982
        %v3984 = vpop.f32.mrb[0].mxu0
        %3985 = vmatprep.mubr.f32.mxu0 0.0
        %3986 = vmatmul.mubr.f32.gmra.mrb[0].mxu0 %v3032
        %v3987 = vpop.f32.mrb[0].mxu0
        %v3988 = vadd.f32 0.0, %v3987
        %v3989 = vpop.f32.mrb[0].mxu0
        %3990 = vmatprep.mubr.f32.mxu0 0.0
        %3991 = vmatmul.mubr.f32.gmra.mrb[0].mxu0 %v3035
        %v3992 = vpop.f32.mrb[0].mxu0
        %v3993 = vadd.f32 0.0, %v3992
        %v3994 = vpop.f32.mrb[0].mxu0
        %3995 = vmatprep.mubr.f32.mxu0 0.0
        %3996 = vmatmul.mubr.f32.gmra.mrb[0].mxu0 %v3038
        %v3997 = vpop.f32.mrb[0].mxu0
        %v3998 = vadd.f32 0.0, %v3997
        %v3999 = vpop.f32.mrb[0].mxu0
        %4000 = vmatprep.mubr.f32.mxu0 0.0
        %4001 = vmatmul.mubr.f32.gmra.mrb[0].mxu0 %v3041
        %v4002 = vpop.f32.mrb[0].mxu0
        %v4003 = vadd.f32 0.0, %v4002
        %v4004 = vpop.f32.mrb[0].mxu0
        %4005 = vmatprep.mubr.f32.mxu0 0.0
        %4006 = vmatmul.mubr.f32.gmra.mrb[0].mxu0 %v3044
        %v4007 = vpop.f32.mrb[0].mxu0
        %v4008 = vadd.f32 0.0, %v4007
        %v4009 = vpop.f32.mrb[0].mxu0
        %4010 = vmatprep.mubr.f32.mxu0 0.0
        %4011 = vmatmul.mubr.f32.gmra.mrb[0].mxu0 %v3047
        %v4012 = vpop.f32.mrb[0].mxu0
        %v4013 = vadd.f32 0.0, %v4012
        %v4014 = vpop.f32.mrb[0].mxu0
        %4015 = vmatprep.mubr.f32.mxu0 0.0
        %4016 = vmatmul.mubr.f32.gmra.mrb[0].mxu0 %v3050
        %v4017 = vpop.f32.mrb[0].mxu0
        %v4018 = vadd.f32 0.0, %v4017
        %v4019 = vpop.f32.mrb[0].mxu0
        %4020 = vmatprep.mubr.f32.mxu0 0.0
        %4021 = vmatmul.mubr.f32.gmra.mrb[0].mxu0 %v3053
        %v4022 = vpop.f32.mrb[0].mxu0
        %v4023 = vadd.f32 0.0, %v4022
        %v4024 = vpop.f32.mrb[0].mxu0
        %4025 = vmatprep.mubr.f32.mxu0 0.0
        %4026 = vmatmul.mubr.f32.gmra.mrb[0].mxu0 %v3056
        %v4027 = vpop.f32.mrb[0].mxu0
        %v4028 = vadd.f32 0.0, %v4027
        %v4029 = vpop.f32.mrb[0].mxu0
        %4030 = vmatprep.mubr.f32.mxu0 0.0
        %4031 = vmatmul.mubr.f32.gmra.mrb[0].mxu0 %v3059
        %v4032 = vpop.f32.mrb[0].mxu0
        %v4033 = vadd.f32 0.0, %v4032
        %v4034 = vpop.f32.mrb[0].mxu0
        %4035 = vmatprep.mubr.f32.mxu0 0.0
        %4036 = vmatmul.mubr.f32.gmra.mrb[0].mxu0 %v3062
        %v4037 = vpop.f32.mrb[0].mxu0
        %v4038 = vadd.f32 0.0, %v4037
        %v4039 = vpop.f32.mrb[0].mxu0
        %4040 = vmatprep.mubr.f32.mxu0 0.0
        %4041 = vmatmul.mubr.f32.gmra.mrb[0].mxu0 %v3065
        %v4042 = vpop.f32.mrb[0].mxu0
        %v4043 = vadd.f32 0.0, %v4042
        %v4044 = vpop.f32.mrb[0].mxu0
        %4045 = vmatprep.mubr.f32.mxu0 0.0
        %4046 = vmatmul.mubr.f32.gmra.mrb[0].mxu0 %v3068
        %v4047 = vpop.f32.mrb[0].mxu0
        %v4048 = vadd.f32 0.0, %v4047
        %v4049 = vpop.f32.mrb[0].mxu0
        %4050 = vmatprep.mubr.f32.mxu0 0.0
        %4051 = vmatmul.mubr.f32.gmra.mrb[0].mxu0 %v3071
        %v4052 = vpop.f32.mrb[0].mxu0
        %v4053 = vadd.f32 0.0, %v4052
        %v4054 = vpop.f32.mrb[0].mxu0
        %4055 = vmatprep.mubr.f32.mxu0 0.0
        %4056 = vmatmul.mubr.f32.gmra.mrb[0].mxu0 %v3074
        %v4057 = vpop.f32.mrb[0].mxu0
        %v4058 = vadd.f32 0.0, %v4057
        %v4059 = vpop.f32.mrb[0].mxu0
        %4060 = vmatprep.mubr.f32.mxu0 0.0
        %4061 = vmatmul.mubr.f32.gmra.mrb[0].mxu0 %v3077
        %v4062 = vpop.f32.mrb[0].mxu0
        %v4063 = vadd.f32 0.0, %v4062
        %v4064 = vpop.f32.mrb[0].mxu0
        %4065 = vmatprep.mubr.f32.mxu0 0.0
        %4066 = vmatmul.mubr.f32.gmra.mrb[0].mxu0 %v3080
        %v4067 = vpop.f32.mrb[0].mxu0
        %v4068 = vadd.f32 0.0, %v4067
        %v4069 = vpop.f32.mrb[0].mxu0
        %4070 = vmatprep.mubr.f32.mxu0 0.0
        %4071 = vmatmul.mubr.f32.gmra.mrb[0].mxu0 %v3083
        %v4072 = vpop.f32.mrb[0].mxu0
        %v4073 = vadd.f32 0.0, %v4072
        %v4074 = vpop.f32.mrb[0].mxu0
        %4075 = vmatprep.mubr.f32.mxu0 0.0
        %4076 = vmatmul.mubr.f32.gmra.mrb[0].mxu0 %v3086
        %v4077 = vpop.f32.mrb[0].mxu0
        %v4078 = vadd.f32 0.0, %v4077
        %v4079 = vpop.f32.mrb[0].mxu0
        %4080 = vmatprep.mubr.f32.mxu0 0.0
        %4081 = vmatmul.mubr.f32.gmra.mrb[0].mxu0 %v3089
        %v4082 = vpop.f32.mrb[0].mxu0
        %v4083 = vadd.f32 0.0, %v4082
        %v4084 = vpop.f32.mrb[0].mxu0
        %4085 = vmatprep.mubr.f32.mxu0 0.0
        %4086 = vmatmul.mubr.f32.gmra.mrb[0].mxu0 %v3092
        %v4087 = vpop.f32.mrb[0].mxu0
        %v4088 = vadd.f32 0.0, %v4087
        %v4089 = vpop.f32.mrb[0].mxu0
        %4090 = vmatprep.mubr.f32.mxu0 0.0
        %4091 = vmatmul.mubr.f32.gmra.mrb[0].mxu0 %v3095
        %v4092 = vpop.f32.mrb[0].mxu0
        %v4093 = vadd.f32 0.0, %v4092
        %v4094 = vpop.f32.mrb[0].mxu0
        %4095 = vmatprep.mubr.f32.mxu0 0.0
        %4096 = vmatmul.mubr.f32.gmra.mrb[0].mxu0 %v3098
        %v4097 = vpop.f32.mrb[0].mxu0
        %v4098 = vadd.f32 0.0, %v4097
        %v4099 = vpop.f32.mrb[0].mxu0
        %4100 = vmatprep.mubr.f32.mxu0 0.0
        %4101 = vmatmul.mubr.f32.gmra.mrb[0].mxu0 %v3101
        %v4102 = vpop.f32.mrb[0].mxu0
        %v4103 = vadd.f32 0.0, %v4102
        %v4104 = vpop.f32.mrb[0].mxu0
        %4105 = vmatprep.mubr.f32.mxu0 0.0
        %4106 = vmatmul.mubr.f32.gmra.mrb[0].mxu0 %v3104
        %v4107 = vpop.f32.mrb[0].mxu0
        %v4108 = vadd.f32 0.0, %v4107
        %v4109 = vpop.f32.mrb[0].mxu0
        %4110 = vmatprep.mubr.f32.mxu0 0.0
        %4111 = vmatmul.mubr.f32.gmra.mrb[0].mxu0 %v3107
        %v4112 = vpop.f32.mrb[0].mxu0
        %v4113 = vadd.f32 0.0, %v4112
        %v4114 = vpop.f32.mrb[0].mxu0
        %4115 = vmatprep.mubr.f32.mxu0 0.0
        %4116 = vmatmul.mubr.f32.gmra.mrb[0].mxu0 %v3110
        %v4117 = vpop.f32.mrb[0].mxu0
        %v4118 = vadd.f32 0.0, %v4117
        %v4119 = vpop.f32.mrb[0].mxu0
        %4120 = vmatprep.mubr.f32.mxu0 0.0
        %4121 = vmatmul.mubr.f32.gmra.mrb[0].mxu0 %v3113
        %v4122 = vpop.f32.mrb[0].mxu0
        %v4123 = vadd.f32 0.0, %v4122
        %v4124 = vpop.f32.mrb[0].mxu0
        %4125 = vmatprep.mubr.f32.mxu0 0.0
        %4126 = vmatmul.mubr.f32.gmra.mrb[0].mxu0 %v3116
        %v4127 = vpop.f32.mrb[0].mxu0
        %v4128 = vadd.f32 0.0, %v4127
        %v4129 = vpop.f32.mrb[0].mxu0
        %4130 = vmatprep.mubr.f32.mxu0 0.0
        %4131 = vmatmul.mubr.f32.gmra.mrb[0].mxu0 %v3119
        %v4132 = vpop.f32.mrb[0].mxu0
        %v4133 = vadd.f32 0.0, %v4132
        %v4134 = vpop.f32.mrb[0].mxu0
        %4135 = vmatprep.mubr.f32.mxu0 0.0
        %4136 = vmatmul.mubr.f32.gmra.mrb[0].mxu0 %v3122
        %v4137 = vpop.f32.mrb[0].mxu0
        %v4138 = vadd.f32 0.0, %v4137
        %v4139 = vpop.f32.mrb[0].mxu0
        %4140 = vmatprep.mubr.f32.mxu0 0.0
        %4141 = vmatmul.mubr.f32.gmra.mrb[0].mxu0 %v3125
        %v4142 = vpop.f32.mrb[0].mxu0
        %v4143 = vadd.f32 0.0, %v4142
        %v4144 = vpop.f32.mrb[0].mxu0
        %4145 = vmatprep.mubr.f32.mxu0 0.0
        %4146 = vmatmul.mubr.f32.gmra.mrb[0].mxu0 %v3128
        %v4147 = vpop.f32.mrb[0].mxu0
        %v4148 = vadd.f32 0.0, %v4147
        %v4149 = vpop.f32.mrb[0].mxu0
        %4150 = vmatprep.mubr.f32.mxu0 0.0
        %4151 = vmatmul.mubr.f32.gmra.mrb[0].mxu0 %v3131
        %v4152 = vpop.f32.mrb[0].mxu0
        %v4153 = vadd.f32 0.0, %v4152
        %v4154 = vpop.f32.mrb[0].mxu0
        %4155 = vmatprep.mubr.f32.mxu0 0.0
        %4156 = vmatmul.mubr.f32.gmra.mrb[0].mxu0 %v3134
        %v4157 = vpop.f32.mrb[0].mxu0
        %v4158 = vadd.f32 0.0, %v4157
        %v4159 = vpop.f32.mrb[0].mxu0
        %4160 = vmatprep.mubr.f32.mxu0 0.0
        %4161 = vmatmul.mubr.f32.gmra.mrb[0].mxu0 %v3137
        %v4162 = vpop.f32.mrb[0].mxu0
        %v4163 = vadd.f32 0.0, %v4162
        %v4164 = vpop.f32.mrb[0].mxu0
        %4165 = vmatprep.mubr.f32.mxu0 0.0
        %4166 = vmatmul.mubr.f32.gmra.mrb[0].mxu0 %v3140
        %v4167 = vpop.f32.mrb[0].mxu0
        %v4168 = vadd.f32 0.0, %v4167
        %v4169 = vpop.f32.mrb[0].mxu0
        %4170 = vmatprep.mubr.f32.mxu0 0.0
        %4171 = vmatmul.mubr.f32.gmra.mrb[0].mxu0 %v3143
        %v4172 = vpop.f32.mrb[0].mxu0
        %v4173 = vadd.f32 0.0, %v4172
        %v4174 = vpop.f32.mrb[0].mxu0
        %4175 = vmatprep.mubr.f32.mxu0 0.0
        %4176 = vmatmul.mubr.f32.gmra.mrb[0].mxu0 %v3146
        %v4177 = vpop.f32.mrb[0].mxu0
        %v4178 = vadd.f32 0.0, %v4177
        %v4179 = vpop.f32.mrb[0].mxu0
        %4180 = vmatprep.mubr.f32.mxu0 0.0
        %4181 = vmatmul.mubr.f32.gmra.mrb[0].mxu0 %v3149
        %v4182 = vpop.f32.mrb[0].mxu0
        %v4183 = vadd.f32 0.0, %v4182
        %v4184 = vpop.f32.mrb[0].mxu0
        %4185 = vmatprep.mubr.f32.mxu0 0.0
        %4186 = vmatmul.mubr.f32.gmra.mrb[0].mxu0 %v3152
        %v4187 = vpop.f32.mrb[0].mxu0
        %v4188 = vadd.f32 0.0, %v4187
        %v4189 = vpop.f32.mrb[0].mxu0
        %4190 = vmatprep.mubr.f32.mxu0 0.0
        %4191 = vmatmul.mubr.f32.gmra.mrb[0].mxu0 %v3155
        %v4192 = vpop.f32.mrb[0].mxu0
        %v4193 = vadd.f32 0.0, %v4192
        %v4194 = vpop.f32.mrb[0].mxu0
        %4195 = vmatprep.mubr.f32.mxu0 0.0
        %4196 = vmatmul.mubr.f32.gmra.mrb[0].mxu0 %v3158
        %v4197 = vpop.f32.mrb[0].mxu0
        %v4198 = vadd.f32 0.0, %v4197
        %v4199 = vpop.f32.mrb[0].mxu0
        %4200 = vmatprep.mubr.f32.mxu0 0.0
        %4201 = vmatmul.mubr.f32.gmra.mrb[0].mxu0 %v3161
        %v4202 = vpop.f32.mrb[0].mxu0
        %v4203 = vadd.f32 0.0, %v4202
        %v4204 = vpop.f32.mrb[0].mxu0
        %4205 = vmatprep.mubr.f32.mxu0 0.0
        %4206 = vmatmul.mubr.f32.gmra.mrb[0].mxu0 %v3164
        %v4207 = vpop.f32.mrb[0].mxu0
        %v4208 = vadd.f32 0.0, %v4207
        %v4209 = vpop.f32.mrb[0].mxu0
        %4210 = vmatprep.mubr.f32.mxu0 0.0
        %4211 = vmatmul.mubr.f32.gmra.mrb[0].mxu0 %v3167
        %v4212 = vpop.f32.mrb[0].mxu0
        %v4213 = vadd.f32 0.0, %v4212
        %v4214 = vpop.f32.mrb[0].mxu0
        %4215 = vmatprep.mubr.f32.mxu0 0.0
        %4216 = vmatmul.mubr.f32.gmra.mrb[0].mxu0 %v3170
        %v4217 = vpop.f32.mrb[0].mxu0
        %v4218 = vadd.f32 0.0, %v4217
        %v4219 = vpop.f32.mrb[0].mxu0
        %4220 = vmatprep.mubr.f32.mxu0 0.0
        %4221 = vmatmul.mubr.f32.gmra.mrb[0].mxu0 %v3173
        %v4222 = vpop.f32.mrb[0].mxu0
        %v4223 = vadd.f32 0.0, %v4222
        %v4224 = vpop.f32.mrb[0].mxu0
        %4225 = vmatprep.mubr.f32.mxu0 0.0
        %4226 = vmatmul.mubr.f32.gmra.mrb[0].mxu0 %v3176
        %v4227 = vpop.f32.mrb[0].mxu0
        %v4228 = vadd.f32 0.0, %v4227
        %v4229 = vpop.f32.mrb[0].mxu0
        %4230 = vmatprep.mubr.f32.mxu0 0.0
        %4231 = vmatmul.mubr.f32.gmra.mrb[0].mxu0 %v3179
        %v4232 = vpop.f32.mrb[0].mxu0
        %v4233 = vadd.f32 0.0, %v4232
        %v4234 = vpop.f32.mrb[0].mxu0
        %4235 = vmatprep.mubr.f32.mxu0 0.0
        %4236 = vmatmul.mubr.f32.gmra.mrb[0].mxu0 %v3182
        %v4237 = vpop.f32.mrb[0].mxu0
        %v4238 = vadd.f32 0.0, %v4237
        %v4239 = vpop.f32.mrb[0].mxu0
        %4240 = vmatprep.mubr.f32.mxu0 0.0
        %4241 = vmatmul.mubr.f32.gmra.mrb[0].mxu0 %v3185
        %v4242 = vpop.f32.mrb[0].mxu0
        %v4243 = vadd.f32 0.0, %v4242
        %v4244 = vpop.f32.mrb[0].mxu0
        %4245 = vmatprep.mubr.f32.mxu0 0.0
        %4246 = vmatmul.mubr.f32.gmra.mrb[0].mxu0 %v3188
        %v4247 = vpop.f32.mrb[0].mxu0
        %v4248 = vadd.f32 0.0, %v4247
        %v4249 = vpop.f32.mrb[0].mxu0
        %4250 = vmatprep.mubr.f32.mxu0 0.0
        %4251 = vmatmul.mubr.f32.gmra.mrb[0].mxu0 %v3191
        %v4252 = vpop.f32.mrb[0].mxu0
        %v4253 = vadd.f32 0.0, %v4252
        %v4254 = vpop.f32.mrb[0].mxu0
        %4255 = vmatprep.mubr.f32.mxu0 0.0
        %4256 = vmatmul.mubr.f32.gmra.mrb[0].mxu0 %v3194
        %v4257 = vpop.f32.mrb[0].mxu0
        %v4258 = vadd.f32 0.0, %v4257
        %v4259 = vpop.f32.mrb[0].mxu0
        %4260 = vmatprep.mubr.f32.mxu0 0.0
        %4261 = vmatmul.mubr.f32.gmra.mrb[0].mxu0 %v3197
        %v4262 = vpop.f32.mrb[0].mxu0
        %v4263 = vadd.f32 0.0, %v4262
        %v4264 = vpop.f32.mrb[0].mxu0
        %4265 = vmatprep.mubr.f32.mxu0 0.0
        %4266 = vmatmul.mubr.f32.gmra.mrb[0].mxu0 %v3200
        %v4267 = vpop.f32.mrb[0].mxu0
        %v4268 = vadd.f32 0.0, %v4267
        %v4269 = vpop.f32.mrb[0].mxu0
        %4270 = vmatprep.mubr.f32.mxu0 0.0
        %4271 = vmatmul.mubr.f32.gmra.mrb[0].mxu0 %v3203
        %v4272 = vpop.f32.mrb[0].mxu0
        %v4273 = vadd.f32 0.0, %v4272
        %v4274 = vpop.f32.mrb[0].mxu0
        %4275 = vmatprep.mubr.f32.mxu0 0.0
        %4276 = vmatmul.mubr.f32.gmra.mrb[0].mxu0 %v3206
        %v4277 = vpop.f32.mrb[0].mxu0
        %v4278 = vadd.f32 0.0, %v4277
        %v4279 = vpop.f32.mrb[0].mxu0
        %4280 = vmatprep.mubr.f32.mxu0 0.0
        %4281 = vmatmul.mubr.f32.gmra.mrb[0].mxu0 %v3209
        %v4282 = vpop.f32.mrb[0].mxu0
        %v4283 = vadd.f32 0.0, %v4282
        %v4284 = vpop.f32.mrb[0].mxu0
        %4285 = vmatprep.mubr.f32.mxu0 0.0
        %4286 = vmatmul.mubr.f32.gmra.mrb[0].mxu0 %v3212
        %v4287 = vpop.f32.mrb[0].mxu0
        %v4288 = vadd.f32 0.0, %v4287
        %v4289 = vpop.f32.mrb[0].mxu0
        %4290 = vmatprep.mubr.f32.mxu0 0.0
        %4291 = vmatmul.mubr.f32.gmra.mrb[0].mxu0 %v3215
        %v4292 = vpop.f32.mrb[0].mxu0
        %v4293 = vadd.f32 0.0, %v4292
        %v4294 = vpop.f32.mrb[0].mxu0
        %4295 = vmatprep.mubr.f32.mxu0 0.0
        %4296 = vmatmul.mubr.f32.gmra.mrb[0].mxu0 %v3218
        %v4297 = vpop.f32.mrb[0].mxu0
        %v4298 = vadd.f32 0.0, %v4297
        %v4299 = vpop.f32.mrb[0].mxu0
        %4300 = vmatprep.mubr.f32.mxu0 0.0
        %4301 = vmatmul.mubr.f32.gmra.mrb[0].mxu0 %v3221
        %v4302 = vpop.f32.mrb[0].mxu0
        %v4303 = vadd.f32 0.0, %v4302
        %v4304 = vpop.f32.mrb[0].mxu0
        %4305 = vmatprep.mubr.f32.mxu0 0.0
        %4306 = vmatmul.mubr.f32.gmra.mrb[0].mxu0 %v3224
        %v4307 = vpop.f32.mrb[0].mxu0
        %v4308 = vadd.f32 0.0, %v4307
        %v4309 = vpop.f32.mrb[0].mxu0
        %4310 = vmatprep.mubr.f32.mxu0 0.0
        %4311 = vmatmul.mubr.f32.gmra.mrb[0].mxu0 %v3227
        %v4312 = vpop.f32.mrb[0].mxu0
        %v4313 = vadd.f32 0.0, %v4312
        %v4314 = vpop.f32.mrb[0].mxu0
        %4315 = vmatprep.mubr.f32.mxu0 0.0
        %4316 = vmatmul.mubr.f32.gmra.mrb[0].mxu0 %v3230
        %v4317 = vpop.f32.mrb[0].mxu0
        %v4318 = vadd.f32 0.0, %v4317
        %v4319 = vpop.f32.mrb[0].mxu0
        %4320 = vmatprep.mubr.f32.mxu0 0.0
        %4321 = vmatmul.mubr.f32.gmra.mrb[0].mxu0 %v3233
        %v4322 = vpop.f32.mrb[0].mxu0
        %v4323 = vadd.f32 0.0, %v4322
        %v4324 = vpop.f32.mrb[0].mxu0
        %4325 = vmatprep.mubr.f32.mxu0 0.0
        %4326 = vmatmul.mubr.f32.gmra.mrb[0].mxu0 %v3236
        %v4327 = vpop.f32.mrb[0].mxu0
        %v4328 = vadd.f32 0.0, %v4327
        %v4329 = vpop.f32.mrb[0].mxu0
        %4330 = vmatprep.mubr.f32.mxu0 0.0
        %4331 = vmatmul.mubr.f32.gmra.mrb[0].mxu0 %v3239
        %v4332 = vpop.f32.mrb[0].mxu0
        %v4333 = vadd.f32 0.0, %v4332
        %v4334 = vpop.f32.mrb[0].mxu0
        %4335 = vmatprep.mubr.f32.mxu0 0.0
        %4336 = vmatmul.mubr.f32.gmra.mrb[0].mxu0 %v3242
        %v4337 = vpop.f32.mrb[0].mxu0
        %v4338 = vadd.f32 0.0, %v4337
        %v4339 = vpop.f32.mrb[0].mxu0
        %4340 = vmatprep.mubr.f32.mxu0 0.0
        %4341 = vmatmul.mubr.f32.gmra.mrb[0].mxu0 %v3245
        %v4342 = vpop.f32.mrb[0].mxu0
        %v4343 = vadd.f32 0.0, %v4342
        %v4344 = vpop.f32.mrb[0].mxu0
        %4345 = vmatprep.mubr.f32.mxu0 0.0
        %4346 = vmatmul.mubr.f32.gmra.mrb[0].mxu0 %v3248
        %v4347 = vpop.f32.mrb[0].mxu0
        %v4348 = vadd.f32 0.0, %v4347
        %v4349 = vpop.f32.mrb[0].mxu0
        %4350 = vmatprep.mubr.f32.mxu0 0.0
        %4351 = vmatmul.mubr.f32.gmra.mrb[0].mxu0 %v3251
        %v4352 = vpop.f32.mrb[0].mxu0
        %v4353 = vadd.f32 0.0, %v4352
        %v4354 = vpop.f32.mrb[0].mxu0
        %4355 = vmatprep.mubr.f32.mxu0 0.0
        %4356 = vmatmul.mubr.f32.gmra.mrb[0].mxu0 %v3254
        %v4357 = vpop.f32.mrb[0].mxu0
        %v4358 = vadd.f32 0.0, %v4357
        %v4359 = vpop.f32.mrb[0].mxu0
        %4360 = vmatprep.mubr.f32.mxu0 0.0
        %4361 = vmatmul.mubr.f32.gmra.mrb[0].mxu0 %v3257
        %v4362 = vpop.f32.mrb[0].mxu0
        %v4363 = vadd.f32 0.0, %v4362
        %v4364 = vpop.f32.mrb[0].mxu0
        %4365 = vmatprep.mubr.f32.mxu0 0.0
        %4366 = vmatmul.mubr.f32.gmra.mrb[0].mxu0 %v3260
        %v4367 = vpop.f32.mrb[0].mxu0
        %v4368 = vadd.f32 0.0, %v4367
        %v4369 = vpop.f32.mrb[0].mxu0
        %4370 = vmatprep.mubr.f32.mxu0 0.0
        %4371 = vmatmul.mubr.f32.gmra.mrb[0].mxu0 %v3263
        %v4372 = vpop.f32.mrb[0].mxu0
        %v4373 = vadd.f32 0.0, %v4372
        %v4374 = vpop.f32.mrb[0].mxu0
        %4375 = vmatprep.mubr.f32.mxu0 0.0
        %4376 = vmatmul.mubr.f32.gmra.mrb[0].mxu0 %v3266
        %v4377 = vpop.f32.mrb[0].mxu0
        %v4378 = vadd.f32 0.0, %v4377
        %v4379 = vpop.f32.mrb[0].mxu0
        %4380 = vmatprep.mubr.f32.mxu0 0.0
        %4381 = vmatmul.mubr.f32.gmra.mrb[0].mxu0 %v3269
        %v4382 = vpop.f32.mrb[0].mxu0
        %v4383 = vadd.f32 0.0, %v4382
        %v4384 = vpop.f32.mrb[0].mxu0
        %4385 = vmatprep.mubr.f32.mxu0 0.0
        %4386 = vmatmul.mubr.f32.gmra.mrb[0].mxu0 %v3272
        %v4387 = vpop.f32.mrb[0].mxu0
        %v4388 = vadd.f32 0.0, %v4387
        %v4389 = vpop.f32.mrb[0].mxu0
        %4390 = vmatprep.mubr.f32.mxu0 0.0
        %4391 = vmatmul.mubr.f32.gmra.mrb[0].mxu0 %v3275
        %v4392 = vpop.f32.mrb[0].mxu0
        %v4393 = vadd.f32 0.0, %v4392
        %v4394 = vpop.f32.mrb[0].mxu0
        %4395 = vmatprep.mubr.f32.mxu0 0.0
        %4396 = vmatmul.mubr.f32.gmra.mrb[0].mxu0 %v3278
        %v4397 = vpop.f32.mrb[0].mxu0
        %v4398 = vadd.f32 0.0, %v4397
        %v4399 = vpop.f32.mrb[0].mxu0
        %4400 = vmatprep.mubr.f32.mxu0 0.0
        %4401 = vmatmul.mubr.f32.gmra.mrb[0].mxu0 %v3281
        %v4402 = vpop.f32.mrb[0].mxu0
        %v4403 = vadd.f32 0.0, %v4402
        %v4404 = vpop.f32.mrb[0].mxu0
        %4405 = vmatprep.mubr.f32.mxu0 0.0
        %4406 = vmatmul.mubr.f32.gmra.mrb[0].mxu0 %v3284
        %v4407 = vpop.f32.mrb[0].mxu0
        %v4408 = vadd.f32 0.0, %v4407
        %v4409 = vpop.f32.mrb[0].mxu0
        %4410 = vmatprep.mubr.f32.mxu0 0.0
        %4411 = vmatmul.mubr.f32.gmra.mrb[0].mxu0 %v3287
        %v4412 = vpop.f32.mrb[0].mxu0
        %v4413 = vadd.f32 0.0, %v4412
        %v4414 = vpop.f32.mrb[0].mxu0
        %4415 = vmatprep.mubr.f32.mxu0 0.0
        %4416 = vmatmul.mubr.f32.gmra.mrb[0].mxu0 %v3290
        %v4417 = vpop.f32.mrb[0].mxu0
        %v4418 = vadd.f32 0.0, %v4417
        %v4419 = vpop.f32.mrb[0].mxu0
        %4420 = vmatprep.mubr.f32.mxu0 0.0
        %4421 = vmatmul.mubr.f32.gmra.mrb[0].mxu0 %v3293
        %v4422 = vpop.f32.mrb[0].mxu0
        %v4423 = vadd.f32 0.0, %v4422
        %v4424 = vpop.f32.mrb[0].mxu0
        %4425 = vmatprep.mubr.f32.mxu0 0.0
        %4426 = vmatmul.mubr.f32.gmra.mrb[0].mxu0 %v3296
        %v4427 = vpop.f32.mrb[0].mxu0
        %v4428 = vadd.f32 0.0, %v4427
        %v4429 = vpop.f32.mrb[0].mxu0
        %4430 = vmatprep.mubr.f32.mxu0 0.0
        %4431 = vmatmul.mubr.f32.gmra.mrb[0].mxu0 %v3299
        %v4432 = vpop.f32.mrb[0].mxu0
        %v4433 = vadd.f32 0.0, %v4432
        %v4434 = vpop.f32.mrb[0].mxu0
        %4435 = vmatprep.mubr.f32.mxu0 0.0
        %4436 = vmatmul.mubr.f32.gmra.mrb[0].mxu0 %v3302
        %v4437 = vpop.f32.mrb[0].mxu0
        %v4438 = vadd.f32 0.0, %v4437
        %v4439 = vpop.f32.mrb[0].mxu0
        %4440 = vmatprep.mubr.f32.mxu0 0.0
        %4441 = vmatmul.mubr.f32.gmra.mrb[0].mxu0 %v3305
        %v4442 = vpop.f32.mrb[0].mxu0
        %v4443 = vadd.f32 0.0, %v4442
        %v4444 = vpop.f32.mrb[0].mxu0
        %4445 = vmatprep.mubr.f32.mxu0 0.0
        %4446 = vmatmul.mubr.f32.gmra.mrb[0].mxu0 %v3308
        %v4447 = vpop.f32.mrb[0].mxu0
        %v4448 = vadd.f32 0.0, %v4447
        %v4449 = vpop.f32.mrb[0].mxu0
        %4450 = vmatprep.mubr.f32.mxu0 0.0
        %4451 = vmatmul.mubr.f32.gmra.mrb[0].mxu0 %v3311
        %v4452 = vpop.f32.mrb[0].mxu0
        %v4453 = vadd.f32 0.0, %v4452
        %v4454 = vpop.f32.mrb[0].mxu0
        %4455 = vmatprep.mubr.f32.mxu0 0.0
        %4456 = vmatmul.mubr.f32.gmra.mrb[0].mxu0 %v3314
        %v4457 = vpop.f32.mrb[0].mxu0
        %v4458 = vadd.f32 0.0, %v4457
        %v4459 = vpop.f32.mrb[0].mxu0
        %4460 = vmatprep.mubr.f32.mxu0 0.0
        %4461 = vmatmul.mubr.f32.gmra.mrb[0].mxu0 %v3317
        %v4462 = vpop.f32.mrb[0].mxu0
        %v4463 = vadd.f32 0.0, %v4462
        %v4464 = vpop.f32.mrb[0].mxu0
        %4465 = vmatprep.mubr.f32.mxu0 0.0
        %4466 = vmatmul.mubr.f32.gmra.mrb[0].mxu0 %v3320
        %v4467 = vpop.f32.mrb[0].mxu0
        %v4468 = vadd.f32 0.0, %v4467
        %v4469 = vpop.f32.mrb[0].mxu0
        %4470 = vmatprep.mubr.f32.mxu0 0.0
        %4471 = vmatmul.mubr.f32.gmra.mrb[0].mxu0 %v3323
        %v4472 = vpop.f32.mrb[0].mxu0
        %v4473 = vadd.f32 0.0, %v4472
        %v4474 = vpop.f32.mrb[0].mxu0
        %4475 = vmatprep.mubr.f32.mxu0 0.0
        %4476 = vmatmul.mubr.f32.gmra.mrb[0].mxu0 %v3326
        %v4477 = vpop.f32.mrb[0].mxu0
        %v4478 = vadd.f32 0.0, %v4477
        %v4479 = vpop.f32.mrb[0].mxu0
        %4480 = vmatprep.mubr.f32.mxu0 0.0
        %4481 = vmatmul.mubr.f32.gmra.mrb[0].mxu0 %v3329
        %v4482 = vpop.f32.mrb[0].mxu0
        %v4483 = vadd.f32 0.0, %v4482
        %v4484 = vpop.f32.mrb[0].mxu0
        %4485 = vmatprep.mubr.f32.mxu0 0.0
        %4486 = vmatmul.mubr.f32.gmra.mrb[0].mxu0 %v3332
        %v4487 = vpop.f32.mrb[0].mxu0
        %v4488 = vadd.f32 0.0, %v4487
        %v4489 = vpop.f32.mrb[0].mxu0
        %4490 = vmatprep.mubr.f32.mxu0 0.0
        %4491 = vmatmul.mubr.f32.gmra.mrb[0].mxu0 %v3335
        %v4492 = vpop.f32.mrb[0].mxu0
        %v4493 = vadd.f32 0.0, %v4492
        %v4494 = vpop.f32.mrb[0].mxu0
        %4495 = vmatprep.mubr.f32.mxu0 0.0
        %4496 = vmatmul.mubr.f32.gmra.mrb[0].mxu0 %v3338
        %v4497 = vpop.f32.mrb[0].mxu0
        %v4498 = vadd.f32 0.0, %v4497
        %v4499 = vpop.f32.mrb[0].mxu0
        %4500 = vmatprep.mubr.f32.mxu0 0.0
        %4501 = vmatmul.mubr.f32.gmra.mrb[0].mxu0 %v3341
        %v4502 = vpop.f32.mrb[0].mxu0
        %v4503 = vadd.f32 0.0, %v4502
        %v4504 = vpop.f32.mrb[0].mxu0
        %4505 = vmatprep.mubr.f32.mxu0 0.0
        %4506 = vmatmul.mubr.f32.gmra.mrb[0].mxu0 %v3344
        %v4507 = vpop.f32.mrb[0].mxu0
        %v4508 = vadd.f32 0.0, %v4507
        %v4509 = vpop.f32.mrb[0].mxu0
        %4510 = vmatprep.mubr.f32.mxu0 0.0
        %4511 = vmatmul.mubr.f32.gmra.mrb[0].mxu0 %v3347
        %v4512 = vpop.f32.mrb[0].mxu0
        %v4513 = vadd.f32 0.0, %v4512
        %v4514 = vpop.f32.mrb[0].mxu0
        %4515 = vmatprep.mubr.f32.mxu0 0.0
        %4516 = vmatmul.mubr.f32.gmra.mrb[0].mxu0 %v3350
        %v4517 = vpop.f32.mrb[0].mxu0
        %v4518 = vadd.f32 0.0, %v4517
        %v4519 = vpop.f32.mrb[0].mxu0
        %4520 = vmatprep.mubr.f32.mxu0 0.0
        %4521 = vmatmul.mubr.f32.gmra.mrb[0].mxu0 %v3353
        %v4522 = vpop.f32.mrb[0].mxu0
        %v4523 = vadd.f32 0.0, %v4522
        %v4524 = vpop.f32.mrb[0].mxu0
        %4525 = vmatprep.mubr.f32.mxu0 0.0
        %4526 = vmatmul.mubr.f32.gmra.mrb[0].mxu0 %v3356
        %v4527 = vpop.f32.mrb[0].mxu0
        %v4528 = vadd.f32 0.0, %v4527
        %v4529 = vpop.f32.mrb[0].mxu0
        %4530 = vmatprep.mubr.f32.mxu0 0.0
        %4531 = vmatmul.mubr.f32.gmra.mrb[0].mxu0 %v3359
        %v4532 = vpop.f32.mrb[0].mxu0
        %v4533 = vadd.f32 0.0, %v4532
        %v4534 = vpop.f32.mrb[0].mxu0
        %4535 = vmatprep.mubr.f32.mxu0 0.0
        %4536 = vmatmul.mubr.f32.gmra.mrb[0].mxu0 %v3362
        %v4537 = vpop.f32.mrb[0].mxu0
        %v4538 = vadd.f32 0.0, %v4537
        %v4539 = vpop.f32.mrb[0].mxu0
        %4540 = vmatprep.mubr.f32.mxu0 0.0
        %4541 = vmatmul.mubr.f32.gmra.mrb[0].mxu0 %v3365
        %v4542 = vpop.f32.mrb[0].mxu0
        %v4543 = vadd.f32 0.0, %v4542
        %v4544 = vpop.f32.mrb[0].mxu0
        %4545 = vmatprep.mubr.f32.mxu0 0.0
        %4546 = vmatmul.mubr.f32.gmra.mrb[0].mxu0 %v3368
        %v4547 = vpop.f32.mrb[0].mxu0
        %v4548 = vadd.f32 0.0, %v4547
        %v4549 = vpop.f32.mrb[0].mxu0
        %4550 = vmatprep.mubr.f32.mxu0 0.0
        %4551 = vmatmul.mubr.f32.gmra.mrb[0].mxu0 %v3371
        %v4552 = vpop.f32.mrb[0].mxu0
        %v4553 = vadd.f32 0.0, %v4552
        %v4554 = vpop.f32.mrb[0].mxu0
        %4555 = vmatprep.mubr.f32.mxu0 0.0
        %4556 = vmatmul.mubr.f32.gmra.mrb[0].mxu0 %v3374
        %v4557 = vpop.f32.mrb[0].mxu0
        %v4558 = vadd.f32 0.0, %v4557
        %v4559 = vpop.f32.mrb[0].mxu0
        %4560 = vmatprep.mubr.f32.mxu0 0.0
        %4561 = vmatmul.mubr.f32.gmra.mrb[0].mxu0 %v3377
        %v4562 = vpop.f32.mrb[0].mxu0
        %v4563 = vadd.f32 0.0, %v4562
        %v4564 = vpop.f32.mrb[0].mxu0
        %4565 = vmatprep.mubr.f32.mxu0 0.0
        %4566 = vmatmul.mubr.f32.gmra.mrb[0].mxu0 %v3380
        %v4567 = vpop.f32.mrb[0].mxu0
        %v4568 = vadd.f32 0.0, %v4567
        %v4569 = vpop.f32.mrb[0].mxu0
        %4570 = vmatprep.mubr.f32.mxu0 0.0
        %4571 = vmatmul.mubr.f32.gmra.mrb[0].mxu0 %v3383
        %v4572 = vpop.f32.mrb[0].mxu0
        %v4573 = vadd.f32 0.0, %v4572
        %v4574 = vpop.f32.mrb[0].mxu0
        %4575 = vmatprep.mubr.f32.mxu0 0.0
        %4576 = vmatmul.mubr.f32.gmra.mrb[0].mxu0 %v3386
        %v4577 = vpop.f32.mrb[0].mxu0
        %v4578 = vadd.f32 0.0, %v4577
        %v4579 = vpop.f32.mrb[0].mxu0
        %4580 = vmatprep.mubr.f32.mxu0 0.0
        %4581 = vmatmul.mubr.f32.gmra.mrb[0].mxu0 %v3389
        %v4582 = vpop.f32.mrb[0].mxu0
        %v4583 = vadd.f32 0.0, %v4582
        %v4584 = vpop.f32.mrb[0].mxu0
        %4585 = vmatprep.mubr.f32.mxu0 0.0
        %4586 = vmatmul.mubr.f32.gmra.mrb[0].mxu0 %v3392
        %v4587 = vpop.f32.mrb[0].mxu0
        %v4588 = vadd.f32 0.0, %v4587
        %v4589 = vpop.f32.mrb[0].mxu0
        %4590 = vmatprep.mubr.f32.mxu0 0.0
        %4591 = vmatmul.mubr.f32.gmra.mrb[0].mxu0 %v3395
        %v4592 = vpop.f32.mrb[0].mxu0
        %v4593 = vadd.f32 0.0, %v4592
        %v4594 = vpop.f32.mrb[0].mxu0
        %4595 = vmatprep.mubr.f32.mxu0 0.0
        %4596 = vmatmul.mubr.f32.gmra.mrb[0].mxu0 %v3398
        %v4597 = vpop.f32.mrb[0].mxu0
        %v4598 = vadd.f32 0.0, %v4597
        %v4599 = vpop.f32.mrb[0].mxu0
        %4600 = vmatprep.mubr.f32.mxu0 0.0
        %4601 = vmatmul.mubr.f32.gmra.mrb[0].mxu0 %v3401
        %v4602 = vpop.f32.mrb[0].mxu0
        %v4603 = vadd.f32 0.0, %v4602
        %v4604 = vpop.f32.mrb[0].mxu0
        %4605 = vmatprep.mubr.f32.mxu0 0.0
        %4606 = vmatmul.mubr.f32.gmra.mrb[0].mxu0 %v3404
        %v4607 = vpop.f32.mrb[0].mxu0
        %v4608 = vadd.f32 0.0, %v4607
        %v4609 = vpop.f32.mrb[0].mxu0
        %4610 = vmatprep.mubr.f32.mxu0 0.0
        %4611 = vmatmul.mubr.f32.gmra.mrb[0].mxu0 %v3407
        %v4612 = vpop.f32.mrb[0].mxu0
        %v4613 = vadd.f32 0.0, %v4612
        %v4614 = vpop.f32.mrb[0].mxu0
        %4615 = vmatprep.mubr.f32.mxu0 0.0
        %4616 = vmatmul.mubr.f32.gmra.mrb[0].mxu0 %v3410
        %v4617 = vpop.f32.mrb[0].mxu0
        %v4618 = vadd.f32 0.0, %v4617
        %v4619 = vpop.f32.mrb[0].mxu0
        %4620 = vmatprep.mubr.f32.mxu0 0.0
        %4621 = vmatmul.mubr.f32.gmra.mrb[0].mxu0 %v3413
        %v4622 = vpop.f32.mrb[0].mxu0
        %v4623 = vadd.f32 0.0, %v4622
        %v4624 = vpop.f32.mrb[0].mxu0
        %4625 = vmatprep.mubr.f32.mxu0 0.0
        %4626 = vmatmul.mubr.f32.gmra.mrb[0].mxu0 %v3416
        %v4627 = vpop.f32.mrb[0].mxu0
        %v4628 = vadd.f32 0.0, %v4627
        %v4629 = vpop.f32.mrb[0].mxu0
        %4630 = vmatprep.mubr.f32.mxu0 0.0
        %4631 = vmatmul.mubr.f32.gmra.mrb[0].mxu0 %v3419
        %v4632 = vpop.f32.mrb[0].mxu0
        %v4633 = vadd.f32 0.0, %v4632
        %v4634 = vpop.f32.mrb[0].mxu0
        %4635 = vmatprep.mubr.f32.mxu0 0.0
        %4636 = vmatmul.mubr.f32.gmra.mrb[0].mxu0 %v3422
        %v4637 = vpop.f32.mrb[0].mxu0
        %v4638 = vadd.f32 0.0, %v4637
        %v4639 = vpop.f32.mrb[0].mxu0
        %4640 = vmatprep.mubr.f32.mxu0 0.0
        %4641 = vmatmul.mubr.f32.gmra.mrb[0].mxu0 %v3425
        %v4642 = vpop.f32.mrb[0].mxu0
        %v4643 = vadd.f32 0.0, %v4642
        %v4644 = vpop.f32.mrb[0].mxu0
        %4645 = vmatprep.mubr.f32.mxu0 0.0
        %4646 = vmatmul.mubr.f32.gmra.mrb[0].mxu0 %v3428
        %v4647 = vpop.f32.mrb[0].mxu0
        %v4648 = vadd.f32 0.0, %v4647
        %v4649 = vpop.f32.mrb[0].mxu0
        %4650 = vmatprep.mubr.f32.mxu0 0.0
        %4651 = vmatmul.mubr.f32.gmra.mrb[0].mxu0 %v3431
        %v4652 = vpop.f32.mrb[0].mxu0
        %v4653 = vadd.f32 0.0, %v4652
        %v4654 = vpop.f32.mrb[0].mxu0
        %4655 = vmatprep.mubr.f32.mxu0 0.0
        %4656 = vmatmul.mubr.f32.gmra.mrb[0].mxu0 %v3434
        %v4657 = vpop.f32.mrb[0].mxu0
        %v4658 = vadd.f32 0.0, %v4657
        %v4659 = vpop.f32.mrb[0].mxu0
        %4660 = vmatprep.mubr.f32.mxu0 0.0
        %4661 = vmatmul.mubr.f32.gmra.mrb[0].mxu0 %v3437
        %v4662 = vpop.f32.mrb[0].mxu0
        %v4663 = vadd.f32 0.0, %v4662
        %v4664 = vpop.f32.mrb[0].mxu0
        %4665 = vmatprep.mubr.f32.mxu0 0.0
        %4666 = vmatmul.mubr.f32.gmra.mrb[0].mxu0 %v3440
        %v4667 = vpop.f32.mrb[0].mxu0
        %v4668 = vadd.f32 0.0, %v4667
        %v4669 = vpop.f32.mrb[0].mxu0
        %4670 = vmatprep.mubr.f32.mxu0 0.0
        %4671 = vmatmul.mubr.f32.gmra.mrb[0].mxu0 %v3443
        %v4672 = vpop.f32.mrb[0].mxu0
        %v4673 = vadd.f32 0.0, %v4672
        %v4674 = vpop.f32.mrb[0].mxu0
        %4675 = vmatprep.mubr.f32.mxu0 0.0
        %4676 = vmatmul.mubr.f32.gmra.mrb[0].mxu0 %v3446
        %v4677 = vpop.f32.mrb[0].mxu0
        %v4678 = vadd.f32 0.0, %v4677
        %v4679 = vpop.f32.mrb[0].mxu0
        %4680 = vmatprep.mubr.f32.mxu0 0.0
        %4681 = vmatmul.mubr.f32.gmra.mrb[0].mxu0 %v3449
        %v4682 = vpop.f32.mrb[0].mxu0
        %v4683 = vadd.f32 0.0, %v4682
        %v4684 = vpop.f32.mrb[0].mxu0
        %4685 = vmatprep.mubr.f32.mxu0 0.0
        %4686 = vmatmul.mubr.f32.gmra.mrb[0].mxu0 %v3452
        %v4687 = vpop.f32.mrb[0].mxu0
        %v4688 = vadd.f32 0.0, %v4687
        %v4689 = vpop.f32.mrb[0].mxu0
        %4690 = vmatprep.mubr.f32.mxu0 0.0
        %4691 = vmatmul.mubr.f32.gmra.mrb[0].mxu0 %v3455
        %v4692 = vpop.f32.mrb[0].mxu0
        %v4693 = vadd.f32 0.0, %v4692
        %v4694 = vpop.f32.mrb[0].mxu0
        %4695 = vmatprep.mubr.f32.mxu0 0.0
        %4696 = vmatmul.mubr.f32.gmra.mrb[0].mxu0 %v3458
        %v4697 = vpop.f32.mrb[0].mxu0
        %v4698 = vadd.f32 0.0, %v4697
        %v4699 = vpop.f32.mrb[0].mxu0
        %4700 = vmatprep.mubr.f32.mxu0 0.0
        %4701 = vmatmul.mubr.f32.gmra.mrb[0].mxu0 %v3461
        %v4702 = vpop.f32.mrb[0].mxu0
        %v4703 = vadd.f32 0.0, %v4702
        %v4704 = vpop.f32.mrb[0].mxu0
        %4705 = vmatprep.mubr.f32.mxu0 0.0
        %4706 = vmatmul.mubr.f32.gmra.mrb[0].mxu0 %v3464
        %v4707 = vpop.f32.mrb[0].mxu0
        %v4708 = vadd.f32 0.0, %v4707
        %v4709 = vpop.f32.mrb[0].mxu0
        %4710 = vmatprep.mubr.f32.mxu0 0.0
        %4711 = vmatmul.mubr.f32.gmra.mrb[0].mxu0 %v3467
        %v4712 = vpop.f32.mrb[0].mxu0
        %v4713 = vadd.f32 0.0, %v4712
        %v4714 = vpop.f32.mrb[0].mxu0
        %4715 = vmatprep.mubr.f32.mxu0 0.0
        %4716 = vmatmul.mubr.f32.gmra.mrb[0].mxu0 %v3470
        %v4717 = vpop.f32.mrb[0].mxu0
        %v4718 = vadd.f32 0.0, %v4717
        %v4719 = vpop.f32.mrb[0].mxu0
        %4720 = vmatprep.mubr.f32.mxu0 0.0
        %4721 = vmatmul.mubr.f32.gmra.mrb[0].mxu0 %v3473
        %v4722 = vpop.f32.mrb[0].mxu0
        %v4723 = vadd.f32 0.0, %v4722
        %v4724 = vpop.f32.mrb[0].mxu0
        %4725 = vmatprep.mubr.f32.mxu0 0.0
        %4726 = vmatmul.mubr.f32.gmra.mrb[0].mxu0 %v3476
        %v4727 = vpop.f32.mrb[0].mxu0
        %v4728 = vadd.f32 0.0, %v4727
        %v4729 = vpop.f32.mrb[0].mxu0
        %4730 = vmatprep.mubr.f32.mxu0 0.0
        %4731 = vmatmul.mubr.f32.gmra.mrb[0].mxu0 %v3479
        %v4732 = vpop.f32.mrb[0].mxu0
        %v4733 = vadd.f32 0.0, %v4732
        %v4734 = vpop.f32.mrb[0].mxu0
        %4735 = vmatprep.mubr.f32.mxu0 0.0
        %4736 = vmatmul.mubr.f32.gmra.mrb[0].mxu0 %v3482
        %v4737 = vpop.f32.mrb[0].mxu0
        %v4738 = vadd.f32 0.0, %v4737
        %v4739 = vpop.f32.mrb[0].mxu0
        %4740 = vmatprep.mubr.f32.mxu0 0.0
        %4741 = vmatmul.mubr.f32.gmra.mrb[0].mxu0 %v3485
        %v4742 = vpop.f32.mrb[0].mxu0
        %v4743 = vadd.f32 0.0, %v4742
        %v4744 = vpop.f32.mrb[0].mxu0
        %4745 = vmatprep.mubr.f32.mxu0 0.0
        %4746 = vmatmul.mubr.f32.gmra.mrb[0].mxu0 %v3488
        %v4747 = vpop.f32.mrb[0].mxu0
        %v4748 = vadd.f32 0.0, %v4747
        %v4749 = vpop.f32.mrb[0].mxu0
        %4750 = vmatprep.mubr.f32.mxu0 0.0
        %4751 = vmatmul.mubr.f32.gmra.mrb[0].mxu0 %v3491
        %v4752 = vpop.f32.mrb[0].mxu0
        %v4753 = vadd.f32 0.0, %v4752
        %v4754 = vpop.f32.mrb[0].mxu0
        %4755 = vmatprep.mubr.f32.mxu0 0.0
        %4756 = vmatmul.mubr.f32.gmra.mrb[0].mxu0 %v3494
        %v4757 = vpop.f32.mrb[0].mxu0
        %v4758 = vadd.f32 0.0, %v4757
        %v4759 = vpop.f32.mrb[0].mxu0
        %4760 = vmatprep.mubr.f32.mxu0 0.0
        %4761 = vmatmul.mubr.f32.gmra.mrb[0].mxu0 %v3497
        %v4762 = vpop.f32.mrb[0].mxu0
        %v4763 = vadd.f32 0.0, %v4762
        %v4764 = vpop.f32.mrb[0].mxu0
        %4765 = vmatprep.mubr.f32.mxu0 0.0
        %4766 = vmatmul.mubr.f32.gmra.mrb[0].mxu0 %v3500
        %v4767 = vpop.f32.mrb[0].mxu0
        %v4768 = vadd.f32 0.0, %v4767
        %v4769 = vpop.f32.mrb[0].mxu0
        %4770 = vmatprep.mubr.f32.mxu0 0.0
        %4771 = vmatmul.mubr.f32.gmra.mrb[0].mxu0 %v3503
        %v4772 = vpop.f32.mrb[0].mxu0
        %v4773 = vadd.f32 0.0, %v4772
        %v4774 = vpop.f32.mrb[0].mxu0
        %4775 = vmatprep.mubr.f32.mxu0 0.0
        %4776 = vmatmul.mubr.f32.gmra.mrb[0].mxu0 %v3506
        %v4777 = vpop.f32.mrb[0].mxu0
        %v4778 = vadd.f32 0.0, %v4777
        %v4779 = vpop.f32.mrb[0].mxu0
        %4780 = vmatprep.mubr.f32.mxu0 0.0
        %4781 = vmatmul.mubr.f32.gmra.mrb[0].mxu0 %v3509
        %v4782 = vpop.f32.mrb[0].mxu0
        %v4783 = vadd.f32 0.0, %v4782
        %v4784 = vpop.f32.mrb[0].mxu0
        %4785 = vmatprep.mubr.f32.mxu0 0.0
        %4786 = vmatmul.mubr.f32.gmra.mrb[0].mxu0 %v3512
        %v4787 = vpop.f32.mrb[0].mxu0
        %v4788 = vadd.f32 0.0, %v4787
        %v4789 = vpop.f32.mrb[0].mxu0
        %4790 = vmatprep.mubr.f32.mxu0 0.0
        %4791 = vmatmul.mubr.f32.gmra.mrb[0].mxu0 %v3515
        %v4792 = vpop.f32.mrb[0].mxu0
        %v4793 = vadd.f32 0.0, %v4792
        %v4794 = vpop.f32.mrb[0].mxu0
        %4795 = vmatprep.mubr.f32.mxu0 0.0
        %4796 = vmatmul.mubr.f32.gmra.mrb[0].mxu0 %v3518
        %v4797 = vpop.f32.mrb[0].mxu0
        %v4798 = vadd.f32 0.0, %v4797
        %v4799 = vpop.f32.mrb[0].mxu0
        %4800 = vmatprep.mubr.f32.mxu0 0.0
        %4801 = vmatmul.mubr.f32.gmra.mrb[0].mxu0 %v3521
        %v4802 = vpop.f32.mrb[0].mxu0
        %v4803 = vadd.f32 0.0, %v4802
        %v4804 = vpop.f32.mrb[0].mxu0
        %4805 = vmatprep.mubr.f32.mxu0 0.0
        %4806 = vmatmul.mubr.f32.gmra.mrb[0].mxu0 %v3524
        %v4807 = vpop.f32.mrb[0].mxu0
        %v4808 = vadd.f32 0.0, %v4807
        %v4809 = vpop.f32.mrb[0].mxu0
        %4810 = vmatprep.mubr.f32.mxu0 0.0
        %4811 = vmatmul.mubr.f32.gmra.mrb[0].mxu0 %v3527
        %v4812 = vpop.f32.mrb[0].mxu0
        %v4813 = vadd.f32 0.0, %v4812
        %v4814 = vpop.f32.mrb[0].mxu0
        %4815 = vmatprep.mubr.f32.mxu0 0.0
        %4816 = vmatmul.mubr.f32.gmra.mrb[0].mxu0 %v3530
        %v4817 = vpop.f32.mrb[0].mxu0
        %v4818 = vadd.f32 0.0, %v4817
        %v4819 = vpop.f32.mrb[0].mxu0
        %4820 = vmatprep.mubr.f32.mxu0 0.0
        %4821 = vmatmul.mubr.f32.gmra.mrb[0].mxu0 %v3533
        %v4822 = vpop.f32.mrb[0].mxu0
        %v4823 = vadd.f32 0.0, %v4822
        %v4824 = vpop.f32.mrb[0].mxu0
        %4825 = vmatprep.mubr.f32.mxu0 0.0
        %4826 = vmatmul.mubr.f32.gmra.mrb[0].mxu0 %v3536
        %v4827 = vpop.f32.mrb[0].mxu0
        %v4828 = vadd.f32 0.0, %v4827
        %v4829 = vpop.f32.mrb[0].mxu0
        %4830 = vmatprep.mubr.f32.mxu0 0.0
        %4831 = vmatmul.mubr.f32.gmra.mrb[0].mxu0 %v3539
        %v4832 = vpop.f32.mrb[0].mxu0
        %v4833 = vadd.f32 0.0, %v4832
        %v4834 = vpop.f32.mrb[0].mxu0
        %4835 = vmatprep.mubr.f32.mxu0 0.0
        %4836 = vmatmul.mubr.f32.gmra.mrb[0].mxu0 %v3542
        %v4837 = vpop.f32.mrb[0].mxu0
        %v4838 = vadd.f32 0.0, %v4837
        %v4839 = vpop.f32.mrb[0].mxu0
        %4840 = vmatprep.mubr.f32.mxu0 0.0
        %4841 = vmatmul.mubr.f32.gmra.mrb[0].mxu0 %v3545
        %v4842 = vpop.f32.mrb[0].mxu0
        %v4843 = vadd.f32 0.0, %v4842
        %v4844 = vpop.f32.mrb[0].mxu0
        %4845 = vmatprep.mubr.f32.mxu0 0.0
        %4846 = vmatmul.mubr.f32.gmra.mrb[0].mxu0 %v3548
        %v4847 = vpop.f32.mrb[0].mxu0
        %v4848 = vadd.f32 0.0, %v4847
        %v4849 = vpop.f32.mrb[0].mxu0
        %4850 = vmatprep.mubr.f32.mxu0 0.0
        %4851 = vmatmul.mubr.f32.gmra.mrb[0].mxu0 %v3551
        %v4852 = vpop.f32.mrb[0].mxu0
        %v4853 = vadd.f32 0.0, %v4852
        %v4854 = vpop.f32.mrb[0].mxu0
        %4855 = vmatprep.mubr.f32.mxu0 0.0
        %4856 = vmatmul.mubr.f32.gmra.mrb[0].mxu0 %v3554
        %v4857 = vpop.f32.mrb[0].mxu0
        %v4858 = vadd.f32 0.0, %v4857
        %v4859 = vpop.f32.mrb[0].mxu0
        %4860 = vmatprep.mubr.f32.mxu0 0.0
        %4861 = vmatmul.mubr.f32.gmra.mrb[0].mxu0 %v3557
        %v4862 = vpop.f32.mrb[0].mxu0
        %v4863 = vadd.f32 0.0, %v4862
        %v4864 = vpop.f32.mrb[0].mxu0
        %4865 = vmatprep.mubr.f32.mxu0 0.0
        %4866 = vmatmul.mubr.f32.gmra.mrb[0].mxu0 %v3560
        %v4867 = vpop.f32.mrb[0].mxu0
        %v4868 = vadd.f32 0.0, %v4867
        %v4869 = vpop.f32.mrb[0].mxu0
        %4870 = vmatprep.mubr.f32.mxu0 0.0
        %4871 = vmatmul.mubr.f32.gmra.mrb[0].mxu0 %v3563
        %v4872 = vpop.f32.mrb[0].mxu0
        %v4873 = vadd.f32 0.0, %v4872
        %v4874 = vpop.f32.mrb[0].mxu0
        %4875 = vmatprep.mubr.f32.mxu0 0.0
        %4876 = vmatmul.mubr.f32.gmra.mrb[0].mxu0 %v3566
        %v4877 = vpop.f32.mrb[0].mxu0
        %v4878 = vadd.f32 0.0, %v4877
        %v4879 = vpop.f32.mrb[0].mxu0
        %4880 = vmatprep.mubr.f32.mxu0 0.0
        %4881 = vmatmul.mubr.f32.gmra.mrb[0].mxu0 %v3569
        %v4882 = vpop.f32.mrb[0].mxu0
        %v4883 = vadd.f32 0.0, %v4882
        %v4884 = vpop.f32.mrb[0].mxu0
        %4885 = vmatprep.mubr.f32.mxu0 0.0
        %4886 = vmatmul.mubr.f32.gmra.mrb[0].mxu0 %v3572
        %v4887 = vpop.f32.mrb[0].mxu0
        %v4888 = vadd.f32 0.0, %v4887
        %v4889 = vpop.f32.mrb[0].mxu0
        %4890 = vmatprep.mubr.f32.mxu0 0.0
        %4891 = vmatmul.mubr.f32.gmra.mrb[0].mxu0 %v3575
        %v4892 = vpop.f32.mrb[0].mxu0
        %v4893 = vadd.f32 0.0, %v4892
        %v4894 = vpop.f32.mrb[0].mxu0
        %4895 = vmatprep.mubr.f32.mxu0 0.0
        %4896 = vmatmul.mubr.f32.gmra.mrb[0].mxu0 %v3578
        %v4897 = vpop.f32.mrb[0].mxu0
        %v4898 = vadd.f32 0.0, %v4897
        %v4899 = vpop.f32.mrb[0].mxu0
        %4900 = vmatprep.mubr.f32.mxu0 0.0
        %4901 = vmatmul.mubr.f32.gmra.mrb[0].mxu0 %v3581
        %v4902 = vpop.f32.mrb[0].mxu0
        %v4903 = vadd.f32 0.0, %v4902
        %v4904 = vpop.f32.mrb[0].mxu0
        %4905 = vmatprep.mubr.f32.mxu0 0.0
        %4906 = vmatmul.mubr.f32.gmra.mrb[0].mxu0 %v3584
        %v4907 = vpop.f32.mrb[0].mxu0
        %v4908 = vadd.f32 0.0, %v4907
        %v4909 = vpop.f32.mrb[0].mxu0
        %4910 = vmatprep.mubr.f32.mxu0 0.0
        %4911 = vmatmul.mubr.f32.gmra.mrb[0].mxu0 %v3587
        %v4912 = vpop.f32.mrb[0].mxu0
        %v4913 = vadd.f32 0.0, %v4912
        %v4914 = vpop.f32.mrb[0].mxu0
        %4915 = vmatprep.mubr.f32.mxu0 0.0
        %4916 = vmatmul.mubr.f32.gmra.mrb[0].mxu0 %v3590
        %v4917 = vpop.f32.mrb[0].mxu0
        %v4918 = vadd.f32 0.0, %v4917
        %v4919 = vpop.f32.mrb[0].mxu0
        %4920 = vmatprep.mubr.f32.mxu0 0.0
        %4921 = vmatmul.mubr.f32.gmra.mrb[0].mxu0 %v3593
        %v4922 = vpop.f32.mrb[0].mxu0
        %v4923 = vadd.f32 0.0, %v4922
        %v4924 = vpop.f32.mrb[0].mxu0
        %4925 = vmatprep.mubr.f32.mxu0 0.0
        %4926 = vmatmul.mubr.f32.gmra.mrb[0].mxu0 %v3596
        %v4927 = vpop.f32.mrb[0].mxu0
        %v4928 = vadd.f32 0.0, %v4927
        %v4929 = vpop.f32.mrb[0].mxu0
        %4930 = vmatprep.mubr.f32.mxu0 0.0
        %4931 = vmatmul.mubr.f32.gmra.mrb[0].mxu0 %v3599
        %v4932 = vpop.f32.mrb[0].mxu0
        %v4933 = vadd.f32 0.0, %v4932
        %v4934 = vpop.f32.mrb[0].mxu0
        %4935 = vmatprep.mubr.f32.mxu0 0.0
        %4936 = vmatmul.mubr.f32.gmra.mrb[0].mxu0 %v3602
        %v4937 = vpop.f32.mrb[0].mxu0
        %v4938 = vadd.f32 0.0, %v4937
        %v4939 = vpop.f32.mrb[0].mxu0
        %4940 = vmatprep.mubr.f32.mxu0 0.0
        %4941 = vmatmul.mubr.f32.gmra.mrb[0].mxu0 %v3605
        %v4942 = vpop.f32.mrb[0].mxu0
        %v4943 = vadd.f32 0.0, %v4942
        %v4944 = vpop.f32.mrb[0].mxu0
        %4945 = vmatprep.mubr.f32.mxu0 0.0
        %4946 = vmatmul.mubr.f32.gmra.mrb[0].mxu0 %v3608
        %v4947 = vpop.f32.mrb[0].mxu0
        %v4948 = vadd.f32 0.0, %v4947
        %v4949 = vpop.f32.mrb[0].mxu0
        %4950 = vmatprep.mubr.f32.mxu0 0.0
        %4951 = vmatmul.mubr.f32.gmra.mrb[0].mxu0 %v3611
        %v4952 = vpop.f32.mrb[0].mxu0
        %v4953 = vadd.f32 0.0, %v4952
        %v4954 = vpop.f32.mrb[0].mxu0
        %4955 = vmatprep.mubr.f32.mxu0 0.0
        %4956 = vmatmul.mubr.f32.gmra.mrb[0].mxu0 %v3614
        %v4957 = vpop.f32.mrb[0].mxu0
        %v4958 = vadd.f32 0.0, %v4957
        %v4959 = vpop.f32.mrb[0].mxu0
        %4960 = vdwg.mxu0
        %vm4961 = vcmask 130048
        %v4962 = vsel %vm4961, %v1313, 0.0
        %v4963 = vsel %vm4961, %v1318, 0.0
        %v4964 = vadd.f32 %v4962, %v4963
        %v4965 = vsel %vm4961, %v1323, 0.0
        %v4966 = vadd.f32 %v4964, %v4965
        %v4967 = vsel %vm4961, %v1328, 0.0
        %v4968 = vadd.f32 %v4966, %v4967
        %v4969 = vsel %vm4961, %v1333, 0.0
        %v4970 = vadd.f32 %v4968, %v4969
        %v4971 = vsel %vm4961, %v1338, 0.0
        %v4972 = vadd.f32 %v4970, %v4971
        %v4973 = vsel %vm4961, %v1343, 0.0
        %v4974 = vadd.f32 %v4972, %v4973
        %v4975 = vsel %vm4961, %v1348, 0.0
        %v4976 = vadd.f32 %v4974, %v4975
        %v4977 = vsel %vm4961, %v1353, 0.0
        %v4978 = vadd.f32 %v4976, %v4977
        %v4979 = vsel %vm4961, %v1358, 0.0
        %v4980 = vadd.f32 %v4978, %v4979
        %v4981 = vsel %vm4961, %v1363, 0.0
        %v4982 = vadd.f32 %v4980, %v4981
        %v4983 = vsel %vm4961, %v1368, 0.0
        %v4984 = vadd.f32 %v4982, %v4983
        %v4985 = vsel %vm4961, %v1373, 0.0
        %v4986 = vadd.f32 %v4984, %v4985
        %v4987 = vsel %vm4961, %v1378, 0.0
        %v4988 = vadd.f32 %v4986, %v4987
        %v4989 = vsel %vm4961, %v1383, 0.0
        %v4990 = vadd.f32 %v4988, %v4989
        %v4991 = vsel %vm4961, %v1388, 0.0
        %v4992 = vadd.f32 %v4990, %v4991
        %v4993 = vsel %vm4961, %v1393, 0.0
        %v4994 = vadd.f32 %v4992, %v4993
        %v4995 = vsel %vm4961, %v1398, 0.0
        %v4996 = vadd.f32 %v4994, %v4995
        %v4997 = vsel %vm4961, %v1403, 0.0
        %v4998 = vadd.f32 %v4996, %v4997
        %v4999 = vsel %vm4961, %v1408, 0.0
        %v5000 = vadd.f32 %v4998, %v4999
        %v5001 = vsel %vm4961, %v1413, 0.0
        %v5002 = vadd.f32 %v5000, %v5001
        %v5003 = vsel %vm4961, %v1418, 0.0
        %v5004 = vadd.f32 %v5002, %v5003
        %v5005 = vsel %vm4961, %v1423, 0.0
        %v5006 = vadd.f32 %v5004, %v5005
        %v5007 = vsel %vm4961, %v1428, 0.0
        %v5008 = vadd.f32 %v5006, %v5007
        %v5009 = vsel %vm4961, %v1433, 0.0
        %v5010 = vadd.f32 %v5008, %v5009
        %v5011 = vsel %vm4961, %v1438, 0.0
        %v5012 = vadd.f32 %v5010, %v5011
        %v5013 = vsel %vm4961, %v1443, 0.0
        %v5014 = vadd.f32 %v5012, %v5013
        %v5015 = vsel %vm4961, %v1448, 0.0
        %v5016 = vadd.f32 %v5014, %v5015
        %v5017 = vsel %vm4961, %v1453, 0.0
        %v5018 = vadd.f32 %v5016, %v5017
        %v5019 = vsel %vm4961, %v1458, 0.0
        %v5020 = vadd.f32 %v5018, %v5019
        %v5021 = vsel %vm4961, %v1463, 0.0
        %v5022 = vadd.f32 %v5020, %v5021
        %v5023 = vsel %vm4961, %v1468, 0.0
        %v5024 = vadd.f32 %v5022, %v5023
        %v5025 = vsel %vm4961, %v1473, 0.0
        %v5026 = vadd.f32 %v5024, %v5025
        %v5027 = vsel %vm4961, %v1478, 0.0
        %v5028 = vadd.f32 %v5026, %v5027
        %v5029 = vsel %vm4961, %v1483, 0.0
        %v5030 = vadd.f32 %v5028, %v5029
        %v5031 = vsel %vm4961, %v1488, 0.0
        %v5032 = vadd.f32 %v5030, %v5031
        %v5033 = vsel %vm4961, %v1493, 0.0
        %v5034 = vadd.f32 %v5032, %v5033
        %v5035 = vsel %vm4961, %v1498, 0.0
        %v5036 = vadd.f32 %v5034, %v5035
        %v5037 = vsel %vm4961, %v1503, 0.0
        %v5038 = vadd.f32 %v5036, %v5037
        %v5039 = vsel %vm4961, %v1508, 0.0
        %v5040 = vadd.f32 %v5038, %v5039
        %v5041 = vsel %vm4961, %v1513, 0.0
        %v5042 = vadd.f32 %v5040, %v5041
        %v5043 = vsel %vm4961, %v1518, 0.0
        %v5044 = vadd.f32 %v5042, %v5043
        %v5045 = vsel %vm4961, %v1523, 0.0
        %v5046 = vadd.f32 %v5044, %v5045
        %v5047 = vsel %vm4961, %v1528, 0.0
        %v5048 = vadd.f32 %v5046, %v5047
        %v5049 = vsel %vm4961, %v1533, 0.0
        %v5050 = vadd.f32 %v5048, %v5049
        %v5051 = vsel %vm4961, %v1538, 0.0
        %v5052 = vadd.f32 %v5050, %v5051
        %v5053 = vsel %vm4961, %v1543, 0.0
        %v5054 = vadd.f32 %v5052, %v5053
        %v5055 = vsel %vm4961, %v1548, 0.0
        %v5056 = vadd.f32 %v5054, %v5055
        %v5057 = vsel %vm4961, %v1553, 0.0
        %v5058 = vadd.f32 %v5056, %v5057
        %v5059 = vsel %vm4961, %v1558, 0.0
        %v5060 = vadd.f32 %v5058, %v5059
        %v5061 = vsel %vm4961, %v1563, 0.0
        %v5062 = vadd.f32 %v5060, %v5061
        %v5063 = vsel %vm4961, %v1568, 0.0
        %v5064 = vadd.f32 %v5062, %v5063
        %v5065 = vsel %vm4961, %v1573, 0.0
        %v5066 = vadd.f32 %v5064, %v5065
        %v5067 = vsel %vm4961, %v1578, 0.0
        %v5068 = vadd.f32 %v5066, %v5067
        %v5069 = vsel %vm4961, %v1583, 0.0
        %v5070 = vadd.f32 %v5068, %v5069
        %v5071 = vsel %vm4961, %v1588, 0.0
        %v5072 = vadd.f32 %v5070, %v5071
        %v5073 = vsel %vm4961, %v1593, 0.0
        %v5074 = vadd.f32 %v5072, %v5073
        %v5075 = vsel %vm4961, %v1598, 0.0
        %v5076 = vadd.f32 %v5074, %v5075
        %v5077 = vsel %vm4961, %v1603, 0.0
        %v5078 = vadd.f32 %v5076, %v5077
        %v5079 = vsel %vm4961, %v1608, 0.0
        %v5080 = vadd.f32 %v5078, %v5079
        %v5081 = vsel %vm4961, %v1613, 0.0
        %v5082 = vadd.f32 %v5080, %v5081
        %v5083 = vsel %vm4961, %v1618, 0.0
        %v5084 = vadd.f32 %v5082, %v5083
        %v5085 = vsel %vm4961, %v1623, 0.0
        %v5086 = vadd.f32 %v5084, %v5085
        %v5087 = vsel %vm4961, %v1628, 0.0
        %v5088 = vadd.f32 %v5086, %v5087
        %v5089 = vsel %vm4961, %v1633, 0.0
        %v5090 = vadd.f32 %v5088, %v5089
        %v5091 = vsel %vm4961, %v1638, 0.0
        %v5092 = vadd.f32 %v5090, %v5091
        %v5093 = vsel %vm4961, %v1643, 0.0
        %v5094 = vadd.f32 %v5092, %v5093
        %v5095 = vsel %vm4961, %v1648, 0.0
        %v5096 = vadd.f32 %v5094, %v5095
        %v5097 = vsel %vm4961, %v1653, 0.0
        %v5098 = vadd.f32 %v5096, %v5097
        %v5099 = vsel %vm4961, %v1658, 0.0
        %v5100 = vadd.f32 %v5098, %v5099
        %v5101 = vsel %vm4961, %v1663, 0.0
        %v5102 = vadd.f32 %v5100, %v5101
        %v5103 = vsel %vm4961, %v1668, 0.0
        %v5104 = vadd.f32 %v5102, %v5103
        %v5105 = vsel %vm4961, %v1673, 0.0
        %v5106 = vadd.f32 %v5104, %v5105
        %v5107 = vsel %vm4961, %v1678, 0.0
        %v5108 = vadd.f32 %v5106, %v5107
        %v5109 = vsel %vm4961, %v1683, 0.0
        %v5110 = vadd.f32 %v5108, %v5109
        %v5111 = vsel %vm4961, %v1688, 0.0
        %v5112 = vadd.f32 %v5110, %v5111
        %v5113 = vsel %vm4961, %v1693, 0.0
        %v5114 = vadd.f32 %v5112, %v5113
        %v5115 = vsel %vm4961, %v1698, 0.0
        %v5116 = vadd.f32 %v5114, %v5115
        %v5117 = vsel %vm4961, %v1703, 0.0
        %v5118 = vadd.f32 %v5116, %v5117
        %v5119 = vsel %vm4961, %v1708, 0.0
        %v5120 = vadd.f32 %v5118, %v5119
        %v5121 = vsel %vm4961, %v1713, 0.0
        %v5122 = vadd.f32 %v5120, %v5121
        %v5123 = vsel %vm4961, %v1718, 0.0
        %v5124 = vadd.f32 %v5122, %v5123
        %v5125 = vsel %vm4961, %v1723, 0.0
        %v5126 = vadd.f32 %v5124, %v5125
        %v5127 = vsel %vm4961, %v1728, 0.0
        %v5128 = vadd.f32 %v5126, %v5127
        %v5129 = vsel %vm4961, %v1733, 0.0
        %v5130 = vadd.f32 %v5128, %v5129
        %v5131 = vsel %vm4961, %v1738, 0.0
        %v5132 = vadd.f32 %v5130, %v5131
        %v5133 = vsel %vm4961, %v1743, 0.0
        %v5134 = vadd.f32 %v5132, %v5133
        %v5135 = vsel %vm4961, %v1748, 0.0
        %v5136 = vadd.f32 %v5134, %v5135
        %v5137 = vsel %vm4961, %v1753, 0.0
        %v5138 = vadd.f32 %v5136, %v5137
        %v5139 = vsel %vm4961, %v1758, 0.0
        %v5140 = vadd.f32 %v5138, %v5139
        %v5141 = vsel %vm4961, %v1763, 0.0
        %v5142 = vadd.f32 %v5140, %v5141
        %v5143 = vsel %vm4961, %v1768, 0.0
        %v5144 = vadd.f32 %v5142, %v5143
        %v5145 = vsel %vm4961, %v1773, 0.0
        %v5146 = vadd.f32 %v5144, %v5145
        %v5147 = vsel %vm4961, %v1778, 0.0
        %v5148 = vadd.f32 %v5146, %v5147
        %v5149 = vsel %vm4961, %v1783, 0.0
        %v5150 = vadd.f32 %v5148, %v5149
        %v5151 = vsel %vm4961, %v1788, 0.0
        %v5152 = vadd.f32 %v5150, %v5151
        %v5153 = vsel %vm4961, %v1793, 0.0
        %v5154 = vadd.f32 %v5152, %v5153
        %v5155 = vsel %vm4961, %v1798, 0.0
        %v5156 = vadd.f32 %v5154, %v5155
        %v5157 = vsel %vm4961, %v1803, 0.0
        %v5158 = vadd.f32 %v5156, %v5157
        %v5159 = vsel %vm4961, %v1808, 0.0
        %v5160 = vadd.f32 %v5158, %v5159
        %v5161 = vsel %vm4961, %v1813, 0.0
        %v5162 = vadd.f32 %v5160, %v5161
        %v5163 = vsel %vm4961, %v1818, 0.0
        %v5164 = vadd.f32 %v5162, %v5163
        %v5165 = vsel %vm4961, %v1823, 0.0
        %v5166 = vadd.f32 %v5164, %v5165
        %v5167 = vsel %vm4961, %v1828, 0.0
        %v5168 = vadd.f32 %v5166, %v5167
        %v5169 = vsel %vm4961, %v1833, 0.0
        %v5170 = vadd.f32 %v5168, %v5169
        %v5171 = vsel %vm4961, %v1838, 0.0
        %v5172 = vadd.f32 %v5170, %v5171
        %v5173 = vsel %vm4961, %v1843, 0.0
        %v5174 = vadd.f32 %v5172, %v5173
        %v5175 = vsel %vm4961, %v1848, 0.0
        %v5176 = vadd.f32 %v5174, %v5175
        %v5177 = vsel %vm4961, %v1853, 0.0
        %v5178 = vadd.f32 %v5176, %v5177
        %v5179 = vsel %vm4961, %v1858, 0.0
        %v5180 = vadd.f32 %v5178, %v5179
        %v5181 = vsel %vm4961, %v1863, 0.0
        %v5182 = vadd.f32 %v5180, %v5181
        %v5183 = vsel %vm4961, %v1868, 0.0
        %v5184 = vadd.f32 %v5182, %v5183
        %v5185 = vsel %vm4961, %v1873, 0.0
        %v5186 = vadd.f32 %v5184, %v5185
        %v5187 = vsel %vm4961, %v1878, 0.0
        %v5188 = vadd.f32 %v5186, %v5187
        %v5189 = vsel %vm4961, %v1883, 0.0
        %v5190 = vadd.f32 %v5188, %v5189
        %v5191 = vsel %vm4961, %v1888, 0.0
        %v5192 = vadd.f32 %v5190, %v5191
        %v5193 = vsel %vm4961, %v1893, 0.0
        %v5194 = vadd.f32 %v5192, %v5193
        %v5195 = vsel %vm4961, %v1898, 0.0
        %v5196 = vadd.f32 %v5194, %v5195
        %v5197 = vsel %vm4961, %v1903, 0.0
        %v5198 = vadd.f32 %v5196, %v5197
        %v5199 = vsel %vm4961, %v1908, 0.0
        %v5200 = vadd.f32 %v5198, %v5199
        %v5201 = vsel %vm4961, %v1913, 0.0
        %v5202 = vadd.f32 %v5200, %v5201
        %v5203 = vsel %vm4961, %v1918, 0.0
        %v5204 = vadd.f32 %v5202, %v5203
        %v5205 = vsel %vm4961, %v1923, 0.0
        %v5206 = vadd.f32 %v5204, %v5205
        %v5207 = vsel %vm4961, %v1928, 0.0
        %v5208 = vadd.f32 %v5206, %v5207
        %v5209 = vsel %vm4961, %v1933, 0.0
        %v5210 = vadd.f32 %v5208, %v5209
        %v5211 = vsel %vm4961, %v1938, 0.0
        %v5212 = vadd.f32 %v5210, %v5211
        %v5213 = vsel %vm4961, %v1943, 0.0
        %v5214 = vadd.f32 %v5212, %v5213
        %v5215 = vsel %vm4961, %v1948, 0.0
        %v5216 = vadd.f32 %v5214, %v5215
        %v5217 = vsel %vm4961, %v1953, 0.0
        %v5218 = vadd.f32 %v5216, %v5217
        %v5219 = vsel %vm4961, %v1958, 0.0
        %v5220 = vadd.f32 %v5218, %v5219
        %v5221 = vsel %vm4961, %v1963, 0.0
        %v5222 = vadd.f32 %v5220, %v5221
        %v5223 = vsel %vm4961, %v1968, 0.0
        %v5224 = vadd.f32 %v5222, %v5223
        %v5225 = vsel %vm4961, %v1973, 0.0
        %v5226 = vadd.f32 %v5224, %v5225
        %v5227 = vsel %vm4961, %v1978, 0.0
        %v5228 = vadd.f32 %v5226, %v5227
        %v5229 = vsel %vm4961, %v1983, 0.0
        %v5230 = vadd.f32 %v5228, %v5229
        %v5231 = vsel %vm4961, %v1988, 0.0
        %v5232 = vadd.f32 %v5230, %v5231
        %v5233 = vsel %vm4961, %v1993, 0.0
        %v5234 = vadd.f32 %v5232, %v5233
        %v5235 = vsel %vm4961, %v1998, 0.0
        %v5236 = vadd.f32 %v5234, %v5235
        %v5237 = vsel %vm4961, %v2003, 0.0
        %v5238 = vadd.f32 %v5236, %v5237
        %v5239 = vsel %vm4961, %v2008, 0.0
        %v5240 = vadd.f32 %v5238, %v5239
        %v5241 = vsel %vm4961, %v2013, 0.0
        %v5242 = vadd.f32 %v5240, %v5241
        %v5243 = vsel %vm4961, %v2018, 0.0
        %v5244 = vadd.f32 %v5242, %v5243
        %v5245 = vsel %vm4961, %v2023, 0.0
        %v5246 = vadd.f32 %v5244, %v5245
        %v5247 = vsel %vm4961, %v2028, 0.0
        %v5248 = vadd.f32 %v5246, %v5247
        %v5249 = vsel %vm4961, %v2033, 0.0
        %v5250 = vadd.f32 %v5248, %v5249
        %v5251 = vsel %vm4961, %v2038, 0.0
        %v5252 = vadd.f32 %v5250, %v5251
        %v5253 = vsel %vm4961, %v2043, 0.0
        %v5254 = vadd.f32 %v5252, %v5253
        %v5255 = vsel %vm4961, %v2048, 0.0
        %v5256 = vadd.f32 %v5254, %v5255
        %v5257 = vsel %vm4961, %v2053, 0.0
        %v5258 = vadd.f32 %v5256, %v5257
        %v5259 = vsel %vm4961, %v2058, 0.0
        %v5260 = vadd.f32 %v5258, %v5259
        %v5261 = vsel %vm4961, %v2063, 0.0
        %v5262 = vadd.f32 %v5260, %v5261
        %v5263 = vsel %vm4961, %v2068, 0.0
        %v5264 = vadd.f32 %v5262, %v5263
        %v5265 = vsel %vm4961, %v2073, 0.0
        %v5266 = vadd.f32 %v5264, %v5265
        %v5267 = vsel %vm4961, %v2078, 0.0
        %v5268 = vadd.f32 %v5266, %v5267
        %v5269 = vsel %vm4961, %v2083, 0.0
        %v5270 = vadd.f32 %v5268, %v5269
        %v5271 = vsel %vm4961, %v2088, 0.0
        %v5272 = vadd.f32 %v5270, %v5271
        %v5273 = vsel %vm4961, %v2093, 0.0
        %v5274 = vadd.f32 %v5272, %v5273
        %v5275 = vsel %vm4961, %v2098, 0.0
        %v5276 = vadd.f32 %v5274, %v5275
        %v5277 = vsel %vm4961, %v2103, 0.0
        %v5278 = vadd.f32 %v5276, %v5277
        %v5279 = vsel %vm4961, %v2108, 0.0
        %v5280 = vadd.f32 %v5278, %v5279
        %v5281 = vsel %vm4961, %v2113, 0.0
        %v5282 = vadd.f32 %v5280, %v5281
        %v5283 = vsel %vm4961, %v2118, 0.0
        %v5284 = vadd.f32 %v5282, %v5283
        %v5285 = vsel %vm4961, %v2123, 0.0
        %v5286 = vadd.f32 %v5284, %v5285
        %v5287 = vsel %vm4961, %v2128, 0.0
        %v5288 = vadd.f32 %v5286, %v5287
        %v5289 = vsel %vm4961, %v2133, 0.0
        %v5290 = vadd.f32 %v5288, %v5289
        %v5291 = vsel %vm4961, %v2138, 0.0
        %v5292 = vadd.f32 %v5290, %v5291
        %v5293 = vsel %vm4961, %v2143, 0.0
        %v5294 = vadd.f32 %v5292, %v5293
        %v5295 = vsel %vm4961, %v2148, 0.0
        %v5296 = vadd.f32 %v5294, %v5295
        %v5297 = vsel %vm4961, %v2153, 0.0
        %v5298 = vadd.f32 %v5296, %v5297
        %v5299 = vsel %vm4961, %v2158, 0.0
        %v5300 = vadd.f32 %v5298, %v5299
        %v5301 = vsel %vm4961, %v2163, 0.0
        %v5302 = vadd.f32 %v5300, %v5301
        %v5303 = vsel %vm4961, %v2168, 0.0
        %v5304 = vadd.f32 %v5302, %v5303
        %v5305 = vsel %vm4961, %v2173, 0.0
        %v5306 = vadd.f32 %v5304, %v5305
        %v5307 = vsel %vm4961, %v2178, 0.0
        %v5308 = vadd.f32 %v5306, %v5307
        %v5309 = vsel %vm4961, %v2183, 0.0
        %v5310 = vadd.f32 %v5308, %v5309
        %v5311 = vsel %vm4961, %v2188, 0.0
        %v5312 = vadd.f32 %v5310, %v5311
        %v5313 = vsel %vm4961, %v2193, 0.0
        %v5314 = vadd.f32 %v5312, %v5313
        %v5315 = vsel %vm4961, %v2198, 0.0
        %v5316 = vadd.f32 %v5314, %v5315
        %v5317 = vsel %vm4961, %v2203, 0.0
        %v5318 = vadd.f32 %v5316, %v5317
        %v5319 = vsel %vm4961, %v2208, 0.0
        %v5320 = vadd.f32 %v5318, %v5319
        %v5321 = vsel %vm4961, %v2213, 0.0
        %v5322 = vadd.f32 %v5320, %v5321
        %v5323 = vsel %vm4961, %v2218, 0.0
        %v5324 = vadd.f32 %v5322, %v5323
        %v5325 = vsel %vm4961, %v2223, 0.0
        %v5326 = vadd.f32 %v5324, %v5325
        %v5327 = vsel %vm4961, %v2228, 0.0
        %v5328 = vadd.f32 %v5326, %v5327
        %v5329 = vsel %vm4961, %v2233, 0.0
        %v5330 = vadd.f32 %v5328, %v5329
        %v5331 = vsel %vm4961, %v2238, 0.0
        %v5332 = vadd.f32 %v5330, %v5331
        %v5333 = vsel %vm4961, %v2243, 0.0
        %v5334 = vadd.f32 %v5332, %v5333
        %v5335 = vsel %vm4961, %v2248, 0.0
        %v5336 = vadd.f32 %v5334, %v5335
        %v5337 = vsel %vm4961, %v2253, 0.0
        %v5338 = vadd.f32 %v5336, %v5337
        %v5339 = vsel %vm4961, %v2258, 0.0
        %v5340 = vadd.f32 %v5338, %v5339
        %v5341 = vsel %vm4961, %v2263, 0.0
        %v5342 = vadd.f32 %v5340, %v5341
        %v5343 = vsel %vm4961, %v2268, 0.0
        %v5344 = vadd.f32 %v5342, %v5343
        %v5345 = vsel %vm4961, %v2273, 0.0
        %v5346 = vadd.f32 %v5344, %v5345
        %v5347 = vsel %vm4961, %v2278, 0.0
        %v5348 = vadd.f32 %v5346, %v5347
        %v5349 = vsel %vm4961, %v2283, 0.0
        %v5350 = vadd.f32 %v5348, %v5349
        %v5351 = vsel %vm4961, %v2288, 0.0
        %v5352 = vadd.f32 %v5350, %v5351
        %v5353 = vsel %vm4961, %v2293, 0.0
        %v5354 = vadd.f32 %v5352, %v5353
        %v5355 = vsel %vm4961, %v2298, 0.0
        %v5356 = vadd.f32 %v5354, %v5355
        %v5357 = vsel %vm4961, %v2303, 0.0
        %v5358 = vadd.f32 %v5356, %v5357
        %v5359 = vsel %vm4961, %v2308, 0.0
        %v5360 = vadd.f32 %v5358, %v5359
        %v5361 = vsel %vm4961, %v2313, 0.0
        %v5362 = vadd.f32 %v5360, %v5361
        %v5363 = vsel %vm4961, %v2318, 0.0
        %v5364 = vadd.f32 %v5362, %v5363
        %v5365 = vsel %vm4961, %v2323, 0.0
        %v5366 = vadd.f32 %v5364, %v5365
        %v5367 = vsel %vm4961, %v2328, 0.0
        %v5368 = vadd.f32 %v5366, %v5367
        %v5369 = vsel %vm4961, %v2333, 0.0
        %v5370 = vadd.f32 %v5368, %v5369
        %v5371 = vsel %vm4961, %v2338, 0.0
        %v5372 = vadd.f32 %v5370, %v5371
        %v5373 = vsel %vm4961, %v2343, 0.0
        %v5374 = vadd.f32 %v5372, %v5373
        %v5375 = vsel %vm4961, %v2348, 0.0
        %v5376 = vadd.f32 %v5374, %v5375
        %v5377 = vsel %vm4961, %v2353, 0.0
        %v5378 = vadd.f32 %v5376, %v5377
        %v5379 = vsel %vm4961, %v2358, 0.0
        %v5380 = vadd.f32 %v5378, %v5379
        %v5381 = vsel %vm4961, %v2363, 0.0
        %v5382 = vadd.f32 %v5380, %v5381
        %v5383 = vsel %vm4961, %v2368, 0.0
        %v5384 = vadd.f32 %v5382, %v5383
        %v5385 = vsel %vm4961, %v2373, 0.0
        %v5386 = vadd.f32 %v5384, %v5385
        %v5387 = vsel %vm4961, %v2378, 0.0
        %v5388 = vadd.f32 %v5386, %v5387
        %v5389 = vsel %vm4961, %v2383, 0.0
        %v5390 = vadd.f32 %v5388, %v5389
        %v5391 = vsel %vm4961, %v2388, 0.0
        %v5392 = vadd.f32 %v5390, %v5391
        %v5393 = vsel %vm4961, %v2393, 0.0
        %v5394 = vadd.f32 %v5392, %v5393
        %v5395 = vsel %vm4961, %v2398, 0.0
        %v5396 = vadd.f32 %v5394, %v5395
        %v5397 = vsel %vm4961, %v2403, 0.0
        %v5398 = vadd.f32 %v5396, %v5397
        %v5399 = vsel %vm4961, %v2408, 0.0
        %v5400 = vadd.f32 %v5398, %v5399
        %v5401 = vsel %vm4961, %v2413, 0.0
        %v5402 = vadd.f32 %v5400, %v5401
        %v5403 = vsel %vm4961, %v2418, 0.0
        %v5404 = vadd.f32 %v5402, %v5403
        %v5405 = vsel %vm4961, %v2423, 0.0
        %v5406 = vadd.f32 %v5404, %v5405
        %v5407 = vsel %vm4961, %v2428, 0.0
        %v5408 = vadd.f32 %v5406, %v5407
        %v5409 = vsel %vm4961, %v2433, 0.0
        %v5410 = vadd.f32 %v5408, %v5409
        %v5411 = vsel %vm4961, %v2438, 0.0
        %v5412 = vadd.f32 %v5410, %v5411
        %v5413 = vsel %vm4961, %v2443, 0.0
        %v5414 = vadd.f32 %v5412, %v5413
        %v5415 = vsel %vm4961, %v2448, 0.0
        %v5416 = vadd.f32 %v5414, %v5415
        %v5417 = vsel %vm4961, %v2453, 0.0
        %v5418 = vadd.f32 %v5416, %v5417
        %v5419 = vsel %vm4961, %v2458, 0.0
        %v5420 = vadd.f32 %v5418, %v5419
        %v5421 = vsel %vm4961, %v2463, 0.0
        %v5422 = vadd.f32 %v5420, %v5421
        %v5423 = vsel %vm4961, %v2468, 0.0
        %v5424 = vadd.f32 %v5422, %v5423
        %v5425 = vsel %vm4961, %v2473, 0.0
        %v5426 = vadd.f32 %v5424, %v5425
        %v5427 = vsel %vm4961, %v2478, 0.0
        %v5428 = vadd.f32 %v5426, %v5427
        %v5429 = vsel %vm4961, %v2483, 0.0
        %v5430 = vadd.f32 %v5428, %v5429
        %v5431 = vsel %vm4961, %v2488, 0.0
        %v5432 = vadd.f32 %v5430, %v5431
        %v5433 = vsel %vm4961, %v2493, 0.0
        %v5434 = vadd.f32 %v5432, %v5433
        %v5435 = vsel %vm4961, %v2498, 0.0
        %v5436 = vadd.f32 %v5434, %v5435
        %v5437 = vsel %vm4961, %v2503, 0.0
        %v5438 = vadd.f32 %v5436, %v5437
        %v5439 = vsel %vm4961, %v2508, 0.0
        %v5440 = vadd.f32 %v5438, %v5439
        %v5441 = vsel %vm4961, %v2513, 0.0
        %v5442 = vadd.f32 %v5440, %v5441
        %v5443 = vsel %vm4961, %v2518, 0.0
        %v5444 = vadd.f32 %v5442, %v5443
        %v5445 = vsel %vm4961, %v2523, 0.0
        %v5446 = vadd.f32 %v5444, %v5445
        %v5447 = vsel %vm4961, %v2528, 0.0
        %v5448 = vadd.f32 %v5446, %v5447
        %v5449 = vsel %vm4961, %v2533, 0.0
        %v5450 = vadd.f32 %v5448, %v5449
        %v5451 = vsel %vm4961, %v2538, 0.0
        %v5452 = vadd.f32 %v5450, %v5451
        %v5453 = vsel %vm4961, %v2543, 0.0
        %v5454 = vadd.f32 %v5452, %v5453
        %v5455 = vsel %vm4961, %v2548, 0.0
        %v5456 = vadd.f32 %v5454, %v5455
        %v5457 = vsel %vm4961, %v2553, 0.0
        %v5458 = vadd.f32 %v5456, %v5457
        %v5459 = vsel %vm4961, %v2558, 0.0
        %v5460 = vadd.f32 %v5458, %v5459
        %v5461 = vsel %vm4961, %v2563, 0.0
        %v5462 = vadd.f32 %v5460, %v5461
        %v5463 = vsel %vm4961, %v2568, 0.0
        %v5464 = vadd.f32 %v5462, %v5463
        %v5465 = vsel %vm4961, %v2573, 0.0
        %v5466 = vadd.f32 %v5464, %v5465
        %v5467 = vsel %vm4961, %v2578, 0.0
        %v5468 = vadd.f32 %v5466, %v5467
        %v5469 = vsel %vm4961, %v2583, 0.0
        %v5470 = vadd.f32 %v5468, %v5469
        %v5471 = vsel %vm4961, %v2588, 0.0
        %v5472 = vadd.f32 %v5470, %v5471
        %v5473 = vrot.slane %v5472, 4
        %v5474 = vadd.f32 %v5472, %v5473
        %v5475 = vrot.slane %v5474, 2
        %v5476 = vadd.f32 %v5474, %v5475
        %v5477 = vrot.slane %v5476, 1
        %v5478 = vadd.f32 %v5476, %v5477
        %v5479 = vrcp.pop 2048.0
        %v5480 = vmul.f32 %v5478, %v5479
        %v5481 = vsub.f32 %v1313, %v5480
        %v5482 = vsub.f32 %v1318, %v5480
        %v5483 = vsub.f32 %v1323, %v5480
        %v5484 = vsub.f32 %v1328, %v5480
        %v5485 = vsub.f32 %v1333, %v5480
        %v5486 = vsub.f32 %v1338, %v5480
        %v5487 = vsub.f32 %v1343, %v5480
        %v5488 = vsub.f32 %v1348, %v5480
        %v5489 = vsub.f32 %v1353, %v5480
        %v5490 = vsub.f32 %v1358, %v5480
        %v5491 = vsub.f32 %v1363, %v5480
        %v5492 = vsub.f32 %v1368, %v5480
        %v5493 = vsub.f32 %v1373, %v5480
        %v5494 = vsub.f32 %v1378, %v5480
        %v5495 = vsub.f32 %v1383, %v5480
        %v5496 = vsub.f32 %v1388, %v5480
        %v5497 = vsub.f32 %v1393, %v5480
        %v5498 = vsub.f32 %v1398, %v5480
        %v5499 = vsub.f32 %v1403, %v5480
        %v5500 = vsub.f32 %v1408, %v5480
        %v5501 = vsub.f32 %v1413, %v5480
        %v5502 = vsub.f32 %v1418, %v5480
        %v5503 = vsub.f32 %v1423, %v5480
        %v5504 = vsub.f32 %v1428, %v5480
        %v5505 = vsub.f32 %v1433, %v5480
        %v5506 = vsub.f32 %v1438, %v5480
        %v5507 = vsub.f32 %v1443, %v5480
        %v5508 = vsub.f32 %v1448, %v5480
        %v5509 = vsub.f32 %v1453, %v5480
        %v5510 = vsub.f32 %v1458, %v5480
        %v5511 = vsub.f32 %v1463, %v5480
        %v5512 = vsub.f32 %v1468, %v5480
        %v5513 = vsub.f32 %v1473, %v5480
        %v5514 = vsub.f32 %v1478, %v5480
        %v5515 = vsub.f32 %v1483, %v5480
        %v5516 = vsub.f32 %v1488, %v5480
        %v5517 = vsub.f32 %v1493, %v5480
        %v5518 = vsub.f32 %v1498, %v5480
        %v5519 = vsub.f32 %v1503, %v5480
        %v5520 = vsub.f32 %v1508, %v5480
        %v5521 = vsub.f32 %v1513, %v5480
        %v5522 = vsub.f32 %v1518, %v5480
        %v5523 = vsub.f32 %v1523, %v5480
        %v5524 = vsub.f32 %v1528, %v5480
        %v5525 = vsub.f32 %v1533, %v5480
        %v5526 = vsub.f32 %v1538, %v5480
        %v5527 = vsub.f32 %v1543, %v5480
        %v5528 = vsub.f32 %v1548, %v5480
        %v5529 = vsub.f32 %v1553, %v5480
        %v5530 = vsub.f32 %v1558, %v5480
        %v5531 = vsub.f32 %v1563, %v5480
        %v5532 = vsub.f32 %v1568, %v5480
        %v5533 = vsub.f32 %v1573, %v5480
        %v5534 = vsub.f32 %v1578, %v5480
        %v5535 = vsub.f32 %v1583, %v5480
        %v5536 = vsub.f32 %v1588, %v5480
        %v5537 = vsub.f32 %v1593, %v5480
        %v5538 = vsub.f32 %v1598, %v5480
        %v5539 = vsub.f32 %v1603, %v5480
        %v5540 = vsub.f32 %v1608, %v5480
        %v5541 = vsub.f32 %v1613, %v5480
        %v5542 = vsub.f32 %v1618, %v5480
        %v5543 = vsub.f32 %v1623, %v5480
        %v5544 = vsub.f32 %v1628, %v5480
        %v5545 = vsub.f32 %v1633, %v5480
        %v5546 = vsub.f32 %v1638, %v5480
        %v5547 = vsub.f32 %v1643, %v5480
        %v5548 = vsub.f32 %v1648, %v5480
        %v5549 = vsub.f32 %v1653, %v5480
        %v5550 = vsub.f32 %v1658, %v5480
        %v5551 = vsub.f32 %v1663, %v5480
        %v5552 = vsub.f32 %v1668, %v5480
        %v5553 = vsub.f32 %v1673, %v5480
        %v5554 = vsub.f32 %v1678, %v5480
        %v5555 = vsub.f32 %v1683, %v5480
        %v5556 = vsub.f32 %v1688, %v5480
        %v5557 = vsub.f32 %v1693, %v5480
        %v5558 = vsub.f32 %v1698, %v5480
        %v5559 = vsub.f32 %v1703, %v5480
        %v5560 = vsub.f32 %v1708, %v5480
        %v5561 = vsub.f32 %v1713, %v5480
        %v5562 = vsub.f32 %v1718, %v5480
        %v5563 = vsub.f32 %v1723, %v5480
        %v5564 = vsub.f32 %v1728, %v5480
        %v5565 = vsub.f32 %v1733, %v5480
        %v5566 = vsub.f32 %v1738, %v5480
        %v5567 = vsub.f32 %v1743, %v5480
        %v5568 = vsub.f32 %v1748, %v5480
        %v5569 = vsub.f32 %v1753, %v5480
        %v5570 = vsub.f32 %v1758, %v5480
        %v5571 = vsub.f32 %v1763, %v5480
        %v5572 = vsub.f32 %v1768, %v5480
        %v5573 = vsub.f32 %v1773, %v5480
        %v5574 = vsub.f32 %v1778, %v5480
        %v5575 = vsub.f32 %v1783, %v5480
        %v5576 = vsub.f32 %v1788, %v5480
        %v5577 = vsub.f32 %v1793, %v5480
        %v5578 = vsub.f32 %v1798, %v5480
        %v5579 = vsub.f32 %v1803, %v5480
        %v5580 = vsub.f32 %v1808, %v5480
        %v5581 = vsub.f32 %v1813, %v5480
        %v5582 = vsub.f32 %v1818, %v5480
        %v5583 = vsub.f32 %v1823, %v5480
        %v5584 = vsub.f32 %v1828, %v5480
        %v5585 = vsub.f32 %v1833, %v5480
        %v5586 = vsub.f32 %v1838, %v5480
        %v5587 = vsub.f32 %v1843, %v5480
        %v5588 = vsub.f32 %v1848, %v5480
        %v5589 = vsub.f32 %v1853, %v5480
        %v5590 = vsub.f32 %v1858, %v5480
        %v5591 = vsub.f32 %v1863, %v5480
        %v5592 = vsub.f32 %v1868, %v5480
        %v5593 = vsub.f32 %v1873, %v5480
        %v5594 = vsub.f32 %v1878, %v5480
        %v5595 = vsub.f32 %v1883, %v5480
        %v5596 = vsub.f32 %v1888, %v5480
        %v5597 = vsub.f32 %v1893, %v5480
        %v5598 = vsub.f32 %v1898, %v5480
        %v5599 = vsub.f32 %v1903, %v5480
        %v5600 = vsub.f32 %v1908, %v5480
        %v5601 = vsub.f32 %v1913, %v5480
        %v5602 = vsub.f32 %v1918, %v5480
        %v5603 = vsub.f32 %v1923, %v5480
        %v5604 = vsub.f32 %v1928, %v5480
        %v5605 = vsub.f32 %v1933, %v5480
        %v5606 = vsub.f32 %v1938, %v5480
        %v5607 = vsub.f32 %v1943, %v5480
        %v5608 = vsub.f32 %v1948, %v5480
        %v5609 = vsub.f32 %v1953, %v5480
        %v5610 = vsub.f32 %v1958, %v5480
        %v5611 = vsub.f32 %v1963, %v5480
        %v5612 = vsub.f32 %v1968, %v5480
        %v5613 = vsub.f32 %v1973, %v5480
        %v5614 = vsub.f32 %v1978, %v5480
        %v5615 = vsub.f32 %v1983, %v5480
        %v5616 = vsub.f32 %v1988, %v5480
        %v5617 = vsub.f32 %v1993, %v5480
        %v5618 = vsub.f32 %v1998, %v5480
        %v5619 = vsub.f32 %v2003, %v5480
        %v5620 = vsub.f32 %v2008, %v5480
        %v5621 = vsub.f32 %v2013, %v5480
        %v5622 = vsub.f32 %v2018, %v5480
        %v5623 = vsub.f32 %v2023, %v5480
        %v5624 = vsub.f32 %v2028, %v5480
        %v5625 = vsub.f32 %v2033, %v5480
        %v5626 = vsub.f32 %v2038, %v5480
        %v5627 = vsub.f32 %v2043, %v5480
        %v5628 = vsub.f32 %v2048, %v5480
        %v5629 = vsub.f32 %v2053, %v5480
        %v5630 = vsub.f32 %v2058, %v5480
        %v5631 = vsub.f32 %v2063, %v5480
        %v5632 = vsub.f32 %v2068, %v5480
        %v5633 = vsub.f32 %v2073, %v5480
        %v5634 = vsub.f32 %v2078, %v5480
        %v5635 = vsub.f32 %v2083, %v5480
        %v5636 = vsub.f32 %v2088, %v5480
        %v5637 = vsub.f32 %v2093, %v5480
        %v5638 = vsub.f32 %v2098, %v5480
        %v5639 = vsub.f32 %v2103, %v5480
        %v5640 = vsub.f32 %v2108, %v5480
        %v5641 = vsub.f32 %v2113, %v5480
        %v5642 = vsub.f32 %v2118, %v5480
        %v5643 = vsub.f32 %v2123, %v5480
        %v5644 = vsub.f32 %v2128, %v5480
        %v5645 = vsub.f32 %v2133, %v5480
        %v5646 = vsub.f32 %v2138, %v5480
        %v5647 = vsub.f32 %v2143, %v5480
        %v5648 = vsub.f32 %v2148, %v5480
        %v5649 = vsub.f32 %v2153, %v5480
        %v5650 = vsub.f32 %v2158, %v5480
        %v5651 = vsub.f32 %v2163, %v5480
        %v5652 = vsub.f32 %v2168, %v5480
        %v5653 = vsub.f32 %v2173, %v5480
        %v5654 = vsub.f32 %v2178, %v5480
        %v5655 = vsub.f32 %v2183, %v5480
        %v5656 = vsub.f32 %v2188, %v5480
        %v5657 = vsub.f32 %v2193, %v5480
        %v5658 = vsub.f32 %v2198, %v5480
        %v5659 = vsub.f32 %v2203, %v5480
        %v5660 = vsub.f32 %v2208, %v5480
        %v5661 = vsub.f32 %v2213, %v5480
        %v5662 = vsub.f32 %v2218, %v5480
        %v5663 = vsub.f32 %v2223, %v5480
        %v5664 = vsub.f32 %v2228, %v5480
        %v5665 = vsub.f32 %v2233, %v5480
        %v5666 = vsub.f32 %v2238, %v5480
        %v5667 = vsub.f32 %v2243, %v5480
        %v5668 = vsub.f32 %v2248, %v5480
        %v5669 = vsub.f32 %v2253, %v5480
        %v5670 = vsub.f32 %v2258, %v5480
        %v5671 = vsub.f32 %v2263, %v5480
        %v5672 = vsub.f32 %v2268, %v5480
        %v5673 = vsub.f32 %v2273, %v5480
        %v5674 = vsub.f32 %v2278, %v5480
        %v5675 = vsub.f32 %v2283, %v5480
        %v5676 = vsub.f32 %v2288, %v5480
        %v5677 = vsub.f32 %v2293, %v5480
        %v5678 = vsub.f32 %v2298, %v5480
        %v5679 = vsub.f32 %v2303, %v5480
        %v5680 = vsub.f32 %v2308, %v5480
        %v5681 = vsub.f32 %v2313, %v5480
        %v5682 = vsub.f32 %v2318, %v5480
        %v5683 = vsub.f32 %v2323, %v5480
        %v5684 = vsub.f32 %v2328, %v5480
        %v5685 = vsub.f32 %v2333, %v5480
        %v5686 = vsub.f32 %v2338, %v5480
        %v5687 = vsub.f32 %v2343, %v5480
        %v5688 = vsub.f32 %v2348, %v5480
        %v5689 = vsub.f32 %v2353, %v5480
        %v5690 = vsub.f32 %v2358, %v5480
        %v5691 = vsub.f32 %v2363, %v5480
        %v5692 = vsub.f32 %v2368, %v5480
        %v5693 = vsub.f32 %v2373, %v5480
        %v5694 = vsub.f32 %v2378, %v5480
        %v5695 = vsub.f32 %v2383, %v5480
        %v5696 = vsub.f32 %v2388, %v5480
        %v5697 = vsub.f32 %v2393, %v5480
        %v5698 = vsub.f32 %v2398, %v5480
        %v5699 = vsub.f32 %v2403, %v5480
        %v5700 = vsub.f32 %v2408, %v5480
        %v5701 = vsub.f32 %v2413, %v5480
        %v5702 = vsub.f32 %v2418, %v5480
        %v5703 = vsub.f32 %v2423, %v5480
        %v5704 = vsub.f32 %v2428, %v5480
        %v5705 = vsub.f32 %v2433, %v5480
        %v5706 = vsub.f32 %v2438, %v5480
        %v5707 = vsub.f32 %v2443, %v5480
        %v5708 = vsub.f32 %v2448, %v5480
        %v5709 = vsub.f32 %v2453, %v5480
        %v5710 = vsub.f32 %v2458, %v5480
        %v5711 = vsub.f32 %v2463, %v5480
        %v5712 = vsub.f32 %v2468, %v5480
        %v5713 = vsub.f32 %v2473, %v5480
        %v5714 = vsub.f32 %v2478, %v5480
        %v5715 = vsub.f32 %v2483, %v5480
        %v5716 = vsub.f32 %v2488, %v5480
        %v5717 = vsub.f32 %v2493, %v5480
        %v5718 = vsub.f32 %v2498, %v5480
        %v5719 = vsub.f32 %v2503, %v5480
        %v5720 = vsub.f32 %v2508, %v5480
        %v5721 = vsub.f32 %v2513, %v5480
        %v5722 = vsub.f32 %v2518, %v5480
        %v5723 = vsub.f32 %v2523, %v5480
        %v5724 = vsub.f32 %v2528, %v5480
        %v5725 = vsub.f32 %v2533, %v5480
        %v5726 = vsub.f32 %v2538, %v5480
        %v5727 = vsub.f32 %v2543, %v5480
        %v5728 = vsub.f32 %v2548, %v5480
        %v5729 = vsub.f32 %v2553, %v5480
        %v5730 = vsub.f32 %v2558, %v5480
        %v5731 = vsub.f32 %v2563, %v5480
        %v5732 = vsub.f32 %v2568, %v5480
        %v5733 = vsub.f32 %v2573, %v5480
        %v5734 = vsub.f32 %v2578, %v5480
        %v5735 = vsub.f32 %v2583, %v5480
        %v5736 = vsub.f32 %v2588, %v5480
        %v5737 = vmul.f32 %v5481, %v5481
        %v5738 = vmul.f32 %v5482, %v5482
        %v5739 = vmul.f32 %v5483, %v5483
        %v5740 = vmul.f32 %v5484, %v5484
        %v5741 = vmul.f32 %v5485, %v5485
        %v5742 = vmul.f32 %v5486, %v5486
        %v5743 = vmul.f32 %v5487, %v5487
        %v5744 = vmul.f32 %v5488, %v5488
        %v5745 = vmul.f32 %v5489, %v5489
        %v5746 = vmul.f32 %v5490, %v5490
        %v5747 = vmul.f32 %v5491, %v5491
        %v5748 = vmul.f32 %v5492, %v5492
        %v5749 = vmul.f32 %v5493, %v5493
        %v5750 = vmul.f32 %v5494, %v5494
        %v5751 = vmul.f32 %v5495, %v5495
        %v5752 = vmul.f32 %v5496, %v5496
        %v5753 = vmul.f32 %v5497, %v5497
        %v5754 = vmul.f32 %v5498, %v5498
        %v5755 = vmul.f32 %v5499, %v5499
        %v5756 = vmul.f32 %v5500, %v5500
        %v5757 = vmul.f32 %v5501, %v5501
        %v5758 = vmul.f32 %v5502, %v5502
        %v5759 = vmul.f32 %v5503, %v5503
        %v5760 = vmul.f32 %v5504, %v5504
        %v5761 = vmul.f32 %v5505, %v5505
        %v5762 = vmul.f32 %v5506, %v5506
        %v5763 = vmul.f32 %v5507, %v5507
        %v5764 = vmul.f32 %v5508, %v5508
        %v5765 = vmul.f32 %v5509, %v5509
        %v5766 = vmul.f32 %v5510, %v5510
        %v5767 = vmul.f32 %v5511, %v5511
        %v5768 = vmul.f32 %v5512, %v5512
        %v5769 = vmul.f32 %v5513, %v5513
        %v5770 = vmul.f32 %v5514, %v5514
        %v5771 = vmul.f32 %v5515, %v5515
        %v5772 = vmul.f32 %v5516, %v5516
        %v5773 = vmul.f32 %v5517, %v5517
        %v5774 = vmul.f32 %v5518, %v5518
        %v5775 = vmul.f32 %v5519, %v5519
        %v5776 = vmul.f32 %v5520, %v5520
        %v5777 = vmul.f32 %v5521, %v5521
        %v5778 = vmul.f32 %v5522, %v5522
        %v5779 = vmul.f32 %v5523, %v5523
        %v5780 = vmul.f32 %v5524, %v5524
        %v5781 = vmul.f32 %v5525, %v5525
        %v5782 = vmul.f32 %v5526, %v5526
        %v5783 = vmul.f32 %v5527, %v5527
        %v5784 = vmul.f32 %v5528, %v5528
        %v5785 = vmul.f32 %v5529, %v5529
        %v5786 = vmul.f32 %v5530, %v5530
        %v5787 = vmul.f32 %v5531, %v5531
        %v5788 = vmul.f32 %v5532, %v5532
        %v5789 = vmul.f32 %v5533, %v5533
        %v5790 = vmul.f32 %v5534, %v5534
        %v5791 = vmul.f32 %v5535, %v5535
        %v5792 = vmul.f32 %v5536, %v5536
        %v5793 = vmul.f32 %v5537, %v5537
        %v5794 = vmul.f32 %v5538, %v5538
        %v5795 = vmul.f32 %v5539, %v5539
        %v5796 = vmul.f32 %v5540, %v5540
        %v5797 = vmul.f32 %v5541, %v5541
        %v5798 = vmul.f32 %v5542, %v5542
        %v5799 = vmul.f32 %v5543, %v5543
        %v5800 = vmul.f32 %v5544, %v5544
        %v5801 = vmul.f32 %v5545, %v5545
        %v5802 = vmul.f32 %v5546, %v5546
        %v5803 = vmul.f32 %v5547, %v5547
        %v5804 = vmul.f32 %v5548, %v5548
        %v5805 = vmul.f32 %v5549, %v5549
        %v5806 = vmul.f32 %v5550, %v5550
        %v5807 = vmul.f32 %v5551, %v5551
        %v5808 = vmul.f32 %v5552, %v5552
        %v5809 = vmul.f32 %v5553, %v5553
        %v5810 = vmul.f32 %v5554, %v5554
        %v5811 = vmul.f32 %v5555, %v5555
        %v5812 = vmul.f32 %v5556, %v5556
        %v5813 = vmul.f32 %v5557, %v5557
        %v5814 = vmul.f32 %v5558, %v5558
        %v5815 = vmul.f32 %v5559, %v5559
        %v5816 = vmul.f32 %v5560, %v5560
        %v5817 = vmul.f32 %v5561, %v5561
        %v5818 = vmul.f32 %v5562, %v5562
        %v5819 = vmul.f32 %v5563, %v5563
        %v5820 = vmul.f32 %v5564, %v5564
        %v5821 = vmul.f32 %v5565, %v5565
        %v5822 = vmul.f32 %v5566, %v5566
        %v5823 = vmul.f32 %v5567, %v5567
        %v5824 = vmul.f32 %v5568, %v5568
        %v5825 = vmul.f32 %v5569, %v5569
        %v5826 = vmul.f32 %v5570, %v5570
        %v5827 = vmul.f32 %v5571, %v5571
        %v5828 = vmul.f32 %v5572, %v5572
        %v5829 = vmul.f32 %v5573, %v5573
        %v5830 = vmul.f32 %v5574, %v5574
        %v5831 = vmul.f32 %v5575, %v5575
        %v5832 = vmul.f32 %v5576, %v5576
        %v5833 = vmul.f32 %v5577, %v5577
        %v5834 = vmul.f32 %v5578, %v5578
        %v5835 = vmul.f32 %v5579, %v5579
        %v5836 = vmul.f32 %v5580, %v5580
        %v5837 = vmul.f32 %v5581, %v5581
        %v5838 = vmul.f32 %v5582, %v5582
        %v5839 = vmul.f32 %v5583, %v5583
        %v5840 = vmul.f32 %v5584, %v5584
        %v5841 = vmul.f32 %v5585, %v5585
        %v5842 = vmul.f32 %v5586, %v5586
        %v5843 = vmul.f32 %v5587, %v5587
        %v5844 = vmul.f32 %v5588, %v5588
        %v5845 = vmul.f32 %v5589, %v5589
        %v5846 = vmul.f32 %v5590, %v5590
        %v5847 = vmul.f32 %v5591, %v5591
        %v5848 = vmul.f32 %v5592, %v5592
        %v5849 = vmul.f32 %v5593, %v5593
        %v5850 = vmul.f32 %v5594, %v5594
        %v5851 = vmul.f32 %v5595, %v5595
        %v5852 = vmul.f32 %v5596, %v5596
        %v5853 = vmul.f32 %v5597, %v5597
        %v5854 = vmul.f32 %v5598, %v5598
        %v5855 = vmul.f32 %v5599, %v5599
        %v5856 = vmul.f32 %v5600, %v5600
        %v5857 = vmul.f32 %v5601, %v5601
        %v5858 = vmul.f32 %v5602, %v5602
        %v5859 = vmul.f32 %v5603, %v5603
        %v5860 = vmul.f32 %v5604, %v5604
        %v5861 = vmul.f32 %v5605, %v5605
        %v5862 = vmul.f32 %v5606, %v5606
        %v5863 = vmul.f32 %v5607, %v5607
        %v5864 = vmul.f32 %v5608, %v5608
        %v5865 = vmul.f32 %v5609, %v5609
        %v5866 = vmul.f32 %v5610, %v5610
        %v5867 = vmul.f32 %v5611, %v5611
        %v5868 = vmul.f32 %v5612, %v5612
        %v5869 = vmul.f32 %v5613, %v5613
        %v5870 = vmul.f32 %v5614, %v5614
        %v5871 = vmul.f32 %v5615, %v5615
        %v5872 = vmul.f32 %v5616, %v5616
        %v5873 = vmul.f32 %v5617, %v5617
        %v5874 = vmul.f32 %v5618, %v5618
        %v5875 = vmul.f32 %v5619, %v5619
        %v5876 = vmul.f32 %v5620, %v5620
        %v5877 = vmul.f32 %v5621, %v5621
        %v5878 = vmul.f32 %v5622, %v5622
        %v5879 = vmul.f32 %v5623, %v5623
        %v5880 = vmul.f32 %v5624, %v5624
        %v5881 = vmul.f32 %v5625, %v5625
        %v5882 = vmul.f32 %v5626, %v5626
        %v5883 = vmul.f32 %v5627, %v5627
        %v5884 = vmul.f32 %v5628, %v5628
        %v5885 = vmul.f32 %v5629, %v5629
        %v5886 = vmul.f32 %v5630, %v5630
        %v5887 = vmul.f32 %v5631, %v5631
        %v5888 = vmul.f32 %v5632, %v5632
        %v5889 = vmul.f32 %v5633, %v5633
        %v5890 = vmul.f32 %v5634, %v5634
        %v5891 = vmul.f32 %v5635, %v5635
        %v5892 = vmul.f32 %v5636, %v5636
        %v5893 = vmul.f32 %v5637, %v5637
        %v5894 = vmul.f32 %v5638, %v5638
        %v5895 = vmul.f32 %v5639, %v5639
        %v5896 = vmul.f32 %v5640, %v5640
        %v5897 = vmul.f32 %v5641, %v5641
        %v5898 = vmul.f32 %v5642, %v5642
        %v5899 = vmul.f32 %v5643, %v5643
        %v5900 = vmul.f32 %v5644, %v5644
        %v5901 = vmul.f32 %v5645, %v5645
        %v5902 = vmul.f32 %v5646, %v5646
        %v5903 = vmul.f32 %v5647, %v5647
        %v5904 = vmul.f32 %v5648, %v5648
        %v5905 = vmul.f32 %v5649, %v5649
        %v5906 = vmul.f32 %v5650, %v5650
        %v5907 = vmul.f32 %v5651, %v5651
        %v5908 = vmul.f32 %v5652, %v5652
        %v5909 = vmul.f32 %v5653, %v5653
        %v5910 = vmul.f32 %v5654, %v5654
        %v5911 = vmul.f32 %v5655, %v5655
        %v5912 = vmul.f32 %v5656, %v5656
        %v5913 = vmul.f32 %v5657, %v5657
        %v5914 = vmul.f32 %v5658, %v5658
        %v5915 = vmul.f32 %v5659, %v5659
        %v5916 = vmul.f32 %v5660, %v5660
        %v5917 = vmul.f32 %v5661, %v5661
        %v5918 = vmul.f32 %v5662, %v5662
        %v5919 = vmul.f32 %v5663, %v5663
        %v5920 = vmul.f32 %v5664, %v5664
        %v5921 = vmul.f32 %v5665, %v5665
        %v5922 = vmul.f32 %v5666, %v5666
        %v5923 = vmul.f32 %v5667, %v5667
        %v5924 = vmul.f32 %v5668, %v5668
        %v5925 = vmul.f32 %v5669, %v5669
        %v5926 = vmul.f32 %v5670, %v5670
        %v5927 = vmul.f32 %v5671, %v5671
        %v5928 = vmul.f32 %v5672, %v5672
        %v5929 = vmul.f32 %v5673, %v5673
        %v5930 = vmul.f32 %v5674, %v5674
        %v5931 = vmul.f32 %v5675, %v5675
        %v5932 = vmul.f32 %v5676, %v5676
        %v5933 = vmul.f32 %v5677, %v5677
        %v5934 = vmul.f32 %v5678, %v5678
        %v5935 = vmul.f32 %v5679, %v5679
        %v5936 = vmul.f32 %v5680, %v5680
        %v5937 = vmul.f32 %v5681, %v5681
        %v5938 = vmul.f32 %v5682, %v5682
        %v5939 = vmul.f32 %v5683, %v5683
        %v5940 = vmul.f32 %v5684, %v5684
        %v5941 = vmul.f32 %v5685, %v5685
        %v5942 = vmul.f32 %v5686, %v5686
        %v5943 = vmul.f32 %v5687, %v5687
        %v5944 = vmul.f32 %v5688, %v5688
        %v5945 = vmul.f32 %v5689, %v5689
        %v5946 = vmul.f32 %v5690, %v5690
        %v5947 = vmul.f32 %v5691, %v5691
        %v5948 = vmul.f32 %v5692, %v5692
        %v5949 = vmul.f32 %v5693, %v5693
        %v5950 = vmul.f32 %v5694, %v5694
        %v5951 = vmul.f32 %v5695, %v5695
        %v5952 = vmul.f32 %v5696, %v5696
        %v5953 = vmul.f32 %v5697, %v5697
        %v5954 = vmul.f32 %v5698, %v5698
        %v5955 = vmul.f32 %v5699, %v5699
        %v5956 = vmul.f32 %v5700, %v5700
        %v5957 = vmul.f32 %v5701, %v5701
        %v5958 = vmul.f32 %v5702, %v5702
        %v5959 = vmul.f32 %v5703, %v5703
        %v5960 = vmul.f32 %v5704, %v5704
        %v5961 = vmul.f32 %v5705, %v5705
        %v5962 = vmul.f32 %v5706, %v5706
        %v5963 = vmul.f32 %v5707, %v5707
        %v5964 = vmul.f32 %v5708, %v5708
        %v5965 = vmul.f32 %v5709, %v5709
        %v5966 = vmul.f32 %v5710, %v5710
        %v5967 = vmul.f32 %v5711, %v5711
        %v5968 = vmul.f32 %v5712, %v5712
        %v5969 = vmul.f32 %v5713, %v5713
        %v5970 = vmul.f32 %v5714, %v5714
        %v5971 = vmul.f32 %v5715, %v5715
        %v5972 = vmul.f32 %v5716, %v5716
        %v5973 = vmul.f32 %v5717, %v5717
        %v5974 = vmul.f32 %v5718, %v5718
        %v5975 = vmul.f32 %v5719, %v5719
        %v5976 = vmul.f32 %v5720, %v5720
        %v5977 = vmul.f32 %v5721, %v5721
        %v5978 = vmul.f32 %v5722, %v5722
        %v5979 = vmul.f32 %v5723, %v5723
        %v5980 = vmul.f32 %v5724, %v5724
        %v5981 = vmul.f32 %v5725, %v5725
        %v5982 = vmul.f32 %v5726, %v5726
        %v5983 = vmul.f32 %v5727, %v5727
        %v5984 = vmul.f32 %v5728, %v5728
        %v5985 = vmul.f32 %v5729, %v5729
        %v5986 = vmul.f32 %v5730, %v5730
        %v5987 = vmul.f32 %v5731, %v5731
        %v5988 = vmul.f32 %v5732, %v5732
        %v5989 = vmul.f32 %v5733, %v5733
        %v5990 = vmul.f32 %v5734, %v5734
        %v5991 = vmul.f32 %v5735, %v5735
        %v5992 = vmul.f32 %v5736, %v5736
        %v5993 = vsel %vm4961, %v5737, 0.0
        %v5994 = vsel %vm4961, %v5738, 0.0
        %v5995 = vadd.f32 %v5993, %v5994
        %v5996 = vsel %vm4961, %v5739, 0.0
        %v5997 = vadd.f32 %v5995, %v5996
        %v5998 = vsel %vm4961, %v5740, 0.0
        %v5999 = vadd.f32 %v5997, %v5998
        %v6000 = vsel %vm4961, %v5741, 0.0
        %v6001 = vadd.f32 %v5999, %v6000
        %v6002 = vsel %vm4961, %v5742, 0.0
        %v6003 = vadd.f32 %v6001, %v6002
        %v6004 = vsel %vm4961, %v5743, 0.0
        %v6005 = vadd.f32 %v6003, %v6004
        %v6006 = vsel %vm4961, %v5744, 0.0
        %v6007 = vadd.f32 %v6005, %v6006
        %v6008 = vsel %vm4961, %v5745, 0.0
        %v6009 = vadd.f32 %v6007, %v6008
        %v6010 = vsel %vm4961, %v5746, 0.0
        %v6011 = vadd.f32 %v6009, %v6010
        %v6012 = vsel %vm4961, %v5747, 0.0
        %v6013 = vadd.f32 %v6011, %v6012
        %v6014 = vsel %vm4961, %v5748, 0.0
        %v6015 = vadd.f32 %v6013, %v6014
        %v6016 = vsel %vm4961, %v5749, 0.0
        %v6017 = vadd.f32 %v6015, %v6016
        %v6018 = vsel %vm4961, %v5750, 0.0
        %v6019 = vadd.f32 %v6017, %v6018
        %v6020 = vsel %vm4961, %v5751, 0.0
        %v6021 = vadd.f32 %v6019, %v6020
        %v6022 = vsel %vm4961, %v5752, 0.0
        %v6023 = vadd.f32 %v6021, %v6022
        %v6024 = vsel %vm4961, %v5753, 0.0
        %v6025 = vadd.f32 %v6023, %v6024
        %v6026 = vsel %vm4961, %v5754, 0.0
        %v6027 = vadd.f32 %v6025, %v6026
        %v6028 = vsel %vm4961, %v5755, 0.0
        %v6029 = vadd.f32 %v6027, %v6028
        %v6030 = vsel %vm4961, %v5756, 0.0
        %v6031 = vadd.f32 %v6029, %v6030
        %v6032 = vsel %vm4961, %v5757, 0.0
        %v6033 = vadd.f32 %v6031, %v6032
        %v6034 = vsel %vm4961, %v5758, 0.0
        %v6035 = vadd.f32 %v6033, %v6034
        %v6036 = vsel %vm4961, %v5759, 0.0
        %v6037 = vadd.f32 %v6035, %v6036
        %v6038 = vsel %vm4961, %v5760, 0.0
        %v6039 = vadd.f32 %v6037, %v6038
        %v6040 = vsel %vm4961, %v5761, 0.0
        %v6041 = vadd.f32 %v6039, %v6040
        %v6042 = vsel %vm4961, %v5762, 0.0
        %v6043 = vadd.f32 %v6041, %v6042
        %v6044 = vsel %vm4961, %v5763, 0.0
        %v6045 = vadd.f32 %v6043, %v6044
        %v6046 = vsel %vm4961, %v5764, 0.0
        %v6047 = vadd.f32 %v6045, %v6046
        %v6048 = vsel %vm4961, %v5765, 0.0
        %v6049 = vadd.f32 %v6047, %v6048
        %v6050 = vsel %vm4961, %v5766, 0.0
        %v6051 = vadd.f32 %v6049, %v6050
        %v6052 = vsel %vm4961, %v5767, 0.0
        %v6053 = vadd.f32 %v6051, %v6052
        %v6054 = vsel %vm4961, %v5768, 0.0
        %v6055 = vadd.f32 %v6053, %v6054
        %v6056 = vsel %vm4961, %v5769, 0.0
        %v6057 = vadd.f32 %v6055, %v6056
        %v6058 = vsel %vm4961, %v5770, 0.0
        %v6059 = vadd.f32 %v6057, %v6058
        %v6060 = vsel %vm4961, %v5771, 0.0
        %v6061 = vadd.f32 %v6059, %v6060
        %v6062 = vsel %vm4961, %v5772, 0.0
        %v6063 = vadd.f32 %v6061, %v6062
        %v6064 = vsel %vm4961, %v5773, 0.0
        %v6065 = vadd.f32 %v6063, %v6064
        %v6066 = vsel %vm4961, %v5774, 0.0
        %v6067 = vadd.f32 %v6065, %v6066
        %v6068 = vsel %vm4961, %v5775, 0.0
        %v6069 = vadd.f32 %v6067, %v6068
        %v6070 = vsel %vm4961, %v5776, 0.0
        %v6071 = vadd.f32 %v6069, %v6070
        %v6072 = vsel %vm4961, %v5777, 0.0
        %v6073 = vadd.f32 %v6071, %v6072
        %v6074 = vsel %vm4961, %v5778, 0.0
        %v6075 = vadd.f32 %v6073, %v6074
        %v6076 = vsel %vm4961, %v5779, 0.0
        %v6077 = vadd.f32 %v6075, %v6076
        %v6078 = vsel %vm4961, %v5780, 0.0
        %v6079 = vadd.f32 %v6077, %v6078
        %v6080 = vsel %vm4961, %v5781, 0.0
        %v6081 = vadd.f32 %v6079, %v6080
        %v6082 = vsel %vm4961, %v5782, 0.0
        %v6083 = vadd.f32 %v6081, %v6082
        %v6084 = vsel %vm4961, %v5783, 0.0
        %v6085 = vadd.f32 %v6083, %v6084
        %v6086 = vsel %vm4961, %v5784, 0.0
        %v6087 = vadd.f32 %v6085, %v6086
        %v6088 = vsel %vm4961, %v5785, 0.0
        %v6089 = vadd.f32 %v6087, %v6088
        %v6090 = vsel %vm4961, %v5786, 0.0
        %v6091 = vadd.f32 %v6089, %v6090
        %v6092 = vsel %vm4961, %v5787, 0.0
        %v6093 = vadd.f32 %v6091, %v6092
        %v6094 = vsel %vm4961, %v5788, 0.0
        %v6095 = vadd.f32 %v6093, %v6094
        %v6096 = vsel %vm4961, %v5789, 0.0
        %v6097 = vadd.f32 %v6095, %v6096
        %v6098 = vsel %vm4961, %v5790, 0.0
        %v6099 = vadd.f32 %v6097, %v6098
        %v6100 = vsel %vm4961, %v5791, 0.0
        %v6101 = vadd.f32 %v6099, %v6100
        %v6102 = vsel %vm4961, %v5792, 0.0
        %v6103 = vadd.f32 %v6101, %v6102
        %v6104 = vsel %vm4961, %v5793, 0.0
        %v6105 = vadd.f32 %v6103, %v6104
        %v6106 = vsel %vm4961, %v5794, 0.0
        %v6107 = vadd.f32 %v6105, %v6106
        %v6108 = vsel %vm4961, %v5795, 0.0
        %v6109 = vadd.f32 %v6107, %v6108
        %v6110 = vsel %vm4961, %v5796, 0.0
        %v6111 = vadd.f32 %v6109, %v6110
        %v6112 = vsel %vm4961, %v5797, 0.0
        %v6113 = vadd.f32 %v6111, %v6112
        %v6114 = vsel %vm4961, %v5798, 0.0
        %v6115 = vadd.f32 %v6113, %v6114
        %v6116 = vsel %vm4961, %v5799, 0.0
        %v6117 = vadd.f32 %v6115, %v6116
        %v6118 = vsel %vm4961, %v5800, 0.0
        %v6119 = vadd.f32 %v6117, %v6118
        %v6120 = vsel %vm4961, %v5801, 0.0
        %v6121 = vadd.f32 %v6119, %v6120
        %v6122 = vsel %vm4961, %v5802, 0.0
        %v6123 = vadd.f32 %v6121, %v6122
        %v6124 = vsel %vm4961, %v5803, 0.0
        %v6125 = vadd.f32 %v6123, %v6124
        %v6126 = vsel %vm4961, %v5804, 0.0
        %v6127 = vadd.f32 %v6125, %v6126
        %v6128 = vsel %vm4961, %v5805, 0.0
        %v6129 = vadd.f32 %v6127, %v6128
        %v6130 = vsel %vm4961, %v5806, 0.0
        %v6131 = vadd.f32 %v6129, %v6130
        %v6132 = vsel %vm4961, %v5807, 0.0
        %v6133 = vadd.f32 %v6131, %v6132
        %v6134 = vsel %vm4961, %v5808, 0.0
        %v6135 = vadd.f32 %v6133, %v6134
        %v6136 = vsel %vm4961, %v5809, 0.0
        %v6137 = vadd.f32 %v6135, %v6136
        %v6138 = vsel %vm4961, %v5810, 0.0
        %v6139 = vadd.f32 %v6137, %v6138
        %v6140 = vsel %vm4961, %v5811, 0.0
        %v6141 = vadd.f32 %v6139, %v6140
        %v6142 = vsel %vm4961, %v5812, 0.0
        %v6143 = vadd.f32 %v6141, %v6142
        %v6144 = vsel %vm4961, %v5813, 0.0
        %v6145 = vadd.f32 %v6143, %v6144
        %v6146 = vsel %vm4961, %v5814, 0.0
        %v6147 = vadd.f32 %v6145, %v6146
        %v6148 = vsel %vm4961, %v5815, 0.0
        %v6149 = vadd.f32 %v6147, %v6148
        %v6150 = vsel %vm4961, %v5816, 0.0
        %v6151 = vadd.f32 %v6149, %v6150
        %v6152 = vsel %vm4961, %v5817, 0.0
        %v6153 = vadd.f32 %v6151, %v6152
        %v6154 = vsel %vm4961, %v5818, 0.0
        %v6155 = vadd.f32 %v6153, %v6154
        %v6156 = vsel %vm4961, %v5819, 0.0
        %v6157 = vadd.f32 %v6155, %v6156
        %v6158 = vsel %vm4961, %v5820, 0.0
        %v6159 = vadd.f32 %v6157, %v6158
        %v6160 = vsel %vm4961, %v5821, 0.0
        %v6161 = vadd.f32 %v6159, %v6160
        %v6162 = vsel %vm4961, %v5822, 0.0
        %v6163 = vadd.f32 %v6161, %v6162
        %v6164 = vsel %vm4961, %v5823, 0.0
        %v6165 = vadd.f32 %v6163, %v6164
        %v6166 = vsel %vm4961, %v5824, 0.0
        %v6167 = vadd.f32 %v6165, %v6166
        %v6168 = vsel %vm4961, %v5825, 0.0
        %v6169 = vadd.f32 %v6167, %v6168
        %v6170 = vsel %vm4961, %v5826, 0.0
        %v6171 = vadd.f32 %v6169, %v6170
        %v6172 = vsel %vm4961, %v5827, 0.0
        %v6173 = vadd.f32 %v6171, %v6172
        %v6174 = vsel %vm4961, %v5828, 0.0
        %v6175 = vadd.f32 %v6173, %v6174
        %v6176 = vsel %vm4961, %v5829, 0.0
        %v6177 = vadd.f32 %v6175, %v6176
        %v6178 = vsel %vm4961, %v5830, 0.0
        %v6179 = vadd.f32 %v6177, %v6178
        %v6180 = vsel %vm4961, %v5831, 0.0
        %v6181 = vadd.f32 %v6179, %v6180
        %v6182 = vsel %vm4961, %v5832, 0.0
        %v6183 = vadd.f32 %v6181, %v6182
        %v6184 = vsel %vm4961, %v5833, 0.0
        %v6185 = vadd.f32 %v6183, %v6184
        %v6186 = vsel %vm4961, %v5834, 0.0
        %v6187 = vadd.f32 %v6185, %v6186
        %v6188 = vsel %vm4961, %v5835, 0.0
        %v6189 = vadd.f32 %v6187, %v6188
        %v6190 = vsel %vm4961, %v5836, 0.0
        %v6191 = vadd.f32 %v6189, %v6190
        %v6192 = vsel %vm4961, %v5837, 0.0
        %v6193 = vadd.f32 %v6191, %v6192
        %v6194 = vsel %vm4961, %v5838, 0.0
        %v6195 = vadd.f32 %v6193, %v6194
        %v6196 = vsel %vm4961, %v5839, 0.0
        %v6197 = vadd.f32 %v6195, %v6196
        %v6198 = vsel %vm4961, %v5840, 0.0
        %v6199 = vadd.f32 %v6197, %v6198
        %v6200 = vsel %vm4961, %v5841, 0.0
        %v6201 = vadd.f32 %v6199, %v6200
        %v6202 = vsel %vm4961, %v5842, 0.0
        %v6203 = vadd.f32 %v6201, %v6202
        %v6204 = vsel %vm4961, %v5843, 0.0
        %v6205 = vadd.f32 %v6203, %v6204
        %v6206 = vsel %vm4961, %v5844, 0.0
        %v6207 = vadd.f32 %v6205, %v6206
        %v6208 = vsel %vm4961, %v5845, 0.0
        %v6209 = vadd.f32 %v6207, %v6208
        %v6210 = vsel %vm4961, %v5846, 0.0
        %v6211 = vadd.f32 %v6209, %v6210
        %v6212 = vsel %vm4961, %v5847, 0.0
        %v6213 = vadd.f32 %v6211, %v6212
        %v6214 = vsel %vm4961, %v5848, 0.0
        %v6215 = vadd.f32 %v6213, %v6214
        %v6216 = vsel %vm4961, %v5849, 0.0
        %v6217 = vadd.f32 %v6215, %v6216
        %v6218 = vsel %vm4961, %v5850, 0.0
        %v6219 = vadd.f32 %v6217, %v6218
        %v6220 = vsel %vm4961, %v5851, 0.0
        %v6221 = vadd.f32 %v6219, %v6220
        %v6222 = vsel %vm4961, %v5852, 0.0
        %v6223 = vadd.f32 %v6221, %v6222
        %v6224 = vsel %vm4961, %v5853, 0.0
        %v6225 = vadd.f32 %v6223, %v6224
        %v6226 = vsel %vm4961, %v5854, 0.0
        %v6227 = vadd.f32 %v6225, %v6226
        %v6228 = vsel %vm4961, %v5855, 0.0
        %v6229 = vadd.f32 %v6227, %v6228
        %v6230 = vsel %vm4961, %v5856, 0.0
        %v6231 = vadd.f32 %v6229, %v6230
        %v6232 = vsel %vm4961, %v5857, 0.0
        %v6233 = vadd.f32 %v6231, %v6232
        %v6234 = vsel %vm4961, %v5858, 0.0
        %v6235 = vadd.f32 %v6233, %v6234
        %v6236 = vsel %vm4961, %v5859, 0.0
        %v6237 = vadd.f32 %v6235, %v6236
        %v6238 = vsel %vm4961, %v5860, 0.0
        %v6239 = vadd.f32 %v6237, %v6238
        %v6240 = vsel %vm4961, %v5861, 0.0
        %v6241 = vadd.f32 %v6239, %v6240
        %v6242 = vsel %vm4961, %v5862, 0.0
        %v6243 = vadd.f32 %v6241, %v6242
        %v6244 = vsel %vm4961, %v5863, 0.0
        %v6245 = vadd.f32 %v6243, %v6244
        %v6246 = vsel %vm4961, %v5864, 0.0
        %v6247 = vadd.f32 %v6245, %v6246
        %v6248 = vsel %vm4961, %v5865, 0.0
        %v6249 = vadd.f32 %v6247, %v6248
        %v6250 = vsel %vm4961, %v5866, 0.0
        %v6251 = vadd.f32 %v6249, %v6250
        %v6252 = vsel %vm4961, %v5867, 0.0
        %v6253 = vadd.f32 %v6251, %v6252
        %v6254 = vsel %vm4961, %v5868, 0.0
        %v6255 = vadd.f32 %v6253, %v6254
        %v6256 = vsel %vm4961, %v5869, 0.0
        %v6257 = vadd.f32 %v6255, %v6256
        %v6258 = vsel %vm4961, %v5870, 0.0
        %v6259 = vadd.f32 %v6257, %v6258
        %v6260 = vsel %vm4961, %v5871, 0.0
        %v6261 = vadd.f32 %v6259, %v6260
        %v6262 = vsel %vm4961, %v5872, 0.0
        %v6263 = vadd.f32 %v6261, %v6262
        %v6264 = vsel %vm4961, %v5873, 0.0
        %v6265 = vadd.f32 %v6263, %v6264
        %v6266 = vsel %vm4961, %v5874, 0.0
        %v6267 = vadd.f32 %v6265, %v6266
        %v6268 = vsel %vm4961, %v5875, 0.0
        %v6269 = vadd.f32 %v6267, %v6268
        %v6270 = vsel %vm4961, %v5876, 0.0
        %v6271 = vadd.f32 %v6269, %v6270
        %v6272 = vsel %vm4961, %v5877, 0.0
        %v6273 = vadd.f32 %v6271, %v6272
        %v6274 = vsel %vm4961, %v5878, 0.0
        %v6275 = vadd.f32 %v6273, %v6274
        %v6276 = vsel %vm4961, %v5879, 0.0
        %v6277 = vadd.f32 %v6275, %v6276
        %v6278 = vsel %vm4961, %v5880, 0.0
        %v6279 = vadd.f32 %v6277, %v6278
        %v6280 = vsel %vm4961, %v5881, 0.0
        %v6281 = vadd.f32 %v6279, %v6280
        %v6282 = vsel %vm4961, %v5882, 0.0
        %v6283 = vadd.f32 %v6281, %v6282
        %v6284 = vsel %vm4961, %v5883, 0.0
        %v6285 = vadd.f32 %v6283, %v6284
        %v6286 = vsel %vm4961, %v5884, 0.0
        %v6287 = vadd.f32 %v6285, %v6286
        %v6288 = vsel %vm4961, %v5885, 0.0
        %v6289 = vadd.f32 %v6287, %v6288
        %v6290 = vsel %vm4961, %v5886, 0.0
        %v6291 = vadd.f32 %v6289, %v6290
        %v6292 = vsel %vm4961, %v5887, 0.0
        %v6293 = vadd.f32 %v6291, %v6292
        %v6294 = vsel %vm4961, %v5888, 0.0
        %v6295 = vadd.f32 %v6293, %v6294
        %v6296 = vsel %vm4961, %v5889, 0.0
        %v6297 = vadd.f32 %v6295, %v6296
        %v6298 = vsel %vm4961, %v5890, 0.0
        %v6299 = vadd.f32 %v6297, %v6298
        %v6300 = vsel %vm4961, %v5891, 0.0
        %v6301 = vadd.f32 %v6299, %v6300
        %v6302 = vsel %vm4961, %v5892, 0.0
        %v6303 = vadd.f32 %v6301, %v6302
        %v6304 = vsel %vm4961, %v5893, 0.0
        %v6305 = vadd.f32 %v6303, %v6304
        %v6306 = vsel %vm4961, %v5894, 0.0
        %v6307 = vadd.f32 %v6305, %v6306
        %v6308 = vsel %vm4961, %v5895, 0.0
        %v6309 = vadd.f32 %v6307, %v6308
        %v6310 = vsel %vm4961, %v5896, 0.0
        %v6311 = vadd.f32 %v6309, %v6310
        %v6312 = vsel %vm4961, %v5897, 0.0
        %v6313 = vadd.f32 %v6311, %v6312
        %v6314 = vsel %vm4961, %v5898, 0.0
        %v6315 = vadd.f32 %v6313, %v6314
        %v6316 = vsel %vm4961, %v5899, 0.0
        %v6317 = vadd.f32 %v6315, %v6316
        %v6318 = vsel %vm4961, %v5900, 0.0
        %v6319 = vadd.f32 %v6317, %v6318
        %v6320 = vsel %vm4961, %v5901, 0.0
        %v6321 = vadd.f32 %v6319, %v6320
        %v6322 = vsel %vm4961, %v5902, 0.0
        %v6323 = vadd.f32 %v6321, %v6322
        %v6324 = vsel %vm4961, %v5903, 0.0
        %v6325 = vadd.f32 %v6323, %v6324
        %v6326 = vsel %vm4961, %v5904, 0.0
        %v6327 = vadd.f32 %v6325, %v6326
        %v6328 = vsel %vm4961, %v5905, 0.0
        %v6329 = vadd.f32 %v6327, %v6328
        %v6330 = vsel %vm4961, %v5906, 0.0
        %v6331 = vadd.f32 %v6329, %v6330
        %v6332 = vsel %vm4961, %v5907, 0.0
        %v6333 = vadd.f32 %v6331, %v6332
        %v6334 = vsel %vm4961, %v5908, 0.0
        %v6335 = vadd.f32 %v6333, %v6334
        %v6336 = vsel %vm4961, %v5909, 0.0
        %v6337 = vadd.f32 %v6335, %v6336
        %v6338 = vsel %vm4961, %v5910, 0.0
        %v6339 = vadd.f32 %v6337, %v6338
        %v6340 = vsel %vm4961, %v5911, 0.0
        %v6341 = vadd.f32 %v6339, %v6340
        %v6342 = vsel %vm4961, %v5912, 0.0
        %v6343 = vadd.f32 %v6341, %v6342
        %v6344 = vsel %vm4961, %v5913, 0.0
        %v6345 = vadd.f32 %v6343, %v6344
        %v6346 = vsel %vm4961, %v5914, 0.0
        %v6347 = vadd.f32 %v6345, %v6346
        %v6348 = vsel %vm4961, %v5915, 0.0
        %v6349 = vadd.f32 %v6347, %v6348
        %v6350 = vsel %vm4961, %v5916, 0.0
        %v6351 = vadd.f32 %v6349, %v6350
        %v6352 = vsel %vm4961, %v5917, 0.0
        %v6353 = vadd.f32 %v6351, %v6352
        %v6354 = vsel %vm4961, %v5918, 0.0
        %v6355 = vadd.f32 %v6353, %v6354
        %v6356 = vsel %vm4961, %v5919, 0.0
        %v6357 = vadd.f32 %v6355, %v6356
        %v6358 = vsel %vm4961, %v5920, 0.0
        %v6359 = vadd.f32 %v6357, %v6358
        %v6360 = vsel %vm4961, %v5921, 0.0
        %v6361 = vadd.f32 %v6359, %v6360
        %v6362 = vsel %vm4961, %v5922, 0.0
        %v6363 = vadd.f32 %v6361, %v6362
        %v6364 = vsel %vm4961, %v5923, 0.0
        %v6365 = vadd.f32 %v6363, %v6364
        %v6366 = vsel %vm4961, %v5924, 0.0
        %v6367 = vadd.f32 %v6365, %v6366
        %v6368 = vsel %vm4961, %v5925, 0.0
        %v6369 = vadd.f32 %v6367, %v6368
        %v6370 = vsel %vm4961, %v5926, 0.0
        %v6371 = vadd.f32 %v6369, %v6370
        %v6372 = vsel %vm4961, %v5927, 0.0
        %v6373 = vadd.f32 %v6371, %v6372
        %v6374 = vsel %vm4961, %v5928, 0.0
        %v6375 = vadd.f32 %v6373, %v6374
        %v6376 = vsel %vm4961, %v5929, 0.0
        %v6377 = vadd.f32 %v6375, %v6376
        %v6378 = vsel %vm4961, %v5930, 0.0
        %v6379 = vadd.f32 %v6377, %v6378
        %v6380 = vsel %vm4961, %v5931, 0.0
        %v6381 = vadd.f32 %v6379, %v6380
        %v6382 = vsel %vm4961, %v5932, 0.0
        %v6383 = vadd.f32 %v6381, %v6382
        %v6384 = vsel %vm4961, %v5933, 0.0
        %v6385 = vadd.f32 %v6383, %v6384
        %v6386 = vsel %vm4961, %v5934, 0.0
        %v6387 = vadd.f32 %v6385, %v6386
        %v6388 = vsel %vm4961, %v5935, 0.0
        %v6389 = vadd.f32 %v6387, %v6388
        %v6390 = vsel %vm4961, %v5936, 0.0
        %v6391 = vadd.f32 %v6389, %v6390
        %v6392 = vsel %vm4961, %v5937, 0.0
        %v6393 = vadd.f32 %v6391, %v6392
        %v6394 = vsel %vm4961, %v5938, 0.0
        %v6395 = vadd.f32 %v6393, %v6394
        %v6396 = vsel %vm4961, %v5939, 0.0
        %v6397 = vadd.f32 %v6395, %v6396
        %v6398 = vsel %vm4961, %v5940, 0.0
        %v6399 = vadd.f32 %v6397, %v6398
        %v6400 = vsel %vm4961, %v5941, 0.0
        %v6401 = vadd.f32 %v6399, %v6400
        %v6402 = vsel %vm4961, %v5942, 0.0
        %v6403 = vadd.f32 %v6401, %v6402
        %v6404 = vsel %vm4961, %v5943, 0.0
        %v6405 = vadd.f32 %v6403, %v6404
        %v6406 = vsel %vm4961, %v5944, 0.0
        %v6407 = vadd.f32 %v6405, %v6406
        %v6408 = vsel %vm4961, %v5945, 0.0
        %v6409 = vadd.f32 %v6407, %v6408
        %v6410 = vsel %vm4961, %v5946, 0.0
        %v6411 = vadd.f32 %v6409, %v6410
        %v6412 = vsel %vm4961, %v5947, 0.0
        %v6413 = vadd.f32 %v6411, %v6412
        %v6414 = vsel %vm4961, %v5948, 0.0
        %v6415 = vadd.f32 %v6413, %v6414
        %v6416 = vsel %vm4961, %v5949, 0.0
        %v6417 = vadd.f32 %v6415, %v6416
        %v6418 = vsel %vm4961, %v5950, 0.0
        %v6419 = vadd.f32 %v6417, %v6418
        %v6420 = vsel %vm4961, %v5951, 0.0
        %v6421 = vadd.f32 %v6419, %v6420
        %v6422 = vsel %vm4961, %v5952, 0.0
        %v6423 = vadd.f32 %v6421, %v6422
        %v6424 = vsel %vm4961, %v5953, 0.0
        %v6425 = vadd.f32 %v6423, %v6424
        %v6426 = vsel %vm4961, %v5954, 0.0
        %v6427 = vadd.f32 %v6425, %v6426
        %v6428 = vsel %vm4961, %v5955, 0.0
        %v6429 = vadd.f32 %v6427, %v6428
        %v6430 = vsel %vm4961, %v5956, 0.0
        %v6431 = vadd.f32 %v6429, %v6430
        %v6432 = vsel %vm4961, %v5957, 0.0
        %v6433 = vadd.f32 %v6431, %v6432
        %v6434 = vsel %vm4961, %v5958, 0.0
        %v6435 = vadd.f32 %v6433, %v6434
        %v6436 = vsel %vm4961, %v5959, 0.0
        %v6437 = vadd.f32 %v6435, %v6436
        %v6438 = vsel %vm4961, %v5960, 0.0
        %v6439 = vadd.f32 %v6437, %v6438
        %v6440 = vsel %vm4961, %v5961, 0.0
        %v6441 = vadd.f32 %v6439, %v6440
        %v6442 = vsel %vm4961, %v5962, 0.0
        %v6443 = vadd.f32 %v6441, %v6442
        %v6444 = vsel %vm4961, %v5963, 0.0
        %v6445 = vadd.f32 %v6443, %v6444
        %v6446 = vsel %vm4961, %v5964, 0.0
        %v6447 = vadd.f32 %v6445, %v6446
        %v6448 = vsel %vm4961, %v5965, 0.0
        %v6449 = vadd.f32 %v6447, %v6448
        %v6450 = vsel %vm4961, %v5966, 0.0
        %v6451 = vadd.f32 %v6449, %v6450
        %v6452 = vsel %vm4961, %v5967, 0.0
        %v6453 = vadd.f32 %v6451, %v6452
        %v6454 = vsel %vm4961, %v5968, 0.0
        %v6455 = vadd.f32 %v6453, %v6454
        %v6456 = vsel %vm4961, %v5969, 0.0
        %v6457 = vadd.f32 %v6455, %v6456
        %v6458 = vsel %vm4961, %v5970, 0.0
        %v6459 = vadd.f32 %v6457, %v6458
        %v6460 = vsel %vm4961, %v5971, 0.0
        %v6461 = vadd.f32 %v6459, %v6460
        %v6462 = vsel %vm4961, %v5972, 0.0
        %v6463 = vadd.f32 %v6461, %v6462
        %v6464 = vsel %vm4961, %v5973, 0.0
        %v6465 = vadd.f32 %v6463, %v6464
        %v6466 = vsel %vm4961, %v5974, 0.0
        %v6467 = vadd.f32 %v6465, %v6466
        %v6468 = vsel %vm4961, %v5975, 0.0
        %v6469 = vadd.f32 %v6467, %v6468
        %v6470 = vsel %vm4961, %v5976, 0.0
        %v6471 = vadd.f32 %v6469, %v6470
        %v6472 = vsel %vm4961, %v5977, 0.0
        %v6473 = vadd.f32 %v6471, %v6472
        %v6474 = vsel %vm4961, %v5978, 0.0
        %v6475 = vadd.f32 %v6473, %v6474
        %v6476 = vsel %vm4961, %v5979, 0.0
        %v6477 = vadd.f32 %v6475, %v6476
        %v6478 = vsel %vm4961, %v5980, 0.0
        %v6479 = vadd.f32 %v6477, %v6478
        %v6480 = vsel %vm4961, %v5981, 0.0
        %v6481 = vadd.f32 %v6479, %v6480
        %v6482 = vsel %vm4961, %v5982, 0.0
        %v6483 = vadd.f32 %v6481, %v6482
        %v6484 = vsel %vm4961, %v5983, 0.0
        %v6485 = vadd.f32 %v6483, %v6484
        %v6486 = vsel %vm4961, %v5984, 0.0
        %v6487 = vadd.f32 %v6485, %v6486
        %v6488 = vsel %vm4961, %v5985, 0.0
        %v6489 = vadd.f32 %v6487, %v6488
        %v6490 = vsel %vm4961, %v5986, 0.0
        %v6491 = vadd.f32 %v6489, %v6490
        %v6492 = vsel %vm4961, %v5987, 0.0
        %v6493 = vadd.f32 %v6491, %v6492
        %v6494 = vsel %vm4961, %v5988, 0.0
        %v6495 = vadd.f32 %v6493, %v6494
        %v6496 = vsel %vm4961, %v5989, 0.0
        %v6497 = vadd.f32 %v6495, %v6496
        %v6498 = vsel %vm4961, %v5990, 0.0
        %v6499 = vadd.f32 %v6497, %v6498
        %v6500 = vsel %vm4961, %v5991, 0.0
        %v6501 = vadd.f32 %v6499, %v6500
        %v6502 = vsel %vm4961, %v5992, 0.0
        %v6503 = vadd.f32 %v6501, %v6502
        %v6504 = vrot.slane %v6503, 4
        %v6505 = vadd.f32 %v6503, %v6504
        %v6506 = vrot.slane %v6505, 2
        %v6507 = vadd.f32 %v6505, %v6506
        %v6508 = vrot.slane %v6507, 1
        %v6509 = vadd.f32 %v6507, %v6508
        %v6510 = vsel %vm4961, %v3683, 0.0
        %v6511 = vsel %vm4961, %v3688, 0.0
        %v6512 = vadd.f32 %v6510, %v6511
        %v6513 = vsel %vm4961, %v3693, 0.0
        %v6514 = vadd.f32 %v6512, %v6513
        %v6515 = vsel %vm4961, %v3698, 0.0
        %v6516 = vadd.f32 %v6514, %v6515
        %v6517 = vsel %vm4961, %v3703, 0.0
        %v6518 = vadd.f32 %v6516, %v6517
        %v6519 = vsel %vm4961, %v3708, 0.0
        %v6520 = vadd.f32 %v6518, %v6519
        %v6521 = vsel %vm4961, %v3713, 0.0
        %v6522 = vadd.f32 %v6520, %v6521
        %v6523 = vsel %vm4961, %v3718, 0.0
        %v6524 = vadd.f32 %v6522, %v6523
        %v6525 = vsel %vm4961, %v3723, 0.0
        %v6526 = vadd.f32 %v6524, %v6525
        %v6527 = vsel %vm4961, %v3728, 0.0
        %v6528 = vadd.f32 %v6526, %v6527
        %v6529 = vsel %vm4961, %v3733, 0.0
        %v6530 = vadd.f32 %v6528, %v6529
        %v6531 = vsel %vm4961, %v3738, 0.0
        %v6532 = vadd.f32 %v6530, %v6531
        %v6533 = vsel %vm4961, %v3743, 0.0
        %v6534 = vadd.f32 %v6532, %v6533
        %v6535 = vsel %vm4961, %v3748, 0.0
        %v6536 = vadd.f32 %v6534, %v6535
        %v6537 = vsel %vm4961, %v3753, 0.0
        %v6538 = vadd.f32 %v6536, %v6537
        %v6539 = vsel %vm4961, %v3758, 0.0
        %v6540 = vadd.f32 %v6538, %v6539
        %v6541 = vsel %vm4961, %v3763, 0.0
        %v6542 = vadd.f32 %v6540, %v6541
        %v6543 = vsel %vm4961, %v3768, 0.0
        %v6544 = vadd.f32 %v6542, %v6543
        %v6545 = vsel %vm4961, %v3773, 0.0
        %v6546 = vadd.f32 %v6544, %v6545
        %v6547 = vsel %vm4961, %v3778, 0.0
        %v6548 = vadd.f32 %v6546, %v6547
        %v6549 = vsel %vm4961, %v3783, 0.0
        %v6550 = vadd.f32 %v6548, %v6549
        %v6551 = vsel %vm4961, %v3788, 0.0
        %v6552 = vadd.f32 %v6550, %v6551
        %v6553 = vsel %vm4961, %v3793, 0.0
        %v6554 = vadd.f32 %v6552, %v6553
        %v6555 = vsel %vm4961, %v3798, 0.0
        %v6556 = vadd.f32 %v6554, %v6555
        %v6557 = vsel %vm4961, %v3803, 0.0
        %v6558 = vadd.f32 %v6556, %v6557
        %v6559 = vsel %vm4961, %v3808, 0.0
        %v6560 = vadd.f32 %v6558, %v6559
        %v6561 = vsel %vm4961, %v3813, 0.0
        %v6562 = vadd.f32 %v6560, %v6561
        %v6563 = vsel %vm4961, %v3818, 0.0
        %v6564 = vadd.f32 %v6562, %v6563
        %v6565 = vsel %vm4961, %v3823, 0.0
        %v6566 = vadd.f32 %v6564, %v6565
        %v6567 = vsel %vm4961, %v3828, 0.0
        %v6568 = vadd.f32 %v6566, %v6567
        %v6569 = vsel %vm4961, %v3833, 0.0
        %v6570 = vadd.f32 %v6568, %v6569
        %v6571 = vsel %vm4961, %v3838, 0.0
        %v6572 = vadd.f32 %v6570, %v6571
        %v6573 = vsel %vm4961, %v3843, 0.0
        %v6574 = vadd.f32 %v6572, %v6573
        %v6575 = vsel %vm4961, %v3848, 0.0
        %v6576 = vadd.f32 %v6574, %v6575
        %v6577 = vsel %vm4961, %v3853, 0.0
        %v6578 = vadd.f32 %v6576, %v6577
        %v6579 = vsel %vm4961, %v3858, 0.0
        %v6580 = vadd.f32 %v6578, %v6579
        %v6581 = vsel %vm4961, %v3863, 0.0
        %v6582 = vadd.f32 %v6580, %v6581
        %v6583 = vsel %vm4961, %v3868, 0.0
        %v6584 = vadd.f32 %v6582, %v6583
        %v6585 = vsel %vm4961, %v3873, 0.0
        %v6586 = vadd.f32 %v6584, %v6585
        %v6587 = vsel %vm4961, %v3878, 0.0
        %v6588 = vadd.f32 %v6586, %v6587
        %v6589 = vsel %vm4961, %v3883, 0.0
        %v6590 = vadd.f32 %v6588, %v6589
        %v6591 = vsel %vm4961, %v3888, 0.0
        %v6592 = vadd.f32 %v6590, %v6591
        %v6593 = vsel %vm4961, %v3893, 0.0
        %v6594 = vadd.f32 %v6592, %v6593
        %v6595 = vsel %vm4961, %v3898, 0.0
        %v6596 = vadd.f32 %v6594, %v6595
        %v6597 = vsel %vm4961, %v3903, 0.0
        %v6598 = vadd.f32 %v6596, %v6597
        %v6599 = vsel %vm4961, %v3908, 0.0
        %v6600 = vadd.f32 %v6598, %v6599
        %v6601 = vsel %vm4961, %v3913, 0.0
        %v6602 = vadd.f32 %v6600, %v6601
        %v6603 = vsel %vm4961, %v3918, 0.0
        %v6604 = vadd.f32 %v6602, %v6603
        %v6605 = vsel %vm4961, %v3923, 0.0
        %v6606 = vadd.f32 %v6604, %v6605
        %v6607 = vsel %vm4961, %v3928, 0.0
        %v6608 = vadd.f32 %v6606, %v6607
        %v6609 = vsel %vm4961, %v3933, 0.0
        %v6610 = vadd.f32 %v6608, %v6609
        %v6611 = vsel %vm4961, %v3938, 0.0
        %v6612 = vadd.f32 %v6610, %v6611
        %v6613 = vsel %vm4961, %v3943, 0.0
        %v6614 = vadd.f32 %v6612, %v6613
        %v6615 = vsel %vm4961, %v3948, 0.0
        %v6616 = vadd.f32 %v6614, %v6615
        %v6617 = vsel %vm4961, %v3953, 0.0
        %v6618 = vadd.f32 %v6616, %v6617
        %v6619 = vsel %vm4961, %v3958, 0.0
        %v6620 = vadd.f32 %v6618, %v6619
        %v6621 = vsel %vm4961, %v3963, 0.0
        %v6622 = vadd.f32 %v6620, %v6621
        %v6623 = vsel %vm4961, %v3968, 0.0
        %v6624 = vadd.f32 %v6622, %v6623
        %v6625 = vsel %vm4961, %v3973, 0.0
        %v6626 = vadd.f32 %v6624, %v6625
        %v6627 = vsel %vm4961, %v3978, 0.0
        %v6628 = vadd.f32 %v6626, %v6627
        %v6629 = vsel %vm4961, %v3983, 0.0
        %v6630 = vadd.f32 %v6628, %v6629
        %v6631 = vsel %vm4961, %v3988, 0.0
        %v6632 = vadd.f32 %v6630, %v6631
        %v6633 = vsel %vm4961, %v3993, 0.0
        %v6634 = vadd.f32 %v6632, %v6633
        %v6635 = vsel %vm4961, %v3998, 0.0
        %v6636 = vadd.f32 %v6634, %v6635
        %v6637 = vsel %vm4961, %v4003, 0.0
        %v6638 = vadd.f32 %v6636, %v6637
        %v6639 = vsel %vm4961, %v4008, 0.0
        %v6640 = vadd.f32 %v6638, %v6639
        %v6641 = vsel %vm4961, %v4013, 0.0
        %v6642 = vadd.f32 %v6640, %v6641
        %v6643 = vsel %vm4961, %v4018, 0.0
        %v6644 = vadd.f32 %v6642, %v6643
        %v6645 = vsel %vm4961, %v4023, 0.0
        %v6646 = vadd.f32 %v6644, %v6645
        %v6647 = vsel %vm4961, %v4028, 0.0
        %v6648 = vadd.f32 %v6646, %v6647
        %v6649 = vsel %vm4961, %v4033, 0.0
        %v6650 = vadd.f32 %v6648, %v6649
        %v6651 = vsel %vm4961, %v4038, 0.0
        %v6652 = vadd.f32 %v6650, %v6651
        %v6653 = vsel %vm4961, %v4043, 0.0
        %v6654 = vadd.f32 %v6652, %v6653
        %v6655 = vsel %vm4961, %v4048, 0.0
        %v6656 = vadd.f32 %v6654, %v6655
        %v6657 = vsel %vm4961, %v4053, 0.0
        %v6658 = vadd.f32 %v6656, %v6657
        %v6659 = vsel %vm4961, %v4058, 0.0
        %v6660 = vadd.f32 %v6658, %v6659
        %v6661 = vsel %vm4961, %v4063, 0.0
        %v6662 = vadd.f32 %v6660, %v6661
        %v6663 = vsel %vm4961, %v4068, 0.0
        %v6664 = vadd.f32 %v6662, %v6663
        %v6665 = vsel %vm4961, %v4073, 0.0
        %v6666 = vadd.f32 %v6664, %v6665
        %v6667 = vsel %vm4961, %v4078, 0.0
        %v6668 = vadd.f32 %v6666, %v6667
        %v6669 = vsel %vm4961, %v4083, 0.0
        %v6670 = vadd.f32 %v6668, %v6669
        %v6671 = vsel %vm4961, %v4088, 0.0
        %v6672 = vadd.f32 %v6670, %v6671
        %v6673 = vsel %vm4961, %v4093, 0.0
        %v6674 = vadd.f32 %v6672, %v6673
        %v6675 = vsel %vm4961, %v4098, 0.0
        %v6676 = vadd.f32 %v6674, %v6675
        %v6677 = vsel %vm4961, %v4103, 0.0
        %v6678 = vadd.f32 %v6676, %v6677
        %v6679 = vsel %vm4961, %v4108, 0.0
        %v6680 = vadd.f32 %v6678, %v6679
        %v6681 = vsel %vm4961, %v4113, 0.0
        %v6682 = vadd.f32 %v6680, %v6681
        %v6683 = vsel %vm4961, %v4118, 0.0
        %v6684 = vadd.f32 %v6682, %v6683
        %v6685 = vsel %vm4961, %v4123, 0.0
        %v6686 = vadd.f32 %v6684, %v6685
        %v6687 = vsel %vm4961, %v4128, 0.0
        %v6688 = vadd.f32 %v6686, %v6687
        %v6689 = vsel %vm4961, %v4133, 0.0
        %v6690 = vadd.f32 %v6688, %v6689
        %v6691 = vsel %vm4961, %v4138, 0.0
        %v6692 = vadd.f32 %v6690, %v6691
        %v6693 = vsel %vm4961, %v4143, 0.0
        %v6694 = vadd.f32 %v6692, %v6693
        %v6695 = vsel %vm4961, %v4148, 0.0
        %v6696 = vadd.f32 %v6694, %v6695
        %v6697 = vsel %vm4961, %v4153, 0.0
        %v6698 = vadd.f32 %v6696, %v6697
        %v6699 = vsel %vm4961, %v4158, 0.0
        %v6700 = vadd.f32 %v6698, %v6699
        %v6701 = vsel %vm4961, %v4163, 0.0
        %v6702 = vadd.f32 %v6700, %v6701
        %v6703 = vsel %vm4961, %v4168, 0.0
        %v6704 = vadd.f32 %v6702, %v6703
        %v6705 = vsel %vm4961, %v4173, 0.0
        %v6706 = vadd.f32 %v6704, %v6705
        %v6707 = vsel %vm4961, %v4178, 0.0
        %v6708 = vadd.f32 %v6706, %v6707
        %v6709 = vsel %vm4961, %v4183, 0.0
        %v6710 = vadd.f32 %v6708, %v6709
        %v6711 = vsel %vm4961, %v4188, 0.0
        %v6712 = vadd.f32 %v6710, %v6711
        %v6713 = vsel %vm4961, %v4193, 0.0
        %v6714 = vadd.f32 %v6712, %v6713
        %v6715 = vsel %vm4961, %v4198, 0.0
        %v6716 = vadd.f32 %v6714, %v6715
        %v6717 = vsel %vm4961, %v4203, 0.0
        %v6718 = vadd.f32 %v6716, %v6717
        %v6719 = vsel %vm4961, %v4208, 0.0
        %v6720 = vadd.f32 %v6718, %v6719
        %v6721 = vsel %vm4961, %v4213, 0.0
        %v6722 = vadd.f32 %v6720, %v6721
        %v6723 = vsel %vm4961, %v4218, 0.0
        %v6724 = vadd.f32 %v6722, %v6723
        %v6725 = vsel %vm4961, %v4223, 0.0
        %v6726 = vadd.f32 %v6724, %v6725
        %v6727 = vsel %vm4961, %v4228, 0.0
        %v6728 = vadd.f32 %v6726, %v6727
        %v6729 = vsel %vm4961, %v4233, 0.0
        %v6730 = vadd.f32 %v6728, %v6729
        %v6731 = vsel %vm4961, %v4238, 0.0
        %v6732 = vadd.f32 %v6730, %v6731
        %v6733 = vsel %vm4961, %v4243, 0.0
        %v6734 = vadd.f32 %v6732, %v6733
        %v6735 = vsel %vm4961, %v4248, 0.0
        %v6736 = vadd.f32 %v6734, %v6735
        %v6737 = vsel %vm4961, %v4253, 0.0
        %v6738 = vadd.f32 %v6736, %v6737
        %v6739 = vsel %vm4961, %v4258, 0.0
        %v6740 = vadd.f32 %v6738, %v6739
        %v6741 = vsel %vm4961, %v4263, 0.0
        %v6742 = vadd.f32 %v6740, %v6741
        %v6743 = vsel %vm4961, %v4268, 0.0
        %v6744 = vadd.f32 %v6742, %v6743
        %v6745 = vsel %vm4961, %v4273, 0.0
        %v6746 = vadd.f32 %v6744, %v6745
        %v6747 = vsel %vm4961, %v4278, 0.0
        %v6748 = vadd.f32 %v6746, %v6747
        %v6749 = vsel %vm4961, %v4283, 0.0
        %v6750 = vadd.f32 %v6748, %v6749
        %v6751 = vsel %vm4961, %v4288, 0.0
        %v6752 = vadd.f32 %v6750, %v6751
        %v6753 = vsel %vm4961, %v4293, 0.0
        %v6754 = vadd.f32 %v6752, %v6753
        %v6755 = vsel %vm4961, %v4298, 0.0
        %v6756 = vadd.f32 %v6754, %v6755
        %v6757 = vsel %vm4961, %v4303, 0.0
        %v6758 = vadd.f32 %v6756, %v6757
        %v6759 = vsel %vm4961, %v4308, 0.0
        %v6760 = vadd.f32 %v6758, %v6759
        %v6761 = vsel %vm4961, %v4313, 0.0
        %v6762 = vadd.f32 %v6760, %v6761
        %v6763 = vsel %vm4961, %v4318, 0.0
        %v6764 = vadd.f32 %v6762, %v6763
        %v6765 = vsel %vm4961, %v4323, 0.0
        %v6766 = vadd.f32 %v6764, %v6765
        %v6767 = vsel %vm4961, %v4328, 0.0
        %v6768 = vadd.f32 %v6766, %v6767
        %v6769 = vsel %vm4961, %v4333, 0.0
        %v6770 = vadd.f32 %v6768, %v6769
        %v6771 = vsel %vm4961, %v4338, 0.0
        %v6772 = vadd.f32 %v6770, %v6771
        %v6773 = vsel %vm4961, %v4343, 0.0
        %v6774 = vadd.f32 %v6772, %v6773
        %v6775 = vsel %vm4961, %v4348, 0.0
        %v6776 = vadd.f32 %v6774, %v6775
        %v6777 = vsel %vm4961, %v4353, 0.0
        %v6778 = vadd.f32 %v6776, %v6777
        %v6779 = vsel %vm4961, %v4358, 0.0
        %v6780 = vadd.f32 %v6778, %v6779
        %v6781 = vsel %vm4961, %v4363, 0.0
        %v6782 = vadd.f32 %v6780, %v6781
        %v6783 = vsel %vm4961, %v4368, 0.0
        %v6784 = vadd.f32 %v6782, %v6783
        %v6785 = vsel %vm4961, %v4373, 0.0
        %v6786 = vadd.f32 %v6784, %v6785
        %v6787 = vsel %vm4961, %v4378, 0.0
        %v6788 = vadd.f32 %v6786, %v6787
        %v6789 = vsel %vm4961, %v4383, 0.0
        %v6790 = vadd.f32 %v6788, %v6789
        %v6791 = vsel %vm4961, %v4388, 0.0
        %v6792 = vadd.f32 %v6790, %v6791
        %v6793 = vsel %vm4961, %v4393, 0.0
        %v6794 = vadd.f32 %v6792, %v6793
        %v6795 = vsel %vm4961, %v4398, 0.0
        %v6796 = vadd.f32 %v6794, %v6795
        %v6797 = vsel %vm4961, %v4403, 0.0
        %v6798 = vadd.f32 %v6796, %v6797
        %v6799 = vsel %vm4961, %v4408, 0.0
        %v6800 = vadd.f32 %v6798, %v6799
        %v6801 = vsel %vm4961, %v4413, 0.0
        %v6802 = vadd.f32 %v6800, %v6801
        %v6803 = vsel %vm4961, %v4418, 0.0
        %v6804 = vadd.f32 %v6802, %v6803
        %v6805 = vsel %vm4961, %v4423, 0.0
        %v6806 = vadd.f32 %v6804, %v6805
        %v6807 = vsel %vm4961, %v4428, 0.0
        %v6808 = vadd.f32 %v6806, %v6807
        %v6809 = vsel %vm4961, %v4433, 0.0
        %v6810 = vadd.f32 %v6808, %v6809
        %v6811 = vsel %vm4961, %v4438, 0.0
        %v6812 = vadd.f32 %v6810, %v6811
        %v6813 = vsel %vm4961, %v4443, 0.0
        %v6814 = vadd.f32 %v6812, %v6813
        %v6815 = vsel %vm4961, %v4448, 0.0
        %v6816 = vadd.f32 %v6814, %v6815
        %v6817 = vsel %vm4961, %v4453, 0.0
        %v6818 = vadd.f32 %v6816, %v6817
        %v6819 = vsel %vm4961, %v4458, 0.0
        %v6820 = vadd.f32 %v6818, %v6819
        %v6821 = vsel %vm4961, %v4463, 0.0
        %v6822 = vadd.f32 %v6820, %v6821
        %v6823 = vsel %vm4961, %v4468, 0.0
        %v6824 = vadd.f32 %v6822, %v6823
        %v6825 = vsel %vm4961, %v4473, 0.0
        %v6826 = vadd.f32 %v6824, %v6825
        %v6827 = vsel %vm4961, %v4478, 0.0
        %v6828 = vadd.f32 %v6826, %v6827
        %v6829 = vsel %vm4961, %v4483, 0.0
        %v6830 = vadd.f32 %v6828, %v6829
        %v6831 = vsel %vm4961, %v4488, 0.0
        %v6832 = vadd.f32 %v6830, %v6831
        %v6833 = vsel %vm4961, %v4493, 0.0
        %v6834 = vadd.f32 %v6832, %v6833
        %v6835 = vsel %vm4961, %v4498, 0.0
        %v6836 = vadd.f32 %v6834, %v6835
        %v6837 = vsel %vm4961, %v4503, 0.0
        %v6838 = vadd.f32 %v6836, %v6837
        %v6839 = vsel %vm4961, %v4508, 0.0
        %v6840 = vadd.f32 %v6838, %v6839
        %v6841 = vsel %vm4961, %v4513, 0.0
        %v6842 = vadd.f32 %v6840, %v6841
        %v6843 = vsel %vm4961, %v4518, 0.0
        %v6844 = vadd.f32 %v6842, %v6843
        %v6845 = vsel %vm4961, %v4523, 0.0
        %v6846 = vadd.f32 %v6844, %v6845
        %v6847 = vsel %vm4961, %v4528, 0.0
        %v6848 = vadd.f32 %v6846, %v6847
        %v6849 = vsel %vm4961, %v4533, 0.0
        %v6850 = vadd.f32 %v6848, %v6849
        %v6851 = vsel %vm4961, %v4538, 0.0
        %v6852 = vadd.f32 %v6850, %v6851
        %v6853 = vsel %vm4961, %v4543, 0.0
        %v6854 = vadd.f32 %v6852, %v6853
        %v6855 = vsel %vm4961, %v4548, 0.0
        %v6856 = vadd.f32 %v6854, %v6855
        %v6857 = vsel %vm4961, %v4553, 0.0
        %v6858 = vadd.f32 %v6856, %v6857
        %v6859 = vsel %vm4961, %v4558, 0.0
        %v6860 = vadd.f32 %v6858, %v6859
        %v6861 = vsel %vm4961, %v4563, 0.0
        %v6862 = vadd.f32 %v6860, %v6861
        %v6863 = vsel %vm4961, %v4568, 0.0
        %v6864 = vadd.f32 %v6862, %v6863
        %v6865 = vsel %vm4961, %v4573, 0.0
        %v6866 = vadd.f32 %v6864, %v6865
        %v6867 = vsel %vm4961, %v4578, 0.0
        %v6868 = vadd.f32 %v6866, %v6867
        %v6869 = vsel %vm4961, %v4583, 0.0
        %v6870 = vadd.f32 %v6868, %v6869
        %v6871 = vsel %vm4961, %v4588, 0.0
        %v6872 = vadd.f32 %v6870, %v6871
        %v6873 = vsel %vm4961, %v4593, 0.0
        %v6874 = vadd.f32 %v6872, %v6873
        %v6875 = vsel %vm4961, %v4598, 0.0
        %v6876 = vadd.f32 %v6874, %v6875
        %v6877 = vsel %vm4961, %v4603, 0.0
        %v6878 = vadd.f32 %v6876, %v6877
        %v6879 = vsel %vm4961, %v4608, 0.0
        %v6880 = vadd.f32 %v6878, %v6879
        %v6881 = vsel %vm4961, %v4613, 0.0
        %v6882 = vadd.f32 %v6880, %v6881
        %v6883 = vsel %vm4961, %v4618, 0.0
        %v6884 = vadd.f32 %v6882, %v6883
        %v6885 = vsel %vm4961, %v4623, 0.0
        %v6886 = vadd.f32 %v6884, %v6885
        %v6887 = vsel %vm4961, %v4628, 0.0
        %v6888 = vadd.f32 %v6886, %v6887
        %v6889 = vsel %vm4961, %v4633, 0.0
        %v6890 = vadd.f32 %v6888, %v6889
        %v6891 = vsel %vm4961, %v4638, 0.0
        %v6892 = vadd.f32 %v6890, %v6891
        %v6893 = vsel %vm4961, %v4643, 0.0
        %v6894 = vadd.f32 %v6892, %v6893
        %v6895 = vsel %vm4961, %v4648, 0.0
        %v6896 = vadd.f32 %v6894, %v6895
        %v6897 = vsel %vm4961, %v4653, 0.0
        %v6898 = vadd.f32 %v6896, %v6897
        %v6899 = vsel %vm4961, %v4658, 0.0
        %v6900 = vadd.f32 %v6898, %v6899
        %v6901 = vsel %vm4961, %v4663, 0.0
        %v6902 = vadd.f32 %v6900, %v6901
        %v6903 = vsel %vm4961, %v4668, 0.0
        %v6904 = vadd.f32 %v6902, %v6903
        %v6905 = vsel %vm4961, %v4673, 0.0
        %v6906 = vadd.f32 %v6904, %v6905
        %v6907 = vsel %vm4961, %v4678, 0.0
        %v6908 = vadd.f32 %v6906, %v6907
        %v6909 = vsel %vm4961, %v4683, 0.0
        %v6910 = vadd.f32 %v6908, %v6909
        %v6911 = vsel %vm4961, %v4688, 0.0
        %v6912 = vadd.f32 %v6910, %v6911
        %v6913 = vsel %vm4961, %v4693, 0.0
        %v6914 = vadd.f32 %v6912, %v6913
        %v6915 = vsel %vm4961, %v4698, 0.0
        %v6916 = vadd.f32 %v6914, %v6915
        %v6917 = vsel %vm4961, %v4703, 0.0
        %v6918 = vadd.f32 %v6916, %v6917
        %v6919 = vsel %vm4961, %v4708, 0.0
        %v6920 = vadd.f32 %v6918, %v6919
        %v6921 = vsel %vm4961, %v4713, 0.0
        %v6922 = vadd.f32 %v6920, %v6921
        %v6923 = vsel %vm4961, %v4718, 0.0
        %v6924 = vadd.f32 %v6922, %v6923
        %v6925 = vsel %vm4961, %v4723, 0.0
        %v6926 = vadd.f32 %v6924, %v6925
        %v6927 = vsel %vm4961, %v4728, 0.0
        %v6928 = vadd.f32 %v6926, %v6927
        %v6929 = vsel %vm4961, %v4733, 0.0
        %v6930 = vadd.f32 %v6928, %v6929
        %v6931 = vsel %vm4961, %v4738, 0.0
        %v6932 = vadd.f32 %v6930, %v6931
        %v6933 = vsel %vm4961, %v4743, 0.0
        %v6934 = vadd.f32 %v6932, %v6933
        %v6935 = vsel %vm4961, %v4748, 0.0
        %v6936 = vadd.f32 %v6934, %v6935
        %v6937 = vsel %vm4961, %v4753, 0.0
        %v6938 = vadd.f32 %v6936, %v6937
        %v6939 = vsel %vm4961, %v4758, 0.0
        %v6940 = vadd.f32 %v6938, %v6939
        %v6941 = vsel %vm4961, %v4763, 0.0
        %v6942 = vadd.f32 %v6940, %v6941
        %v6943 = vsel %vm4961, %v4768, 0.0
        %v6944 = vadd.f32 %v6942, %v6943
        %v6945 = vsel %vm4961, %v4773, 0.0
        %v6946 = vadd.f32 %v6944, %v6945
        %v6947 = vsel %vm4961, %v4778, 0.0
        %v6948 = vadd.f32 %v6946, %v6947
        %v6949 = vsel %vm4961, %v4783, 0.0
        %v6950 = vadd.f32 %v6948, %v6949
        %v6951 = vsel %vm4961, %v4788, 0.0
        %v6952 = vadd.f32 %v6950, %v6951
        %v6953 = vsel %vm4961, %v4793, 0.0
        %v6954 = vadd.f32 %v6952, %v6953
        %v6955 = vsel %vm4961, %v4798, 0.0
        %v6956 = vadd.f32 %v6954, %v6955
        %v6957 = vsel %vm4961, %v4803, 0.0
        %v6958 = vadd.f32 %v6956, %v6957
        %v6959 = vsel %vm4961, %v4808, 0.0
        %v6960 = vadd.f32 %v6958, %v6959
        %v6961 = vsel %vm4961, %v4813, 0.0
        %v6962 = vadd.f32 %v6960, %v6961
        %v6963 = vsel %vm4961, %v4818, 0.0
        %v6964 = vadd.f32 %v6962, %v6963
        %v6965 = vsel %vm4961, %v4823, 0.0
        %v6966 = vadd.f32 %v6964, %v6965
        %v6967 = vsel %vm4961, %v4828, 0.0
        %v6968 = vadd.f32 %v6966, %v6967
        %v6969 = vsel %vm4961, %v4833, 0.0
        %v6970 = vadd.f32 %v6968, %v6969
        %v6971 = vsel %vm4961, %v4838, 0.0
        %v6972 = vadd.f32 %v6970, %v6971
        %v6973 = vsel %vm4961, %v4843, 0.0
        %v6974 = vadd.f32 %v6972, %v6973
        %v6975 = vsel %vm4961, %v4848, 0.0
        %v6976 = vadd.f32 %v6974, %v6975
        %v6977 = vsel %vm4961, %v4853, 0.0
        %v6978 = vadd.f32 %v6976, %v6977
        %v6979 = vsel %vm4961, %v4858, 0.0
        %v6980 = vadd.f32 %v6978, %v6979
        %v6981 = vsel %vm4961, %v4863, 0.0
        %v6982 = vadd.f32 %v6980, %v6981
        %v6983 = vsel %vm4961, %v4868, 0.0
        %v6984 = vadd.f32 %v6982, %v6983
        %v6985 = vsel %vm4961, %v4873, 0.0
        %v6986 = vadd.f32 %v6984, %v6985
        %v6987 = vsel %vm4961, %v4878, 0.0
        %v6988 = vadd.f32 %v6986, %v6987
        %v6989 = vsel %vm4961, %v4883, 0.0
        %v6990 = vadd.f32 %v6988, %v6989
        %v6991 = vsel %vm4961, %v4888, 0.0
        %v6992 = vadd.f32 %v6990, %v6991
        %v6993 = vsel %vm4961, %v4893, 0.0
        %v6994 = vadd.f32 %v6992, %v6993
        %v6995 = vsel %vm4961, %v4898, 0.0
        %v6996 = vadd.f32 %v6994, %v6995
        %v6997 = vsel %vm4961, %v4903, 0.0
        %v6998 = vadd.f32 %v6996, %v6997
        %v6999 = vsel %vm4961, %v4908, 0.0
        %v7000 = vadd.f32 %v6998, %v6999
        %v7001 = vsel %vm4961, %v4913, 0.0
        %v7002 = vadd.f32 %v7000, %v7001
        %v7003 = vsel %vm4961, %v4918, 0.0
        %v7004 = vadd.f32 %v7002, %v7003
        %v7005 = vsel %vm4961, %v4923, 0.0
        %v7006 = vadd.f32 %v7004, %v7005
        %v7007 = vsel %vm4961, %v4928, 0.0
        %v7008 = vadd.f32 %v7006, %v7007
        %v7009 = vsel %vm4961, %v4933, 0.0
        %v7010 = vadd.f32 %v7008, %v7009
        %v7011 = vsel %vm4961, %v4938, 0.0
        %v7012 = vadd.f32 %v7010, %v7011
        %v7013 = vsel %vm4961, %v4943, 0.0
        %v7014 = vadd.f32 %v7012, %v7013
        %v7015 = vsel %vm4961, %v4948, 0.0
        %v7016 = vadd.f32 %v7014, %v7015
        %v7017 = vsel %vm4961, %v4953, 0.0
        %v7018 = vadd.f32 %v7016, %v7017
        %v7019 = vsel %vm4961, %v4958, 0.0
        %v7020 = vadd.f32 %v7018, %v7019
        %v7021 = vrot.slane %v7020, 4
        %v7022 = vadd.f32 %v7020, %v7021
        %v7023 = vrot.slane %v7022, 2
        %v7024 = vadd.f32 %v7022, %v7023
        %v7025 = vrot.slane %v7024, 1
        %v7026 = vadd.f32 %v7024, %v7025
        %v7027 = vmul.f32 %v7026, %v5479
        %v7028 = vsub.f32 %v3683, %v7027
        %v7029 = vsub.f32 %v3688, %v7027
        %v7030 = vsub.f32 %v3693, %v7027
        %v7031 = vsub.f32 %v3698, %v7027
        %v7032 = vsub.f32 %v3703, %v7027
        %v7033 = vsub.f32 %v3708, %v7027
        %v7034 = vsub.f32 %v3713, %v7027
        %v7035 = vsub.f32 %v3718, %v7027
        %v7036 = vsub.f32 %v3723, %v7027
        %v7037 = vsub.f32 %v3728, %v7027
        %v7038 = vsub.f32 %v3733, %v7027
        %v7039 = vsub.f32 %v3738, %v7027
        %v7040 = vsub.f32 %v3743, %v7027
        %v7041 = vsub.f32 %v3748, %v7027
        %v7042 = vsub.f32 %v3753, %v7027
        %v7043 = vsub.f32 %v3758, %v7027
        %v7044 = vsub.f32 %v3763, %v7027
        %v7045 = vsub.f32 %v3768, %v7027
        %v7046 = vsub.f32 %v3773, %v7027
        %v7047 = vsub.f32 %v3778, %v7027
        %v7048 = vsub.f32 %v3783, %v7027
        %v7049 = vsub.f32 %v3788, %v7027
        %v7050 = vsub.f32 %v3793, %v7027
        %v7051 = vsub.f32 %v3798, %v7027
        %v7052 = vsub.f32 %v3803, %v7027
        %v7053 = vsub.f32 %v3808, %v7027
        %v7054 = vsub.f32 %v3813, %v7027
        %v7055 = vsub.f32 %v3818, %v7027
        %v7056 = vsub.f32 %v3823, %v7027
        %v7057 = vsub.f32 %v3828, %v7027
        %v7058 = vsub.f32 %v3833, %v7027
        %v7059 = vsub.f32 %v3838, %v7027
        %v7060 = vsub.f32 %v3843, %v7027
        %v7061 = vsub.f32 %v3848, %v7027
        %v7062 = vsub.f32 %v3853, %v7027
        %v7063 = vsub.f32 %v3858, %v7027
        %v7064 = vsub.f32 %v3863, %v7027
        %v7065 = vsub.f32 %v3868, %v7027
        %v7066 = vsub.f32 %v3873, %v7027
        %v7067 = vsub.f32 %v3878, %v7027
        %v7068 = vsub.f32 %v3883, %v7027
        %v7069 = vsub.f32 %v3888, %v7027
        %v7070 = vsub.f32 %v3893, %v7027
        %v7071 = vsub.f32 %v3898, %v7027
        %v7072 = vsub.f32 %v3903, %v7027
        %v7073 = vsub.f32 %v3908, %v7027
        %v7074 = vsub.f32 %v3913, %v7027
        %v7075 = vsub.f32 %v3918, %v7027
        %v7076 = vsub.f32 %v3923, %v7027
        %v7077 = vsub.f32 %v3928, %v7027
        %v7078 = vsub.f32 %v3933, %v7027
        %v7079 = vsub.f32 %v3938, %v7027
        %v7080 = vsub.f32 %v3943, %v7027
        %v7081 = vsub.f32 %v3948, %v7027
        %v7082 = vsub.f32 %v3953, %v7027
        %v7083 = vsub.f32 %v3958, %v7027
        %v7084 = vsub.f32 %v3963, %v7027
        %v7085 = vsub.f32 %v3968, %v7027
        %v7086 = vsub.f32 %v3973, %v7027
        %v7087 = vsub.f32 %v3978, %v7027
        %v7088 = vsub.f32 %v3983, %v7027
        %v7089 = vsub.f32 %v3988, %v7027
        %v7090 = vsub.f32 %v3993, %v7027
        %v7091 = vsub.f32 %v3998, %v7027
        %v7092 = vsub.f32 %v4003, %v7027
        %v7093 = vsub.f32 %v4008, %v7027
        %v7094 = vsub.f32 %v4013, %v7027
        %v7095 = vsub.f32 %v4018, %v7027
        %v7096 = vsub.f32 %v4023, %v7027
        %v7097 = vsub.f32 %v4028, %v7027
        %v7098 = vsub.f32 %v4033, %v7027
        %v7099 = vsub.f32 %v4038, %v7027
        %v7100 = vsub.f32 %v4043, %v7027
        %v7101 = vsub.f32 %v4048, %v7027
        %v7102 = vsub.f32 %v4053, %v7027
        %v7103 = vsub.f32 %v4058, %v7027
        %v7104 = vsub.f32 %v4063, %v7027
        %v7105 = vsub.f32 %v4068, %v7027
        %v7106 = vsub.f32 %v4073, %v7027
        %v7107 = vsub.f32 %v4078, %v7027
        %v7108 = vsub.f32 %v4083, %v7027
        %v7109 = vsub.f32 %v4088, %v7027
        %v7110 = vsub.f32 %v4093, %v7027
        %v7111 = vsub.f32 %v4098, %v7027
        %v7112 = vsub.f32 %v4103, %v7027
        %v7113 = vsub.f32 %v4108, %v7027
        %v7114 = vsub.f32 %v4113, %v7027
        %v7115 = vsub.f32 %v4118, %v7027
        %v7116 = vsub.f32 %v4123, %v7027
        %v7117 = vsub.f32 %v4128, %v7027
        %v7118 = vsub.f32 %v4133, %v7027
        %v7119 = vsub.f32 %v4138, %v7027
        %v7120 = vsub.f32 %v4143, %v7027
        %v7121 = vsub.f32 %v4148, %v7027
        %v7122 = vsub.f32 %v4153, %v7027
        %v7123 = vsub.f32 %v4158, %v7027
        %v7124 = vsub.f32 %v4163, %v7027
        %v7125 = vsub.f32 %v4168, %v7027
        %v7126 = vsub.f32 %v4173, %v7027
        %v7127 = vsub.f32 %v4178, %v7027
        %v7128 = vsub.f32 %v4183, %v7027
        %v7129 = vsub.f32 %v4188, %v7027
        %v7130 = vsub.f32 %v4193, %v7027
        %v7131 = vsub.f32 %v4198, %v7027
        %v7132 = vsub.f32 %v4203, %v7027
        %v7133 = vsub.f32 %v4208, %v7027
        %v7134 = vsub.f32 %v4213, %v7027
        %v7135 = vsub.f32 %v4218, %v7027
        %v7136 = vsub.f32 %v4223, %v7027
        %v7137 = vsub.f32 %v4228, %v7027
        %v7138 = vsub.f32 %v4233, %v7027
        %v7139 = vsub.f32 %v4238, %v7027
        %v7140 = vsub.f32 %v4243, %v7027
        %v7141 = vsub.f32 %v4248, %v7027
        %v7142 = vsub.f32 %v4253, %v7027
        %v7143 = vsub.f32 %v4258, %v7027
        %v7144 = vsub.f32 %v4263, %v7027
        %v7145 = vsub.f32 %v4268, %v7027
        %v7146 = vsub.f32 %v4273, %v7027
        %v7147 = vsub.f32 %v4278, %v7027
        %v7148 = vsub.f32 %v4283, %v7027
        %v7149 = vsub.f32 %v4288, %v7027
        %v7150 = vsub.f32 %v4293, %v7027
        %v7151 = vsub.f32 %v4298, %v7027
        %v7152 = vsub.f32 %v4303, %v7027
        %v7153 = vsub.f32 %v4308, %v7027
        %v7154 = vsub.f32 %v4313, %v7027
        %v7155 = vsub.f32 %v4318, %v7027
        %v7156 = vsub.f32 %v4323, %v7027
        %v7157 = vsub.f32 %v4328, %v7027
        %v7158 = vsub.f32 %v4333, %v7027
        %v7159 = vsub.f32 %v4338, %v7027
        %v7160 = vsub.f32 %v4343, %v7027
        %v7161 = vsub.f32 %v4348, %v7027
        %v7162 = vsub.f32 %v4353, %v7027
        %v7163 = vsub.f32 %v4358, %v7027
        %v7164 = vsub.f32 %v4363, %v7027
        %v7165 = vsub.f32 %v4368, %v7027
        %v7166 = vsub.f32 %v4373, %v7027
        %v7167 = vsub.f32 %v4378, %v7027
        %v7168 = vsub.f32 %v4383, %v7027
        %v7169 = vsub.f32 %v4388, %v7027
        %v7170 = vsub.f32 %v4393, %v7027
        %v7171 = vsub.f32 %v4398, %v7027
        %v7172 = vsub.f32 %v4403, %v7027
        %v7173 = vsub.f32 %v4408, %v7027
        %v7174 = vsub.f32 %v4413, %v7027
        %v7175 = vsub.f32 %v4418, %v7027
        %v7176 = vsub.f32 %v4423, %v7027
        %v7177 = vsub.f32 %v4428, %v7027
        %v7178 = vsub.f32 %v4433, %v7027
        %v7179 = vsub.f32 %v4438, %v7027
        %v7180 = vsub.f32 %v4443, %v7027
        %v7181 = vsub.f32 %v4448, %v7027
        %v7182 = vsub.f32 %v4453, %v7027
        %v7183 = vsub.f32 %v4458, %v7027
        %v7184 = vsub.f32 %v4463, %v7027
        %v7185 = vsub.f32 %v4468, %v7027
        %v7186 = vsub.f32 %v4473, %v7027
        %v7187 = vsub.f32 %v4478, %v7027
        %v7188 = vsub.f32 %v4483, %v7027
        %v7189 = vsub.f32 %v4488, %v7027
        %v7190 = vsub.f32 %v4493, %v7027
        %v7191 = vsub.f32 %v4498, %v7027
        %v7192 = vsub.f32 %v4503, %v7027
        %v7193 = vsub.f32 %v4508, %v7027
        %v7194 = vsub.f32 %v4513, %v7027
        %v7195 = vsub.f32 %v4518, %v7027
        %v7196 = vsub.f32 %v4523, %v7027
        %v7197 = vsub.f32 %v4528, %v7027
        %v7198 = vsub.f32 %v4533, %v7027
        %v7199 = vsub.f32 %v4538, %v7027
        %v7200 = vsub.f32 %v4543, %v7027
        %v7201 = vsub.f32 %v4548, %v7027
        %v7202 = vsub.f32 %v4553, %v7027
        %v7203 = vsub.f32 %v4558, %v7027
        %v7204 = vsub.f32 %v4563, %v7027
        %v7205 = vsub.f32 %v4568, %v7027
        %v7206 = vsub.f32 %v4573, %v7027
        %v7207 = vsub.f32 %v4578, %v7027
        %v7208 = vsub.f32 %v4583, %v7027
        %v7209 = vsub.f32 %v4588, %v7027
        %v7210 = vsub.f32 %v4593, %v7027
        %v7211 = vsub.f32 %v4598, %v7027
        %v7212 = vsub.f32 %v4603, %v7027
        %v7213 = vsub.f32 %v4608, %v7027
        %v7214 = vsub.f32 %v4613, %v7027
        %v7215 = vsub.f32 %v4618, %v7027
        %v7216 = vsub.f32 %v4623, %v7027
        %v7217 = vsub.f32 %v4628, %v7027
        %v7218 = vsub.f32 %v4633, %v7027
        %v7219 = vsub.f32 %v4638, %v7027
        %v7220 = vsub.f32 %v4643, %v7027
        %v7221 = vsub.f32 %v4648, %v7027
        %v7222 = vsub.f32 %v4653, %v7027
        %v7223 = vsub.f32 %v4658, %v7027
        %v7224 = vsub.f32 %v4663, %v7027
        %v7225 = vsub.f32 %v4668, %v7027
        %v7226 = vsub.f32 %v4673, %v7027
        %v7227 = vsub.f32 %v4678, %v7027
        %v7228 = vsub.f32 %v4683, %v7027
        %v7229 = vsub.f32 %v4688, %v7027
        %v7230 = vsub.f32 %v4693, %v7027
        %v7231 = vsub.f32 %v4698, %v7027
        %v7232 = vsub.f32 %v4703, %v7027
        %v7233 = vsub.f32 %v4708, %v7027
        %v7234 = vsub.f32 %v4713, %v7027
        %v7235 = vsub.f32 %v4718, %v7027
        %v7236 = vsub.f32 %v4723, %v7027
        %v7237 = vsub.f32 %v4728, %v7027
        %v7238 = vsub.f32 %v4733, %v7027
        %v7239 = vsub.f32 %v4738, %v7027
        %v7240 = vsub.f32 %v4743, %v7027
        %v7241 = vsub.f32 %v4748, %v7027
        %v7242 = vsub.f32 %v4753, %v7027
        %v7243 = vsub.f32 %v4758, %v7027
        %v7244 = vsub.f32 %v4763, %v7027
        %v7245 = vsub.f32 %v4768, %v7027
        %v7246 = vsub.f32 %v4773, %v7027
        %v7247 = vsub.f32 %v4778, %v7027
        %v7248 = vsub.f32 %v4783, %v7027
        %v7249 = vsub.f32 %v4788, %v7027
        %v7250 = vsub.f32 %v4793, %v7027
        %v7251 = vsub.f32 %v4798, %v7027
        %v7252 = vsub.f32 %v4803, %v7027
        %v7253 = vsub.f32 %v4808, %v7027
        %v7254 = vsub.f32 %v4813, %v7027
        %v7255 = vsub.f32 %v4818, %v7027
        %v7256 = vsub.f32 %v4823, %v7027
        %v7257 = vsub.f32 %v4828, %v7027
        %v7258 = vsub.f32 %v4833, %v7027
        %v7259 = vsub.f32 %v4838, %v7027
        %v7260 = vsub.f32 %v4843, %v7027
        %v7261 = vsub.f32 %v4848, %v7027
        %v7262 = vsub.f32 %v4853, %v7027
        %v7263 = vsub.f32 %v4858, %v7027
        %v7264 = vsub.f32 %v4863, %v7027
        %v7265 = vsub.f32 %v4868, %v7027
        %v7266 = vsub.f32 %v4873, %v7027
        %v7267 = vsub.f32 %v4878, %v7027
        %v7268 = vsub.f32 %v4883, %v7027
        %v7269 = vsub.f32 %v4888, %v7027
        %v7270 = vsub.f32 %v4893, %v7027
        %v7271 = vsub.f32 %v4898, %v7027
        %v7272 = vsub.f32 %v4903, %v7027
        %v7273 = vsub.f32 %v4908, %v7027
        %v7274 = vsub.f32 %v4913, %v7027
        %v7275 = vsub.f32 %v4918, %v7027
        %v7276 = vsub.f32 %v4923, %v7027
        %v7277 = vsub.f32 %v4928, %v7027
        %v7278 = vsub.f32 %v4933, %v7027
        %v7279 = vsub.f32 %v4938, %v7027
        %v7280 = vsub.f32 %v4943, %v7027
        %v7281 = vsub.f32 %v4948, %v7027
        %v7282 = vsub.f32 %v4953, %v7027
        %v7283 = vsub.f32 %v4958, %v7027
        %v7284 = vmul.f32 %v7028, %v7028
        %v7285 = vmul.f32 %v7029, %v7029
        %v7286 = vmul.f32 %v7030, %v7030
        %v7287 = vmul.f32 %v7031, %v7031
        %v7288 = vmul.f32 %v7032, %v7032
        %v7289 = vmul.f32 %v7033, %v7033
        %v7290 = vmul.f32 %v7034, %v7034
        %v7291 = vmul.f32 %v7035, %v7035
        %v7292 = vmul.f32 %v7036, %v7036
        %v7293 = vmul.f32 %v7037, %v7037
        %v7294 = vmul.f32 %v7038, %v7038
        %v7295 = vmul.f32 %v7039, %v7039
        %v7296 = vmul.f32 %v7040, %v7040
        %v7297 = vmul.f32 %v7041, %v7041
        %v7298 = vmul.f32 %v7042, %v7042
        %v7299 = vmul.f32 %v7043, %v7043
        %v7300 = vmul.f32 %v7044, %v7044
        %v7301 = vmul.f32 %v7045, %v7045
        %v7302 = vmul.f32 %v7046, %v7046
        %v7303 = vmul.f32 %v7047, %v7047
        %v7304 = vmul.f32 %v7048, %v7048
        %v7305 = vmul.f32 %v7049, %v7049
        %v7306 = vmul.f32 %v7050, %v7050
        %v7307 = vmul.f32 %v7051, %v7051
        %v7308 = vmul.f32 %v7052, %v7052
        %v7309 = vmul.f32 %v7053, %v7053
        %v7310 = vmul.f32 %v7054, %v7054
        %v7311 = vmul.f32 %v7055, %v7055
        %v7312 = vmul.f32 %v7056, %v7056
        %v7313 = vmul.f32 %v7057, %v7057
        %v7314 = vmul.f32 %v7058, %v7058
        %v7315 = vmul.f32 %v7059, %v7059
        %v7316 = vmul.f32 %v7060, %v7060
        %v7317 = vmul.f32 %v7061, %v7061
        %v7318 = vmul.f32 %v7062, %v7062
        %v7319 = vmul.f32 %v7063, %v7063
        %v7320 = vmul.f32 %v7064, %v7064
        %v7321 = vmul.f32 %v7065, %v7065
        %v7322 = vmul.f32 %v7066, %v7066
        %v7323 = vmul.f32 %v7067, %v7067
        %v7324 = vmul.f32 %v7068, %v7068
        %v7325 = vmul.f32 %v7069, %v7069
        %v7326 = vmul.f32 %v7070, %v7070
        %v7327 = vmul.f32 %v7071, %v7071
        %v7328 = vmul.f32 %v7072, %v7072
        %v7329 = vmul.f32 %v7073, %v7073
        %v7330 = vmul.f32 %v7074, %v7074
        %v7331 = vmul.f32 %v7075, %v7075
        %v7332 = vmul.f32 %v7076, %v7076
        %v7333 = vmul.f32 %v7077, %v7077
        %v7334 = vmul.f32 %v7078, %v7078
        %v7335 = vmul.f32 %v7079, %v7079
        %v7336 = vmul.f32 %v7080, %v7080
        %v7337 = vmul.f32 %v7081, %v7081
        %v7338 = vmul.f32 %v7082, %v7082
        %v7339 = vmul.f32 %v7083, %v7083
        %v7340 = vmul.f32 %v7084, %v7084
        %v7341 = vmul.f32 %v7085, %v7085
        %v7342 = vmul.f32 %v7086, %v7086
        %v7343 = vmul.f32 %v7087, %v7087
        %v7344 = vmul.f32 %v7088, %v7088
        %v7345 = vmul.f32 %v7089, %v7089
        %v7346 = vmul.f32 %v7090, %v7090
        %v7347 = vmul.f32 %v7091, %v7091
        %v7348 = vmul.f32 %v7092, %v7092
        %v7349 = vmul.f32 %v7093, %v7093
        %v7350 = vmul.f32 %v7094, %v7094
        %v7351 = vmul.f32 %v7095, %v7095
        %v7352 = vmul.f32 %v7096, %v7096
        %v7353 = vmul.f32 %v7097, %v7097
        %v7354 = vmul.f32 %v7098, %v7098
        %v7355 = vmul.f32 %v7099, %v7099
        %v7356 = vmul.f32 %v7100, %v7100
        %v7357 = vmul.f32 %v7101, %v7101
        %v7358 = vmul.f32 %v7102, %v7102
        %v7359 = vmul.f32 %v7103, %v7103
        %v7360 = vmul.f32 %v7104, %v7104
        %v7361 = vmul.f32 %v7105, %v7105
        %v7362 = vmul.f32 %v7106, %v7106
        %v7363 = vmul.f32 %v7107, %v7107
        %v7364 = vmul.f32 %v7108, %v7108
        %v7365 = vmul.f32 %v7109, %v7109
        %v7366 = vmul.f32 %v7110, %v7110
        %v7367 = vmul.f32 %v7111, %v7111
        %v7368 = vmul.f32 %v7112, %v7112
        %v7369 = vmul.f32 %v7113, %v7113
        %v7370 = vmul.f32 %v7114, %v7114
        %v7371 = vmul.f32 %v7115, %v7115
        %v7372 = vmul.f32 %v7116, %v7116
        %v7373 = vmul.f32 %v7117, %v7117
        %v7374 = vmul.f32 %v7118, %v7118
        %v7375 = vmul.f32 %v7119, %v7119
        %v7376 = vmul.f32 %v7120, %v7120
        %v7377 = vmul.f32 %v7121, %v7121
        %v7378 = vmul.f32 %v7122, %v7122
        %v7379 = vmul.f32 %v7123, %v7123
        %v7380 = vmul.f32 %v7124, %v7124
        %v7381 = vmul.f32 %v7125, %v7125
        %v7382 = vmul.f32 %v7126, %v7126
        %v7383 = vmul.f32 %v7127, %v7127
        %v7384 = vmul.f32 %v7128, %v7128
        %v7385 = vmul.f32 %v7129, %v7129
        %v7386 = vmul.f32 %v7130, %v7130
        %v7387 = vmul.f32 %v7131, %v7131
        %v7388 = vmul.f32 %v7132, %v7132
        %v7389 = vmul.f32 %v7133, %v7133
        %v7390 = vmul.f32 %v7134, %v7134
        %v7391 = vmul.f32 %v7135, %v7135
        %v7392 = vmul.f32 %v7136, %v7136
        %v7393 = vmul.f32 %v7137, %v7137
        %v7394 = vmul.f32 %v7138, %v7138
        %v7395 = vmul.f32 %v7139, %v7139
        %v7396 = vmul.f32 %v7140, %v7140
        %v7397 = vmul.f32 %v7141, %v7141
        %v7398 = vmul.f32 %v7142, %v7142
        %v7399 = vmul.f32 %v7143, %v7143
        %v7400 = vmul.f32 %v7144, %v7144
        %v7401 = vmul.f32 %v7145, %v7145
        %v7402 = vmul.f32 %v7146, %v7146
        %v7403 = vmul.f32 %v7147, %v7147
        %v7404 = vmul.f32 %v7148, %v7148
        %v7405 = vmul.f32 %v7149, %v7149
        %v7406 = vmul.f32 %v7150, %v7150
        %v7407 = vmul.f32 %v7151, %v7151
        %v7408 = vmul.f32 %v7152, %v7152
        %v7409 = vmul.f32 %v7153, %v7153
        %v7410 = vmul.f32 %v7154, %v7154
        %v7411 = vmul.f32 %v7155, %v7155
        %v7412 = vmul.f32 %v7156, %v7156
        %v7413 = vmul.f32 %v7157, %v7157
        %v7414 = vmul.f32 %v7158, %v7158
        %v7415 = vmul.f32 %v7159, %v7159
        %v7416 = vmul.f32 %v7160, %v7160
        %v7417 = vmul.f32 %v7161, %v7161
        %v7418 = vmul.f32 %v7162, %v7162
        %v7419 = vmul.f32 %v7163, %v7163
        %v7420 = vmul.f32 %v7164, %v7164
        %v7421 = vmul.f32 %v7165, %v7165
        %v7422 = vmul.f32 %v7166, %v7166
        %v7423 = vmul.f32 %v7167, %v7167
        %v7424 = vmul.f32 %v7168, %v7168
        %v7425 = vmul.f32 %v7169, %v7169
        %v7426 = vmul.f32 %v7170, %v7170
        %v7427 = vmul.f32 %v7171, %v7171
        %v7428 = vmul.f32 %v7172, %v7172
        %v7429 = vmul.f32 %v7173, %v7173
        %v7430 = vmul.f32 %v7174, %v7174
        %v7431 = vmul.f32 %v7175, %v7175
        %v7432 = vmul.f32 %v7176, %v7176
        %v7433 = vmul.f32 %v7177, %v7177
        %v7434 = vmul.f32 %v7178, %v7178
        %v7435 = vmul.f32 %v7179, %v7179
        %v7436 = vmul.f32 %v7180, %v7180
        %v7437 = vmul.f32 %v7181, %v7181
        %v7438 = vmul.f32 %v7182, %v7182
        %v7439 = vmul.f32 %v7183, %v7183
        %v7440 = vmul.f32 %v7184, %v7184
        %v7441 = vmul.f32 %v7185, %v7185
        %v7442 = vmul.f32 %v7186, %v7186
        %v7443 = vmul.f32 %v7187, %v7187
        %v7444 = vmul.f32 %v7188, %v7188
        %v7445 = vmul.f32 %v7189, %v7189
        %v7446 = vmul.f32 %v7190, %v7190
        %v7447 = vmul.f32 %v7191, %v7191
        %v7448 = vmul.f32 %v7192, %v7192
        %v7449 = vmul.f32 %v7193, %v7193
        %v7450 = vmul.f32 %v7194, %v7194
        %v7451 = vmul.f32 %v7195, %v7195
        %v7452 = vmul.f32 %v7196, %v7196
        %v7453 = vmul.f32 %v7197, %v7197
        %v7454 = vmul.f32 %v7198, %v7198
        %v7455 = vmul.f32 %v7199, %v7199
        %v7456 = vmul.f32 %v7200, %v7200
        %v7457 = vmul.f32 %v7201, %v7201
        %v7458 = vmul.f32 %v7202, %v7202
        %v7459 = vmul.f32 %v7203, %v7203
        %v7460 = vmul.f32 %v7204, %v7204
        %v7461 = vmul.f32 %v7205, %v7205
        %v7462 = vmul.f32 %v7206, %v7206
        %v7463 = vmul.f32 %v7207, %v7207
        %v7464 = vmul.f32 %v7208, %v7208
        %v7465 = vmul.f32 %v7209, %v7209
        %v7466 = vmul.f32 %v7210, %v7210
        %v7467 = vmul.f32 %v7211, %v7211
        %v7468 = vmul.f32 %v7212, %v7212
        %v7469 = vmul.f32 %v7213, %v7213
        %v7470 = vmul.f32 %v7214, %v7214
        %v7471 = vmul.f32 %v7215, %v7215
        %v7472 = vmul.f32 %v7216, %v7216
        %v7473 = vmul.f32 %v7217, %v7217
        %v7474 = vmul.f32 %v7218, %v7218
        %v7475 = vmul.f32 %v7219, %v7219
        %v7476 = vmul.f32 %v7220, %v7220
        %v7477 = vmul.f32 %v7221, %v7221
        %v7478 = vmul.f32 %v7222, %v7222
        %v7479 = vmul.f32 %v7223, %v7223
        %v7480 = vmul.f32 %v7224, %v7224
        %v7481 = vmul.f32 %v7225, %v7225
        %v7482 = vmul.f32 %v7226, %v7226
        %v7483 = vmul.f32 %v7227, %v7227
        %v7484 = vmul.f32 %v7228, %v7228
        %v7485 = vmul.f32 %v7229, %v7229
        %v7486 = vmul.f32 %v7230, %v7230
        %v7487 = vmul.f32 %v7231, %v7231
        %v7488 = vmul.f32 %v7232, %v7232
        %v7489 = vmul.f32 %v7233, %v7233
        %v7490 = vmul.f32 %v7234, %v7234
        %v7491 = vmul.f32 %v7235, %v7235
        %v7492 = vmul.f32 %v7236, %v7236
        %v7493 = vmul.f32 %v7237, %v7237
        %v7494 = vmul.f32 %v7238, %v7238
        %v7495 = vmul.f32 %v7239, %v7239
        %v7496 = vmul.f32 %v7240, %v7240
        %v7497 = vmul.f32 %v7241, %v7241
        %v7498 = vmul.f32 %v7242, %v7242
        %v7499 = vmul.f32 %v7243, %v7243
        %v7500 = vmul.f32 %v7244, %v7244
        %v7501 = vmul.f32 %v7245, %v7245
        %v7502 = vmul.f32 %v7246, %v7246
        %v7503 = vmul.f32 %v7247, %v7247
        %v7504 = vmul.f32 %v7248, %v7248
        %v7505 = vmul.f32 %v7249, %v7249
        %v7506 = vmul.f32 %v7250, %v7250
        %v7507 = vmul.f32 %v7251, %v7251
        %v7508 = vmul.f32 %v7252, %v7252
        %v7509 = vmul.f32 %v7253, %v7253
        %v7510 = vmul.f32 %v7254, %v7254
        %v7511 = vmul.f32 %v7255, %v7255
        %v7512 = vmul.f32 %v7256, %v7256
        %v7513 = vmul.f32 %v7257, %v7257
        %v7514 = vmul.f32 %v7258, %v7258
        %v7515 = vmul.f32 %v7259, %v7259
        %v7516 = vmul.f32 %v7260, %v7260
        %v7517 = vmul.f32 %v7261, %v7261
        %v7518 = vmul.f32 %v7262, %v7262
        %v7519 = vmul.f32 %v7263, %v7263
        %v7520 = vmul.f32 %v7264, %v7264
        %v7521 = vmul.f32 %v7265, %v7265
        %v7522 = vmul.f32 %v7266, %v7266
        %v7523 = vmul.f32 %v7267, %v7267
        %v7524 = vmul.f32 %v7268, %v7268
        %v7525 = vmul.f32 %v7269, %v7269
        %v7526 = vmul.f32 %v7270, %v7270
        %v7527 = vmul.f32 %v7271, %v7271
        %v7528 = vmul.f32 %v7272, %v7272
        %v7529 = vmul.f32 %v7273, %v7273
        %v7530 = vmul.f32 %v7274, %v7274
        %v7531 = vmul.f32 %v7275, %v7275
        %v7532 = vmul.f32 %v7276, %v7276
        %v7533 = vmul.f32 %v7277, %v7277
        %v7534 = vmul.f32 %v7278, %v7278
        %v7535 = vmul.f32 %v7279, %v7279
        %v7536 = vmul.f32 %v7280, %v7280
        %v7537 = vmul.f32 %v7281, %v7281
        %v7538 = vmul.f32 %v7282, %v7282
        %v7539 = vmul.f32 %v7283, %v7283
        %v7540 = vsel %vm4961, %v7284, 0.0
        %v7541 = vsel %vm4961, %v7285, 0.0
        %v7542 = vadd.f32 %v7540, %v7541
        %v7543 = vsel %vm4961, %v7286, 0.0
        %v7544 = vadd.f32 %v7542, %v7543
        %v7545 = vsel %vm4961, %v7287, 0.0
        %v7546 = vadd.f32 %v7544, %v7545
        %v7547 = vsel %vm4961, %v7288, 0.0
        %v7548 = vadd.f32 %v7546, %v7547
        %v7549 = vsel %vm4961, %v7289, 0.0
        %v7550 = vadd.f32 %v7548, %v7549
        %v7551 = vsel %vm4961, %v7290, 0.0
        %v7552 = vadd.f32 %v7550, %v7551
        %v7553 = vsel %vm4961, %v7291, 0.0
        %v7554 = vadd.f32 %v7552, %v7553
        %v7555 = vsel %vm4961, %v7292, 0.0
        %v7556 = vadd.f32 %v7554, %v7555
        %v7557 = vsel %vm4961, %v7293, 0.0
        %v7558 = vadd.f32 %v7556, %v7557
        %v7559 = vsel %vm4961, %v7294, 0.0
        %v7560 = vadd.f32 %v7558, %v7559
        %v7561 = vsel %vm4961, %v7295, 0.0
        %v7562 = vadd.f32 %v7560, %v7561
        %v7563 = vsel %vm4961, %v7296, 0.0
        %v7564 = vadd.f32 %v7562, %v7563
        %v7565 = vsel %vm4961, %v7297, 0.0
        %v7566 = vadd.f32 %v7564, %v7565
        %v7567 = vsel %vm4961, %v7298, 0.0
        %v7568 = vadd.f32 %v7566, %v7567
        %v7569 = vsel %vm4961, %v7299, 0.0
        %v7570 = vadd.f32 %v7568, %v7569
        %v7571 = vsel %vm4961, %v7300, 0.0
        %v7572 = vadd.f32 %v7570, %v7571
        %v7573 = vsel %vm4961, %v7301, 0.0
        %v7574 = vadd.f32 %v7572, %v7573
        %v7575 = vsel %vm4961, %v7302, 0.0
        %v7576 = vadd.f32 %v7574, %v7575
        %v7577 = vsel %vm4961, %v7303, 0.0
        %v7578 = vadd.f32 %v7576, %v7577
        %v7579 = vsel %vm4961, %v7304, 0.0
        %v7580 = vadd.f32 %v7578, %v7579
        %v7581 = vsel %vm4961, %v7305, 0.0
        %v7582 = vadd.f32 %v7580, %v7581
        %v7583 = vsel %vm4961, %v7306, 0.0
        %v7584 = vadd.f32 %v7582, %v7583
        %v7585 = vsel %vm4961, %v7307, 0.0
        %v7586 = vadd.f32 %v7584, %v7585
        %v7587 = vsel %vm4961, %v7308, 0.0
        %v7588 = vadd.f32 %v7586, %v7587
        %v7589 = vsel %vm4961, %v7309, 0.0
        %v7590 = vadd.f32 %v7588, %v7589
        %v7591 = vsel %vm4961, %v7310, 0.0
        %v7592 = vadd.f32 %v7590, %v7591
        %v7593 = vsel %vm4961, %v7311, 0.0
        %v7594 = vadd.f32 %v7592, %v7593
        %v7595 = vsel %vm4961, %v7312, 0.0
        %v7596 = vadd.f32 %v7594, %v7595
        %v7597 = vsel %vm4961, %v7313, 0.0
        %v7598 = vadd.f32 %v7596, %v7597
        %v7599 = vsel %vm4961, %v7314, 0.0
        %v7600 = vadd.f32 %v7598, %v7599
        %v7601 = vsel %vm4961, %v7315, 0.0
        %v7602 = vadd.f32 %v7600, %v7601
        %v7603 = vsel %vm4961, %v7316, 0.0
        %v7604 = vadd.f32 %v7602, %v7603
        %v7605 = vsel %vm4961, %v7317, 0.0
        %v7606 = vadd.f32 %v7604, %v7605
        %v7607 = vsel %vm4961, %v7318, 0.0
        %v7608 = vadd.f32 %v7606, %v7607
        %v7609 = vsel %vm4961, %v7319, 0.0
        %v7610 = vadd.f32 %v7608, %v7609
        %v7611 = vsel %vm4961, %v7320, 0.0
        %v7612 = vadd.f32 %v7610, %v7611
        %v7613 = vsel %vm4961, %v7321, 0.0
        %v7614 = vadd.f32 %v7612, %v7613
        %v7615 = vsel %vm4961, %v7322, 0.0
        %v7616 = vadd.f32 %v7614, %v7615
        %v7617 = vsel %vm4961, %v7323, 0.0
        %v7618 = vadd.f32 %v7616, %v7617
        %v7619 = vsel %vm4961, %v7324, 0.0
        %v7620 = vadd.f32 %v7618, %v7619
        %v7621 = vsel %vm4961, %v7325, 0.0
        %v7622 = vadd.f32 %v7620, %v7621
        %v7623 = vsel %vm4961, %v7326, 0.0
        %v7624 = vadd.f32 %v7622, %v7623
        %v7625 = vsel %vm4961, %v7327, 0.0
        %v7626 = vadd.f32 %v7624, %v7625
        %v7627 = vsel %vm4961, %v7328, 0.0
        %v7628 = vadd.f32 %v7626, %v7627
        %v7629 = vsel %vm4961, %v7329, 0.0
        %v7630 = vadd.f32 %v7628, %v7629
        %v7631 = vsel %vm4961, %v7330, 0.0
        %v7632 = vadd.f32 %v7630, %v7631
        %v7633 = vsel %vm4961, %v7331, 0.0
        %v7634 = vadd.f32 %v7632, %v7633
        %v7635 = vsel %vm4961, %v7332, 0.0
        %v7636 = vadd.f32 %v7634, %v7635
        %v7637 = vsel %vm4961, %v7333, 0.0
        %v7638 = vadd.f32 %v7636, %v7637
        %v7639 = vsel %vm4961, %v7334, 0.0
        %v7640 = vadd.f32 %v7638, %v7639
        %v7641 = vsel %vm4961, %v7335, 0.0
        %v7642 = vadd.f32 %v7640, %v7641
        %v7643 = vsel %vm4961, %v7336, 0.0
        %v7644 = vadd.f32 %v7642, %v7643
        %v7645 = vsel %vm4961, %v7337, 0.0
        %v7646 = vadd.f32 %v7644, %v7645
        %v7647 = vsel %vm4961, %v7338, 0.0
        %v7648 = vadd.f32 %v7646, %v7647
        %v7649 = vsel %vm4961, %v7339, 0.0
        %v7650 = vadd.f32 %v7648, %v7649
        %v7651 = vsel %vm4961, %v7340, 0.0
        %v7652 = vadd.f32 %v7650, %v7651
        %v7653 = vsel %vm4961, %v7341, 0.0
        %v7654 = vadd.f32 %v7652, %v7653
        %v7655 = vsel %vm4961, %v7342, 0.0
        %v7656 = vadd.f32 %v7654, %v7655
        %v7657 = vsel %vm4961, %v7343, 0.0
        %v7658 = vadd.f32 %v7656, %v7657
        %v7659 = vsel %vm4961, %v7344, 0.0
        %v7660 = vadd.f32 %v7658, %v7659
        %v7661 = vsel %vm4961, %v7345, 0.0
        %v7662 = vadd.f32 %v7660, %v7661
        %v7663 = vsel %vm4961, %v7346, 0.0
        %v7664 = vadd.f32 %v7662, %v7663
        %v7665 = vsel %vm4961, %v7347, 0.0
        %v7666 = vadd.f32 %v7664, %v7665
        %v7667 = vsel %vm4961, %v7348, 0.0
        %v7668 = vadd.f32 %v7666, %v7667
        %v7669 = vsel %vm4961, %v7349, 0.0
        %v7670 = vadd.f32 %v7668, %v7669
        %v7671 = vsel %vm4961, %v7350, 0.0
        %v7672 = vadd.f32 %v7670, %v7671
        %v7673 = vsel %vm4961, %v7351, 0.0
        %v7674 = vadd.f32 %v7672, %v7673
        %v7675 = vsel %vm4961, %v7352, 0.0
        %v7676 = vadd.f32 %v7674, %v7675
        %v7677 = vsel %vm4961, %v7353, 0.0
        %v7678 = vadd.f32 %v7676, %v7677
        %v7679 = vsel %vm4961, %v7354, 0.0
        %v7680 = vadd.f32 %v7678, %v7679
        %v7681 = vsel %vm4961, %v7355, 0.0
        %v7682 = vadd.f32 %v7680, %v7681
        %v7683 = vsel %vm4961, %v7356, 0.0
        %v7684 = vadd.f32 %v7682, %v7683
        %v7685 = vsel %vm4961, %v7357, 0.0
        %v7686 = vadd.f32 %v7684, %v7685
        %v7687 = vsel %vm4961, %v7358, 0.0
        %v7688 = vadd.f32 %v7686, %v7687
        %v7689 = vsel %vm4961, %v7359, 0.0
        %v7690 = vadd.f32 %v7688, %v7689
        %v7691 = vsel %vm4961, %v7360, 0.0
        %v7692 = vadd.f32 %v7690, %v7691
        %v7693 = vsel %vm4961, %v7361, 0.0
        %v7694 = vadd.f32 %v7692, %v7693
        %v7695 = vsel %vm4961, %v7362, 0.0
        %v7696 = vadd.f32 %v7694, %v7695
        %v7697 = vsel %vm4961, %v7363, 0.0
        %v7698 = vadd.f32 %v7696, %v7697
        %v7699 = vsel %vm4961, %v7364, 0.0
        %v7700 = vadd.f32 %v7698, %v7699
        %v7701 = vsel %vm4961, %v7365, 0.0
        %v7702 = vadd.f32 %v7700, %v7701
        %v7703 = vsel %vm4961, %v7366, 0.0
        %v7704 = vadd.f32 %v7702, %v7703
        %v7705 = vsel %vm4961, %v7367, 0.0
        %v7706 = vadd.f32 %v7704, %v7705
        %v7707 = vsel %vm4961, %v7368, 0.0
        %v7708 = vadd.f32 %v7706, %v7707
        %v7709 = vsel %vm4961, %v7369, 0.0
        %v7710 = vadd.f32 %v7708, %v7709
        %v7711 = vsel %vm4961, %v7370, 0.0
        %v7712 = vadd.f32 %v7710, %v7711
        %v7713 = vsel %vm4961, %v7371, 0.0
        %v7714 = vadd.f32 %v7712, %v7713
        %v7715 = vsel %vm4961, %v7372, 0.0
        %v7716 = vadd.f32 %v7714, %v7715
        %v7717 = vsel %vm4961, %v7373, 0.0
        %v7718 = vadd.f32 %v7716, %v7717
        %v7719 = vsel %vm4961, %v7374, 0.0
        %v7720 = vadd.f32 %v7718, %v7719
        %v7721 = vsel %vm4961, %v7375, 0.0
        %v7722 = vadd.f32 %v7720, %v7721
        %v7723 = vsel %vm4961, %v7376, 0.0
        %v7724 = vadd.f32 %v7722, %v7723
        %v7725 = vsel %vm4961, %v7377, 0.0
        %v7726 = vadd.f32 %v7724, %v7725
        %v7727 = vsel %vm4961, %v7378, 0.0
        %v7728 = vadd.f32 %v7726, %v7727
        %v7729 = vsel %vm4961, %v7379, 0.0
        %v7730 = vadd.f32 %v7728, %v7729
        %v7731 = vsel %vm4961, %v7380, 0.0
        %v7732 = vadd.f32 %v7730, %v7731
        %v7733 = vsel %vm4961, %v7381, 0.0
        %v7734 = vadd.f32 %v7732, %v7733
        %v7735 = vsel %vm4961, %v7382, 0.0
        %v7736 = vadd.f32 %v7734, %v7735
        %v7737 = vsel %vm4961, %v7383, 0.0
        %v7738 = vadd.f32 %v7736, %v7737
        %v7739 = vsel %vm4961, %v7384, 0.0
        %v7740 = vadd.f32 %v7738, %v7739
        %v7741 = vsel %vm4961, %v7385, 0.0
        %v7742 = vadd.f32 %v7740, %v7741
        %v7743 = vsel %vm4961, %v7386, 0.0
        %v7744 = vadd.f32 %v7742, %v7743
        %v7745 = vsel %vm4961, %v7387, 0.0
        %v7746 = vadd.f32 %v7744, %v7745
        %v7747 = vsel %vm4961, %v7388, 0.0
        %v7748 = vadd.f32 %v7746, %v7747
        %v7749 = vsel %vm4961, %v7389, 0.0
        %v7750 = vadd.f32 %v7748, %v7749
        %v7751 = vsel %vm4961, %v7390, 0.0
        %v7752 = vadd.f32 %v7750, %v7751
        %v7753 = vsel %vm4961, %v7391, 0.0
        %v7754 = vadd.f32 %v7752, %v7753
        %v7755 = vsel %vm4961, %v7392, 0.0
        %v7756 = vadd.f32 %v7754, %v7755
        %v7757 = vsel %vm4961, %v7393, 0.0
        %v7758 = vadd.f32 %v7756, %v7757
        %v7759 = vsel %vm4961, %v7394, 0.0
        %v7760 = vadd.f32 %v7758, %v7759
        %v7761 = vsel %vm4961, %v7395, 0.0
        %v7762 = vadd.f32 %v7760, %v7761
        %v7763 = vsel %vm4961, %v7396, 0.0
        %v7764 = vadd.f32 %v7762, %v7763
        %v7765 = vsel %vm4961, %v7397, 0.0
        %v7766 = vadd.f32 %v7764, %v7765
        %v7767 = vsel %vm4961, %v7398, 0.0
        %v7768 = vadd.f32 %v7766, %v7767
        %v7769 = vsel %vm4961, %v7399, 0.0
        %v7770 = vadd.f32 %v7768, %v7769
        %v7771 = vsel %vm4961, %v7400, 0.0
        %v7772 = vadd.f32 %v7770, %v7771
        %v7773 = vsel %vm4961, %v7401, 0.0
        %v7774 = vadd.f32 %v7772, %v7773
        %v7775 = vsel %vm4961, %v7402, 0.0
        %v7776 = vadd.f32 %v7774, %v7775
        %v7777 = vsel %vm4961, %v7403, 0.0
        %v7778 = vadd.f32 %v7776, %v7777
        %v7779 = vsel %vm4961, %v7404, 0.0
        %v7780 = vadd.f32 %v7778, %v7779
        %v7781 = vsel %vm4961, %v7405, 0.0
        %v7782 = vadd.f32 %v7780, %v7781
        %v7783 = vsel %vm4961, %v7406, 0.0
        %v7784 = vadd.f32 %v7782, %v7783
        %v7785 = vsel %vm4961, %v7407, 0.0
        %v7786 = vadd.f32 %v7784, %v7785
        %v7787 = vsel %vm4961, %v7408, 0.0
        %v7788 = vadd.f32 %v7786, %v7787
        %v7789 = vsel %vm4961, %v7409, 0.0
        %v7790 = vadd.f32 %v7788, %v7789
        %v7791 = vsel %vm4961, %v7410, 0.0
        %v7792 = vadd.f32 %v7790, %v7791
        %v7793 = vsel %vm4961, %v7411, 0.0
        %v7794 = vadd.f32 %v7792, %v7793
        %v7795 = vsel %vm4961, %v7412, 0.0
        %v7796 = vadd.f32 %v7794, %v7795
        %v7797 = vsel %vm4961, %v7413, 0.0
        %v7798 = vadd.f32 %v7796, %v7797
        %v7799 = vsel %vm4961, %v7414, 0.0
        %v7800 = vadd.f32 %v7798, %v7799
        %v7801 = vsel %vm4961, %v7415, 0.0
        %v7802 = vadd.f32 %v7800, %v7801
        %v7803 = vsel %vm4961, %v7416, 0.0
        %v7804 = vadd.f32 %v7802, %v7803
        %v7805 = vsel %vm4961, %v7417, 0.0
        %v7806 = vadd.f32 %v7804, %v7805
        %v7807 = vsel %vm4961, %v7418, 0.0
        %v7808 = vadd.f32 %v7806, %v7807
        %v7809 = vsel %vm4961, %v7419, 0.0
        %v7810 = vadd.f32 %v7808, %v7809
        %v7811 = vsel %vm4961, %v7420, 0.0
        %v7812 = vadd.f32 %v7810, %v7811
        %v7813 = vsel %vm4961, %v7421, 0.0
        %v7814 = vadd.f32 %v7812, %v7813
        %v7815 = vsel %vm4961, %v7422, 0.0
        %v7816 = vadd.f32 %v7814, %v7815
        %v7817 = vsel %vm4961, %v7423, 0.0
        %v7818 = vadd.f32 %v7816, %v7817
        %v7819 = vsel %vm4961, %v7424, 0.0
        %v7820 = vadd.f32 %v7818, %v7819
        %v7821 = vsel %vm4961, %v7425, 0.0
        %v7822 = vadd.f32 %v7820, %v7821
        %v7823 = vsel %vm4961, %v7426, 0.0
        %v7824 = vadd.f32 %v7822, %v7823
        %v7825 = vsel %vm4961, %v7427, 0.0
        %v7826 = vadd.f32 %v7824, %v7825
        %v7827 = vsel %vm4961, %v7428, 0.0
        %v7828 = vadd.f32 %v7826, %v7827
        %v7829 = vsel %vm4961, %v7429, 0.0
        %v7830 = vadd.f32 %v7828, %v7829
        %v7831 = vsel %vm4961, %v7430, 0.0
        %v7832 = vadd.f32 %v7830, %v7831
        %v7833 = vsel %vm4961, %v7431, 0.0
        %v7834 = vadd.f32 %v7832, %v7833
        %v7835 = vsel %vm4961, %v7432, 0.0
        %v7836 = vadd.f32 %v7834, %v7835
        %v7837 = vsel %vm4961, %v7433, 0.0
        %v7838 = vadd.f32 %v7836, %v7837
        %v7839 = vsel %vm4961, %v7434, 0.0
        %v7840 = vadd.f32 %v7838, %v7839
        %v7841 = vsel %vm4961, %v7435, 0.0
        %v7842 = vadd.f32 %v7840, %v7841
        %v7843 = vsel %vm4961, %v7436, 0.0
        %v7844 = vadd.f32 %v7842, %v7843
        %v7845 = vsel %vm4961, %v7437, 0.0
        %v7846 = vadd.f32 %v7844, %v7845
        %v7847 = vsel %vm4961, %v7438, 0.0
        %v7848 = vadd.f32 %v7846, %v7847
        %v7849 = vsel %vm4961, %v7439, 0.0
        %v7850 = vadd.f32 %v7848, %v7849
        %v7851 = vsel %vm4961, %v7440, 0.0
        %v7852 = vadd.f32 %v7850, %v7851
        %v7853 = vsel %vm4961, %v7441, 0.0
        %v7854 = vadd.f32 %v7852, %v7853
        %v7855 = vsel %vm4961, %v7442, 0.0
        %v7856 = vadd.f32 %v7854, %v7855
        %v7857 = vsel %vm4961, %v7443, 0.0
        %v7858 = vadd.f32 %v7856, %v7857
        %v7859 = vsel %vm4961, %v7444, 0.0
        %v7860 = vadd.f32 %v7858, %v7859
        %v7861 = vsel %vm4961, %v7445, 0.0
        %v7862 = vadd.f32 %v7860, %v7861
        %v7863 = vsel %vm4961, %v7446, 0.0
        %v7864 = vadd.f32 %v7862, %v7863
        %v7865 = vsel %vm4961, %v7447, 0.0
        %v7866 = vadd.f32 %v7864, %v7865
        %v7867 = vsel %vm4961, %v7448, 0.0
        %v7868 = vadd.f32 %v7866, %v7867
        %v7869 = vsel %vm4961, %v7449, 0.0
        %v7870 = vadd.f32 %v7868, %v7869
        %v7871 = vsel %vm4961, %v7450, 0.0
        %v7872 = vadd.f32 %v7870, %v7871
        %v7873 = vsel %vm4961, %v7451, 0.0
        %v7874 = vadd.f32 %v7872, %v7873
        %v7875 = vsel %vm4961, %v7452, 0.0
        %v7876 = vadd.f32 %v7874, %v7875
        %v7877 = vsel %vm4961, %v7453, 0.0
        %v7878 = vadd.f32 %v7876, %v7877
        %v7879 = vsel %vm4961, %v7454, 0.0
        %v7880 = vadd.f32 %v7878, %v7879
        %v7881 = vsel %vm4961, %v7455, 0.0
        %v7882 = vadd.f32 %v7880, %v7881
        %v7883 = vsel %vm4961, %v7456, 0.0
        %v7884 = vadd.f32 %v7882, %v7883
        %v7885 = vsel %vm4961, %v7457, 0.0
        %v7886 = vadd.f32 %v7884, %v7885
        %v7887 = vsel %vm4961, %v7458, 0.0
        %v7888 = vadd.f32 %v7886, %v7887
        %v7889 = vsel %vm4961, %v7459, 0.0
        %v7890 = vadd.f32 %v7888, %v7889
        %v7891 = vsel %vm4961, %v7460, 0.0
        %v7892 = vadd.f32 %v7890, %v7891
        %v7893 = vsel %vm4961, %v7461, 0.0
        %v7894 = vadd.f32 %v7892, %v7893
        %v7895 = vsel %vm4961, %v7462, 0.0
        %v7896 = vadd.f32 %v7894, %v7895
        %v7897 = vsel %vm4961, %v7463, 0.0
        %v7898 = vadd.f32 %v7896, %v7897
        %v7899 = vsel %vm4961, %v7464, 0.0
        %v7900 = vadd.f32 %v7898, %v7899
        %v7901 = vsel %vm4961, %v7465, 0.0
        %v7902 = vadd.f32 %v7900, %v7901
        %v7903 = vsel %vm4961, %v7466, 0.0
        %v7904 = vadd.f32 %v7902, %v7903
        %v7905 = vsel %vm4961, %v7467, 0.0
        %v7906 = vadd.f32 %v7904, %v7905
        %v7907 = vsel %vm4961, %v7468, 0.0
        %v7908 = vadd.f32 %v7906, %v7907
        %v7909 = vsel %vm4961, %v7469, 0.0
        %v7910 = vadd.f32 %v7908, %v7909
        %v7911 = vsel %vm4961, %v7470, 0.0
        %v7912 = vadd.f32 %v7910, %v7911
        %v7913 = vsel %vm4961, %v7471, 0.0
        %v7914 = vadd.f32 %v7912, %v7913
        %v7915 = vsel %vm4961, %v7472, 0.0
        %v7916 = vadd.f32 %v7914, %v7915
        %v7917 = vsel %vm4961, %v7473, 0.0
        %v7918 = vadd.f32 %v7916, %v7917
        %v7919 = vsel %vm4961, %v7474, 0.0
        %v7920 = vadd.f32 %v7918, %v7919
        %v7921 = vsel %vm4961, %v7475, 0.0
        %v7922 = vadd.f32 %v7920, %v7921
        %v7923 = vsel %vm4961, %v7476, 0.0
        %v7924 = vadd.f32 %v7922, %v7923
        %v7925 = vsel %vm4961, %v7477, 0.0
        %v7926 = vadd.f32 %v7924, %v7925
        %v7927 = vsel %vm4961, %v7478, 0.0
        %v7928 = vadd.f32 %v7926, %v7927
        %v7929 = vsel %vm4961, %v7479, 0.0
        %v7930 = vadd.f32 %v7928, %v7929
        %v7931 = vsel %vm4961, %v7480, 0.0
        %v7932 = vadd.f32 %v7930, %v7931
        %v7933 = vsel %vm4961, %v7481, 0.0
        %v7934 = vadd.f32 %v7932, %v7933
        %v7935 = vsel %vm4961, %v7482, 0.0
        %v7936 = vadd.f32 %v7934, %v7935
        %v7937 = vsel %vm4961, %v7483, 0.0
        %v7938 = vadd.f32 %v7936, %v7937
        %v7939 = vsel %vm4961, %v7484, 0.0
        %v7940 = vadd.f32 %v7938, %v7939
        %v7941 = vsel %vm4961, %v7485, 0.0
        %v7942 = vadd.f32 %v7940, %v7941
        %v7943 = vsel %vm4961, %v7486, 0.0
        %v7944 = vadd.f32 %v7942, %v7943
        %v7945 = vsel %vm4961, %v7487, 0.0
        %v7946 = vadd.f32 %v7944, %v7945
        %v7947 = vsel %vm4961, %v7488, 0.0
        %v7948 = vadd.f32 %v7946, %v7947
        %v7949 = vsel %vm4961, %v7489, 0.0
        %v7950 = vadd.f32 %v7948, %v7949
        %v7951 = vsel %vm4961, %v7490, 0.0
        %v7952 = vadd.f32 %v7950, %v7951
        %v7953 = vsel %vm4961, %v7491, 0.0
        %v7954 = vadd.f32 %v7952, %v7953
        %v7955 = vsel %vm4961, %v7492, 0.0
        %v7956 = vadd.f32 %v7954, %v7955
        %v7957 = vsel %vm4961, %v7493, 0.0
        %v7958 = vadd.f32 %v7956, %v7957
        %v7959 = vsel %vm4961, %v7494, 0.0
        %v7960 = vadd.f32 %v7958, %v7959
        %v7961 = vsel %vm4961, %v7495, 0.0
        %v7962 = vadd.f32 %v7960, %v7961
        %v7963 = vsel %vm4961, %v7496, 0.0
        %v7964 = vadd.f32 %v7962, %v7963
        %v7965 = vsel %vm4961, %v7497, 0.0
        %v7966 = vadd.f32 %v7964, %v7965
        %v7967 = vsel %vm4961, %v7498, 0.0
        %v7968 = vadd.f32 %v7966, %v7967
        %v7969 = vsel %vm4961, %v7499, 0.0
        %v7970 = vadd.f32 %v7968, %v7969
        %v7971 = vsel %vm4961, %v7500, 0.0
        %v7972 = vadd.f32 %v7970, %v7971
        %v7973 = vsel %vm4961, %v7501, 0.0
        %v7974 = vadd.f32 %v7972, %v7973
        %v7975 = vsel %vm4961, %v7502, 0.0
        %v7976 = vadd.f32 %v7974, %v7975
        %v7977 = vsel %vm4961, %v7503, 0.0
        %v7978 = vadd.f32 %v7976, %v7977
        %v7979 = vsel %vm4961, %v7504, 0.0
        %v7980 = vadd.f32 %v7978, %v7979
        %v7981 = vsel %vm4961, %v7505, 0.0
        %v7982 = vadd.f32 %v7980, %v7981
        %v7983 = vsel %vm4961, %v7506, 0.0
        %v7984 = vadd.f32 %v7982, %v7983
        %v7985 = vsel %vm4961, %v7507, 0.0
        %v7986 = vadd.f32 %v7984, %v7985
        %v7987 = vsel %vm4961, %v7508, 0.0
        %v7988 = vadd.f32 %v7986, %v7987
        %v7989 = vsel %vm4961, %v7509, 0.0
        %v7990 = vadd.f32 %v7988, %v7989
        %v7991 = vsel %vm4961, %v7510, 0.0
        %v7992 = vadd.f32 %v7990, %v7991
        %v7993 = vsel %vm4961, %v7511, 0.0
        %v7994 = vadd.f32 %v7992, %v7993
        %v7995 = vsel %vm4961, %v7512, 0.0
        %v7996 = vadd.f32 %v7994, %v7995
        %v7997 = vsel %vm4961, %v7513, 0.0
        %v7998 = vadd.f32 %v7996, %v7997
        %v7999 = vsel %vm4961, %v7514, 0.0
        %v8000 = vadd.f32 %v7998, %v7999
        %v8001 = vsel %vm4961, %v7515, 0.0
        %v8002 = vadd.f32 %v8000, %v8001
        %v8003 = vsel %vm4961, %v7516, 0.0
        %v8004 = vadd.f32 %v8002, %v8003
        %v8005 = vsel %vm4961, %v7517, 0.0
        %v8006 = vadd.f32 %v8004, %v8005
        %v8007 = vsel %vm4961, %v7518, 0.0
        %v8008 = vadd.f32 %v8006, %v8007
        %v8009 = vsel %vm4961, %v7519, 0.0
        %v8010 = vadd.f32 %v8008, %v8009
        %v8011 = vsel %vm4961, %v7520, 0.0
        %v8012 = vadd.f32 %v8010, %v8011
        %v8013 = vsel %vm4961, %v7521, 0.0
        %v8014 = vadd.f32 %v8012, %v8013
        %v8015 = vsel %vm4961, %v7522, 0.0
        %v8016 = vadd.f32 %v8014, %v8015
        %v8017 = vsel %vm4961, %v7523, 0.0
        %v8018 = vadd.f32 %v8016, %v8017
        %v8019 = vsel %vm4961, %v7524, 0.0
        %v8020 = vadd.f32 %v8018, %v8019
        %v8021 = vsel %vm4961, %v7525, 0.0
        %v8022 = vadd.f32 %v8020, %v8021
        %v8023 = vsel %vm4961, %v7526, 0.0
        %v8024 = vadd.f32 %v8022, %v8023
        %v8025 = vsel %vm4961, %v7527, 0.0
        %v8026 = vadd.f32 %v8024, %v8025
        %v8027 = vsel %vm4961, %v7528, 0.0
        %v8028 = vadd.f32 %v8026, %v8027
        %v8029 = vsel %vm4961, %v7529, 0.0
        %v8030 = vadd.f32 %v8028, %v8029
        %v8031 = vsel %vm4961, %v7530, 0.0
        %v8032 = vadd.f32 %v8030, %v8031
        %v8033 = vsel %vm4961, %v7531, 0.0
        %v8034 = vadd.f32 %v8032, %v8033
        %v8035 = vsel %vm4961, %v7532, 0.0
        %v8036 = vadd.f32 %v8034, %v8035
        %v8037 = vsel %vm4961, %v7533, 0.0
        %v8038 = vadd.f32 %v8036, %v8037
        %v8039 = vsel %vm4961, %v7534, 0.0
        %v8040 = vadd.f32 %v8038, %v8039
        %v8041 = vsel %vm4961, %v7535, 0.0
        %v8042 = vadd.f32 %v8040, %v8041
        %v8043 = vsel %vm4961, %v7536, 0.0
        %v8044 = vadd.f32 %v8042, %v8043
        %v8045 = vsel %vm4961, %v7537, 0.0
        %v8046 = vadd.f32 %v8044, %v8045
        %v8047 = vsel %vm4961, %v7538, 0.0
        %v8048 = vadd.f32 %v8046, %v8047
        %v8049 = vsel %vm4961, %v7539, 0.0
        %v8050 = vadd.f32 %v8048, %v8049
        %v8051 = vrot.slane %v8050, 4
        %v8052 = vadd.f32 %v8050, %v8051
        %v8053 = vrot.slane %v8052, 2
        %v8054 = vadd.f32 %v8052, %v8053
        %v8055 = vrot.slane %v8054, 1
        %v8056 = vadd.f32 %v8054, %v8055
        %8058 = vrot.lane.b32.xlu0 %v7027, 16
        %v8059 = vpop.permute.xlu0 %8058
        %v8061 = vsel %vm4961, %v5480, %v8059
        %8063 = vrot.lane.b32.xlu0 %v8056, 16
        %v8064 = vpop.permute.xlu0 %8063
        %v8066 = vsel %vm4961, %v6509, %v8064
        %v8068 = vrot.slane %v8066, 7
        %vm8070 = vcmask 1040384
        %v8071 = vsel %vm8070, %v8061, %v8068
        %vm8072 = vcmask 254976
        %8073 = vst.msk [vmem:[%s207] sm:$0x3] %vm8072, %v8071
        %s8074 = sand.u32 %s120, 1
        %s8075 = scalar_lea.sflag [#allocation3], %s8074
        %s8076 = sand.u32 %s120, 1
        %s8077 = smul.addr %s8076, 2
        %s8078 = scalar_lea.vmem [#allocation2], %s8077
        // Predicated region
        $region37: #{tpu_custom_call.1} parent=35 // pred_check
          %p8079 = pneg %p130
        $region38: #{tpu_custom_call.1} parent=35 // pred_check_branch
          %8081 = sbr.rel (%p8079) target = $region40
        $region39: #{tpu_custom_call.1} parent=35 // pred_region
          %s8083 = ssub.s32 32, 32
          %8084 = vsyncadd %s8075, %s8083
          %s8085 = smul.addr %s18, 32
          %s8086 = scalar_lea.hbm %s4, %s8085
          %s8088 = sshll.u32 %s8078, 4
          %s8089 = int_to_ptr.vmem [resolvable:$true] %s8088
          %8091 = dma.vmem_to_hbm [thread:$0]  %s8089, 32, %s8086, %s8075
        $region40: #{tpu_custom_call.1} parent=35 // pred_fallthru
          _
      $region36: #{tpu_custom_call.1} parent=5 // pred_fallthru
        _
      %p8092 = scmp.le.s32.totalorder 2, %s13
      // Predicated region
      $region41: #{tpu_custom_call.1} parent=5 // pred_check
        %p8093 = pneg %p8092
      $region42: #{tpu_custom_call.1} parent=5 // pred_check_branch
        %8095 = sbr.rel (%p8093) target = $region44
      $region43: #{tpu_custom_call.1} parent=5 // pred_region
        %s8096 = ssub.s32 %s13, 2
        // Predicated region
        $region45: #{tpu_custom_call.1} parent=43 // pred_check
          %p8097 = pneg %p136
        $region46: #{tpu_custom_call.1} parent=43 // pred_check_branch
          %8099 = sbr.rel (%p8097) target = $region48
        $region47: #{tpu_custom_call.1} parent=43 // pred_region
          %s8100 = sand.u32 %s121, 1
          %s8101 = scalar_lea.sflag [#allocation3], %s8100
          %s8102 = sand.u32 %s121, 1
          %s8103 = smul.addr %s8102, 2
          %s8104 = scalar_lea.vmem [#allocation2], %s8103
          %8105 = dma.done %s8101, 32
        $region48: #{tpu_custom_call.1} parent=43 // pred_fallthru
          _
      $region44: #{tpu_custom_call.1} parent=5 // pred_fallthru
        _
    $region6: #{tpu_custom_call.1} parent=1 // loop_footer
      %s17 = sadd.s32 1, %s13
    $region7: #{tpu_custom_call.1} parent=1 // loop_footer_branch
      %12 = sbr.rel target = $region3
    $region8: #{tpu_custom_call.1} parent=1 // loop_exit
      _
    %8106 = vsyncpa [#allocation3], 1
    %s8107 = scalar_lea.sflag [#allocation3], 1
    %8108 = vsyncpa %s8107, 1

</llo_original>
